<compile_context>
chip_gen: v7x
topology: tpu7x:2x2x1
jax: 0.10.0
libtpu: 0.0.40
codegen_flags: <defaults>
</compile_context>

<pallas_src>
import functools
import math

import jax
import jax.numpy as jnp
from jax.experimental import pallas as pl
from jax.experimental.pallas import tpu as pltpu


def _default_vmem_limit():
    # Worst per-step use is ~28 MB (fus1 'conv'); 48 MiB is safe on v7x
    # (64 MiB physical) and we allow up to 96 MiB on v5e/v6e (128 MiB).
    try:
        cap = int(pltpu.get_tpu_info().vmem_capacity_bytes)
        if cap >= 64 * 1024 * 1024:
            return min(3 * cap // 4, 96 * 1024 * 1024)
    except Exception:
        pass
    return 48 * 1024 * 1024


_VMEM_LIMIT = _default_vmem_limit()


# ------------------------------ tiling helpers ------------------------------ #
def _channel_block(c, cap):
    """Largest block <= cap that divides c and is a multiple of 128 (or full c)."""
    if c <= cap:
        return c
    blk = cap - (cap % 128)
    while blk >= 128:
        if c % blk == 0:
            return blk
        blk -= 128
    return c


def _row_block(r, cap):
    if r <= cap:
        return r
    blk = cap - (cap % 8)
    while blk >= 8:
        if r % blk == 0:
            return blk
        blk -= 8
    return r


# ------------- fused 3x3x3 stride-1 conv (+bias +IN +residual +ReLU) -------- #
def _conv3_kernel(*refs, Do, Ho, Wo, n_ci, norm, relu, has_bias, has_res):
    it = iter(refs)
    x_ref = next(it)                               # (1, Dp, Hp, Wp, ci_blk) bf16
    w_ref = next(it)                               # (9, 3, ci_blk, co_blk)  bf16
    b_ref = next(it) if has_bias else None         # (1, co_blk)             f32
    r_ref = next(it) if has_res else None          # (1, S, co_blk)          bf16
    o_ref = next(it)                               # (1, S, co_blk)          bf16
    acc_ref = next(it)                             # (S, co_blk)             f32

    S = Do * Ho * Wo
    ci_blk = x_ref.shape[-1]
    co_blk = o_ref.shape[-1]
    ci = pl.program_id(2)

    @pl.when(ci == 0)
    def _():
        acc_ref[...] = jnp.zeros_like(acc_ref)

    # 9 (kd, kh) tap groups; kw is folded into the matmul K dim (K = 3*ci_blk).
    # Each group accumulates straight into the f32 VMEM scratch so live SSA
    # values are bounded to a single group's operands.
    for g in range(9):
        kd, kh = divmod(g, 3)
        xw = x_ref[0, kd:kd + Do, kh:kh + Ho, :, :]          # (Do, Ho, Wp, ci)
        cols = jnp.concatenate(
            [xw[:, :, kw:kw + Wo, :].reshape(S, ci_blk) for kw in range(3)],
            axis=-1)                                         # (S, 3*ci)
        wg = w_ref[g].reshape(3 * ci_blk, co_blk)            # (3*ci, co)
        acc_ref[...] += jnp.dot(cols, wg, preferred_element_type=jnp.float32)

    @pl.when(ci == n_ci - 1)
    def _():
        y = acc_ref[...]
        if has_bias:
            y = y + b_ref[...]
        if norm:  # InstanceNorm3d (affine=False, eps=1e-5), stats per (n, c)
            mean = jnp.mean(y, axis=0, keepdims=True)
            yc = y - mean
            var = jnp.mean(yc * yc, axis=0, keepdims=True)
            y = yc * jax.lax.rsqrt(var + 1e-5)
        if has_res:
            y = y + r_ref[0].astype(jnp.float32)
        if relu:
            y = jnp.maximum(y, 0.0)
        o_ref[0] = y.astype(o_ref.dtype)


def _conv3_tap(x, w, b, res, norm, relu):
    """3x3x3 conv, stride 1, padding 1.  x:[N,D,H,W,Cin], w:[27,Cin,Cout] bf16."""
    N, D, H, W, Cin = x.shape
    Cout = w.shape[-1]
    S = D * H * W
    xp = jnp.pad(x.astype(jnp.bfloat16),
                 ((0, 0), (1, 1), (1, 1), (1, 1), (0, 0)))
    Dp, Hp, Wp = D + 2, H + 2, W + 2
    ci_blk = _channel_block(Cin, 256)
    co_blk = _channel_block(Cout, 256)
    n_ci = Cin // ci_blk
    n_co = Cout // co_blk
    w9 = w.reshape(9, 3, Cin, Cout)   # free view of (27, Cin, Cout)

    in_specs = [
        pl.BlockSpec((1, Dp, Hp, Wp, ci_blk), lambda n, co, ci: (n, 0, 0, 0, ci)),
        pl.BlockSpec((9, 3, ci_blk, co_blk), lambda n, co, ci: (0, 0, ci, co)),
    ]
    args = [xp, w9]
    has_bias = b is not None
    if has_bias:
        in_specs.append(pl.BlockSpec((1, co_blk), lambda n, co, ci: (0, co)))
        args.append(b.astype(jnp.float32))
    has_res = res is not None
    if has_res:
        in_specs.append(pl.BlockSpec((1, S, co_blk), lambda n, co, ci: (n, 0, co)))
        args.append(res.astype(jnp.bfloat16).reshape(N, S, Cout))

    kernel = functools.partial(_conv3_kernel, Do=D, Ho=H, Wo=W, n_ci=n_ci,
                               norm=norm, relu=relu,
                               has_bias=has_bias, has_res=has_res)
    out = pl.pallas_call(
        kernel,
        out_shape=jax.ShapeDtypeStruct((N, S, Cout), jnp.bfloat16),
        grid=(N, n_co, n_ci),
        in_specs=in_specs,
        out_specs=pl.BlockSpec((1, S, co_blk), lambda n, co, ci: (n, 0, co)),
        scratch_shapes=[pltpu.VMEM((S, co_blk), jnp.float32)],
        compiler_params=pltpu.CompilerParams(
            dimension_semantics=("parallel", "parallel", "arbitrary"),
            vmem_limit_bytes=_VMEM_LIMIT),
    )(*args)
    return out.reshape(N, D, H, W, Cout)


# ----------------- pointwise matmul conv kernel (+IN +ReLU) ----------------- #
def _pw_kernel(x_ref, w_ref, o_ref, *, norm, relu):
    # x_ref: (1, S, K) bf16, w_ref: (K, co_blk) bf16, o_ref: (1, S, co_blk) bf16
    y = jnp.dot(x_ref[0], w_ref[...], preferred_element_type=jnp.float32)
    if norm:
        mean = jnp.mean(y, axis=0, keepdims=True)
        yc = y - mean
        var = jnp.mean(yc * yc, axis=0, keepdims=True)
        y = yc * jax.lax.rsqrt(var + 1e-5)
    if relu:
        y = jnp.maximum(y, 0.0)
    o_ref[0] = y.astype(o_ref.dtype)


def _conv_pw(x2d, w, norm, relu):
    """x2d: [N, S, K] bf16, w: [K, Cout] bf16 -> [N, S, Cout] bf16 (with IN/ReLU)."""
    N, S, K = x2d.shape
    Cout = w.shape[-1]
    co_blk = _channel_block(Cout, 256)
    n_co = Cout // co_blk
    kernel = functools.partial(_pw_kernel, norm=norm, relu=relu)
    return pl.pallas_call(
        kernel,
        out_shape=jax.ShapeDtypeStruct((N, S, Cout), jnp.bfloat16),
        grid=(N, n_co),
        in_specs=[
            pl.BlockSpec((1, S, K), lambda n, co: (n, 0, 0)),
            pl.BlockSpec((K, co_blk), lambda n, co: (0, co)),
        ],
        out_specs=pl.BlockSpec((1, S, co_blk), lambda n, co: (n, 0, co)),
        compiler_params=pltpu.CompilerParams(
            dimension_semantics=("parallel", "parallel"),
            vmem_limit_bytes=_VMEM_LIMIT),
    )(x2d, w)


# ------------------------------- conv dispatcher ---------------------------- #
@functools.partial(jax.jit, static_argnames=("stride", "norm", "relu"))
def conv3d_op(x, w, b=None, *, stride=1, norm=False, relu=False, residual=None):
    """3-D conv with optional fused bias / InstanceNorm3d / residual-add / ReLU.
    x: [N,D,H,W,Cin]; w: [27,Cin,Cout] (3x3x3, pad 1) or [Cin,Cout] (1x1x1).
    The residual (if given) is added after the norm and before the ReLU."""
    N, D, H, W, Cin = x.shape
    Cout = w.shape[-1]

    if w.ndim == 2:  # 1x1x1 conv (padding 0), never has bias or residual here
        if stride > 1:
            x = x[:, ::stride, ::stride, ::stride, :]
            N, D, H, W, Cin = x.shape
        x2d = x.astype(jnp.bfloat16).reshape(N, D * H * W, Cin)
        out = _conv_pw(x2d, w, norm, relu)
        return out.reshape(N, D, H, W, Cout)

    # 3x3x3, padding 1
    if stride == 1:
        return _conv3_tap(x, w, b, residual, norm, relu)

    # stride 2: these layers are small -> cheap im2col + pointwise matmul
    Do, Ho, Wo = D // 2, H // 2, W // 2
    xp = jnp.pad(x.astype(jnp.bfloat16),
                 ((0, 0), (1, 1), (1, 1), (1, 1), (0, 0)))
    cols = []
    for kd in range(3):
        for kh in range(3):
            for kw in range(3):
                cols.append(xp[:, kd:kd + 2 * Do:2,
                               kh:kh + 2 * Ho:2,
                               kw:kw + 2 * Wo:2, :])
    patches = jnp.concatenate(cols, axis=-1).reshape(N, Do * Ho * Wo, 27 * Cin)
    out = _conv_pw(patches, w.reshape(27 * Cin, Cout), norm, relu)
    return out.reshape(N, Do, Ho, Wo, Cout)


# ------------------------ fusion gating (lane-dense) ------------------------ #
def _gate_kernel(g_ref, x1_ref, x2_ref, sm1_ref, sm2_ref, o_ref, *, C):
    g = jax.nn.sigmoid(g_ref[...].astype(jnp.float32))
    x1 = x1_ref[...].astype(jnp.float32)
    x2 = x2_ref[...].astype(jnp.float32)
    sm1 = sm1_ref[...].astype(jnp.float32)   # [convs1(x1) | convm1(x1)]
    sm2 = sm2_ref[...].astype(jnp.float32)   # [convs2(x2) | convm2(x2)]
    y1 = g * x1 + (1.0 - g) * x2
    y2 = jax.nn.sigmoid(sm1[:, 0:C]) * x2
    y3 = jax.nn.sigmoid(sm2[:, 0:C]) * x1
    y4 = jnp.maximum(sm1[:, C:2 * C], sm2[:, C:2 * C])
    dt = o_ref.dtype
    o_ref[...] = jnp.concatenate(
        [y1.astype(dt), y2.astype(dt), y3.astype(dt), y4.astype(dt)], axis=-1)


@jax.jit
def fusion_gate(g, x1, x2, sm1, sm2):
    N, D, H, W, C = x1.shape
    R = N * D * H * W
    rb = _row_block(R, 2048)
    spec_c = pl.BlockSpec((rb, C), lambda i: (i, 0))
    spec_2c = pl.BlockSpec((rb, 2 * C), lambda i: (i, 0))
    out = pl.pallas_call(
        functools.partial(_gate_kernel, C=C),
        out_shape=jax.ShapeDtypeStruct((R, 4 * C), jnp.bfloat16),
        grid=(R // rb,),
        in_specs=[spec_c, spec_c, spec_c, spec_2c, spec_2c],
        out_specs=pl.BlockSpec((rb, 4 * C), lambda i: (i, 0)),
        compiler_params=pltpu.CompilerParams(
            dimension_semantics=("parallel",),
            vmem_limit_bytes=_VMEM_LIMIT),
    )(g.reshape(R, C), x1.reshape(R, C), x2.reshape(R, C),
      sm1.reshape(R, 2 * C), sm2.reshape(R, 2 * C))
    return out.reshape(N, D, H, W, 4 * C)


# ------------------------------ small JAX glue ------------------------------ #
def maxpool2(x):
    N, D, H, W, C = x.shape
    x = x.reshape(N, D // 2, 2, H // 2, 2, W // 2, 2, C)
    return jnp.max(x, axis=(2, 4, 6))


def global_avgpool(x):
    return jnp.mean(x.astype(jnp.float32), axis=(1, 2, 3))


# ---------------------------- parameter creation ---------------------------- #
class KeyGen:
    def __init__(self, key):
        self.key = key

    def __call__(self):
        self.key, sub = jax.random.split(self.key)
        return sub


def _normal(key, shape, std):
    return std * jax.random.normal(key, shape, dtype=jnp.float32)


def init_conv3(key, cin, cout):
    w = _normal(key, (27, cin, cout), 1.0 / math.sqrt(cin * 27))
    return w.astype(jnp.bfloat16)


def init_conv1(key, cin, cout):
    return _normal(key, (cin, cout), 1.0 / math.sqrt(cin)).astype(jnp.bfloat16)


def init_basic_block(kg, inplanes, planes, stride):
    p = {'conv1': init_conv3(kg(), inplanes, planes),
         'conv2': init_conv3(kg(), planes, planes),
         'stride': stride}
    if stride != 1 or inplanes != planes:
        p['down'] = init_conv1(kg(), inplanes, planes)
    return p


def init_resnet(kg, in_channels, num_classes=1):
    n_channel = [64, 128, 256, 512]
    layers_cfg = [2, 2, 2, 2]
    p = {'conv1': init_conv1(kg(), in_channels, 64)}
    inplanes = 64
    layers = []
    for li, (planes, nblocks) in enumerate(zip(n_channel, layers_cfg)):
        stride = 1 if li == 0 else 2
        blocks = []
        for bi in range(nblocks):
            s = stride if bi == 0 else 1
            blocks.append(init_basic_block(kg, inplanes, planes, s))
            inplanes = planes
        layers.append(blocks)
    p['layers'] = layers
    p['fc_w'] = _normal(kg(), (512, num_classes), 1.0 / math.sqrt(512))
    p['fc_b'] = _normal(kg(), (num_classes,), 0.01)
    return p


def init_fusion(kg, inplace, outplace, first):
    p = {'first': first,
         'conv': init_conv3(kg(), 4 * inplace, outplace),
         'kernel_se_w': init_conv3(kg(), 2 * inplace, inplace),
         'kernel_se_b': _normal(kg(), (1, inplace), 0.01),
         # batched side convs: [convs1 | convm1] over x1, [convs2 | convm2] over x2
         'convsm1': init_conv3(kg(), inplace, 2 * inplace),
         'convsm2': init_conv3(kg(), inplace, 2 * inplace)}
    c2_in = outplace if first else outplace + inplace
    p['conv2'] = init_conv3(kg(), c2_in, outplace)
    return p


def init_fusnet(key, inplace=5, num_classes=1):
    kg = KeyGen(key)
    return {'net1': init_resnet(kg, inplace, num_classes),
            'net2': init_resnet(kg, inplace, num_classes),
            'fus1': init_fusion(kg, 64, 128, True),
            'fus2': init_fusion(kg, 128, 256, False),
            'fus3': init_fusion(kg, 256, 512, False),
            'fus4': init_fusion(kg, 512, 512, False),
            'fc_w': _normal(kg(), (512, num_classes), 1.0 / math.sqrt(512)),
            'fc_b': _normal(kg(), (num_classes,), 0.01)}


# ---------------------------------- forward --------------------------------- #
def basic_block_fwd(p, x):
    identity = x
    out = conv3d_op(x, p['conv1'], stride=p['stride'], norm=True, relu=True)
    if 'down' in p:
        identity = conv3d_op(x, p['down'], stride=p['stride'], norm=True, relu=False)
    # conv2 + IN + residual-add + ReLU fused into one kernel epilogue
    return conv3d_op(out, p['conv2'], norm=True, relu=True, residual=identity)


def resnet_fwd(p, x):
    h = conv3d_op(x, p['conv1'], norm=True, relu=True)   # 1x1x1 + IN + ReLU
    outs = []
    for layer in p['layers']:
        for blk in layer:
            h = basic_block_fwd(blk, h)
        outs.append(h)
    feat = global_avgpool(outs[3])                        # [N, 512] f32
    # tiny regression head: plain XLA dot (Pallas would be pure padding waste)
    o = jnp.dot(feat, p['fc_w']) + p['fc_b']
    return outs[0], outs[1], outs[2], outs[3], o


def fusion_fwd(p, x1, x2, z=None):
    xcat = jnp.concatenate([x1, x2], axis=-1)
    g = conv3d_op(xcat, p['kernel_se_w'], p['kernel_se_b'])      # conv with bias
    sm1 = conv3d_op(x1, p['convsm1'])                            # [s1 | m1]
    sm2 = conv3d_op(x2, p['convsm2'])                            # [s2 | m2]
    y = fusion_gate(g, x1, x2, sm1, sm2)                         # [y1|y2|y3|y4]
    y = conv3d_op(y, p['conv'], norm=True, relu=True)
    if not p['first']:
        y = jnp.concatenate([y, z], axis=-1)
    y = conv3d_op(y, p['conv2'], norm=True, relu=True)
    return y


def fusnet_fwd(params, ix1, ix2):
    x1, x2, x3, x4, f1 = resnet_fwd(params['net1'], ix1)
    y1, y2, y3, y4, f2 = resnet_fwd(params['net2'], ix2)
    z = fusion_fwd(params['fus1'], x1, y1)
    z = maxpool2(z)
    z = fusion_fwd(params['fus2'], x2, y2, z)
    z = maxpool2(z)
    z = fusion_fwd(params['fus3'], x3, y3, z)
    z = maxpool2(z)
    z = fusion_fwd(params['fus4'], x4, y4, z)
    z = maxpool2(z)
    feat = global_avgpool(z)                              # [N, 512] f32
    f3 = jnp.dot(feat, params['fc_w']) + params['fc_b']
    return f1, f2, f3   # eval mode of the PyTorch model returns f3


# ------------------------------------ main ---------------------------------- #
if __name__ == "__main__":
    key = jax.random.PRNGKey(0)
    kp, k1, k2 = jax.random.split(key, 3)

    N, S, CIN = 2, 16, 5   # batch, spatial (D=H=W), in-channels (inplace=5)
    # NDHWC inputs (PyTorch equivalent would be NCDHW [2, 5, 16, 16, 16])
    ix1 = jax.random.normal(k1, (N, S, S, S, CIN), dtype=jnp.float32)
    ix2 = jax.random.normal(k2, (N, S, S, S, CIN), dtype=jnp.float32)

    params = init_fusnet(kp, inplace=CIN, num_classes=1)

    f1, f2, f3 = fusnet_fwd(params, ix1, ix2)
    jax.block_until_ready(f3)
    assert f3.shape == (N, 1) and f1.shape == (N, 1) and f2.shape == (N, 1)
    assert bool(jnp.all(jnp.isfinite(f1))) and bool(jnp.all(jnp.isfinite(f2)))
    assert bool(jnp.all(jnp.isfinite(f3)))
    print("KERNEL_OK")
</pallas_src>

<mosaic_0001>
module attributes {stable_mosaic.version = 11 : i64} {
  func.func @_pw_kernel(%arg0: i32, %arg1: i32, %arg2: memref<1x4096x5xbf16, #tpu.memory_space<vmem>>, %arg3: memref<5x64xbf16, #tpu.memory_space<vmem>>, %arg4: memref<1x4096x64xbf16, #tpu.memory_space<vmem>>) attributes {dimension_semantics = [#tpu.dimension_semantics<parallel>, #tpu.dimension_semantics<parallel>], iteration_bounds = array<i64: 2, 1>, scalar_prefetch = 0 : i64, scratch_operands = 0 : i64, tpu.core_type = #tpu.core_type<tc>, window_params = [{transform_indices = @transform_0, window_bounds = array<i64: 1, 4096, 5>}, {transform_indices = @transform_1, window_bounds = array<i64: 5, 64>}, {transform_indices = @transform_2, window_bounds = array<i64: 1, 4096, 64>}]} {
    %c0 = arith.constant 0 : index
    %c0_0 = arith.constant 0 : index
    %c0_1 = arith.constant 0 : index
    %0 = vector.load %arg2[%c0, %c0_0, %c0_1] : memref<1x4096x5xbf16, #tpu.memory_space<vmem>>, vector<1x4096x5xbf16>
    %1 = vector.shape_cast %0 : vector<1x4096x5xbf16> to vector<4096x5xbf16>
    %c0_2 = arith.constant 0 : index
    %c0_3 = arith.constant 0 : index
    %2 = vector.load %arg3[%c0_2, %c0_3] : memref<5x64xbf16, #tpu.memory_space<vmem>>, vector<5x64xbf16>
    %cst = arith.constant dense<0.000000e+00> : vector<4096x64xf32>
    %3 = tpu.matmul %1, %2, %cst {dimension_numbers = #tpu.dot_dimension_numbers<[1], [0], [0], [1], [0, 0, 1, 1], [], []>} : vector<4096x5xbf16>, vector<5x64xbf16>, vector<4096x64xf32> -> vector<4096x64xf32>
    %cst_4 = arith.constant dense<0.000000e+00> : vector<64xf32>
    %4 = vector.multi_reduction <add>, %3, %cst_4 [0] : vector<4096x64xf32> to vector<64xf32>
    %5 = vector.shape_cast %4 : vector<64xf32> to vector<1x64xf32>
    %cst_5 = arith.constant 4.096000e+03 : f32
    %6 = vector.broadcast %cst_5 : f32 to vector<1x64xf32>
    %7 = arith.divf %5, %6 : vector<1x64xf32>
    %8 = vector.broadcast %7 : vector<1x64xf32> to vector<4096x64xf32>
    %9 = arith.subf %3, %8 : vector<4096x64xf32>
    %10 = arith.mulf %9, %9 : vector<4096x64xf32>
    %cst_6 = arith.constant dense<0.000000e+00> : vector<64xf32>
    %11 = vector.multi_reduction <add>, %10, %cst_6 [0] : vector<4096x64xf32> to vector<64xf32>
    %12 = vector.shape_cast %11 : vector<64xf32> to vector<1x64xf32>
    %cst_7 = arith.constant 4.096000e+03 : f32
    %13 = vector.broadcast %cst_7 : f32 to vector<1x64xf32>
    %14 = arith.divf %12, %13 : vector<1x64xf32>
    %cst_8 = arith.constant 9.99999974E-6 : f32
    %15 = vector.broadcast %cst_8 : f32 to vector<1x64xf32>
    %16 = arith.addf %14, %15 : vector<1x64xf32>
    %17 = math.rsqrt %16 : vector<1x64xf32>
    %18 = vector.broadcast %17 : vector<1x64xf32> to vector<4096x64xf32>
    %19 = arith.mulf %9, %18 : vector<4096x64xf32>
    %cst_9 = arith.constant 0.000000e+00 : f32
    %20 = vector.broadcast %cst_9 : f32 to vector<4096x64xf32>
    %21 = arith.maximumf %19, %20 : vector<4096x64xf32>
    %22 = arith.truncf %21 : vector<4096x64xf32> to vector<4096x64xbf16>
    %c0_10 = arith.constant 0 : index
    %c0_11 = arith.constant 0 : index
    %c0_12 = arith.constant 0 : index
    %23 = vector.load %arg4[%c0_10, %c0_11, %c0_12] : memref<1x4096x64xbf16, #tpu.memory_space<vmem>>, vector<1x4096x64xbf16>
    %24 = vector.shape_cast %23 : vector<1x4096x64xbf16> to vector<4096x64xbf16>
    %25 = vector.shape_cast %22 : vector<4096x64xbf16> to vector<1x4096x64xbf16>
    tpu.vector_store %arg4[%c0_10, %c0_11, %c0_12], %25 {strides = array<i32>} : memref<1x4096x64xbf16, #tpu.memory_space<vmem>>, vector<1x4096x64xbf16>,
    return
  }
  func.func @transform_0(%arg0: i32, %arg1: i32) -> (i32, i32, i32) {
    %c0_i32 = arith.constant 0 : i32
    %c0_i32_0 = arith.constant 0 : i32
    %c0_i32_1 = arith.constant 0 : i32
    return %arg0, %c0_i32, %c0_i32_0 : i32, i32, i32
  }
  func.func @transform_1(%arg0: i32, %arg1: i32) -> (i32, i32) {
    %c0_i32 = arith.constant 0 : i32
    %c0_i32_0 = arith.constant 0 : i32
    return %c0_i32, %arg1 : i32, i32
  }
  func.func @transform_2(%arg0: i32, %arg1: i32) -> (i32, i32, i32) {
    %c0_i32 = arith.constant 0 : i32
    %c0_i32_0 = arith.constant 0 : i32
    return %arg0, %c0_i32, %arg1 : i32, i32, i32
  }
}

</mosaic_0001>

<llo_original>
// kernel: conv3d_op.1
$region0: #{conv3d_op.1}
  #allocation0 [shape = 'u32[]', space=smem, size = 0x4, offset = 0x4, fixed_abs, tag = 'smem constant byte address 0x4 - core index']
  #allocation1 [shape = 'u32[144,128]{1,0:T(1,128)}', space=vmem, size = 0x12000, scoped, tag = 'internal scratch']
  %s0 = inlined_call_operand.vmem [shape: bf16[2,4096,5], index: 0, kind: input, shape index: {}]
  %s1 = inlined_call_operand.vmem [shape: bf16[5,64], index: 1, kind: input, shape index: {}]
  %s2 = inlined_call_operand.hbm [shape: bf16[2,4096,64], index: 2, kind: output, shape index: {}]
  %s3 = sld [smem:[#allocation0]]
  $region41: #{conv3d_op.1} parent=0
    _
  %s5 = ssub.s32 1, %s3
  %s6 = scalar_select 0, %s5, %s3
  $region1: #{conv3d_op.1} parent=0
    #allocation2 [shape = 'u8[2097152]{0}', space=vmem, size = 0x200000, scoped, tag = 'output window, operand 0']
    #allocation3 [shape = 's32[2]{0}', space=sflag, size = 0x8, scoped, tag = 'scoped memory for conv3d_op.1']
    %7 = vsyncpa [#allocation3], 0
    %s8 = scalar_lea.sflag [#allocation3], 1
    %9 = vsyncpa %s8, 0
    loop: start=0, step=1, limit=4
    $region2: #{conv3d_op.1} parent=1 // loop_pre_header
      _
    $region3: #{conv3d_op.1} parent=1 // loop_header
      %s11 = sphi 0, %s15
      %p12 = scmp.ge.s32.totalorder %s11, 4
      %s18 = sphi 0, %s30
      %s19 = sphi 0, %s26
      %s20 = sphi 0, %s18
      %s21 = sphi 0, %s19
      %s22 = sphi 0, %s20
      %s23 = sphi 0, %s21
      %s33 = sphi 0, %s35
      %s36 = sphi 0, %s33
      %s37 = sphi 0, %s36
      %s53 = sphi 0, %s37
      %s59 = sphi 0, %s61
      %s62 = sphi 0, %s59
      %s63 = sphi 0, %s62
      %s79 = sphi 0, %s63
      %s87 = sphi 0, %s89
      %s90 = sphi 0, %s87
      %s91 = sphi 0, %s90
      %s107 = sphi 0, %s91
    $region4: #{conv3d_op.1} parent=1 // loop_header_branch
      %14 = sbr.rel (%p12) target = $region8
    $region5: #{conv3d_op.1} parent=1 // loop_body
      %s16 = ssub.s32 %s11, 1
      %s17 = ssub.s32 %s11, 2
      %s24 = sadd.s32 1, %s19
      %p25 = scmp.ge.s32.totalorder %s24, 1
      %s26 = scalar_select %p25, 0, %s24
      %s27 = sadd.s32 1, %s18
      %s28 = scalar_select %p25, %s27, %s18
      %p29 = scmp.ge.s32.totalorder %s28, 2
      %s30 = scalar_select %p29, 0, %s28
      %s31 = ssub.s32 %s18, %s30
      %p32 = scmp.eq.s32.totalorder %s31, 0
      %s34 = sadd.s32 %s33, 1
      %s35 = scalar_select %p32, %s33, %s34
      %p38 = pneg %p32
      %p39 = scmp.eq.s32.totalorder %s11, 1
      %p40 = por %p38, %p39
      %p41 = scmp.ne.s32.totalorder %s33, %s36
      %p42 = scmp.eq.s32.totalorder %s11, 0
      %p43 = por %p41, %p42
      %p44 = scmp.ne.s32.totalorder %s33, %s36
      %p45 = scmp.eq.s32.totalorder %s16, 1
      %p46 = por %p44, %p45
      %p47 = scmp.ne.s32.totalorder %s36, %s37
      %p48 = scmp.eq.s32.totalorder %s16, 0
      %p49 = por %p47, %p48
      %p50 = scmp.ne.s32.totalorder %s36, %s37
      %p51 = scmp.eq.s32.totalorder %s17, 1
      %p52 = por %p50, %p51
      %p54 = scmp.ne.s32.totalorder %s37, %s53
      %p55 = scmp.eq.s32.totalorder %s17, 0
      %p56 = por %p54, %p55
      %s57 = ssub.s32 %s19, %s26
      %p58 = scmp.eq.s32.totalorder %s57, 0
      %s60 = sadd.s32 %s59, 1
      %s61 = scalar_select %p58, %s59, %s60
      %p64 = pneg %p58
      %p65 = scmp.eq.s32.totalorder %s11, 1
      %p66 = por %p64, %p65
      %p67 = scmp.ne.s32.totalorder %s59, %s62
      %p68 = scmp.eq.s32.totalorder %s11, 0
      %p69 = por %p67, %p68
      %p70 = scmp.ne.s32.totalorder %s59, %s62
      %p71 = scmp.eq.s32.totalorder %s16, 1
      %p72 = por %p70, %p71
      %p73 = scmp.ne.s32.totalorder %s62, %s63
      %p74 = scmp.eq.s32.totalorder %s16, 0
      %p75 = por %p73, %p74
      %p76 = scmp.ne.s32.totalorder %s62, %s63
      %p77 = scmp.eq.s32.totalorder %s17, 1
      %p78 = por %p76, %p77
      %p80 = scmp.ne.s32.totalorder %s63, %s79
      %p81 = scmp.eq.s32.totalorder %s17, 0
      %p82 = por %p80, %p81
      %s83 = ssub.s32 %s18, %s30
      %s84 = ssub.s32 %s19, %s26
      %s85 = sor.u32 %s83, %s84
      %p86 = scmp.eq.s32.totalorder %s85, 0
      %s88 = sadd.s32 %s87, 1
      %s89 = scalar_select %p86, %s87, %s88
      %p92 = pneg %p86
      %p93 = scmp.eq.s32.totalorder %s11, 1
      %p94 = por %p92, %p93
      %p95 = scmp.ne.s32.totalorder %s87, %s90
      %p96 = scmp.eq.s32.totalorder %s11, 0
      %p97 = por %p95, %p96
      %p98 = scmp.ne.s32.totalorder %s87, %s90
      %p99 = scmp.eq.s32.totalorder %s16, 1
      %p100 = por %p98, %p99
      %p101 = scmp.ne.s32.totalorder %s90, %s91
      %p102 = scmp.eq.s32.totalorder %s16, 0
      %p103 = por %p101, %p102
      %p104 = scmp.ne.s32.totalorder %s90, %s91
      %p105 = scmp.eq.s32.totalorder %s17, 1
      %p106 = por %p104, %p105
      %p108 = scmp.ne.s32.totalorder %s91, %s107
      %p109 = scmp.eq.s32.totalorder %s17, 0
      %p110 = por %p108, %p109
      %p111 = scmp.le.s32.totalorder 1, %s11
      %p112 = scmp.lt.s32.totalorder %s11, 3
      %p113 = pnand %p111, %p112
      %p114 = pneg %p113
      // Predicated region
      $region9: #{conv3d_op.1} parent=5 // pred_check
        _
      $region10: #{conv3d_op.1} parent=5 // pred_check_branch
        %116 = sbr.rel (%p113) target = $region12
      $region11: #{conv3d_op.1} parent=5 // pred_region
        %s117 = ssub.s32 %s11, 1
        // Predicated region
        $region13: #{conv3d_op.1} parent=11 // pred_check
          %p118 = pneg %p75
        $region14: #{conv3d_op.1} parent=11 // pred_check_branch
          %120 = sbr.rel (%p118) target = $region16
        $region15: #{conv3d_op.1} parent=11 // pred_region
          %p121 = scmp.lt.s32.totalorder %s21, 0
          %s122 = scalar_select %p121, %s21, 0
          %s123 = smul.addr %s122, 4
          %s124 = scalar_lea.vmem %s1, %s123
        $region16: #{conv3d_op.1} parent=11 // pred_fallthru
          _
      $region12: #{conv3d_op.1} parent=5 // pred_fallthru
        _
      %p125 = scmp.lt.s32.totalorder %s11, 2
      // Predicated region
      $region17: #{conv3d_op.1} parent=5 // pred_check
        %p126 = pneg %p125
      $region18: #{conv3d_op.1} parent=5 // pred_check_branch
        %128 = sbr.rel (%p126) target = $region20
      $region19: #{conv3d_op.1} parent=5 // pred_region
        // Predicated region
        $region21: #{conv3d_op.1} parent=19 // pred_check
          %p129 = pneg %p43
        $region22: #{conv3d_op.1} parent=19 // pred_check_branch
          %131 = sbr.rel (%p129) target = $region24
        $region23: #{conv3d_op.1} parent=19 // pred_region
          %p132 = scmp.lt.s32.totalorder %s18, 1
          %s133 = scalar_select %p132, %s18, 1
          %s134 = smul.addr %s133, 512
          %s135 = smul.addr %s134, 4
          %s136 = scalar_lea.vmem %s0, %s135
        $region24: #{conv3d_op.1} parent=19 // pred_fallthru
          _
      $region20: #{conv3d_op.1} parent=5 // pred_fallthru
        _
      %p137 = scmp.le.s32.totalorder 1, %s11
      %p138 = scmp.lt.s32.totalorder %s11, 3
      %p139 = pnand %p137, %p138
      %p140 = pneg %p139
      // Predicated region
      $region25: #{conv3d_op.1} parent=5 // pred_check
        _
      $region26: #{conv3d_op.1} parent=5 // pred_check_branch
        %142 = sbr.rel (%p139) target = $region28
      $region27: #{conv3d_op.1} parent=5 // pred_region
        %s143 = ssub.s32 %s11, 1
        %p144 = scmp.lt.s32.totalorder %s20, 1
        %s145 = scalar_select %p144, %s20, 1
        %s146 = smul.addr %s145, 512
        %s147 = smul.addr %s146, 4
        %s148 = scalar_lea.vmem %s0, %s147
        %p149 = pneg %p49
        %p150 = pneg %p46
        %p151 = scmp.lt.s32.totalorder %s21, 0
        %s152 = scalar_select %p151, %s21, 0
        %s153 = smul.addr %s152, 4
        %s154 = scalar_lea.vmem %s1, %s153
        %p155 = pneg %p75
        %p156 = pneg %p72
        %p157 = pneg %p103
        %p158 = pneg %p100
        %s159 = sand.u32 %s90, 1
        %s160 = scalar_lea.sflag [#allocation3], %s159
        %s161 = sand.u32 %s90, 1
        %s162 = smul.addr %s161, 2048
        %s163 = scalar_lea.vmem [#allocation2], %s162
        %p164 = scmp.lt.s32.totalorder %s20, 1
        %s165 = scalar_select %p164, %s20, 1
        %s166 = smul.addr %s165, 512
        %s167 = smul.addr %s166, 4
        %s168 = scalar_lea.vmem %s0, %s167
        %p169 = scmp.lt.s32.totalorder %s21, 0
        %s170 = scalar_select %p169, %s21, 0
        %s171 = smul.addr %s170, 4
        %s172 = scalar_lea.vmem %s1, %s171
        %v174 = vld [vmem:[%s168] sm:$0xf]
        %v175 = vld [vmem:[%s168 + $0x4] sm:$0xf]
        %v176 = vld [vmem:[%s168 + $0x8] sm:$0xf]
        %v177 = vld [vmem:[%s168 + $0xc] sm:$0xf]
        %v178 = vld [vmem:[%s168 + $0x10] sm:$0xf]
        %v179 = vld [vmem:[%s168 + $0x14] sm:$0xf]
        %v180 = vld [vmem:[%s168 + $0x18] sm:$0xf]
        %v181 = vld [vmem:[%s168 + $0x1c] sm:$0xf]
        %v182 = vld [vmem:[%s168 + $0x20] sm:$0xf]
        %v183 = vld [vmem:[%s168 + $0x24] sm:$0xf]
        %v184 = vld [vmem:[%s168 + $0x28] sm:$0xf]
        %v185 = vld [vmem:[%s168 + $0x2c] sm:$0xf]
        %v186 = vld [vmem:[%s168 + $0x30] sm:$0xf]
        %v187 = vld [vmem:[%s168 + $0x34] sm:$0xf]
        %v188 = vld [vmem:[%s168 + $0x38] sm:$0xf]
        %v189 = vld [vmem:[%s168 + $0x3c] sm:$0xf]
        %v190 = vld [vmem:[%s168 + $0x40] sm:$0xf]
        %v191 = vld [vmem:[%s168 + $0x44] sm:$0xf]
        %v192 = vld [vmem:[%s168 + $0x48] sm:$0xf]
        %v193 = vld [vmem:[%s168 + $0x4c] sm:$0xf]
        %v194 = vld [vmem:[%s168 + $0x50] sm:$0xf]
        %v195 = vld [vmem:[%s168 + $0x54] sm:$0xf]
        %v196 = vld [vmem:[%s168 + $0x58] sm:$0xf]
        %v197 = vld [vmem:[%s168 + $0x5c] sm:$0xf]
        %v198 = vld [vmem:[%s168 + $0x60] sm:$0xf]
        %v199 = vld [vmem:[%s168 + $0x64] sm:$0xf]
        %v200 = vld [vmem:[%s168 + $0x68] sm:$0xf]
        %v201 = vld [vmem:[%s168 + $0x6c] sm:$0xf]
        %v202 = vld [vmem:[%s168 + $0x70] sm:$0xf]
        %v203 = vld [vmem:[%s168 + $0x74] sm:$0xf]
        %v204 = vld [vmem:[%s168 + $0x78] sm:$0xf]
        %v205 = vld [vmem:[%s168 + $0x7c] sm:$0xf]
        %v206 = vld [vmem:[%s168 + $0x80] sm:$0xf]
        %v207 = vld [vmem:[%s168 + $0x84] sm:$0xf]
        %v208 = vld [vmem:[%s168 + $0x88] sm:$0xf]
        %v209 = vld [vmem:[%s168 + $0x8c] sm:$0xf]
        %v210 = vld [vmem:[%s168 + $0x90] sm:$0xf]
        %v211 = vld [vmem:[%s168 + $0x94] sm:$0xf]
        %v212 = vld [vmem:[%s168 + $0x98] sm:$0xf]
        %v213 = vld [vmem:[%s168 + $0x9c] sm:$0xf]
        %v214 = vld [vmem:[%s168 + $0xa0] sm:$0xf]
        %v215 = vld [vmem:[%s168 + $0xa4] sm:$0xf]
        %v216 = vld [vmem:[%s168 + $0xa8] sm:$0xf]
        %v217 = vld [vmem:[%s168 + $0xac] sm:$0xf]
        %v218 = vld [vmem:[%s168 + $0xb0] sm:$0xf]
        %v219 = vld [vmem:[%s168 + $0xb4] sm:$0xf]
        %v220 = vld [vmem:[%s168 + $0xb8] sm:$0xf]
        %v221 = vld [vmem:[%s168 + $0xbc] sm:$0xf]
        %v222 = vld [vmem:[%s168 + $0xc0] sm:$0xf]
        %v223 = vld [vmem:[%s168 + $0xc4] sm:$0xf]
        %v224 = vld [vmem:[%s168 + $0xc8] sm:$0xf]
        %v225 = vld [vmem:[%s168 + $0xcc] sm:$0xf]
        %v226 = vld [vmem:[%s168 + $0xd0] sm:$0xf]
        %v227 = vld [vmem:[%s168 + $0xd4] sm:$0xf]
        %v228 = vld [vmem:[%s168 + $0xd8] sm:$0xf]
        %v229 = vld [vmem:[%s168 + $0xdc] sm:$0xf]
        %v230 = vld [vmem:[%s168 + $0xe0] sm:$0xf]
        %v231 = vld [vmem:[%s168 + $0xe4] sm:$0xf]
        %v232 = vld [vmem:[%s168 + $0xe8] sm:$0xf]
        %v233 = vld [vmem:[%s168 + $0xec] sm:$0xf]
        %v234 = vld [vmem:[%s168 + $0xf0] sm:$0xf]
        %v235 = vld [vmem:[%s168 + $0xf4] sm:$0xf]
        %v236 = vld [vmem:[%s168 + $0xf8] sm:$0xf]
        %v237 = vld [vmem:[%s168 + $0xfc] sm:$0xf]
        %v238 = vld [vmem:[%s168 + $0x100] sm:$0xf]
        %v239 = vld [vmem:[%s168 + $0x104] sm:$0xf]
        %v240 = vld [vmem:[%s168 + $0x108] sm:$0xf]
        %v241 = vld [vmem:[%s168 + $0x10c] sm:$0xf]
        %v242 = vld [vmem:[%s168 + $0x110] sm:$0xf]
        %v243 = vld [vmem:[%s168 + $0x114] sm:$0xf]
        %v244 = vld [vmem:[%s168 + $0x118] sm:$0xf]
        %v245 = vld [vmem:[%s168 + $0x11c] sm:$0xf]
        %v246 = vld [vmem:[%s168 + $0x120] sm:$0xf]
        %v247 = vld [vmem:[%s168 + $0x124] sm:$0xf]
        %v248 = vld [vmem:[%s168 + $0x128] sm:$0xf]
        %v249 = vld [vmem:[%s168 + $0x12c] sm:$0xf]
        %v250 = vld [vmem:[%s168 + $0x130] sm:$0xf]
        %v251 = vld [vmem:[%s168 + $0x134] sm:$0xf]
        %v252 = vld [vmem:[%s168 + $0x138] sm:$0xf]
        %v253 = vld [vmem:[%s168 + $0x13c] sm:$0xf]
        %v254 = vld [vmem:[%s168 + $0x140] sm:$0xf]
        %v255 = vld [vmem:[%s168 + $0x144] sm:$0xf]
        %v256 = vld [vmem:[%s168 + $0x148] sm:$0xf]
        %v257 = vld [vmem:[%s168 + $0x14c] sm:$0xf]
        %v258 = vld [vmem:[%s168 + $0x150] sm:$0xf]
        %v259 = vld [vmem:[%s168 + $0x154] sm:$0xf]
        %v260 = vld [vmem:[%s168 + $0x158] sm:$0xf]
        %v261 = vld [vmem:[%s168 + $0x15c] sm:$0xf]
        %v262 = vld [vmem:[%s168 + $0x160] sm:$0xf]
        %v263 = vld [vmem:[%s168 + $0x164] sm:$0xf]
        %v264 = vld [vmem:[%s168 + $0x168] sm:$0xf]
        %v265 = vld [vmem:[%s168 + $0x16c] sm:$0xf]
        %v266 = vld [vmem:[%s168 + $0x170] sm:$0xf]
        %v267 = vld [vmem:[%s168 + $0x174] sm:$0xf]
        %v268 = vld [vmem:[%s168 + $0x178] sm:$0xf]
        %v269 = vld [vmem:[%s168 + $0x17c] sm:$0xf]
        %v270 = vld [vmem:[%s168 + $0x180] sm:$0xf]
        %v271 = vld [vmem:[%s168 + $0x184] sm:$0xf]
        %v272 = vld [vmem:[%s168 + $0x188] sm:$0xf]
        %v273 = vld [vmem:[%s168 + $0x18c] sm:$0xf]
        %v274 = vld [vmem:[%s168 + $0x190] sm:$0xf]
        %v275 = vld [vmem:[%s168 + $0x194] sm:$0xf]
        %v276 = vld [vmem:[%s168 + $0x198] sm:$0xf]
        %v277 = vld [vmem:[%s168 + $0x19c] sm:$0xf]
        %v278 = vld [vmem:[%s168 + $0x1a0] sm:$0xf]
        %v279 = vld [vmem:[%s168 + $0x1a4] sm:$0xf]
        %v280 = vld [vmem:[%s168 + $0x1a8] sm:$0xf]
        %v281 = vld [vmem:[%s168 + $0x1ac] sm:$0xf]
        %v282 = vld [vmem:[%s168 + $0x1b0] sm:$0xf]
        %v283 = vld [vmem:[%s168 + $0x1b4] sm:$0xf]
        %v284 = vld [vmem:[%s168 + $0x1b8] sm:$0xf]
        %v285 = vld [vmem:[%s168 + $0x1bc] sm:$0xf]
        %v286 = vld [vmem:[%s168 + $0x1c0] sm:$0xf]
        %v287 = vld [vmem:[%s168 + $0x1c4] sm:$0xf]
        %v288 = vld [vmem:[%s168 + $0x1c8] sm:$0xf]
        %v289 = vld [vmem:[%s168 + $0x1cc] sm:$0xf]
        %v290 = vld [vmem:[%s168 + $0x1d0] sm:$0xf]
        %v291 = vld [vmem:[%s168 + $0x1d4] sm:$0xf]
        %v292 = vld [vmem:[%s168 + $0x1d8] sm:$0xf]
        %v293 = vld [vmem:[%s168 + $0x1dc] sm:$0xf]
        %v294 = vld [vmem:[%s168 + $0x1e0] sm:$0xf]
        %v295 = vld [vmem:[%s168 + $0x1e4] sm:$0xf]
        %v296 = vld [vmem:[%s168 + $0x1e8] sm:$0xf]
        %v297 = vld [vmem:[%s168 + $0x1ec] sm:$0xf]
        %v298 = vld [vmem:[%s168 + $0x1f0] sm:$0xf]
        %v299 = vld [vmem:[%s168 + $0x1f4] sm:$0xf]
        %v300 = vld [vmem:[%s168 + $0x1f8] sm:$0xf]
        %v301 = vld [vmem:[%s168 + $0x1fc] sm:$0xf]
        %v302 = vld [vmem:[%s168 + $0x200] sm:$0xf]
        %v303 = vld [vmem:[%s168 + $0x204] sm:$0xf]
        %v304 = vld [vmem:[%s168 + $0x208] sm:$0xf]
        %v305 = vld [vmem:[%s168 + $0x20c] sm:$0xf]
        %v306 = vld [vmem:[%s168 + $0x210] sm:$0xf]
        %v307 = vld [vmem:[%s168 + $0x214] sm:$0xf]
        %v308 = vld [vmem:[%s168 + $0x218] sm:$0xf]
        %v309 = vld [vmem:[%s168 + $0x21c] sm:$0xf]
        %v310 = vld [vmem:[%s168 + $0x220] sm:$0xf]
        %v311 = vld [vmem:[%s168 + $0x224] sm:$0xf]
        %v312 = vld [vmem:[%s168 + $0x228] sm:$0xf]
        %v313 = vld [vmem:[%s168 + $0x22c] sm:$0xf]
        %v314 = vld [vmem:[%s168 + $0x230] sm:$0xf]
        %v315 = vld [vmem:[%s168 + $0x234] sm:$0xf]
        %v316 = vld [vmem:[%s168 + $0x238] sm:$0xf]
        %v317 = vld [vmem:[%s168 + $0x23c] sm:$0xf]
        %v318 = vld [vmem:[%s168 + $0x240] sm:$0xf]
        %v319 = vld [vmem:[%s168 + $0x244] sm:$0xf]
        %v320 = vld [vmem:[%s168 + $0x248] sm:$0xf]
        %v321 = vld [vmem:[%s168 + $0x24c] sm:$0xf]
        %v322 = vld [vmem:[%s168 + $0x250] sm:$0xf]
        %v323 = vld [vmem:[%s168 + $0x254] sm:$0xf]
        %v324 = vld [vmem:[%s168 + $0x258] sm:$0xf]
        %v325 = vld [vmem:[%s168 + $0x25c] sm:$0xf]
        %v326 = vld [vmem:[%s168 + $0x260] sm:$0xf]
        %v327 = vld [vmem:[%s168 + $0x264] sm:$0xf]
        %v328 = vld [vmem:[%s168 + $0x268] sm:$0xf]
        %v329 = vld [vmem:[%s168 + $0x26c] sm:$0xf]
        %v330 = vld [vmem:[%s168 + $0x270] sm:$0xf]
        %v331 = vld [vmem:[%s168 + $0x274] sm:$0xf]
        %v332 = vld [vmem:[%s168 + $0x278] sm:$0xf]
        %v333 = vld [vmem:[%s168 + $0x27c] sm:$0xf]
        %v334 = vld [vmem:[%s168 + $0x280] sm:$0xf]
        %v335 = vld [vmem:[%s168 + $0x284] sm:$0xf]
        %v336 = vld [vmem:[%s168 + $0x288] sm:$0xf]
        %v337 = vld [vmem:[%s168 + $0x28c] sm:$0xf]
        %v338 = vld [vmem:[%s168 + $0x290] sm:$0xf]
        %v339 = vld [vmem:[%s168 + $0x294] sm:$0xf]
        %v340 = vld [vmem:[%s168 + $0x298] sm:$0xf]
        %v341 = vld [vmem:[%s168 + $0x29c] sm:$0xf]
        %v342 = vld [vmem:[%s168 + $0x2a0] sm:$0xf]
        %v343 = vld [vmem:[%s168 + $0x2a4] sm:$0xf]
        %v344 = vld [vmem:[%s168 + $0x2a8] sm:$0xf]
        %v345 = vld [vmem:[%s168 + $0x2ac] sm:$0xf]
        %v346 = vld [vmem:[%s168 + $0x2b0] sm:$0xf]
        %v347 = vld [vmem:[%s168 + $0x2b4] sm:$0xf]
        %v348 = vld [vmem:[%s168 + $0x2b8] sm:$0xf]
        %v349 = vld [vmem:[%s168 + $0x2bc] sm:$0xf]
        %v350 = vld [vmem:[%s168 + $0x2c0] sm:$0xf]
        %v351 = vld [vmem:[%s168 + $0x2c4] sm:$0xf]
        %v352 = vld [vmem:[%s168 + $0x2c8] sm:$0xf]
        %v353 = vld [vmem:[%s168 + $0x2cc] sm:$0xf]
        %v354 = vld [vmem:[%s168 + $0x2d0] sm:$0xf]
        %v355 = vld [vmem:[%s168 + $0x2d4] sm:$0xf]
        %v356 = vld [vmem:[%s168 + $0x2d8] sm:$0xf]
        %v357 = vld [vmem:[%s168 + $0x2dc] sm:$0xf]
        %v358 = vld [vmem:[%s168 + $0x2e0] sm:$0xf]
        %v359 = vld [vmem:[%s168 + $0x2e4] sm:$0xf]
        %v360 = vld [vmem:[%s168 + $0x2e8] sm:$0xf]
        %v361 = vld [vmem:[%s168 + $0x2ec] sm:$0xf]
        %v362 = vld [vmem:[%s168 + $0x2f0] sm:$0xf]
        %v363 = vld [vmem:[%s168 + $0x2f4] sm:$0xf]
        %v364 = vld [vmem:[%s168 + $0x2f8] sm:$0xf]
        %v365 = vld [vmem:[%s168 + $0x2fc] sm:$0xf]
        %v366 = vld [vmem:[%s168 + $0x300] sm:$0xf]
        %v367 = vld [vmem:[%s168 + $0x304] sm:$0xf]
        %v368 = vld [vmem:[%s168 + $0x308] sm:$0xf]
        %v369 = vld [vmem:[%s168 + $0x30c] sm:$0xf]
        %v370 = vld [vmem:[%s168 + $0x310] sm:$0xf]
        %v371 = vld [vmem:[%s168 + $0x314] sm:$0xf]
        %v372 = vld [vmem:[%s168 + $0x318] sm:$0xf]
        %v373 = vld [vmem:[%s168 + $0x31c] sm:$0xf]
        %v374 = vld [vmem:[%s168 + $0x320] sm:$0xf]
        %v375 = vld [vmem:[%s168 + $0x324] sm:$0xf]
        %v376 = vld [vmem:[%s168 + $0x328] sm:$0xf]
        %v377 = vld [vmem:[%s168 + $0x32c] sm:$0xf]
        %v378 = vld [vmem:[%s168 + $0x330] sm:$0xf]
        %v379 = vld [vmem:[%s168 + $0x334] sm:$0xf]
        %v380 = vld [vmem:[%s168 + $0x338] sm:$0xf]
        %v381 = vld [vmem:[%s168 + $0x33c] sm:$0xf]
        %v382 = vld [vmem:[%s168 + $0x340] sm:$0xf]
        %v383 = vld [vmem:[%s168 + $0x344] sm:$0xf]
        %v384 = vld [vmem:[%s168 + $0x348] sm:$0xf]
        %v385 = vld [vmem:[%s168 + $0x34c] sm:$0xf]
        %v386 = vld [vmem:[%s168 + $0x350] sm:$0xf]
        %v387 = vld [vmem:[%s168 + $0x354] sm:$0xf]
        %v388 = vld [vmem:[%s168 + $0x358] sm:$0xf]
        %v389 = vld [vmem:[%s168 + $0x35c] sm:$0xf]
        %v390 = vld [vmem:[%s168 + $0x360] sm:$0xf]
        %v391 = vld [vmem:[%s168 + $0x364] sm:$0xf]
        %v392 = vld [vmem:[%s168 + $0x368] sm:$0xf]
        %v393 = vld [vmem:[%s168 + $0x36c] sm:$0xf]
        %v394 = vld [vmem:[%s168 + $0x370] sm:$0xf]
        %v395 = vld [vmem:[%s168 + $0x374] sm:$0xf]
        %v396 = vld [vmem:[%s168 + $0x378] sm:$0xf]
        %v397 = vld [vmem:[%s168 + $0x37c] sm:$0xf]
        %v398 = vld [vmem:[%s168 + $0x380] sm:$0xf]
        %v399 = vld [vmem:[%s168 + $0x384] sm:$0xf]
        %v400 = vld [vmem:[%s168 + $0x388] sm:$0xf]
        %v401 = vld [vmem:[%s168 + $0x38c] sm:$0xf]
        %v402 = vld [vmem:[%s168 + $0x390] sm:$0xf]
        %v403 = vld [vmem:[%s168 + $0x394] sm:$0xf]
        %v404 = vld [vmem:[%s168 + $0x398] sm:$0xf]
        %v405 = vld [vmem:[%s168 + $0x39c] sm:$0xf]
        %v406 = vld [vmem:[%s168 + $0x3a0] sm:$0xf]
        %v407 = vld [vmem:[%s168 + $0x3a4] sm:$0xf]
        %v408 = vld [vmem:[%s168 + $0x3a8] sm:$0xf]
        %v409 = vld [vmem:[%s168 + $0x3ac] sm:$0xf]
        %v410 = vld [vmem:[%s168 + $0x3b0] sm:$0xf]
        %v411 = vld [vmem:[%s168 + $0x3b4] sm:$0xf]
        %v412 = vld [vmem:[%s168 + $0x3b8] sm:$0xf]
        %v413 = vld [vmem:[%s168 + $0x3bc] sm:$0xf]
        %v414 = vld [vmem:[%s168 + $0x3c0] sm:$0xf]
        %v415 = vld [vmem:[%s168 + $0x3c4] sm:$0xf]
        %v416 = vld [vmem:[%s168 + $0x3c8] sm:$0xf]
        %v417 = vld [vmem:[%s168 + $0x3cc] sm:$0xf]
        %v418 = vld [vmem:[%s168 + $0x3d0] sm:$0xf]
        %v419 = vld [vmem:[%s168 + $0x3d4] sm:$0xf]
        %v420 = vld [vmem:[%s168 + $0x3d8] sm:$0xf]
        %v421 = vld [vmem:[%s168 + $0x3dc] sm:$0xf]
        %v422 = vld [vmem:[%s168 + $0x3e0] sm:$0xf]
        %v423 = vld [vmem:[%s168 + $0x3e4] sm:$0xf]
        %v424 = vld [vmem:[%s168 + $0x3e8] sm:$0xf]
        %v425 = vld [vmem:[%s168 + $0x3ec] sm:$0xf]
        %v426 = vld [vmem:[%s168 + $0x3f0] sm:$0xf]
        %v427 = vld [vmem:[%s168 + $0x3f4] sm:$0xf]
        %v428 = vld [vmem:[%s168 + $0x3f8] sm:$0xf]
        %v429 = vld [vmem:[%s168 + $0x3fc] sm:$0xf]
        %v430 = vld [vmem:[%s168 + $0x400] sm:$0xf]
        %v431 = vld [vmem:[%s168 + $0x404] sm:$0xf]
        %v432 = vld [vmem:[%s168 + $0x408] sm:$0xf]
        %v433 = vld [vmem:[%s168 + $0x40c] sm:$0xf]
        %v434 = vld [vmem:[%s168 + $0x410] sm:$0xf]
        %v435 = vld [vmem:[%s168 + $0x414] sm:$0xf]
        %v436 = vld [vmem:[%s168 + $0x418] sm:$0xf]
        %v437 = vld [vmem:[%s168 + $0x41c] sm:$0xf]
        %v438 = vld [vmem:[%s168 + $0x420] sm:$0xf]
        %v439 = vld [vmem:[%s168 + $0x424] sm:$0xf]
        %v440 = vld [vmem:[%s168 + $0x428] sm:$0xf]
        %v441 = vld [vmem:[%s168 + $0x42c] sm:$0xf]
        %v442 = vld [vmem:[%s168 + $0x430] sm:$0xf]
        %v443 = vld [vmem:[%s168 + $0x434] sm:$0xf]
        %v444 = vld [vmem:[%s168 + $0x438] sm:$0xf]
        %v445 = vld [vmem:[%s168 + $0x43c] sm:$0xf]
        %v446 = vld [vmem:[%s168 + $0x440] sm:$0xf]
        %v447 = vld [vmem:[%s168 + $0x444] sm:$0xf]
        %v448 = vld [vmem:[%s168 + $0x448] sm:$0xf]
        %v449 = vld [vmem:[%s168 + $0x44c] sm:$0xf]
        %v450 = vld [vmem:[%s168 + $0x450] sm:$0xf]
        %v451 = vld [vmem:[%s168 + $0x454] sm:$0xf]
        %v452 = vld [vmem:[%s168 + $0x458] sm:$0xf]
        %v453 = vld [vmem:[%s168 + $0x45c] sm:$0xf]
        %v454 = vld [vmem:[%s168 + $0x460] sm:$0xf]
        %v455 = vld [vmem:[%s168 + $0x464] sm:$0xf]
        %v456 = vld [vmem:[%s168 + $0x468] sm:$0xf]
        %v457 = vld [vmem:[%s168 + $0x46c] sm:$0xf]
        %v458 = vld [vmem:[%s168 + $0x470] sm:$0xf]
        %v459 = vld [vmem:[%s168 + $0x474] sm:$0xf]
        %v460 = vld [vmem:[%s168 + $0x478] sm:$0xf]
        %v461 = vld [vmem:[%s168 + $0x47c] sm:$0xf]
        %v462 = vld [vmem:[%s168 + $0x480] sm:$0xf]
        %v463 = vld [vmem:[%s168 + $0x484] sm:$0xf]
        %v464 = vld [vmem:[%s168 + $0x488] sm:$0xf]
        %v465 = vld [vmem:[%s168 + $0x48c] sm:$0xf]
        %v466 = vld [vmem:[%s168 + $0x490] sm:$0xf]
        %v467 = vld [vmem:[%s168 + $0x494] sm:$0xf]
        %v468 = vld [vmem:[%s168 + $0x498] sm:$0xf]
        %v469 = vld [vmem:[%s168 + $0x49c] sm:$0xf]
        %v470 = vld [vmem:[%s168 + $0x4a0] sm:$0xf]
        %v471 = vld [vmem:[%s168 + $0x4a4] sm:$0xf]
        %v472 = vld [vmem:[%s168 + $0x4a8] sm:$0xf]
        %v473 = vld [vmem:[%s168 + $0x4ac] sm:$0xf]
        %v474 = vld [vmem:[%s168 + $0x4b0] sm:$0xf]
        %v475 = vld [vmem:[%s168 + $0x4b4] sm:$0xf]
        %v476 = vld [vmem:[%s168 + $0x4b8] sm:$0xf]
        %v477 = vld [vmem:[%s168 + $0x4bc] sm:$0xf]
        %v478 = vld [vmem:[%s168 + $0x4c0] sm:$0xf]
        %v479 = vld [vmem:[%s168 + $0x4c4] sm:$0xf]
        %v480 = vld [vmem:[%s168 + $0x4c8] sm:$0xf]
        %v481 = vld [vmem:[%s168 + $0x4cc] sm:$0xf]
        %v482 = vld [vmem:[%s168 + $0x4d0] sm:$0xf]
        %v483 = vld [vmem:[%s168 + $0x4d4] sm:$0xf]
        %v484 = vld [vmem:[%s168 + $0x4d8] sm:$0xf]
        %v485 = vld [vmem:[%s168 + $0x4dc] sm:$0xf]
        %v486 = vld [vmem:[%s168 + $0x4e0] sm:$0xf]
        %v487 = vld [vmem:[%s168 + $0x4e4] sm:$0xf]
        %v488 = vld [vmem:[%s168 + $0x4e8] sm:$0xf]
        %v489 = vld [vmem:[%s168 + $0x4ec] sm:$0xf]
        %v490 = vld [vmem:[%s168 + $0x4f0] sm:$0xf]
        %v491 = vld [vmem:[%s168 + $0x4f4] sm:$0xf]
        %v492 = vld [vmem:[%s168 + $0x4f8] sm:$0xf]
        %v493 = vld [vmem:[%s168 + $0x4fc] sm:$0xf]
        %v494 = vld [vmem:[%s168 + $0x500] sm:$0xf]
        %v495 = vld [vmem:[%s168 + $0x504] sm:$0xf]
        %v496 = vld [vmem:[%s168 + $0x508] sm:$0xf]
        %v497 = vld [vmem:[%s168 + $0x50c] sm:$0xf]
        %v498 = vld [vmem:[%s168 + $0x510] sm:$0xf]
        %v499 = vld [vmem:[%s168 + $0x514] sm:$0xf]
        %v500 = vld [vmem:[%s168 + $0x518] sm:$0xf]
        %v501 = vld [vmem:[%s168 + $0x51c] sm:$0xf]
        %v502 = vld [vmem:[%s168 + $0x520] sm:$0xf]
        %v503 = vld [vmem:[%s168 + $0x524] sm:$0xf]
        %v504 = vld [vmem:[%s168 + $0x528] sm:$0xf]
        %v505 = vld [vmem:[%s168 + $0x52c] sm:$0xf]
        %v506 = vld [vmem:[%s168 + $0x530] sm:$0xf]
        %v507 = vld [vmem:[%s168 + $0x534] sm:$0xf]
        %v508 = vld [vmem:[%s168 + $0x538] sm:$0xf]
        %v509 = vld [vmem:[%s168 + $0x53c] sm:$0xf]
        %v510 = vld [vmem:[%s168 + $0x540] sm:$0xf]
        %v511 = vld [vmem:[%s168 + $0x544] sm:$0xf]
        %v512 = vld [vmem:[%s168 + $0x548] sm:$0xf]
        %v513 = vld [vmem:[%s168 + $0x54c] sm:$0xf]
        %v514 = vld [vmem:[%s168 + $0x550] sm:$0xf]
        %v515 = vld [vmem:[%s168 + $0x554] sm:$0xf]
        %v516 = vld [vmem:[%s168 + $0x558] sm:$0xf]
        %v517 = vld [vmem:[%s168 + $0x55c] sm:$0xf]
        %v518 = vld [vmem:[%s168 + $0x560] sm:$0xf]
        %v519 = vld [vmem:[%s168 + $0x564] sm:$0xf]
        %v520 = vld [vmem:[%s168 + $0x568] sm:$0xf]
        %v521 = vld [vmem:[%s168 + $0x56c] sm:$0xf]
        %v522 = vld [vmem:[%s168 + $0x570] sm:$0xf]
        %v523 = vld [vmem:[%s168 + $0x574] sm:$0xf]
        %v524 = vld [vmem:[%s168 + $0x578] sm:$0xf]
        %v525 = vld [vmem:[%s168 + $0x57c] sm:$0xf]
        %v526 = vld [vmem:[%s168 + $0x580] sm:$0xf]
        %v527 = vld [vmem:[%s168 + $0x584] sm:$0xf]
        %v528 = vld [vmem:[%s168 + $0x588] sm:$0xf]
        %v529 = vld [vmem:[%s168 + $0x58c] sm:$0xf]
        %v530 = vld [vmem:[%s168 + $0x590] sm:$0xf]
        %v531 = vld [vmem:[%s168 + $0x594] sm:$0xf]
        %v532 = vld [vmem:[%s168 + $0x598] sm:$0xf]
        %v533 = vld [vmem:[%s168 + $0x59c] sm:$0xf]
        %v534 = vld [vmem:[%s168 + $0x5a0] sm:$0xf]
        %v535 = vld [vmem:[%s168 + $0x5a4] sm:$0xf]
        %v536 = vld [vmem:[%s168 + $0x5a8] sm:$0xf]
        %v537 = vld [vmem:[%s168 + $0x5ac] sm:$0xf]
        %v538 = vld [vmem:[%s168 + $0x5b0] sm:$0xf]
        %v539 = vld [vmem:[%s168 + $0x5b4] sm:$0xf]
        %v540 = vld [vmem:[%s168 + $0x5b8] sm:$0xf]
        %v541 = vld [vmem:[%s168 + $0x5bc] sm:$0xf]
        %v542 = vld [vmem:[%s168 + $0x5c0] sm:$0xf]
        %v543 = vld [vmem:[%s168 + $0x5c4] sm:$0xf]
        %v544 = vld [vmem:[%s168 + $0x5c8] sm:$0xf]
        %v545 = vld [vmem:[%s168 + $0x5cc] sm:$0xf]
        %v546 = vld [vmem:[%s168 + $0x5d0] sm:$0xf]
        %v547 = vld [vmem:[%s168 + $0x5d4] sm:$0xf]
        %v548 = vld [vmem:[%s168 + $0x5d8] sm:$0xf]
        %v549 = vld [vmem:[%s168 + $0x5dc] sm:$0xf]
        %v550 = vld [vmem:[%s168 + $0x5e0] sm:$0xf]
        %v551 = vld [vmem:[%s168 + $0x5e4] sm:$0xf]
        %v552 = vld [vmem:[%s168 + $0x5e8] sm:$0xf]
        %v553 = vld [vmem:[%s168 + $0x5ec] sm:$0xf]
        %v554 = vld [vmem:[%s168 + $0x5f0] sm:$0xf]
        %v555 = vld [vmem:[%s168 + $0x5f4] sm:$0xf]
        %v556 = vld [vmem:[%s168 + $0x5f8] sm:$0xf]
        %v557 = vld [vmem:[%s168 + $0x5fc] sm:$0xf]
        %v558 = vld [vmem:[%s168 + $0x600] sm:$0xf]
        %v559 = vld [vmem:[%s168 + $0x604] sm:$0xf]
        %v560 = vld [vmem:[%s168 + $0x608] sm:$0xf]
        %v561 = vld [vmem:[%s168 + $0x60c] sm:$0xf]
        %v562 = vld [vmem:[%s168 + $0x610] sm:$0xf]
        %v563 = vld [vmem:[%s168 + $0x614] sm:$0xf]
        %v564 = vld [vmem:[%s168 + $0x618] sm:$0xf]
        %v565 = vld [vmem:[%s168 + $0x61c] sm:$0xf]
        %v566 = vld [vmem:[%s168 + $0x620] sm:$0xf]
        %v567 = vld [vmem:[%s168 + $0x624] sm:$0xf]
        %v568 = vld [vmem:[%s168 + $0x628] sm:$0xf]
        %v569 = vld [vmem:[%s168 + $0x62c] sm:$0xf]
        %v570 = vld [vmem:[%s168 + $0x630] sm:$0xf]
        %v571 = vld [vmem:[%s168 + $0x634] sm:$0xf]
        %v572 = vld [vmem:[%s168 + $0x638] sm:$0xf]
        %v573 = vld [vmem:[%s168 + $0x63c] sm:$0xf]
        %v574 = vld [vmem:[%s168 + $0x640] sm:$0xf]
        %v575 = vld [vmem:[%s168 + $0x644] sm:$0xf]
        %v576 = vld [vmem:[%s168 + $0x648] sm:$0xf]
        %v577 = vld [vmem:[%s168 + $0x64c] sm:$0xf]
        %v578 = vld [vmem:[%s168 + $0x650] sm:$0xf]
        %v579 = vld [vmem:[%s168 + $0x654] sm:$0xf]
        %v580 = vld [vmem:[%s168 + $0x658] sm:$0xf]
        %v581 = vld [vmem:[%s168 + $0x65c] sm:$0xf]
        %v582 = vld [vmem:[%s168 + $0x660] sm:$0xf]
        %v583 = vld [vmem:[%s168 + $0x664] sm:$0xf]
        %v584 = vld [vmem:[%s168 + $0x668] sm:$0xf]
        %v585 = vld [vmem:[%s168 + $0x66c] sm:$0xf]
        %v586 = vld [vmem:[%s168 + $0x670] sm:$0xf]
        %v587 = vld [vmem:[%s168 + $0x674] sm:$0xf]
        %v588 = vld [vmem:[%s168 + $0x678] sm:$0xf]
        %v589 = vld [vmem:[%s168 + $0x67c] sm:$0xf]
        %v590 = vld [vmem:[%s168 + $0x680] sm:$0xf]
        %v591 = vld [vmem:[%s168 + $0x684] sm:$0xf]
        %v592 = vld [vmem:[%s168 + $0x688] sm:$0xf]
        %v593 = vld [vmem:[%s168 + $0x68c] sm:$0xf]
        %v594 = vld [vmem:[%s168 + $0x690] sm:$0xf]
        %v595 = vld [vmem:[%s168 + $0x694] sm:$0xf]
        %v596 = vld [vmem:[%s168 + $0x698] sm:$0xf]
        %v597 = vld [vmem:[%s168 + $0x69c] sm:$0xf]
        %v598 = vld [vmem:[%s168 + $0x6a0] sm:$0xf]
        %v599 = vld [vmem:[%s168 + $0x6a4] sm:$0xf]
        %v600 = vld [vmem:[%s168 + $0x6a8] sm:$0xf]
        %v601 = vld [vmem:[%s168 + $0x6ac] sm:$0xf]
        %v602 = vld [vmem:[%s168 + $0x6b0] sm:$0xf]
        %v603 = vld [vmem:[%s168 + $0x6b4] sm:$0xf]
        %v604 = vld [vmem:[%s168 + $0x6b8] sm:$0xf]
        %v605 = vld [vmem:[%s168 + $0x6bc] sm:$0xf]
        %v606 = vld [vmem:[%s168 + $0x6c0] sm:$0xf]
        %v607 = vld [vmem:[%s168 + $0x6c4] sm:$0xf]
        %v608 = vld [vmem:[%s168 + $0x6c8] sm:$0xf]
        %v609 = vld [vmem:[%s168 + $0x6cc] sm:$0xf]
        %v610 = vld [vmem:[%s168 + $0x6d0] sm:$0xf]
        %v611 = vld [vmem:[%s168 + $0x6d4] sm:$0xf]
        %v612 = vld [vmem:[%s168 + $0x6d8] sm:$0xf]
        %v613 = vld [vmem:[%s168 + $0x6dc] sm:$0xf]
        %v614 = vld [vmem:[%s168 + $0x6e0] sm:$0xf]
        %v615 = vld [vmem:[%s168 + $0x6e4] sm:$0xf]
        %v616 = vld [vmem:[%s168 + $0x6e8] sm:$0xf]
        %v617 = vld [vmem:[%s168 + $0x6ec] sm:$0xf]
        %v618 = vld [vmem:[%s168 + $0x6f0] sm:$0xf]
        %v619 = vld [vmem:[%s168 + $0x6f4] sm:$0xf]
        %v620 = vld [vmem:[%s168 + $0x6f8] sm:$0xf]
        %v621 = vld [vmem:[%s168 + $0x6fc] sm:$0xf]
        %v622 = vld [vmem:[%s168 + $0x700] sm:$0xf]
        %v623 = vld [vmem:[%s168 + $0x704] sm:$0xf]
        %v624 = vld [vmem:[%s168 + $0x708] sm:$0xf]
        %v625 = vld [vmem:[%s168 + $0x70c] sm:$0xf]
        %v626 = vld [vmem:[%s168 + $0x710] sm:$0xf]
        %v627 = vld [vmem:[%s168 + $0x714] sm:$0xf]
        %v628 = vld [vmem:[%s168 + $0x718] sm:$0xf]
        %v629 = vld [vmem:[%s168 + $0x71c] sm:$0xf]
        %v630 = vld [vmem:[%s168 + $0x720] sm:$0xf]
        %v631 = vld [vmem:[%s168 + $0x724] sm:$0xf]
        %v632 = vld [vmem:[%s168 + $0x728] sm:$0xf]
        %v633 = vld [vmem:[%s168 + $0x72c] sm:$0xf]
        %v634 = vld [vmem:[%s168 + $0x730] sm:$0xf]
        %v635 = vld [vmem:[%s168 + $0x734] sm:$0xf]
        %v636 = vld [vmem:[%s168 + $0x738] sm:$0xf]
        %v637 = vld [vmem:[%s168 + $0x73c] sm:$0xf]
        %v638 = vld [vmem:[%s168 + $0x740] sm:$0xf]
        %v639 = vld [vmem:[%s168 + $0x744] sm:$0xf]
        %v640 = vld [vmem:[%s168 + $0x748] sm:$0xf]
        %v641 = vld [vmem:[%s168 + $0x74c] sm:$0xf]
        %v642 = vld [vmem:[%s168 + $0x750] sm:$0xf]
        %v643 = vld [vmem:[%s168 + $0x754] sm:$0xf]
        %v644 = vld [vmem:[%s168 + $0x758] sm:$0xf]
        %v645 = vld [vmem:[%s168 + $0x75c] sm:$0xf]
        %v646 = vld [vmem:[%s168 + $0x760] sm:$0xf]
        %v647 = vld [vmem:[%s168 + $0x764] sm:$0xf]
        %v648 = vld [vmem:[%s168 + $0x768] sm:$0xf]
        %v649 = vld [vmem:[%s168 + $0x76c] sm:$0xf]
        %v650 = vld [vmem:[%s168 + $0x770] sm:$0xf]
        %v651 = vld [vmem:[%s168 + $0x774] sm:$0xf]
        %v652 = vld [vmem:[%s168 + $0x778] sm:$0xf]
        %v653 = vld [vmem:[%s168 + $0x77c] sm:$0xf]
        %v654 = vld [vmem:[%s168 + $0x780] sm:$0xf]
        %v655 = vld [vmem:[%s168 + $0x784] sm:$0xf]
        %v656 = vld [vmem:[%s168 + $0x788] sm:$0xf]
        %v657 = vld [vmem:[%s168 + $0x78c] sm:$0xf]
        %v658 = vld [vmem:[%s168 + $0x790] sm:$0xf]
        %v659 = vld [vmem:[%s168 + $0x794] sm:$0xf]
        %v660 = vld [vmem:[%s168 + $0x798] sm:$0xf]
        %v661 = vld [vmem:[%s168 + $0x79c] sm:$0xf]
        %v662 = vld [vmem:[%s168 + $0x7a0] sm:$0xf]
        %v663 = vld [vmem:[%s168 + $0x7a4] sm:$0xf]
        %v664 = vld [vmem:[%s168 + $0x7a8] sm:$0xf]
        %v665 = vld [vmem:[%s168 + $0x7ac] sm:$0xf]
        %v666 = vld [vmem:[%s168 + $0x7b0] sm:$0xf]
        %v667 = vld [vmem:[%s168 + $0x7b4] sm:$0xf]
        %v668 = vld [vmem:[%s168 + $0x7b8] sm:$0xf]
        %v669 = vld [vmem:[%s168 + $0x7bc] sm:$0xf]
        %v670 = vld [vmem:[%s168 + $0x7c0] sm:$0xf]
        %v671 = vld [vmem:[%s168 + $0x7c4] sm:$0xf]
        %v672 = vld [vmem:[%s168 + $0x7c8] sm:$0xf]
        %v673 = vld [vmem:[%s168 + $0x7cc] sm:$0xf]
        %v674 = vld [vmem:[%s168 + $0x7d0] sm:$0xf]
        %v675 = vld [vmem:[%s168 + $0x7d4] sm:$0xf]
        %v676 = vld [vmem:[%s168 + $0x7d8] sm:$0xf]
        %v677 = vld [vmem:[%s168 + $0x7dc] sm:$0xf]
        %v678 = vld [vmem:[%s168 + $0x7e0] sm:$0xf]
        %v679 = vld [vmem:[%s168 + $0x7e4] sm:$0xf]
        %v680 = vld [vmem:[%s168 + $0x7e8] sm:$0xf]
        %v681 = vld [vmem:[%s168 + $0x7ec] sm:$0xf]
        %v682 = vld [vmem:[%s168 + $0x7f0] sm:$0xf]
        %v683 = vld [vmem:[%s168 + $0x7f4] sm:$0xf]
        %v684 = vld [vmem:[%s168 + $0x7f8] sm:$0xf]
        %v685 = vld [vmem:[%s168 + $0x7fc] sm:$0xf]
        %v686 = vld [vmem:[%s172] sm:$0x7]
        %v1199 = vunpack.c.l.b16 %v174
        %v1200 = vunpack.c.l.b16 %v175
        %v1201 = vunpack.c.l.b16 %v176
        %v1202 = vunpack.c.l.b16 %v177
        %v1203 = vunpack.c.l.b16 %v178
        %v1204 = vunpack.c.l.b16 %v179
        %v1205 = vunpack.c.l.b16 %v180
        %v1206 = vunpack.c.l.b16 %v181
        %v1207 = vunpack.c.l.b16 %v182
        %v1208 = vunpack.c.l.b16 %v183
        %v1209 = vunpack.c.l.b16 %v184
        %v1210 = vunpack.c.l.b16 %v185
        %v1211 = vunpack.c.l.b16 %v186
        %v1212 = vunpack.c.l.b16 %v187
        %v1213 = vunpack.c.l.b16 %v188
        %v1214 = vunpack.c.l.b16 %v189
        %v1215 = vunpack.c.l.b16 %v190
        %v1216 = vunpack.c.l.b16 %v191
        %v1217 = vunpack.c.l.b16 %v192
        %v1218 = vunpack.c.l.b16 %v193
        %v1219 = vunpack.c.l.b16 %v194
        %v1220 = vunpack.c.l.b16 %v195
        %v1221 = vunpack.c.l.b16 %v196
        %v1222 = vunpack.c.l.b16 %v197
        %v1223 = vunpack.c.l.b16 %v198
        %v1224 = vunpack.c.l.b16 %v199
        %v1225 = vunpack.c.l.b16 %v200
        %v1226 = vunpack.c.l.b16 %v201
        %v1227 = vunpack.c.l.b16 %v202
        %v1228 = vunpack.c.l.b16 %v203
        %v1229 = vunpack.c.l.b16 %v204
        %v1230 = vunpack.c.l.b16 %v205
        %v1231 = vunpack.c.l.b16 %v206
        %v1232 = vunpack.c.l.b16 %v207
        %v1233 = vunpack.c.l.b16 %v208
        %v1234 = vunpack.c.l.b16 %v209
        %v1235 = vunpack.c.l.b16 %v210
        %v1236 = vunpack.c.l.b16 %v211
        %v1237 = vunpack.c.l.b16 %v212
        %v1238 = vunpack.c.l.b16 %v213
        %v1239 = vunpack.c.l.b16 %v214
        %v1240 = vunpack.c.l.b16 %v215
        %v1241 = vunpack.c.l.b16 %v216
        %v1242 = vunpack.c.l.b16 %v217
        %v1243 = vunpack.c.l.b16 %v218
        %v1244 = vunpack.c.l.b16 %v219
        %v1245 = vunpack.c.l.b16 %v220
        %v1246 = vunpack.c.l.b16 %v221
        %v1247 = vunpack.c.l.b16 %v222
        %v1248 = vunpack.c.l.b16 %v223
        %v1249 = vunpack.c.l.b16 %v224
        %v1250 = vunpack.c.l.b16 %v225
        %v1251 = vunpack.c.l.b16 %v226
        %v1252 = vunpack.c.l.b16 %v227
        %v1253 = vunpack.c.l.b16 %v228
        %v1254 = vunpack.c.l.b16 %v229
        %v1255 = vunpack.c.l.b16 %v230
        %v1256 = vunpack.c.l.b16 %v231
        %v1257 = vunpack.c.l.b16 %v232
        %v1258 = vunpack.c.l.b16 %v233
        %v1259 = vunpack.c.l.b16 %v234
        %v1260 = vunpack.c.l.b16 %v235
        %v1261 = vunpack.c.l.b16 %v236
        %v1262 = vunpack.c.l.b16 %v237
        %v1263 = vunpack.c.l.b16 %v238
        %v1264 = vunpack.c.l.b16 %v239
        %v1265 = vunpack.c.l.b16 %v240
        %v1266 = vunpack.c.l.b16 %v241
        %v1267 = vunpack.c.l.b16 %v242
        %v1268 = vunpack.c.l.b16 %v243
        %v1269 = vunpack.c.l.b16 %v244
        %v1270 = vunpack.c.l.b16 %v245
        %v1271 = vunpack.c.l.b16 %v246
        %v1272 = vunpack.c.l.b16 %v247
        %v1273 = vunpack.c.l.b16 %v248
        %v1274 = vunpack.c.l.b16 %v249
        %v1275 = vunpack.c.l.b16 %v250
        %v1276 = vunpack.c.l.b16 %v251
        %v1277 = vunpack.c.l.b16 %v252
        %v1278 = vunpack.c.l.b16 %v253
        %v1279 = vunpack.c.l.b16 %v254
        %v1280 = vunpack.c.l.b16 %v255
        %v1281 = vunpack.c.l.b16 %v256
        %v1282 = vunpack.c.l.b16 %v257
        %v1283 = vunpack.c.l.b16 %v258
        %v1284 = vunpack.c.l.b16 %v259
        %v1285 = vunpack.c.l.b16 %v260
        %v1286 = vunpack.c.l.b16 %v261
        %v1287 = vunpack.c.l.b16 %v262
        %v1288 = vunpack.c.l.b16 %v263
        %v1289 = vunpack.c.l.b16 %v264
        %v1290 = vunpack.c.l.b16 %v265
        %v1291 = vunpack.c.l.b16 %v266
        %v1292 = vunpack.c.l.b16 %v267
        %v1293 = vunpack.c.l.b16 %v268
        %v1294 = vunpack.c.l.b16 %v269
        %v1295 = vunpack.c.l.b16 %v270
        %v1296 = vunpack.c.l.b16 %v271
        %v1297 = vunpack.c.l.b16 %v272
        %v1298 = vunpack.c.l.b16 %v273
        %v1299 = vunpack.c.l.b16 %v274
        %v1300 = vunpack.c.l.b16 %v275
        %v1301 = vunpack.c.l.b16 %v276
        %v1302 = vunpack.c.l.b16 %v277
        %v1303 = vunpack.c.l.b16 %v278
        %v1304 = vunpack.c.l.b16 %v279
        %v1305 = vunpack.c.l.b16 %v280
        %v1306 = vunpack.c.l.b16 %v281
        %v1307 = vunpack.c.l.b16 %v282
        %v1308 = vunpack.c.l.b16 %v283
        %v1309 = vunpack.c.l.b16 %v284
        %v1310 = vunpack.c.l.b16 %v285
        %v1311 = vunpack.c.l.b16 %v286
        %v1312 = vunpack.c.l.b16 %v287
        %v1313 = vunpack.c.l.b16 %v288
        %v1314 = vunpack.c.l.b16 %v289
        %v1315 = vunpack.c.l.b16 %v290
        %v1316 = vunpack.c.l.b16 %v291
        %v1317 = vunpack.c.l.b16 %v292
        %v1318 = vunpack.c.l.b16 %v293
        %v1319 = vunpack.c.l.b16 %v294
        %v1320 = vunpack.c.l.b16 %v295
        %v1321 = vunpack.c.l.b16 %v296
        %v1322 = vunpack.c.l.b16 %v297
        %v1323 = vunpack.c.l.b16 %v298
        %v1324 = vunpack.c.l.b16 %v299
        %v1325 = vunpack.c.l.b16 %v300
        %v1326 = vunpack.c.l.b16 %v301
        %v1327 = vunpack.c.l.b16 %v302
        %v1328 = vunpack.c.l.b16 %v303
        %v1329 = vunpack.c.l.b16 %v304
        %v1330 = vunpack.c.l.b16 %v305
        %v1331 = vunpack.c.l.b16 %v306
        %v1332 = vunpack.c.l.b16 %v307
        %v1333 = vunpack.c.l.b16 %v308
        %v1334 = vunpack.c.l.b16 %v309
        %v1335 = vunpack.c.l.b16 %v310
        %v1336 = vunpack.c.l.b16 %v311
        %v1337 = vunpack.c.l.b16 %v312
        %v1338 = vunpack.c.l.b16 %v313
        %v1339 = vunpack.c.l.b16 %v314
        %v1340 = vunpack.c.l.b16 %v315
        %v1341 = vunpack.c.l.b16 %v316
        %v1342 = vunpack.c.l.b16 %v317
        %v1343 = vunpack.c.l.b16 %v318
        %v1344 = vunpack.c.l.b16 %v319
        %v1345 = vunpack.c.l.b16 %v320
        %v1346 = vunpack.c.l.b16 %v321
        %v1347 = vunpack.c.l.b16 %v322
        %v1348 = vunpack.c.l.b16 %v323
        %v1349 = vunpack.c.l.b16 %v324
        %v1350 = vunpack.c.l.b16 %v325
        %v1351 = vunpack.c.l.b16 %v326
        %v1352 = vunpack.c.l.b16 %v327
        %v1353 = vunpack.c.l.b16 %v328
        %v1354 = vunpack.c.l.b16 %v329
        %v1355 = vunpack.c.l.b16 %v330
        %v1356 = vunpack.c.l.b16 %v331
        %v1357 = vunpack.c.l.b16 %v332
        %v1358 = vunpack.c.l.b16 %v333
        %v1359 = vunpack.c.l.b16 %v334
        %v1360 = vunpack.c.l.b16 %v335
        %v1361 = vunpack.c.l.b16 %v336
        %v1362 = vunpack.c.l.b16 %v337
        %v1363 = vunpack.c.l.b16 %v338
        %v1364 = vunpack.c.l.b16 %v339
        %v1365 = vunpack.c.l.b16 %v340
        %v1366 = vunpack.c.l.b16 %v341
        %v1367 = vunpack.c.l.b16 %v342
        %v1368 = vunpack.c.l.b16 %v343
        %v1369 = vunpack.c.l.b16 %v344
        %v1370 = vunpack.c.l.b16 %v345
        %v1371 = vunpack.c.l.b16 %v346
        %v1372 = vunpack.c.l.b16 %v347
        %v1373 = vunpack.c.l.b16 %v348
        %v1374 = vunpack.c.l.b16 %v349
        %v1375 = vunpack.c.l.b16 %v350
        %v1376 = vunpack.c.l.b16 %v351
        %v1377 = vunpack.c.l.b16 %v352
        %v1378 = vunpack.c.l.b16 %v353
        %v1379 = vunpack.c.l.b16 %v354
        %v1380 = vunpack.c.l.b16 %v355
        %v1381 = vunpack.c.l.b16 %v356
        %v1382 = vunpack.c.l.b16 %v357
        %v1383 = vunpack.c.l.b16 %v358
        %v1384 = vunpack.c.l.b16 %v359
        %v1385 = vunpack.c.l.b16 %v360
        %v1386 = vunpack.c.l.b16 %v361
        %v1387 = vunpack.c.l.b16 %v362
        %v1388 = vunpack.c.l.b16 %v363
        %v1389 = vunpack.c.l.b16 %v364
        %v1390 = vunpack.c.l.b16 %v365
        %v1391 = vunpack.c.l.b16 %v366
        %v1392 = vunpack.c.l.b16 %v367
        %v1393 = vunpack.c.l.b16 %v368
        %v1394 = vunpack.c.l.b16 %v369
        %v1395 = vunpack.c.l.b16 %v370
        %v1396 = vunpack.c.l.b16 %v371
        %v1397 = vunpack.c.l.b16 %v372
        %v1398 = vunpack.c.l.b16 %v373
        %v1399 = vunpack.c.l.b16 %v374
        %v1400 = vunpack.c.l.b16 %v375
        %v1401 = vunpack.c.l.b16 %v376
        %v1402 = vunpack.c.l.b16 %v377
        %v1403 = vunpack.c.l.b16 %v378
        %v1404 = vunpack.c.l.b16 %v379
        %v1405 = vunpack.c.l.b16 %v380
        %v1406 = vunpack.c.l.b16 %v381
        %v1407 = vunpack.c.l.b16 %v382
        %v1408 = vunpack.c.l.b16 %v383
        %v1409 = vunpack.c.l.b16 %v384
        %v1410 = vunpack.c.l.b16 %v385
        %v1411 = vunpack.c.l.b16 %v386
        %v1412 = vunpack.c.l.b16 %v387
        %v1413 = vunpack.c.l.b16 %v388
        %v1414 = vunpack.c.l.b16 %v389
        %v1415 = vunpack.c.l.b16 %v390
        %v1416 = vunpack.c.l.b16 %v391
        %v1417 = vunpack.c.l.b16 %v392
        %v1418 = vunpack.c.l.b16 %v393
        %v1419 = vunpack.c.l.b16 %v394
        %v1420 = vunpack.c.l.b16 %v395
        %v1421 = vunpack.c.l.b16 %v396
        %v1422 = vunpack.c.l.b16 %v397
        %v1423 = vunpack.c.l.b16 %v398
        %v1424 = vunpack.c.l.b16 %v399
        %v1425 = vunpack.c.l.b16 %v400
        %v1426 = vunpack.c.l.b16 %v401
        %v1427 = vunpack.c.l.b16 %v402
        %v1428 = vunpack.c.l.b16 %v403
        %v1429 = vunpack.c.l.b16 %v404
        %v1430 = vunpack.c.l.b16 %v405
        %v1431 = vunpack.c.l.b16 %v406
        %v1432 = vunpack.c.l.b16 %v407
        %v1433 = vunpack.c.l.b16 %v408
        %v1434 = vunpack.c.l.b16 %v409
        %v1435 = vunpack.c.l.b16 %v410
        %v1436 = vunpack.c.l.b16 %v411
        %v1437 = vunpack.c.l.b16 %v412
        %v1438 = vunpack.c.l.b16 %v413
        %v1439 = vunpack.c.l.b16 %v414
        %v1440 = vunpack.c.l.b16 %v415
        %v1441 = vunpack.c.l.b16 %v416
        %v1442 = vunpack.c.l.b16 %v417
        %v1443 = vunpack.c.l.b16 %v418
        %v1444 = vunpack.c.l.b16 %v419
        %v1445 = vunpack.c.l.b16 %v420
        %v1446 = vunpack.c.l.b16 %v421
        %v1447 = vunpack.c.l.b16 %v422
        %v1448 = vunpack.c.l.b16 %v423
        %v1449 = vunpack.c.l.b16 %v424
        %v1450 = vunpack.c.l.b16 %v425
        %v1451 = vunpack.c.l.b16 %v426
        %v1452 = vunpack.c.l.b16 %v427
        %v1453 = vunpack.c.l.b16 %v428
        %v1454 = vunpack.c.l.b16 %v429
        %v1455 = vunpack.c.l.b16 %v430
        %v1456 = vunpack.c.l.b16 %v431
        %v1457 = vunpack.c.l.b16 %v432
        %v1458 = vunpack.c.l.b16 %v433
        %v1459 = vunpack.c.l.b16 %v434
        %v1460 = vunpack.c.l.b16 %v435
        %v1461 = vunpack.c.l.b16 %v436
        %v1462 = vunpack.c.l.b16 %v437
        %v1463 = vunpack.c.l.b16 %v438
        %v1464 = vunpack.c.l.b16 %v439
        %v1465 = vunpack.c.l.b16 %v440
        %v1466 = vunpack.c.l.b16 %v441
        %v1467 = vunpack.c.l.b16 %v442
        %v1468 = vunpack.c.l.b16 %v443
        %v1469 = vunpack.c.l.b16 %v444
        %v1470 = vunpack.c.l.b16 %v445
        %v1471 = vunpack.c.l.b16 %v446
        %v1472 = vunpack.c.l.b16 %v447
        %v1473 = vunpack.c.l.b16 %v448
        %v1474 = vunpack.c.l.b16 %v449
        %v1475 = vunpack.c.l.b16 %v450
        %v1476 = vunpack.c.l.b16 %v451
        %v1477 = vunpack.c.l.b16 %v452
        %v1478 = vunpack.c.l.b16 %v453
        %v1479 = vunpack.c.l.b16 %v454
        %v1480 = vunpack.c.l.b16 %v455
        %v1481 = vunpack.c.l.b16 %v456
        %v1482 = vunpack.c.l.b16 %v457
        %v1483 = vunpack.c.l.b16 %v458
        %v1484 = vunpack.c.l.b16 %v459
        %v1485 = vunpack.c.l.b16 %v460
        %v1486 = vunpack.c.l.b16 %v461
        %v1487 = vunpack.c.l.b16 %v462
        %v1488 = vunpack.c.l.b16 %v463
        %v1489 = vunpack.c.l.b16 %v464
        %v1490 = vunpack.c.l.b16 %v465
        %v1491 = vunpack.c.l.b16 %v466
        %v1492 = vunpack.c.l.b16 %v467
        %v1493 = vunpack.c.l.b16 %v468
        %v1494 = vunpack.c.l.b16 %v469
        %v1495 = vunpack.c.l.b16 %v470
        %v1496 = vunpack.c.l.b16 %v471
        %v1497 = vunpack.c.l.b16 %v472
        %v1498 = vunpack.c.l.b16 %v473
        %v1499 = vunpack.c.l.b16 %v474
        %v1500 = vunpack.c.l.b16 %v475
        %v1501 = vunpack.c.l.b16 %v476
        %v1502 = vunpack.c.l.b16 %v477
        %v1503 = vunpack.c.l.b16 %v478
        %v1504 = vunpack.c.l.b16 %v479
        %v1505 = vunpack.c.l.b16 %v480
        %v1506 = vunpack.c.l.b16 %v481
        %v1507 = vunpack.c.l.b16 %v482
        %v1508 = vunpack.c.l.b16 %v483
        %v1509 = vunpack.c.l.b16 %v484
        %v1510 = vunpack.c.l.b16 %v485
        %v1511 = vunpack.c.l.b16 %v486
        %v1512 = vunpack.c.l.b16 %v487
        %v1513 = vunpack.c.l.b16 %v488
        %v1514 = vunpack.c.l.b16 %v489
        %v1515 = vunpack.c.l.b16 %v490
        %v1516 = vunpack.c.l.b16 %v491
        %v1517 = vunpack.c.l.b16 %v492
        %v1518 = vunpack.c.l.b16 %v493
        %v1519 = vunpack.c.l.b16 %v494
        %v1520 = vunpack.c.l.b16 %v495
        %v1521 = vunpack.c.l.b16 %v496
        %v1522 = vunpack.c.l.b16 %v497
        %v1523 = vunpack.c.l.b16 %v498
        %v1524 = vunpack.c.l.b16 %v499
        %v1525 = vunpack.c.l.b16 %v500
        %v1526 = vunpack.c.l.b16 %v501
        %v1527 = vunpack.c.l.b16 %v502
        %v1528 = vunpack.c.l.b16 %v503
        %v1529 = vunpack.c.l.b16 %v504
        %v1530 = vunpack.c.l.b16 %v505
        %v1531 = vunpack.c.l.b16 %v506
        %v1532 = vunpack.c.l.b16 %v507
        %v1533 = vunpack.c.l.b16 %v508
        %v1534 = vunpack.c.l.b16 %v509
        %v1535 = vunpack.c.l.b16 %v510
        %v1536 = vunpack.c.l.b16 %v511
        %v1537 = vunpack.c.l.b16 %v512
        %v1538 = vunpack.c.l.b16 %v513
        %v1539 = vunpack.c.l.b16 %v514
        %v1540 = vunpack.c.l.b16 %v515
        %v1541 = vunpack.c.l.b16 %v516
        %v1542 = vunpack.c.l.b16 %v517
        %v1543 = vunpack.c.l.b16 %v518
        %v1544 = vunpack.c.l.b16 %v519
        %v1545 = vunpack.c.l.b16 %v520
        %v1546 = vunpack.c.l.b16 %v521
        %v1547 = vunpack.c.l.b16 %v522
        %v1548 = vunpack.c.l.b16 %v523
        %v1549 = vunpack.c.l.b16 %v524
        %v1550 = vunpack.c.l.b16 %v525
        %v1551 = vunpack.c.l.b16 %v526
        %v1552 = vunpack.c.l.b16 %v527
        %v1553 = vunpack.c.l.b16 %v528
        %v1554 = vunpack.c.l.b16 %v529
        %v1555 = vunpack.c.l.b16 %v530
        %v1556 = vunpack.c.l.b16 %v531
        %v1557 = vunpack.c.l.b16 %v532
        %v1558 = vunpack.c.l.b16 %v533
        %v1559 = vunpack.c.l.b16 %v534
        %v1560 = vunpack.c.l.b16 %v535
        %v1561 = vunpack.c.l.b16 %v536
        %v1562 = vunpack.c.l.b16 %v537
        %v1563 = vunpack.c.l.b16 %v538
        %v1564 = vunpack.c.l.b16 %v539
        %v1565 = vunpack.c.l.b16 %v540
        %v1566 = vunpack.c.l.b16 %v541
        %v1567 = vunpack.c.l.b16 %v542
        %v1568 = vunpack.c.l.b16 %v543
        %v1569 = vunpack.c.l.b16 %v544
        %v1570 = vunpack.c.l.b16 %v545
        %v1571 = vunpack.c.l.b16 %v546
        %v1572 = vunpack.c.l.b16 %v547
        %v1573 = vunpack.c.l.b16 %v548
        %v1574 = vunpack.c.l.b16 %v549
        %v1575 = vunpack.c.l.b16 %v550
        %v1576 = vunpack.c.l.b16 %v551
        %v1577 = vunpack.c.l.b16 %v552
        %v1578 = vunpack.c.l.b16 %v553
        %v1579 = vunpack.c.l.b16 %v554
        %v1580 = vunpack.c.l.b16 %v555
        %v1581 = vunpack.c.l.b16 %v556
        %v1582 = vunpack.c.l.b16 %v557
        %v1583 = vunpack.c.l.b16 %v558
        %v1584 = vunpack.c.l.b16 %v559
        %v1585 = vunpack.c.l.b16 %v560
        %v1586 = vunpack.c.l.b16 %v561
        %v1587 = vunpack.c.l.b16 %v562
        %v1588 = vunpack.c.l.b16 %v563
        %v1589 = vunpack.c.l.b16 %v564
        %v1590 = vunpack.c.l.b16 %v565
        %v1591 = vunpack.c.l.b16 %v566
        %v1592 = vunpack.c.l.b16 %v567
        %v1593 = vunpack.c.l.b16 %v568
        %v1594 = vunpack.c.l.b16 %v569
        %v1595 = vunpack.c.l.b16 %v570
        %v1596 = vunpack.c.l.b16 %v571
        %v1597 = vunpack.c.l.b16 %v572
        %v1598 = vunpack.c.l.b16 %v573
        %v1599 = vunpack.c.l.b16 %v574
        %v1600 = vunpack.c.l.b16 %v575
        %v1601 = vunpack.c.l.b16 %v576
        %v1602 = vunpack.c.l.b16 %v577
        %v1603 = vunpack.c.l.b16 %v578
        %v1604 = vunpack.c.l.b16 %v579
        %v1605 = vunpack.c.l.b16 %v580
        %v1606 = vunpack.c.l.b16 %v581
        %v1607 = vunpack.c.l.b16 %v582
        %v1608 = vunpack.c.l.b16 %v583
        %v1609 = vunpack.c.l.b16 %v584
        %v1610 = vunpack.c.l.b16 %v585
        %v1611 = vunpack.c.l.b16 %v586
        %v1612 = vunpack.c.l.b16 %v587
        %v1613 = vunpack.c.l.b16 %v588
        %v1614 = vunpack.c.l.b16 %v589
        %v1615 = vunpack.c.l.b16 %v590
        %v1616 = vunpack.c.l.b16 %v591
        %v1617 = vunpack.c.l.b16 %v592
        %v1618 = vunpack.c.l.b16 %v593
        %v1619 = vunpack.c.l.b16 %v594
        %v1620 = vunpack.c.l.b16 %v595
        %v1621 = vunpack.c.l.b16 %v596
        %v1622 = vunpack.c.l.b16 %v597
        %v1623 = vunpack.c.l.b16 %v598
        %v1624 = vunpack.c.l.b16 %v599
        %v1625 = vunpack.c.l.b16 %v600
        %v1626 = vunpack.c.l.b16 %v601
        %v1627 = vunpack.c.l.b16 %v602
        %v1628 = vunpack.c.l.b16 %v603
        %v1629 = vunpack.c.l.b16 %v604
        %v1630 = vunpack.c.l.b16 %v605
        %v1631 = vunpack.c.l.b16 %v606
        %v1632 = vunpack.c.l.b16 %v607
        %v1633 = vunpack.c.l.b16 %v608
        %v1634 = vunpack.c.l.b16 %v609
        %v1635 = vunpack.c.l.b16 %v610
        %v1636 = vunpack.c.l.b16 %v611
        %v1637 = vunpack.c.l.b16 %v612
        %v1638 = vunpack.c.l.b16 %v613
        %v1639 = vunpack.c.l.b16 %v614
        %v1640 = vunpack.c.l.b16 %v615
        %v1641 = vunpack.c.l.b16 %v616
        %v1642 = vunpack.c.l.b16 %v617
        %v1643 = vunpack.c.l.b16 %v618
        %v1644 = vunpack.c.l.b16 %v619
        %v1645 = vunpack.c.l.b16 %v620
        %v1646 = vunpack.c.l.b16 %v621
        %v1647 = vunpack.c.l.b16 %v622
        %v1648 = vunpack.c.l.b16 %v623
        %v1649 = vunpack.c.l.b16 %v624
        %v1650 = vunpack.c.l.b16 %v625
        %v1651 = vunpack.c.l.b16 %v626
        %v1652 = vunpack.c.l.b16 %v627
        %v1653 = vunpack.c.l.b16 %v628
        %v1654 = vunpack.c.l.b16 %v629
        %v1655 = vunpack.c.l.b16 %v630
        %v1656 = vunpack.c.l.b16 %v631
        %v1657 = vunpack.c.l.b16 %v632
        %v1658 = vunpack.c.l.b16 %v633
        %v1659 = vunpack.c.l.b16 %v634
        %v1660 = vunpack.c.l.b16 %v635
        %v1661 = vunpack.c.l.b16 %v636
        %v1662 = vunpack.c.l.b16 %v637
        %v1663 = vunpack.c.l.b16 %v638
        %v1664 = vunpack.c.l.b16 %v639
        %v1665 = vunpack.c.l.b16 %v640
        %v1666 = vunpack.c.l.b16 %v641
        %v1667 = vunpack.c.l.b16 %v642
        %v1668 = vunpack.c.l.b16 %v643
        %v1669 = vunpack.c.l.b16 %v644
        %v1670 = vunpack.c.l.b16 %v645
        %v1671 = vunpack.c.l.b16 %v646
        %v1672 = vunpack.c.l.b16 %v647
        %v1673 = vunpack.c.l.b16 %v648
        %v1674 = vunpack.c.l.b16 %v649
        %v1675 = vunpack.c.l.b16 %v650
        %v1676 = vunpack.c.l.b16 %v651
        %v1677 = vunpack.c.l.b16 %v652
        %v1678 = vunpack.c.l.b16 %v653
        %v1679 = vunpack.c.l.b16 %v654
        %v1680 = vunpack.c.l.b16 %v655
        %v1681 = vunpack.c.l.b16 %v656
        %v1682 = vunpack.c.l.b16 %v657
        %v1683 = vunpack.c.l.b16 %v658
        %v1684 = vunpack.c.l.b16 %v659
        %v1685 = vunpack.c.l.b16 %v660
        %v1686 = vunpack.c.l.b16 %v661
        %v1687 = vunpack.c.l.b16 %v662
        %v1688 = vunpack.c.l.b16 %v663
        %v1689 = vunpack.c.l.b16 %v664
        %v1690 = vunpack.c.l.b16 %v665
        %v1691 = vunpack.c.l.b16 %v666
        %v1692 = vunpack.c.l.b16 %v667
        %v1693 = vunpack.c.l.b16 %v668
        %v1694 = vunpack.c.l.b16 %v669
        %v1695 = vunpack.c.l.b16 %v670
        %v1696 = vunpack.c.l.b16 %v671
        %v1697 = vunpack.c.l.b16 %v672
        %v1698 = vunpack.c.l.b16 %v673
        %v1699 = vunpack.c.l.b16 %v674
        %v1700 = vunpack.c.l.b16 %v675
        %v1701 = vunpack.c.l.b16 %v676
        %v1702 = vunpack.c.l.b16 %v677
        %v1703 = vunpack.c.l.b16 %v678
        %v1704 = vunpack.c.l.b16 %v679
        %v1705 = vunpack.c.l.b16 %v680
        %v1706 = vunpack.c.l.b16 %v681
        %v1707 = vunpack.c.l.b16 %v682
        %v1708 = vunpack.c.l.b16 %v683
        %v1709 = vunpack.c.l.b16 %v684
        %v1710 = vunpack.c.l.b16 %v685
        %v1711 = vpack.c.b16 %v1200, %v1199
        %v1712 = vpack.c.b16 %v1202, %v1201
        %v1713 = vpack.c.b16 %v1204, %v1203
        %v1714 = vpack.c.b16 %v1206, %v1205
        %v1715 = vpack.c.b16 %v1208, %v1207
        %v1716 = vpack.c.b16 %v1210, %v1209
        %v1717 = vpack.c.b16 %v1212, %v1211
        %v1718 = vpack.c.b16 %v1214, %v1213
        %v1719 = vpack.c.b16 %v1216, %v1215
        %v1720 = vpack.c.b16 %v1218, %v1217
        %v1721 = vpack.c.b16 %v1220, %v1219
        %v1722 = vpack.c.b16 %v1222, %v1221
        %v1723 = vpack.c.b16 %v1224, %v1223
        %v1724 = vpack.c.b16 %v1226, %v1225
        %v1725 = vpack.c.b16 %v1228, %v1227
        %v1726 = vpack.c.b16 %v1230, %v1229
        %v1727 = vpack.c.b16 %v1232, %v1231
        %v1728 = vpack.c.b16 %v1234, %v1233
        %v1729 = vpack.c.b16 %v1236, %v1235
        %v1730 = vpack.c.b16 %v1238, %v1237
        %v1731 = vpack.c.b16 %v1240, %v1239
        %v1732 = vpack.c.b16 %v1242, %v1241
        %v1733 = vpack.c.b16 %v1244, %v1243
        %v1734 = vpack.c.b16 %v1246, %v1245
        %v1735 = vpack.c.b16 %v1248, %v1247
        %v1736 = vpack.c.b16 %v1250, %v1249
        %v1737 = vpack.c.b16 %v1252, %v1251
        %v1738 = vpack.c.b16 %v1254, %v1253
        %v1739 = vpack.c.b16 %v1256, %v1255
        %v1740 = vpack.c.b16 %v1258, %v1257
        %v1741 = vpack.c.b16 %v1260, %v1259
        %v1742 = vpack.c.b16 %v1262, %v1261
        %v1743 = vpack.c.b16 %v1264, %v1263
        %v1744 = vpack.c.b16 %v1266, %v1265
        %v1745 = vpack.c.b16 %v1268, %v1267
        %v1746 = vpack.c.b16 %v1270, %v1269
        %v1747 = vpack.c.b16 %v1272, %v1271
        %v1748 = vpack.c.b16 %v1274, %v1273
        %v1749 = vpack.c.b16 %v1276, %v1275
        %v1750 = vpack.c.b16 %v1278, %v1277
        %v1751 = vpack.c.b16 %v1280, %v1279
        %v1752 = vpack.c.b16 %v1282, %v1281
        %v1753 = vpack.c.b16 %v1284, %v1283
        %v1754 = vpack.c.b16 %v1286, %v1285
        %v1755 = vpack.c.b16 %v1288, %v1287
        %v1756 = vpack.c.b16 %v1290, %v1289
        %v1757 = vpack.c.b16 %v1292, %v1291
        %v1758 = vpack.c.b16 %v1294, %v1293
        %v1759 = vpack.c.b16 %v1296, %v1295
        %v1760 = vpack.c.b16 %v1298, %v1297
        %v1761 = vpack.c.b16 %v1300, %v1299
        %v1762 = vpack.c.b16 %v1302, %v1301
        %v1763 = vpack.c.b16 %v1304, %v1303
        %v1764 = vpack.c.b16 %v1306, %v1305
        %v1765 = vpack.c.b16 %v1308, %v1307
        %v1766 = vpack.c.b16 %v1310, %v1309
        %v1767 = vpack.c.b16 %v1312, %v1311
        %v1768 = vpack.c.b16 %v1314, %v1313
        %v1769 = vpack.c.b16 %v1316, %v1315
        %v1770 = vpack.c.b16 %v1318, %v1317
        %v1771 = vpack.c.b16 %v1320, %v1319
        %v1772 = vpack.c.b16 %v1322, %v1321
        %v1773 = vpack.c.b16 %v1324, %v1323
        %v1774 = vpack.c.b16 %v1326, %v1325
        %v1775 = vpack.c.b16 %v1328, %v1327
        %v1776 = vpack.c.b16 %v1330, %v1329
        %v1777 = vpack.c.b16 %v1332, %v1331
        %v1778 = vpack.c.b16 %v1334, %v1333
        %v1779 = vpack.c.b16 %v1336, %v1335
        %v1780 = vpack.c.b16 %v1338, %v1337
        %v1781 = vpack.c.b16 %v1340, %v1339
        %v1782 = vpack.c.b16 %v1342, %v1341
        %v1783 = vpack.c.b16 %v1344, %v1343
        %v1784 = vpack.c.b16 %v1346, %v1345
        %v1785 = vpack.c.b16 %v1348, %v1347
        %v1786 = vpack.c.b16 %v1350, %v1349
        %v1787 = vpack.c.b16 %v1352, %v1351
        %v1788 = vpack.c.b16 %v1354, %v1353
        %v1789 = vpack.c.b16 %v1356, %v1355
        %v1790 = vpack.c.b16 %v1358, %v1357
        %v1791 = vpack.c.b16 %v1360, %v1359
        %v1792 = vpack.c.b16 %v1362, %v1361
        %v1793 = vpack.c.b16 %v1364, %v1363
        %v1794 = vpack.c.b16 %v1366, %v1365
        %v1795 = vpack.c.b16 %v1368, %v1367
        %v1796 = vpack.c.b16 %v1370, %v1369
        %v1797 = vpack.c.b16 %v1372, %v1371
        %v1798 = vpack.c.b16 %v1374, %v1373
        %v1799 = vpack.c.b16 %v1376, %v1375
        %v1800 = vpack.c.b16 %v1378, %v1377
        %v1801 = vpack.c.b16 %v1380, %v1379
        %v1802 = vpack.c.b16 %v1382, %v1381
        %v1803 = vpack.c.b16 %v1384, %v1383
        %v1804 = vpack.c.b16 %v1386, %v1385
        %v1805 = vpack.c.b16 %v1388, %v1387
        %v1806 = vpack.c.b16 %v1390, %v1389
        %v1807 = vpack.c.b16 %v1392, %v1391
        %v1808 = vpack.c.b16 %v1394, %v1393
        %v1809 = vpack.c.b16 %v1396, %v1395
        %v1810 = vpack.c.b16 %v1398, %v1397
        %v1811 = vpack.c.b16 %v1400, %v1399
        %v1812 = vpack.c.b16 %v1402, %v1401
        %v1813 = vpack.c.b16 %v1404, %v1403
        %v1814 = vpack.c.b16 %v1406, %v1405
        %v1815 = vpack.c.b16 %v1408, %v1407
        %v1816 = vpack.c.b16 %v1410, %v1409
        %v1817 = vpack.c.b16 %v1412, %v1411
        %v1818 = vpack.c.b16 %v1414, %v1413
        %v1819 = vpack.c.b16 %v1416, %v1415
        %v1820 = vpack.c.b16 %v1418, %v1417
        %v1821 = vpack.c.b16 %v1420, %v1419
        %v1822 = vpack.c.b16 %v1422, %v1421
        %v1823 = vpack.c.b16 %v1424, %v1423
        %v1824 = vpack.c.b16 %v1426, %v1425
        %v1825 = vpack.c.b16 %v1428, %v1427
        %v1826 = vpack.c.b16 %v1430, %v1429
        %v1827 = vpack.c.b16 %v1432, %v1431
        %v1828 = vpack.c.b16 %v1434, %v1433
        %v1829 = vpack.c.b16 %v1436, %v1435
        %v1830 = vpack.c.b16 %v1438, %v1437
        %v1831 = vpack.c.b16 %v1440, %v1439
        %v1832 = vpack.c.b16 %v1442, %v1441
        %v1833 = vpack.c.b16 %v1444, %v1443
        %v1834 = vpack.c.b16 %v1446, %v1445
        %v1835 = vpack.c.b16 %v1448, %v1447
        %v1836 = vpack.c.b16 %v1450, %v1449
        %v1837 = vpack.c.b16 %v1452, %v1451
        %v1838 = vpack.c.b16 %v1454, %v1453
        %v1839 = vpack.c.b16 %v1456, %v1455
        %v1840 = vpack.c.b16 %v1458, %v1457
        %v1841 = vpack.c.b16 %v1460, %v1459
        %v1842 = vpack.c.b16 %v1462, %v1461
        %v1843 = vpack.c.b16 %v1464, %v1463
        %v1844 = vpack.c.b16 %v1466, %v1465
        %v1845 = vpack.c.b16 %v1468, %v1467
        %v1846 = vpack.c.b16 %v1470, %v1469
        %v1847 = vpack.c.b16 %v1472, %v1471
        %v1848 = vpack.c.b16 %v1474, %v1473
        %v1849 = vpack.c.b16 %v1476, %v1475
        %v1850 = vpack.c.b16 %v1478, %v1477
        %v1851 = vpack.c.b16 %v1480, %v1479
        %v1852 = vpack.c.b16 %v1482, %v1481
        %v1853 = vpack.c.b16 %v1484, %v1483
        %v1854 = vpack.c.b16 %v1486, %v1485
        %v1855 = vpack.c.b16 %v1488, %v1487
        %v1856 = vpack.c.b16 %v1490, %v1489
        %v1857 = vpack.c.b16 %v1492, %v1491
        %v1858 = vpack.c.b16 %v1494, %v1493
        %v1859 = vpack.c.b16 %v1496, %v1495
        %v1860 = vpack.c.b16 %v1498, %v1497
        %v1861 = vpack.c.b16 %v1500, %v1499
        %v1862 = vpack.c.b16 %v1502, %v1501
        %v1863 = vpack.c.b16 %v1504, %v1503
        %v1864 = vpack.c.b16 %v1506, %v1505
        %v1865 = vpack.c.b16 %v1508, %v1507
        %v1866 = vpack.c.b16 %v1510, %v1509
        %v1867 = vpack.c.b16 %v1512, %v1511
        %v1868 = vpack.c.b16 %v1514, %v1513
        %v1869 = vpack.c.b16 %v1516, %v1515
        %v1870 = vpack.c.b16 %v1518, %v1517
        %v1871 = vpack.c.b16 %v1520, %v1519
        %v1872 = vpack.c.b16 %v1522, %v1521
        %v1873 = vpack.c.b16 %v1524, %v1523
        %v1874 = vpack.c.b16 %v1526, %v1525
        %v1875 = vpack.c.b16 %v1528, %v1527
        %v1876 = vpack.c.b16 %v1530, %v1529
        %v1877 = vpack.c.b16 %v1532, %v1531
        %v1878 = vpack.c.b16 %v1534, %v1533
        %v1879 = vpack.c.b16 %v1536, %v1535
        %v1880 = vpack.c.b16 %v1538, %v1537
        %v1881 = vpack.c.b16 %v1540, %v1539
        %v1882 = vpack.c.b16 %v1542, %v1541
        %v1883 = vpack.c.b16 %v1544, %v1543
        %v1884 = vpack.c.b16 %v1546, %v1545
        %v1885 = vpack.c.b16 %v1548, %v1547
        %v1886 = vpack.c.b16 %v1550, %v1549
        %v1887 = vpack.c.b16 %v1552, %v1551
        %v1888 = vpack.c.b16 %v1554, %v1553
        %v1889 = vpack.c.b16 %v1556, %v1555
        %v1890 = vpack.c.b16 %v1558, %v1557
        %v1891 = vpack.c.b16 %v1560, %v1559
        %v1892 = vpack.c.b16 %v1562, %v1561
        %v1893 = vpack.c.b16 %v1564, %v1563
        %v1894 = vpack.c.b16 %v1566, %v1565
        %v1895 = vpack.c.b16 %v1568, %v1567
        %v1896 = vpack.c.b16 %v1570, %v1569
        %v1897 = vpack.c.b16 %v1572, %v1571
        %v1898 = vpack.c.b16 %v1574, %v1573
        %v1899 = vpack.c.b16 %v1576, %v1575
        %v1900 = vpack.c.b16 %v1578, %v1577
        %v1901 = vpack.c.b16 %v1580, %v1579
        %v1902 = vpack.c.b16 %v1582, %v1581
        %v1903 = vpack.c.b16 %v1584, %v1583
        %v1904 = vpack.c.b16 %v1586, %v1585
        %v1905 = vpack.c.b16 %v1588, %v1587
        %v1906 = vpack.c.b16 %v1590, %v1589
        %v1907 = vpack.c.b16 %v1592, %v1591
        %v1908 = vpack.c.b16 %v1594, %v1593
        %v1909 = vpack.c.b16 %v1596, %v1595
        %v1910 = vpack.c.b16 %v1598, %v1597
        %v1911 = vpack.c.b16 %v1600, %v1599
        %v1912 = vpack.c.b16 %v1602, %v1601
        %v1913 = vpack.c.b16 %v1604, %v1603
        %v1914 = vpack.c.b16 %v1606, %v1605
        %v1915 = vpack.c.b16 %v1608, %v1607
        %v1916 = vpack.c.b16 %v1610, %v1609
        %v1917 = vpack.c.b16 %v1612, %v1611
        %v1918 = vpack.c.b16 %v1614, %v1613
        %v1919 = vpack.c.b16 %v1616, %v1615
        %v1920 = vpack.c.b16 %v1618, %v1617
        %v1921 = vpack.c.b16 %v1620, %v1619
        %v1922 = vpack.c.b16 %v1622, %v1621
        %v1923 = vpack.c.b16 %v1624, %v1623
        %v1924 = vpack.c.b16 %v1626, %v1625
        %v1925 = vpack.c.b16 %v1628, %v1627
        %v1926 = vpack.c.b16 %v1630, %v1629
        %v1927 = vpack.c.b16 %v1632, %v1631
        %v1928 = vpack.c.b16 %v1634, %v1633
        %v1929 = vpack.c.b16 %v1636, %v1635
        %v1930 = vpack.c.b16 %v1638, %v1637
        %v1931 = vpack.c.b16 %v1640, %v1639
        %v1932 = vpack.c.b16 %v1642, %v1641
        %v1933 = vpack.c.b16 %v1644, %v1643
        %v1934 = vpack.c.b16 %v1646, %v1645
        %v1935 = vpack.c.b16 %v1648, %v1647
        %v1936 = vpack.c.b16 %v1650, %v1649
        %v1937 = vpack.c.b16 %v1652, %v1651
        %v1938 = vpack.c.b16 %v1654, %v1653
        %v1939 = vpack.c.b16 %v1656, %v1655
        %v1940 = vpack.c.b16 %v1658, %v1657
        %v1941 = vpack.c.b16 %v1660, %v1659
        %v1942 = vpack.c.b16 %v1662, %v1661
        %v1943 = vpack.c.b16 %v1664, %v1663
        %v1944 = vpack.c.b16 %v1666, %v1665
        %v1945 = vpack.c.b16 %v1668, %v1667
        %v1946 = vpack.c.b16 %v1670, %v1669
        %v1947 = vpack.c.b16 %v1672, %v1671
        %v1948 = vpack.c.b16 %v1674, %v1673
        %v1949 = vpack.c.b16 %v1676, %v1675
        %v1950 = vpack.c.b16 %v1678, %v1677
        %v1951 = vpack.c.b16 %v1680, %v1679
        %v1952 = vpack.c.b16 %v1682, %v1681
        %v1953 = vpack.c.b16 %v1684, %v1683
        %v1954 = vpack.c.b16 %v1686, %v1685
        %v1955 = vpack.c.b16 %v1688, %v1687
        %v1956 = vpack.c.b16 %v1690, %v1689
        %v1957 = vpack.c.b16 %v1692, %v1691
        %v1958 = vpack.c.b16 %v1694, %v1693
        %v1959 = vpack.c.b16 %v1696, %v1695
        %v1960 = vpack.c.b16 %v1698, %v1697
        %v1961 = vpack.c.b16 %v1700, %v1699
        %v1962 = vpack.c.b16 %v1702, %v1701
        %v1963 = vpack.c.b16 %v1704, %v1703
        %v1964 = vpack.c.b16 %v1706, %v1705
        %v1965 = vpack.c.b16 %v1708, %v1707
        %v1966 = vpack.c.b16 %v1710, %v1709
        %vm1967 = vcmask 39936
        %v1969 = vsel %vm1967, %v1711, 0
        %v1972 = vsel %vm1967, %v1712, 0
        %v1975 = vsel %vm1967, %v1713, 0
        %v1978 = vsel %vm1967, %v1714, 0
        %v1981 = vsel %vm1967, %v1715, 0
        %v1984 = vsel %vm1967, %v1716, 0
        %v1987 = vsel %vm1967, %v1717, 0
        %v1990 = vsel %vm1967, %v1718, 0
        %v1993 = vsel %vm1967, %v1719, 0
        %v1996 = vsel %vm1967, %v1720, 0
        %v1999 = vsel %vm1967, %v1721, 0
        %v2002 = vsel %vm1967, %v1722, 0
        %v2005 = vsel %vm1967, %v1723, 0
        %v2008 = vsel %vm1967, %v1724, 0
        %v2011 = vsel %vm1967, %v1725, 0
        %v2014 = vsel %vm1967, %v1726, 0
        %v2017 = vsel %vm1967, %v1727, 0
        %v2020 = vsel %vm1967, %v1728, 0
        %v2023 = vsel %vm1967, %v1729, 0
        %v2026 = vsel %vm1967, %v1730, 0
        %v2029 = vsel %vm1967, %v1731, 0
        %v2032 = vsel %vm1967, %v1732, 0
        %v2035 = vsel %vm1967, %v1733, 0
        %v2038 = vsel %vm1967, %v1734, 0
        %v2041 = vsel %vm1967, %v1735, 0
        %v2044 = vsel %vm1967, %v1736, 0
        %v2047 = vsel %vm1967, %v1737, 0
        %v2050 = vsel %vm1967, %v1738, 0
        %v2053 = vsel %vm1967, %v1739, 0
        %v2056 = vsel %vm1967, %v1740, 0
        %v2059 = vsel %vm1967, %v1741, 0
        %v2062 = vsel %vm1967, %v1742, 0
        %v2065 = vsel %vm1967, %v1743, 0
        %v2068 = vsel %vm1967, %v1744, 0
        %v2071 = vsel %vm1967, %v1745, 0
        %v2074 = vsel %vm1967, %v1746, 0
        %v2077 = vsel %vm1967, %v1747, 0
        %v2080 = vsel %vm1967, %v1748, 0
        %v2083 = vsel %vm1967, %v1749, 0
        %v2086 = vsel %vm1967, %v1750, 0
        %v2089 = vsel %vm1967, %v1751, 0
        %v2092 = vsel %vm1967, %v1752, 0
        %v2095 = vsel %vm1967, %v1753, 0
        %v2098 = vsel %vm1967, %v1754, 0
        %v2101 = vsel %vm1967, %v1755, 0
        %v2104 = vsel %vm1967, %v1756, 0
        %v2107 = vsel %vm1967, %v1757, 0
        %v2110 = vsel %vm1967, %v1758, 0
        %v2113 = vsel %vm1967, %v1759, 0
        %v2116 = vsel %vm1967, %v1760, 0
        %v2119 = vsel %vm1967, %v1761, 0
        %v2122 = vsel %vm1967, %v1762, 0
        %v2125 = vsel %vm1967, %v1763, 0
        %v2128 = vsel %vm1967, %v1764, 0
        %v2131 = vsel %vm1967, %v1765, 0
        %v2134 = vsel %vm1967, %v1766, 0
        %v2137 = vsel %vm1967, %v1767, 0
        %v2140 = vsel %vm1967, %v1768, 0
        %v2143 = vsel %vm1967, %v1769, 0
        %v2146 = vsel %vm1967, %v1770, 0
        %v2149 = vsel %vm1967, %v1771, 0
        %v2152 = vsel %vm1967, %v1772, 0
        %v2155 = vsel %vm1967, %v1773, 0
        %v2158 = vsel %vm1967, %v1774, 0
        %v2161 = vsel %vm1967, %v1775, 0
        %v2164 = vsel %vm1967, %v1776, 0
        %v2167 = vsel %vm1967, %v1777, 0
        %v2170 = vsel %vm1967, %v1778, 0
        %v2173 = vsel %vm1967, %v1779, 0
        %v2176 = vsel %vm1967, %v1780, 0
        %v2179 = vsel %vm1967, %v1781, 0
        %v2182 = vsel %vm1967, %v1782, 0
        %v2185 = vsel %vm1967, %v1783, 0
        %v2188 = vsel %vm1967, %v1784, 0
        %v2191 = vsel %vm1967, %v1785, 0
        %v2194 = vsel %vm1967, %v1786, 0
        %v2197 = vsel %vm1967, %v1787, 0
        %v2200 = vsel %vm1967, %v1788, 0
        %v2203 = vsel %vm1967, %v1789, 0
        %v2206 = vsel %vm1967, %v1790, 0
        %v2209 = vsel %vm1967, %v1791, 0
        %v2212 = vsel %vm1967, %v1792, 0
        %v2215 = vsel %vm1967, %v1793, 0
        %v2218 = vsel %vm1967, %v1794, 0
        %v2221 = vsel %vm1967, %v1795, 0
        %v2224 = vsel %vm1967, %v1796, 0
        %v2227 = vsel %vm1967, %v1797, 0
        %v2230 = vsel %vm1967, %v1798, 0
        %v2233 = vsel %vm1967, %v1799, 0
        %v2236 = vsel %vm1967, %v1800, 0
        %v2239 = vsel %vm1967, %v1801, 0
        %v2242 = vsel %vm1967, %v1802, 0
        %v2245 = vsel %vm1967, %v1803, 0
        %v2248 = vsel %vm1967, %v1804, 0
        %v2251 = vsel %vm1967, %v1805, 0
        %v2254 = vsel %vm1967, %v1806, 0
        %v2257 = vsel %vm1967, %v1807, 0
        %v2260 = vsel %vm1967, %v1808, 0
        %v2263 = vsel %vm1967, %v1809, 0
        %v2266 = vsel %vm1967, %v1810, 0
        %v2269 = vsel %vm1967, %v1811, 0
        %v2272 = vsel %vm1967, %v1812, 0
        %v2275 = vsel %vm1967, %v1813, 0
        %v2278 = vsel %vm1967, %v1814, 0
        %v2281 = vsel %vm1967, %v1815, 0
        %v2284 = vsel %vm1967, %v1816, 0
        %v2287 = vsel %vm1967, %v1817, 0
        %v2290 = vsel %vm1967, %v1818, 0
        %v2293 = vsel %vm1967, %v1819, 0
        %v2296 = vsel %vm1967, %v1820, 0
        %v2299 = vsel %vm1967, %v1821, 0
        %v2302 = vsel %vm1967, %v1822, 0
        %v2305 = vsel %vm1967, %v1823, 0
        %v2308 = vsel %vm1967, %v1824, 0
        %v2311 = vsel %vm1967, %v1825, 0
        %v2314 = vsel %vm1967, %v1826, 0
        %v2317 = vsel %vm1967, %v1827, 0
        %v2320 = vsel %vm1967, %v1828, 0
        %v2323 = vsel %vm1967, %v1829, 0
        %v2326 = vsel %vm1967, %v1830, 0
        %v2329 = vsel %vm1967, %v1831, 0
        %v2332 = vsel %vm1967, %v1832, 0
        %v2335 = vsel %vm1967, %v1833, 0
        %v2338 = vsel %vm1967, %v1834, 0
        %v2341 = vsel %vm1967, %v1835, 0
        %v2344 = vsel %vm1967, %v1836, 0
        %v2347 = vsel %vm1967, %v1837, 0
        %v2350 = vsel %vm1967, %v1838, 0
        %v2353 = vsel %vm1967, %v1839, 0
        %v2356 = vsel %vm1967, %v1840, 0
        %v2359 = vsel %vm1967, %v1841, 0
        %v2362 = vsel %vm1967, %v1842, 0
        %v2365 = vsel %vm1967, %v1843, 0
        %v2368 = vsel %vm1967, %v1844, 0
        %v2371 = vsel %vm1967, %v1845, 0
        %v2374 = vsel %vm1967, %v1846, 0
        %v2377 = vsel %vm1967, %v1847, 0
        %v2380 = vsel %vm1967, %v1848, 0
        %v2383 = vsel %vm1967, %v1849, 0
        %v2386 = vsel %vm1967, %v1850, 0
        %v2389 = vsel %vm1967, %v1851, 0
        %v2392 = vsel %vm1967, %v1852, 0
        %v2395 = vsel %vm1967, %v1853, 0
        %v2398 = vsel %vm1967, %v1854, 0
        %v2401 = vsel %vm1967, %v1855, 0
        %v2404 = vsel %vm1967, %v1856, 0
        %v2407 = vsel %vm1967, %v1857, 0
        %v2410 = vsel %vm1967, %v1858, 0
        %v2413 = vsel %vm1967, %v1859, 0
        %v2416 = vsel %vm1967, %v1860, 0
        %v2419 = vsel %vm1967, %v1861, 0
        %v2422 = vsel %vm1967, %v1862, 0
        %v2425 = vsel %vm1967, %v1863, 0
        %v2428 = vsel %vm1967, %v1864, 0
        %v2431 = vsel %vm1967, %v1865, 0
        %v2434 = vsel %vm1967, %v1866, 0
        %v2437 = vsel %vm1967, %v1867, 0
        %v2440 = vsel %vm1967, %v1868, 0
        %v2443 = vsel %vm1967, %v1869, 0
        %v2446 = vsel %vm1967, %v1870, 0
        %v2449 = vsel %vm1967, %v1871, 0
        %v2452 = vsel %vm1967, %v1872, 0
        %v2455 = vsel %vm1967, %v1873, 0
        %v2458 = vsel %vm1967, %v1874, 0
        %v2461 = vsel %vm1967, %v1875, 0
        %v2464 = vsel %vm1967, %v1876, 0
        %v2467 = vsel %vm1967, %v1877, 0
        %v2470 = vsel %vm1967, %v1878, 0
        %v2473 = vsel %vm1967, %v1879, 0
        %v2476 = vsel %vm1967, %v1880, 0
        %v2479 = vsel %vm1967, %v1881, 0
        %v2482 = vsel %vm1967, %v1882, 0
        %v2485 = vsel %vm1967, %v1883, 0
        %v2488 = vsel %vm1967, %v1884, 0
        %v2491 = vsel %vm1967, %v1885, 0
        %v2494 = vsel %vm1967, %v1886, 0
        %v2497 = vsel %vm1967, %v1887, 0
        %v2500 = vsel %vm1967, %v1888, 0
        %v2503 = vsel %vm1967, %v1889, 0
        %v2506 = vsel %vm1967, %v1890, 0
        %v2509 = vsel %vm1967, %v1891, 0
        %v2512 = vsel %vm1967, %v1892, 0
        %v2515 = vsel %vm1967, %v1893, 0
        %v2518 = vsel %vm1967, %v1894, 0
        %v2521 = vsel %vm1967, %v1895, 0
        %v2524 = vsel %vm1967, %v1896, 0
        %v2527 = vsel %vm1967, %v1897, 0
        %v2530 = vsel %vm1967, %v1898, 0
        %v2533 = vsel %vm1967, %v1899, 0
        %v2536 = vsel %vm1967, %v1900, 0
        %v2539 = vsel %vm1967, %v1901, 0
        %v2542 = vsel %vm1967, %v1902, 0
        %v2545 = vsel %vm1967, %v1903, 0
        %v2548 = vsel %vm1967, %v1904, 0
        %v2551 = vsel %vm1967, %v1905, 0
        %v2554 = vsel %vm1967, %v1906, 0
        %v2557 = vsel %vm1967, %v1907, 0
        %v2560 = vsel %vm1967, %v1908, 0
        %v2563 = vsel %vm1967, %v1909, 0
        %v2566 = vsel %vm1967, %v1910, 0
        %v2569 = vsel %vm1967, %v1911, 0
        %v2572 = vsel %vm1967, %v1912, 0
        %v2575 = vsel %vm1967, %v1913, 0
        %v2578 = vsel %vm1967, %v1914, 0
        %v2581 = vsel %vm1967, %v1915, 0
        %v2584 = vsel %vm1967, %v1916, 0
        %v2587 = vsel %vm1967, %v1917, 0
        %v2590 = vsel %vm1967, %v1918, 0
        %v2593 = vsel %vm1967, %v1919, 0
        %v2596 = vsel %vm1967, %v1920, 0
        %v2599 = vsel %vm1967, %v1921, 0
        %v2602 = vsel %vm1967, %v1922, 0
        %v2605 = vsel %vm1967, %v1923, 0
        %v2608 = vsel %vm1967, %v1924, 0
        %v2611 = vsel %vm1967, %v1925, 0
        %v2614 = vsel %vm1967, %v1926, 0
        %v2617 = vsel %vm1967, %v1927, 0
        %v2620 = vsel %vm1967, %v1928, 0
        %v2623 = vsel %vm1967, %v1929, 0
        %v2626 = vsel %vm1967, %v1930, 0
        %v2629 = vsel %vm1967, %v1931, 0
        %v2632 = vsel %vm1967, %v1932, 0
        %v2635 = vsel %vm1967, %v1933, 0
        %v2638 = vsel %vm1967, %v1934, 0
        %v2641 = vsel %vm1967, %v1935, 0
        %v2644 = vsel %vm1967, %v1936, 0
        %v2647 = vsel %vm1967, %v1937, 0
        %v2650 = vsel %vm1967, %v1938, 0
        %v2653 = vsel %vm1967, %v1939, 0
        %v2656 = vsel %vm1967, %v1940, 0
        %v2659 = vsel %vm1967, %v1941, 0
        %v2662 = vsel %vm1967, %v1942, 0
        %v2665 = vsel %vm1967, %v1943, 0
        %v2668 = vsel %vm1967, %v1944, 0
        %v2671 = vsel %vm1967, %v1945, 0
        %v2674 = vsel %vm1967, %v1946, 0
        %v2677 = vsel %vm1967, %v1947, 0
        %v2680 = vsel %vm1967, %v1948, 0
        %v2683 = vsel %vm1967, %v1949, 0
        %v2686 = vsel %vm1967, %v1950, 0
        %v2689 = vsel %vm1967, %v1951, 0
        %v2692 = vsel %vm1967, %v1952, 0
        %v2695 = vsel %vm1967, %v1953, 0
        %v2698 = vsel %vm1967, %v1954, 0
        %v2701 = vsel %vm1967, %v1955, 0
        %v2704 = vsel %vm1967, %v1956, 0
        %v2707 = vsel %vm1967, %v1957, 0
        %v2710 = vsel %vm1967, %v1958, 0
        %v2713 = vsel %vm1967, %v1959, 0
        %v2716 = vsel %vm1967, %v1960, 0
        %v2719 = vsel %vm1967, %v1961, 0
        %v2722 = vsel %vm1967, %v1962, 0
        %v2725 = vsel %vm1967, %v1963, 0
        %v2728 = vsel %vm1967, %v1964, 0
        %v2731 = vsel %vm1967, %v1965, 0
        %v2734 = vsel %vm1967, %v1966, 0
        %vm2736 = vcmask 1041408
        %vm2737 = vcmask 1042432
        %v2738 = vsel %vm2736, 4294967295, 65535
        %v2739 = vsel %vm2737, %v2738, 0
        %v2741 = vand.u32 %v686, %v2739
        %2743 = vmatprep.subr.bf16.mxu0 0
        %2744 = vmatpush1.bf16.msra.mxu0 %v2741
        %2745 = vmatprep.subr.bf16.mxu0 0
        %2746 = vmatpush1.bf16.msra.mxu0 0
        %2747 = vmatprep.subr.bf16.mxu0 0
        %2748 = vmatpush1.bf16.msra.mxu0 0
        %2749 = vmatprep.subr.bf16.mxu0 0
        %2750 = vmatpush1.bf16.msra.mxu0 0
        %2751 = vmatprep.subr.bf16.mxu0 0
        %2752 = vmatpush1.bf16.msra.mxu0 0
        %2753 = vmatprep.subr.bf16.mxu0 0
        %2754 = vmatpush1.bf16.msra.mxu0 0
        %2755 = vmatprep.subr.bf16.mxu0 0
        %2756 = vmatpush1.bf16.msra.mxu0 0
        %2757 = vmatprep.subr.bf16.mxu0 0
        %2758 = vmatpush1.bf16.msra.mxu0 0
        %2759 = vmatprep.subr.bf16.mxu0 0
        %2760 = vmatpush1.bf16.msra.mxu0 0
        %2761 = vmatprep.subr.bf16.mxu0 0
        %2762 = vmatpush1.bf16.msra.mxu0 0
        %2763 = vmatprep.subr.bf16.mxu0 0
        %2764 = vmatpush1.bf16.msra.mxu0 0
        %2765 = vmatprep.subr.bf16.mxu0 0
        %2766 = vmatpush1.bf16.msra.mxu0 0
        %2767 = vmatprep.subr.bf16.mxu0 0
        %2768 = vmatpush1.bf16.msra.mxu0 0
        %2769 = vmatprep.subr.bf16.mxu0 0
        %2770 = vmatpush1.bf16.msra.mxu0 0
        %2771 = vmatprep.subr.bf16.mxu0 0
        %2772 = vmatpush1.bf16.msra.mxu0 0
        %2773 = vmatprep.subr.bf16.mxu0 0
        %2774 = vmatpush1.bf16.msra.mxu0 0
        %2775 = vmatprep.mubr.bf16.mxu0 0
        %2776 = vmatmul.mubr.bf16.gmra.mrb[0].mxu0 %v1969
        %v2777 = vpop.f32.mrb[0].mxu0
        %v2778 = vadd.f32 0.0, %v2777
        %v2779 = vpop.f32.mrb[0].mxu0
        %v2780 = vpop.f32.mrb[0].mxu0
        %v2781 = vadd.f32 0.0, %v2780
        %v2782 = vpop.f32.mrb[0].mxu0
        %2783 = vmatprep.mubr.bf16.mxu0 0
        %2784 = vmatmul.mubr.bf16.gmra.mrb[0].mxu0 %v1972
        %v2785 = vpop.f32.mrb[0].mxu0
        %v2786 = vadd.f32 0.0, %v2785
        %v2787 = vpop.f32.mrb[0].mxu0
        %v2788 = vpop.f32.mrb[0].mxu0
        %v2789 = vadd.f32 0.0, %v2788
        %v2790 = vpop.f32.mrb[0].mxu0
        %2791 = vmatprep.mubr.bf16.mxu0 0
        %2792 = vmatmul.mubr.bf16.gmra.mrb[0].mxu0 %v1975
        %v2793 = vpop.f32.mrb[0].mxu0
        %v2794 = vadd.f32 0.0, %v2793
        %v2795 = vpop.f32.mrb[0].mxu0
        %v2796 = vpop.f32.mrb[0].mxu0
        %v2797 = vadd.f32 0.0, %v2796
        %v2798 = vpop.f32.mrb[0].mxu0
        %2799 = vmatprep.mubr.bf16.mxu0 0
        %2800 = vmatmul.mubr.bf16.gmra.mrb[0].mxu0 %v1978
        %v2801 = vpop.f32.mrb[0].mxu0
        %v2802 = vadd.f32 0.0, %v2801
        %v2803 = vpop.f32.mrb[0].mxu0
        %v2804 = vpop.f32.mrb[0].mxu0
        %v2805 = vadd.f32 0.0, %v2804
        %v2806 = vpop.f32.mrb[0].mxu0
        %2807 = vmatprep.mubr.bf16.mxu0 0
        %2808 = vmatmul.mubr.bf16.gmra.mrb[0].mxu0 %v1981
        %v2809 = vpop.f32.mrb[0].mxu0
        %v2810 = vadd.f32 0.0, %v2809
        %v2811 = vpop.f32.mrb[0].mxu0
        %v2812 = vpop.f32.mrb[0].mxu0
        %v2813 = vadd.f32 0.0, %v2812
        %v2814 = vpop.f32.mrb[0].mxu0
        %2815 = vmatprep.mubr.bf16.mxu0 0
        %2816 = vmatmul.mubr.bf16.gmra.mrb[0].mxu0 %v1984
        %v2817 = vpop.f32.mrb[0].mxu0
        %v2818 = vadd.f32 0.0, %v2817
        %v2819 = vpop.f32.mrb[0].mxu0
        %v2820 = vpop.f32.mrb[0].mxu0
        %v2821 = vadd.f32 0.0, %v2820
        %v2822 = vpop.f32.mrb[0].mxu0
        %2823 = vmatprep.mubr.bf16.mxu0 0
        %2824 = vmatmul.mubr.bf16.gmra.mrb[0].mxu0 %v1987
        %v2825 = vpop.f32.mrb[0].mxu0
        %v2826 = vadd.f32 0.0, %v2825
        %v2827 = vpop.f32.mrb[0].mxu0
        %v2828 = vpop.f32.mrb[0].mxu0
        %v2829 = vadd.f32 0.0, %v2828
        %v2830 = vpop.f32.mrb[0].mxu0
        %2831 = vmatprep.mubr.bf16.mxu0 0
        %2832 = vmatmul.mubr.bf16.gmra.mrb[0].mxu0 %v1990
        %v2833 = vpop.f32.mrb[0].mxu0
        %v2834 = vadd.f32 0.0, %v2833
        %v2835 = vpop.f32.mrb[0].mxu0
        %v2836 = vpop.f32.mrb[0].mxu0
        %v2837 = vadd.f32 0.0, %v2836
        %v2838 = vpop.f32.mrb[0].mxu0
        %2839 = vmatprep.mubr.bf16.mxu0 0
        %2840 = vmatmul.mubr.bf16.gmra.mrb[0].mxu0 %v1993
        %v2841 = vpop.f32.mrb[0].mxu0
        %v2842 = vadd.f32 0.0, %v2841
        %v2843 = vpop.f32.mrb[0].mxu0
        %v2844 = vpop.f32.mrb[0].mxu0
        %v2845 = vadd.f32 0.0, %v2844
        %v2846 = vpop.f32.mrb[0].mxu0
        %2847 = vmatprep.mubr.bf16.mxu0 0
        %2848 = vmatmul.mubr.bf16.gmra.mrb[0].mxu0 %v1996
        %v2849 = vpop.f32.mrb[0].mxu0
        %v2850 = vadd.f32 0.0, %v2849
        %v2851 = vpop.f32.mrb[0].mxu0
        %v2852 = vpop.f32.mrb[0].mxu0
        %v2853 = vadd.f32 0.0, %v2852
        %v2854 = vpop.f32.mrb[0].mxu0
        %2855 = vmatprep.mubr.bf16.mxu0 0
        %2856 = vmatmul.mubr.bf16.gmra.mrb[0].mxu0 %v1999
        %v2857 = vpop.f32.mrb[0].mxu0
        %v2858 = vadd.f32 0.0, %v2857
        %v2859 = vpop.f32.mrb[0].mxu0
        %v2860 = vpop.f32.mrb[0].mxu0
        %v2861 = vadd.f32 0.0, %v2860
        %v2862 = vpop.f32.mrb[0].mxu0
        %2863 = vmatprep.mubr.bf16.mxu0 0
        %2864 = vmatmul.mubr.bf16.gmra.mrb[0].mxu0 %v2002
        %v2865 = vpop.f32.mrb[0].mxu0
        %v2866 = vadd.f32 0.0, %v2865
        %v2867 = vpop.f32.mrb[0].mxu0
        %v2868 = vpop.f32.mrb[0].mxu0
        %v2869 = vadd.f32 0.0, %v2868
        %v2870 = vpop.f32.mrb[0].mxu0
        %2871 = vmatprep.mubr.bf16.mxu0 0
        %2872 = vmatmul.mubr.bf16.gmra.mrb[0].mxu0 %v2005
        %v2873 = vpop.f32.mrb[0].mxu0
        %v2874 = vadd.f32 0.0, %v2873
        %v2875 = vpop.f32.mrb[0].mxu0
        %v2876 = vpop.f32.mrb[0].mxu0
        %v2877 = vadd.f32 0.0, %v2876
        %v2878 = vpop.f32.mrb[0].mxu0
        %2879 = vmatprep.mubr.bf16.mxu0 0
        %2880 = vmatmul.mubr.bf16.gmra.mrb[0].mxu0 %v2008
        %v2881 = vpop.f32.mrb[0].mxu0
        %v2882 = vadd.f32 0.0, %v2881
        %v2883 = vpop.f32.mrb[0].mxu0
        %v2884 = vpop.f32.mrb[0].mxu0
        %v2885 = vadd.f32 0.0, %v2884
        %v2886 = vpop.f32.mrb[0].mxu0
        %2887 = vmatprep.mubr.bf16.mxu0 0
        %2888 = vmatmul.mubr.bf16.gmra.mrb[0].mxu0 %v2011
        %v2889 = vpop.f32.mrb[0].mxu0
        %v2890 = vadd.f32 0.0, %v2889
        %v2891 = vpop.f32.mrb[0].mxu0
        %v2892 = vpop.f32.mrb[0].mxu0
        %v2893 = vadd.f32 0.0, %v2892
        %v2894 = vpop.f32.mrb[0].mxu0
        %2895 = vmatprep.mubr.bf16.mxu0 0
        %2896 = vmatmul.mubr.bf16.gmra.mrb[0].mxu0 %v2014
        %v2897 = vpop.f32.mrb[0].mxu0
        %v2898 = vadd.f32 0.0, %v2897
        %v2899 = vpop.f32.mrb[0].mxu0
        %v2900 = vpop.f32.mrb[0].mxu0
        %v2901 = vadd.f32 0.0, %v2900
        %v2902 = vpop.f32.mrb[0].mxu0
        %2903 = vmatprep.mubr.bf16.mxu0 0
        %2904 = vmatmul.mubr.bf16.gmra.mrb[0].mxu0 %v2017
        %v2905 = vpop.f32.mrb[0].mxu0
        %v2906 = vadd.f32 0.0, %v2905
        %v2907 = vpop.f32.mrb[0].mxu0
        %v2908 = vpop.f32.mrb[0].mxu0
        %v2909 = vadd.f32 0.0, %v2908
        %v2910 = vpop.f32.mrb[0].mxu0
        %2911 = vmatprep.mubr.bf16.mxu0 0
        %2912 = vmatmul.mubr.bf16.gmra.mrb[0].mxu0 %v2020
        %v2913 = vpop.f32.mrb[0].mxu0
        %v2914 = vadd.f32 0.0, %v2913
        %v2915 = vpop.f32.mrb[0].mxu0
        %v2916 = vpop.f32.mrb[0].mxu0
        %v2917 = vadd.f32 0.0, %v2916
        %v2918 = vpop.f32.mrb[0].mxu0
        %2919 = vmatprep.mubr.bf16.mxu0 0
        %2920 = vmatmul.mubr.bf16.gmra.mrb[0].mxu0 %v2023
        %v2921 = vpop.f32.mrb[0].mxu0
        %v2922 = vadd.f32 0.0, %v2921
        %v2923 = vpop.f32.mrb[0].mxu0
        %v2924 = vpop.f32.mrb[0].mxu0
        %v2925 = vadd.f32 0.0, %v2924
        %v2926 = vpop.f32.mrb[0].mxu0
        %2927 = vmatprep.mubr.bf16.mxu0 0
        %2928 = vmatmul.mubr.bf16.gmra.mrb[0].mxu0 %v2026
        %v2929 = vpop.f32.mrb[0].mxu0
        %v2930 = vadd.f32 0.0, %v2929
        %v2931 = vpop.f32.mrb[0].mxu0
        %v2932 = vpop.f32.mrb[0].mxu0
        %v2933 = vadd.f32 0.0, %v2932
        %v2934 = vpop.f32.mrb[0].mxu0
        %2935 = vmatprep.mubr.bf16.mxu0 0
        %2936 = vmatmul.mubr.bf16.gmra.mrb[0].mxu0 %v2029
        %v2937 = vpop.f32.mrb[0].mxu0
        %v2938 = vadd.f32 0.0, %v2937
        %v2939 = vpop.f32.mrb[0].mxu0
        %v2940 = vpop.f32.mrb[0].mxu0
        %v2941 = vadd.f32 0.0, %v2940
        %v2942 = vpop.f32.mrb[0].mxu0
        %2943 = vmatprep.mubr.bf16.mxu0 0
        %2944 = vmatmul.mubr.bf16.gmra.mrb[0].mxu0 %v2032
        %v2945 = vpop.f32.mrb[0].mxu0
        %v2946 = vadd.f32 0.0, %v2945
        %v2947 = vpop.f32.mrb[0].mxu0
        %v2948 = vpop.f32.mrb[0].mxu0
        %v2949 = vadd.f32 0.0, %v2948
        %v2950 = vpop.f32.mrb[0].mxu0
        %2951 = vmatprep.mubr.bf16.mxu0 0
        %2952 = vmatmul.mubr.bf16.gmra.mrb[0].mxu0 %v2035
        %v2953 = vpop.f32.mrb[0].mxu0
        %v2954 = vadd.f32 0.0, %v2953
        %v2955 = vpop.f32.mrb[0].mxu0
        %v2956 = vpop.f32.mrb[0].mxu0
        %v2957 = vadd.f32 0.0, %v2956
        %v2958 = vpop.f32.mrb[0].mxu0
        %2959 = vmatprep.mubr.bf16.mxu0 0
        %2960 = vmatmul.mubr.bf16.gmra.mrb[0].mxu0 %v2038
        %v2961 = vpop.f32.mrb[0].mxu0
        %v2962 = vadd.f32 0.0, %v2961
        %v2963 = vpop.f32.mrb[0].mxu0
        %v2964 = vpop.f32.mrb[0].mxu0
        %v2965 = vadd.f32 0.0, %v2964
        %v2966 = vpop.f32.mrb[0].mxu0
        %2967 = vmatprep.mubr.bf16.mxu0 0
        %2968 = vmatmul.mubr.bf16.gmra.mrb[0].mxu0 %v2041
        %v2969 = vpop.f32.mrb[0].mxu0
        %v2970 = vadd.f32 0.0, %v2969
        %v2971 = vpop.f32.mrb[0].mxu0
        %v2972 = vpop.f32.mrb[0].mxu0
        %v2973 = vadd.f32 0.0, %v2972
        %v2974 = vpop.f32.mrb[0].mxu0
        %2975 = vmatprep.mubr.bf16.mxu0 0
        %2976 = vmatmul.mubr.bf16.gmra.mrb[0].mxu0 %v2044
        %v2977 = vpop.f32.mrb[0].mxu0
        %v2978 = vadd.f32 0.0, %v2977
        %v2979 = vpop.f32.mrb[0].mxu0
        %v2980 = vpop.f32.mrb[0].mxu0
        %v2981 = vadd.f32 0.0, %v2980
        %v2982 = vpop.f32.mrb[0].mxu0
        %2983 = vmatprep.mubr.bf16.mxu0 0
        %2984 = vmatmul.mubr.bf16.gmra.mrb[0].mxu0 %v2047
        %v2985 = vpop.f32.mrb[0].mxu0
        %v2986 = vadd.f32 0.0, %v2985
        %v2987 = vpop.f32.mrb[0].mxu0
        %v2988 = vpop.f32.mrb[0].mxu0
        %v2989 = vadd.f32 0.0, %v2988
        %v2990 = vpop.f32.mrb[0].mxu0
        %2991 = vmatprep.mubr.bf16.mxu0 0
        %2992 = vmatmul.mubr.bf16.gmra.mrb[0].mxu0 %v2050
        %v2993 = vpop.f32.mrb[0].mxu0
        %v2994 = vadd.f32 0.0, %v2993
        %v2995 = vpop.f32.mrb[0].mxu0
        %v2996 = vpop.f32.mrb[0].mxu0
        %v2997 = vadd.f32 0.0, %v2996
        %v2998 = vpop.f32.mrb[0].mxu0
        %2999 = vmatprep.mubr.bf16.mxu0 0
        %3000 = vmatmul.mubr.bf16.gmra.mrb[0].mxu0 %v2053
        %v3001 = vpop.f32.mrb[0].mxu0
        %v3002 = vadd.f32 0.0, %v3001
        %v3003 = vpop.f32.mrb[0].mxu0
        %v3004 = vpop.f32.mrb[0].mxu0
        %v3005 = vadd.f32 0.0, %v3004
        %v3006 = vpop.f32.mrb[0].mxu0
        %3007 = vmatprep.mubr.bf16.mxu0 0
        %3008 = vmatmul.mubr.bf16.gmra.mrb[0].mxu0 %v2056
        %v3009 = vpop.f32.mrb[0].mxu0
        %v3010 = vadd.f32 0.0, %v3009
        %v3011 = vpop.f32.mrb[0].mxu0
        %v3012 = vpop.f32.mrb[0].mxu0
        %v3013 = vadd.f32 0.0, %v3012
        %v3014 = vpop.f32.mrb[0].mxu0
        %3015 = vmatprep.mubr.bf16.mxu0 0
        %3016 = vmatmul.mubr.bf16.gmra.mrb[0].mxu0 %v2059
        %v3017 = vpop.f32.mrb[0].mxu0
        %v3018 = vadd.f32 0.0, %v3017
        %v3019 = vpop.f32.mrb[0].mxu0
        %v3020 = vpop.f32.mrb[0].mxu0
        %v3021 = vadd.f32 0.0, %v3020
        %v3022 = vpop.f32.mrb[0].mxu0
        %3023 = vmatprep.mubr.bf16.mxu0 0
        %3024 = vmatmul.mubr.bf16.gmra.mrb[0].mxu0 %v2062
        %v3025 = vpop.f32.mrb[0].mxu0
        %v3026 = vadd.f32 0.0, %v3025
        %v3027 = vpop.f32.mrb[0].mxu0
        %v3028 = vpop.f32.mrb[0].mxu0
        %v3029 = vadd.f32 0.0, %v3028
        %v3030 = vpop.f32.mrb[0].mxu0
        %3031 = vmatprep.mubr.bf16.mxu0 0
        %3032 = vmatmul.mubr.bf16.gmra.mrb[0].mxu0 %v2065
        %v3033 = vpop.f32.mrb[0].mxu0
        %v3034 = vadd.f32 0.0, %v3033
        %v3035 = vpop.f32.mrb[0].mxu0
        %v3036 = vpop.f32.mrb[0].mxu0
        %v3037 = vadd.f32 0.0, %v3036
        %v3038 = vpop.f32.mrb[0].mxu0
        %3039 = vmatprep.mubr.bf16.mxu0 0
        %3040 = vmatmul.mubr.bf16.gmra.mrb[0].mxu0 %v2068
        %v3041 = vpop.f32.mrb[0].mxu0
        %v3042 = vadd.f32 0.0, %v3041
        %v3043 = vpop.f32.mrb[0].mxu0
        %v3044 = vpop.f32.mrb[0].mxu0
        %v3045 = vadd.f32 0.0, %v3044
        %v3046 = vpop.f32.mrb[0].mxu0
        %3047 = vmatprep.mubr.bf16.mxu0 0
        %3048 = vmatmul.mubr.bf16.gmra.mrb[0].mxu0 %v2071
        %v3049 = vpop.f32.mrb[0].mxu0
        %v3050 = vadd.f32 0.0, %v3049
        %v3051 = vpop.f32.mrb[0].mxu0
        %v3052 = vpop.f32.mrb[0].mxu0
        %v3053 = vadd.f32 0.0, %v3052
        %v3054 = vpop.f32.mrb[0].mxu0
        %3055 = vmatprep.mubr.bf16.mxu0 0
        %3056 = vmatmul.mubr.bf16.gmra.mrb[0].mxu0 %v2074
        %v3057 = vpop.f32.mrb[0].mxu0
        %v3058 = vadd.f32 0.0, %v3057
        %v3059 = vpop.f32.mrb[0].mxu0
        %v3060 = vpop.f32.mrb[0].mxu0
        %v3061 = vadd.f32 0.0, %v3060
        %v3062 = vpop.f32.mrb[0].mxu0
        %3063 = vmatprep.mubr.bf16.mxu0 0
        %3064 = vmatmul.mubr.bf16.gmra.mrb[0].mxu0 %v2077
        %v3065 = vpop.f32.mrb[0].mxu0
        %v3066 = vadd.f32 0.0, %v3065
        %v3067 = vpop.f32.mrb[0].mxu0
        %v3068 = vpop.f32.mrb[0].mxu0
        %v3069 = vadd.f32 0.0, %v3068
        %v3070 = vpop.f32.mrb[0].mxu0
        %3071 = vmatprep.mubr.bf16.mxu0 0
        %3072 = vmatmul.mubr.bf16.gmra.mrb[0].mxu0 %v2080
        %v3073 = vpop.f32.mrb[0].mxu0
        %v3074 = vadd.f32 0.0, %v3073
        %v3075 = vpop.f32.mrb[0].mxu0
        %v3076 = vpop.f32.mrb[0].mxu0
        %v3077 = vadd.f32 0.0, %v3076
        %v3078 = vpop.f32.mrb[0].mxu0
        %3079 = vmatprep.mubr.bf16.mxu0 0
        %3080 = vmatmul.mubr.bf16.gmra.mrb[0].mxu0 %v2083
        %v3081 = vpop.f32.mrb[0].mxu0
        %v3082 = vadd.f32 0.0, %v3081
        %v3083 = vpop.f32.mrb[0].mxu0
        %v3084 = vpop.f32.mrb[0].mxu0
        %v3085 = vadd.f32 0.0, %v3084
        %v3086 = vpop.f32.mrb[0].mxu0
        %3087 = vmatprep.mubr.bf16.mxu0 0
        %3088 = vmatmul.mubr.bf16.gmra.mrb[0].mxu0 %v2086
        %v3089 = vpop.f32.mrb[0].mxu0
        %v3090 = vadd.f32 0.0, %v3089
        %v3091 = vpop.f32.mrb[0].mxu0
        %v3092 = vpop.f32.mrb[0].mxu0
        %v3093 = vadd.f32 0.0, %v3092
        %v3094 = vpop.f32.mrb[0].mxu0
        %3095 = vmatprep.mubr.bf16.mxu0 0
        %3096 = vmatmul.mubr.bf16.gmra.mrb[0].mxu0 %v2089
        %v3097 = vpop.f32.mrb[0].mxu0
        %v3098 = vadd.f32 0.0, %v3097
        %v3099 = vpop.f32.mrb[0].mxu0
        %v3100 = vpop.f32.mrb[0].mxu0
        %v3101 = vadd.f32 0.0, %v3100
        %v3102 = vpop.f32.mrb[0].mxu0
        %3103 = vmatprep.mubr.bf16.mxu0 0
        %3104 = vmatmul.mubr.bf16.gmra.mrb[0].mxu0 %v2092
        %v3105 = vpop.f32.mrb[0].mxu0
        %v3106 = vadd.f32 0.0, %v3105
        %v3107 = vpop.f32.mrb[0].mxu0
        %v3108 = vpop.f32.mrb[0].mxu0
        %v3109 = vadd.f32 0.0, %v3108
        %v3110 = vpop.f32.mrb[0].mxu0
        %3111 = vmatprep.mubr.bf16.mxu0 0
        %3112 = vmatmul.mubr.bf16.gmra.mrb[0].mxu0 %v2095
        %v3113 = vpop.f32.mrb[0].mxu0
        %v3114 = vadd.f32 0.0, %v3113
        %v3115 = vpop.f32.mrb[0].mxu0
        %v3116 = vpop.f32.mrb[0].mxu0
        %v3117 = vadd.f32 0.0, %v3116
        %v3118 = vpop.f32.mrb[0].mxu0
        %3119 = vmatprep.mubr.bf16.mxu0 0
        %3120 = vmatmul.mubr.bf16.gmra.mrb[0].mxu0 %v2098
        %v3121 = vpop.f32.mrb[0].mxu0
        %v3122 = vadd.f32 0.0, %v3121
        %v3123 = vpop.f32.mrb[0].mxu0
        %v3124 = vpop.f32.mrb[0].mxu0
        %v3125 = vadd.f32 0.0, %v3124
        %v3126 = vpop.f32.mrb[0].mxu0
        %3127 = vmatprep.mubr.bf16.mxu0 0
        %3128 = vmatmul.mubr.bf16.gmra.mrb[0].mxu0 %v2101
        %v3129 = vpop.f32.mrb[0].mxu0
        %v3130 = vadd.f32 0.0, %v3129
        %v3131 = vpop.f32.mrb[0].mxu0
        %v3132 = vpop.f32.mrb[0].mxu0
        %v3133 = vadd.f32 0.0, %v3132
        %v3134 = vpop.f32.mrb[0].mxu0
        %3135 = vmatprep.mubr.bf16.mxu0 0
        %3136 = vmatmul.mubr.bf16.gmra.mrb[0].mxu0 %v2104
        %v3137 = vpop.f32.mrb[0].mxu0
        %v3138 = vadd.f32 0.0, %v3137
        %v3139 = vpop.f32.mrb[0].mxu0
        %v3140 = vpop.f32.mrb[0].mxu0
        %v3141 = vadd.f32 0.0, %v3140
        %v3142 = vpop.f32.mrb[0].mxu0
        %3143 = vmatprep.mubr.bf16.mxu0 0
        %3144 = vmatmul.mubr.bf16.gmra.mrb[0].mxu0 %v2107
        %v3145 = vpop.f32.mrb[0].mxu0
        %v3146 = vadd.f32 0.0, %v3145
        %v3147 = vpop.f32.mrb[0].mxu0
        %v3148 = vpop.f32.mrb[0].mxu0
        %v3149 = vadd.f32 0.0, %v3148
        %v3150 = vpop.f32.mrb[0].mxu0
        %3151 = vmatprep.mubr.bf16.mxu0 0
        %3152 = vmatmul.mubr.bf16.gmra.mrb[0].mxu0 %v2110
        %v3153 = vpop.f32.mrb[0].mxu0
        %v3154 = vadd.f32 0.0, %v3153
        %v3155 = vpop.f32.mrb[0].mxu0
        %v3156 = vpop.f32.mrb[0].mxu0
        %v3157 = vadd.f32 0.0, %v3156
        %v3158 = vpop.f32.mrb[0].mxu0
        %3159 = vmatprep.mubr.bf16.mxu0 0
        %3160 = vmatmul.mubr.bf16.gmra.mrb[0].mxu0 %v2113
        %v3161 = vpop.f32.mrb[0].mxu0
        %v3162 = vadd.f32 0.0, %v3161
        %v3163 = vpop.f32.mrb[0].mxu0
        %v3164 = vpop.f32.mrb[0].mxu0
        %v3165 = vadd.f32 0.0, %v3164
        %v3166 = vpop.f32.mrb[0].mxu0
        %3167 = vmatprep.mubr.bf16.mxu0 0
        %3168 = vmatmul.mubr.bf16.gmra.mrb[0].mxu0 %v2116
        %v3169 = vpop.f32.mrb[0].mxu0
        %v3170 = vadd.f32 0.0, %v3169
        %v3171 = vpop.f32.mrb[0].mxu0
        %v3172 = vpop.f32.mrb[0].mxu0
        %v3173 = vadd.f32 0.0, %v3172
        %v3174 = vpop.f32.mrb[0].mxu0
        %3175 = vmatprep.mubr.bf16.mxu0 0
        %3176 = vmatmul.mubr.bf16.gmra.mrb[0].mxu0 %v2119
        %v3177 = vpop.f32.mrb[0].mxu0
        %v3178 = vadd.f32 0.0, %v3177
        %v3179 = vpop.f32.mrb[0].mxu0
        %v3180 = vpop.f32.mrb[0].mxu0
        %v3181 = vadd.f32 0.0, %v3180
        %v3182 = vpop.f32.mrb[0].mxu0
        %3183 = vmatprep.mubr.bf16.mxu0 0
        %3184 = vmatmul.mubr.bf16.gmra.mrb[0].mxu0 %v2122
        %v3185 = vpop.f32.mrb[0].mxu0
        %v3186 = vadd.f32 0.0, %v3185
        %v3187 = vpop.f32.mrb[0].mxu0
        %v3188 = vpop.f32.mrb[0].mxu0
        %v3189 = vadd.f32 0.0, %v3188
        %v3190 = vpop.f32.mrb[0].mxu0
        %3191 = vmatprep.mubr.bf16.mxu0 0
        %3192 = vmatmul.mubr.bf16.gmra.mrb[0].mxu0 %v2125
        %v3193 = vpop.f32.mrb[0].mxu0
        %v3194 = vadd.f32 0.0, %v3193
        %v3195 = vpop.f32.mrb[0].mxu0
        %v3196 = vpop.f32.mrb[0].mxu0
        %v3197 = vadd.f32 0.0, %v3196
        %v3198 = vpop.f32.mrb[0].mxu0
        %3199 = vmatprep.mubr.bf16.mxu0 0
        %3200 = vmatmul.mubr.bf16.gmra.mrb[0].mxu0 %v2128
        %v3201 = vpop.f32.mrb[0].mxu0
        %v3202 = vadd.f32 0.0, %v3201
        %v3203 = vpop.f32.mrb[0].mxu0
        %v3204 = vpop.f32.mrb[0].mxu0
        %v3205 = vadd.f32 0.0, %v3204
        %v3206 = vpop.f32.mrb[0].mxu0
        %3207 = vmatprep.mubr.bf16.mxu0 0
        %3208 = vmatmul.mubr.bf16.gmra.mrb[0].mxu0 %v2131
        %v3209 = vpop.f32.mrb[0].mxu0
        %v3210 = vadd.f32 0.0, %v3209
        %v3211 = vpop.f32.mrb[0].mxu0
        %v3212 = vpop.f32.mrb[0].mxu0
        %v3213 = vadd.f32 0.0, %v3212
        %v3214 = vpop.f32.mrb[0].mxu0
        %3215 = vmatprep.mubr.bf16.mxu0 0
        %3216 = vmatmul.mubr.bf16.gmra.mrb[0].mxu0 %v2134
        %v3217 = vpop.f32.mrb[0].mxu0
        %v3218 = vadd.f32 0.0, %v3217
        %v3219 = vpop.f32.mrb[0].mxu0
        %v3220 = vpop.f32.mrb[0].mxu0
        %v3221 = vadd.f32 0.0, %v3220
        %v3222 = vpop.f32.mrb[0].mxu0
        %3223 = vmatprep.mubr.bf16.mxu0 0
        %3224 = vmatmul.mubr.bf16.gmra.mrb[0].mxu0 %v2137
        %v3225 = vpop.f32.mrb[0].mxu0
        %v3226 = vadd.f32 0.0, %v3225
        %v3227 = vpop.f32.mrb[0].mxu0
        %v3228 = vpop.f32.mrb[0].mxu0
        %v3229 = vadd.f32 0.0, %v3228
        %v3230 = vpop.f32.mrb[0].mxu0
        %3231 = vmatprep.mubr.bf16.mxu0 0
        %3232 = vmatmul.mubr.bf16.gmra.mrb[0].mxu0 %v2140
        %v3233 = vpop.f32.mrb[0].mxu0
        %v3234 = vadd.f32 0.0, %v3233
        %v3235 = vpop.f32.mrb[0].mxu0
        %v3236 = vpop.f32.mrb[0].mxu0
        %v3237 = vadd.f32 0.0, %v3236
        %v3238 = vpop.f32.mrb[0].mxu0
        %3239 = vmatprep.mubr.bf16.mxu0 0
        %3240 = vmatmul.mubr.bf16.gmra.mrb[0].mxu0 %v2143
        %v3241 = vpop.f32.mrb[0].mxu0
        %v3242 = vadd.f32 0.0, %v3241
        %v3243 = vpop.f32.mrb[0].mxu0
        %v3244 = vpop.f32.mrb[0].mxu0
        %v3245 = vadd.f32 0.0, %v3244
        %v3246 = vpop.f32.mrb[0].mxu0
        %3247 = vmatprep.mubr.bf16.mxu0 0
        %3248 = vmatmul.mubr.bf16.gmra.mrb[0].mxu0 %v2146
        %v3249 = vpop.f32.mrb[0].mxu0
        %v3250 = vadd.f32 0.0, %v3249
        %v3251 = vpop.f32.mrb[0].mxu0
        %v3252 = vpop.f32.mrb[0].mxu0
        %v3253 = vadd.f32 0.0, %v3252
        %v3254 = vpop.f32.mrb[0].mxu0
        %3255 = vmatprep.mubr.bf16.mxu0 0
        %3256 = vmatmul.mubr.bf16.gmra.mrb[0].mxu0 %v2149
        %v3257 = vpop.f32.mrb[0].mxu0
        %v3258 = vadd.f32 0.0, %v3257
        %v3259 = vpop.f32.mrb[0].mxu0
        %v3260 = vpop.f32.mrb[0].mxu0
        %v3261 = vadd.f32 0.0, %v3260
        %v3262 = vpop.f32.mrb[0].mxu0
        %3263 = vmatprep.mubr.bf16.mxu0 0
        %3264 = vmatmul.mubr.bf16.gmra.mrb[0].mxu0 %v2152
        %v3265 = vpop.f32.mrb[0].mxu0
        %v3266 = vadd.f32 0.0, %v3265
        %v3267 = vpop.f32.mrb[0].mxu0
        %v3268 = vpop.f32.mrb[0].mxu0
        %v3269 = vadd.f32 0.0, %v3268
        %v3270 = vpop.f32.mrb[0].mxu0
        %3271 = vmatprep.mubr.bf16.mxu0 0
        %3272 = vmatmul.mubr.bf16.gmra.mrb[0].mxu0 %v2155
        %v3273 = vpop.f32.mrb[0].mxu0
        %v3274 = vadd.f32 0.0, %v3273
        %v3275 = vpop.f32.mrb[0].mxu0
        %v3276 = vpop.f32.mrb[0].mxu0
        %v3277 = vadd.f32 0.0, %v3276
        %v3278 = vpop.f32.mrb[0].mxu0
        %3279 = vmatprep.mubr.bf16.mxu0 0
        %3280 = vmatmul.mubr.bf16.gmra.mrb[0].mxu0 %v2158
        %v3281 = vpop.f32.mrb[0].mxu0
        %v3282 = vadd.f32 0.0, %v3281
        %v3283 = vpop.f32.mrb[0].mxu0
        %v3284 = vpop.f32.mrb[0].mxu0
        %v3285 = vadd.f32 0.0, %v3284
        %v3286 = vpop.f32.mrb[0].mxu0
        %3287 = vmatprep.mubr.bf16.mxu0 0
        %3288 = vmatmul.mubr.bf16.gmra.mrb[0].mxu0 %v2161
        %v3289 = vpop.f32.mrb[0].mxu0
        %v3290 = vadd.f32 0.0, %v3289
        %v3291 = vpop.f32.mrb[0].mxu0
        %v3292 = vpop.f32.mrb[0].mxu0
        %v3293 = vadd.f32 0.0, %v3292
        %v3294 = vpop.f32.mrb[0].mxu0
        %3295 = vmatprep.mubr.bf16.mxu0 0
        %3296 = vmatmul.mubr.bf16.gmra.mrb[0].mxu0 %v2164
        %v3297 = vpop.f32.mrb[0].mxu0
        %v3298 = vadd.f32 0.0, %v3297
        %v3299 = vpop.f32.mrb[0].mxu0
        %v3300 = vpop.f32.mrb[0].mxu0
        %v3301 = vadd.f32 0.0, %v3300
        %v3302 = vpop.f32.mrb[0].mxu0
        %3303 = vmatprep.mubr.bf16.mxu0 0
        %3304 = vmatmul.mubr.bf16.gmra.mrb[0].mxu0 %v2167
        %v3305 = vpop.f32.mrb[0].mxu0
        %v3306 = vadd.f32 0.0, %v3305
        %v3307 = vpop.f32.mrb[0].mxu0
        %v3308 = vpop.f32.mrb[0].mxu0
        %v3309 = vadd.f32 0.0, %v3308
        %v3310 = vpop.f32.mrb[0].mxu0
        %3311 = vmatprep.mubr.bf16.mxu0 0
        %3312 = vmatmul.mubr.bf16.gmra.mrb[0].mxu0 %v2170
        %v3313 = vpop.f32.mrb[0].mxu0
        %v3314 = vadd.f32 0.0, %v3313
        %v3315 = vpop.f32.mrb[0].mxu0
        %v3316 = vpop.f32.mrb[0].mxu0
        %v3317 = vadd.f32 0.0, %v3316
        %v3318 = vpop.f32.mrb[0].mxu0
        %3319 = vmatprep.mubr.bf16.mxu0 0
        %3320 = vmatmul.mubr.bf16.gmra.mrb[0].mxu0 %v2173
        %v3321 = vpop.f32.mrb[0].mxu0
        %v3322 = vadd.f32 0.0, %v3321
        %v3323 = vpop.f32.mrb[0].mxu0
        %v3324 = vpop.f32.mrb[0].mxu0
        %v3325 = vadd.f32 0.0, %v3324
        %v3326 = vpop.f32.mrb[0].mxu0
        %3327 = vmatprep.mubr.bf16.mxu0 0
        %3328 = vmatmul.mubr.bf16.gmra.mrb[0].mxu0 %v2176
        %v3329 = vpop.f32.mrb[0].mxu0
        %v3330 = vadd.f32 0.0, %v3329
        %v3331 = vpop.f32.mrb[0].mxu0
        %v3332 = vpop.f32.mrb[0].mxu0
        %v3333 = vadd.f32 0.0, %v3332
        %v3334 = vpop.f32.mrb[0].mxu0
        %3335 = vmatprep.mubr.bf16.mxu0 0
        %3336 = vmatmul.mubr.bf16.gmra.mrb[0].mxu0 %v2179
        %v3337 = vpop.f32.mrb[0].mxu0
        %v3338 = vadd.f32 0.0, %v3337
        %v3339 = vpop.f32.mrb[0].mxu0
        %v3340 = vpop.f32.mrb[0].mxu0
        %v3341 = vadd.f32 0.0, %v3340
        %v3342 = vpop.f32.mrb[0].mxu0
        %3343 = vmatprep.mubr.bf16.mxu0 0
        %3344 = vmatmul.mubr.bf16.gmra.mrb[0].mxu0 %v2182
        %v3345 = vpop.f32.mrb[0].mxu0
        %v3346 = vadd.f32 0.0, %v3345
        %v3347 = vpop.f32.mrb[0].mxu0
        %v3348 = vpop.f32.mrb[0].mxu0
        %v3349 = vadd.f32 0.0, %v3348
        %v3350 = vpop.f32.mrb[0].mxu0
        %3351 = vmatprep.mubr.bf16.mxu0 0
        %3352 = vmatmul.mubr.bf16.gmra.mrb[0].mxu0 %v2185
        %v3353 = vpop.f32.mrb[0].mxu0
        %v3354 = vadd.f32 0.0, %v3353
        %v3355 = vpop.f32.mrb[0].mxu0
        %v3356 = vpop.f32.mrb[0].mxu0
        %v3357 = vadd.f32 0.0, %v3356
        %v3358 = vpop.f32.mrb[0].mxu0
        %3359 = vmatprep.mubr.bf16.mxu0 0
        %3360 = vmatmul.mubr.bf16.gmra.mrb[0].mxu0 %v2188
        %v3361 = vpop.f32.mrb[0].mxu0
        %v3362 = vadd.f32 0.0, %v3361
        %v3363 = vpop.f32.mrb[0].mxu0
        %v3364 = vpop.f32.mrb[0].mxu0
        %v3365 = vadd.f32 0.0, %v3364
        %v3366 = vpop.f32.mrb[0].mxu0
        %3367 = vmatprep.mubr.bf16.mxu0 0
        %3368 = vmatmul.mubr.bf16.gmra.mrb[0].mxu0 %v2191
        %v3369 = vpop.f32.mrb[0].mxu0
        %v3370 = vadd.f32 0.0, %v3369
        %v3371 = vpop.f32.mrb[0].mxu0
        %v3372 = vpop.f32.mrb[0].mxu0
        %v3373 = vadd.f32 0.0, %v3372
        %v3374 = vpop.f32.mrb[0].mxu0
        %3375 = vmatprep.mubr.bf16.mxu0 0
        %3376 = vmatmul.mubr.bf16.gmra.mrb[0].mxu0 %v2194
        %v3377 = vpop.f32.mrb[0].mxu0
        %v3378 = vadd.f32 0.0, %v3377
        %v3379 = vpop.f32.mrb[0].mxu0
        %v3380 = vpop.f32.mrb[0].mxu0
        %v3381 = vadd.f32 0.0, %v3380
        %v3382 = vpop.f32.mrb[0].mxu0
        %3383 = vmatprep.mubr.bf16.mxu0 0
        %3384 = vmatmul.mubr.bf16.gmra.mrb[0].mxu0 %v2197
        %v3385 = vpop.f32.mrb[0].mxu0
        %v3386 = vadd.f32 0.0, %v3385
        %v3387 = vpop.f32.mrb[0].mxu0
        %v3388 = vpop.f32.mrb[0].mxu0
        %v3389 = vadd.f32 0.0, %v3388
        %v3390 = vpop.f32.mrb[0].mxu0
        %3391 = vmatprep.mubr.bf16.mxu0 0
        %3392 = vmatmul.mubr.bf16.gmra.mrb[0].mxu0 %v2200
        %v3393 = vpop.f32.mrb[0].mxu0
        %v3394 = vadd.f32 0.0, %v3393
        %v3395 = vpop.f32.mrb[0].mxu0
        %v3396 = vpop.f32.mrb[0].mxu0
        %v3397 = vadd.f32 0.0, %v3396
        %v3398 = vpop.f32.mrb[0].mxu0
        %3399 = vmatprep.mubr.bf16.mxu0 0
        %3400 = vmatmul.mubr.bf16.gmra.mrb[0].mxu0 %v2203
        %v3401 = vpop.f32.mrb[0].mxu0
        %v3402 = vadd.f32 0.0, %v3401
        %v3403 = vpop.f32.mrb[0].mxu0
        %v3404 = vpop.f32.mrb[0].mxu0
        %v3405 = vadd.f32 0.0, %v3404
        %v3406 = vpop.f32.mrb[0].mxu0
        %3407 = vmatprep.mubr.bf16.mxu0 0
        %3408 = vmatmul.mubr.bf16.gmra.mrb[0].mxu0 %v2206
        %v3409 = vpop.f32.mrb[0].mxu0
        %v3410 = vadd.f32 0.0, %v3409
        %v3411 = vpop.f32.mrb[0].mxu0
        %v3412 = vpop.f32.mrb[0].mxu0
        %v3413 = vadd.f32 0.0, %v3412
        %v3414 = vpop.f32.mrb[0].mxu0
        %3415 = vmatprep.mubr.bf16.mxu0 0
        %3416 = vmatmul.mubr.bf16.gmra.mrb[0].mxu0 %v2209
        %v3417 = vpop.f32.mrb[0].mxu0
        %v3418 = vadd.f32 0.0, %v3417
        %v3419 = vpop.f32.mrb[0].mxu0
        %v3420 = vpop.f32.mrb[0].mxu0
        %v3421 = vadd.f32 0.0, %v3420
        %v3422 = vpop.f32.mrb[0].mxu0
        %3423 = vmatprep.mubr.bf16.mxu0 0
        %3424 = vmatmul.mubr.bf16.gmra.mrb[0].mxu0 %v2212
        %v3425 = vpop.f32.mrb[0].mxu0
        %v3426 = vadd.f32 0.0, %v3425
        %v3427 = vpop.f32.mrb[0].mxu0
        %v3428 = vpop.f32.mrb[0].mxu0
        %v3429 = vadd.f32 0.0, %v3428
        %v3430 = vpop.f32.mrb[0].mxu0
        %3431 = vmatprep.mubr.bf16.mxu0 0
        %3432 = vmatmul.mubr.bf16.gmra.mrb[0].mxu0 %v2215
        %v3433 = vpop.f32.mrb[0].mxu0
        %v3434 = vadd.f32 0.0, %v3433
        %v3435 = vpop.f32.mrb[0].mxu0
        %v3436 = vpop.f32.mrb[0].mxu0
        %v3437 = vadd.f32 0.0, %v3436
        %v3438 = vpop.f32.mrb[0].mxu0
        %3439 = vmatprep.mubr.bf16.mxu0 0
        %3440 = vmatmul.mubr.bf16.gmra.mrb[0].mxu0 %v2218
        %v3441 = vpop.f32.mrb[0].mxu0
        %v3442 = vadd.f32 0.0, %v3441
        %v3443 = vpop.f32.mrb[0].mxu0
        %v3444 = vpop.f32.mrb[0].mxu0
        %v3445 = vadd.f32 0.0, %v3444
        %v3446 = vpop.f32.mrb[0].mxu0
        %3447 = vmatprep.mubr.bf16.mxu0 0
        %3448 = vmatmul.mubr.bf16.gmra.mrb[0].mxu0 %v2221
        %v3449 = vpop.f32.mrb[0].mxu0
        %v3450 = vadd.f32 0.0, %v3449
        %v3451 = vpop.f32.mrb[0].mxu0
        %v3452 = vpop.f32.mrb[0].mxu0
        %v3453 = vadd.f32 0.0, %v3452
        %v3454 = vpop.f32.mrb[0].mxu0
        %3455 = vmatprep.mubr.bf16.mxu0 0
        %3456 = vmatmul.mubr.bf16.gmra.mrb[0].mxu0 %v2224
        %v3457 = vpop.f32.mrb[0].mxu0
        %v3458 = vadd.f32 0.0, %v3457
        %v3459 = vpop.f32.mrb[0].mxu0
        %v3460 = vpop.f32.mrb[0].mxu0
        %v3461 = vadd.f32 0.0, %v3460
        %v3462 = vpop.f32.mrb[0].mxu0
        %3463 = vmatprep.mubr.bf16.mxu0 0
        %3464 = vmatmul.mubr.bf16.gmra.mrb[0].mxu0 %v2227
        %v3465 = vpop.f32.mrb[0].mxu0
        %v3466 = vadd.f32 0.0, %v3465
        %v3467 = vpop.f32.mrb[0].mxu0
        %v3468 = vpop.f32.mrb[0].mxu0
        %v3469 = vadd.f32 0.0, %v3468
        %v3470 = vpop.f32.mrb[0].mxu0
        %3471 = vmatprep.mubr.bf16.mxu0 0
        %3472 = vmatmul.mubr.bf16.gmra.mrb[0].mxu0 %v2230
        %v3473 = vpop.f32.mrb[0].mxu0
        %v3474 = vadd.f32 0.0, %v3473
        %v3475 = vpop.f32.mrb[0].mxu0
        %v3476 = vpop.f32.mrb[0].mxu0
        %v3477 = vadd.f32 0.0, %v3476
        %v3478 = vpop.f32.mrb[0].mxu0
        %3479 = vmatprep.mubr.bf16.mxu0 0
        %3480 = vmatmul.mubr.bf16.gmra.mrb[0].mxu0 %v2233
        %v3481 = vpop.f32.mrb[0].mxu0
        %v3482 = vadd.f32 0.0, %v3481
        %v3483 = vpop.f32.mrb[0].mxu0
        %v3484 = vpop.f32.mrb[0].mxu0
        %v3485 = vadd.f32 0.0, %v3484
        %v3486 = vpop.f32.mrb[0].mxu0
        %3487 = vmatprep.mubr.bf16.mxu0 0
        %3488 = vmatmul.mubr.bf16.gmra.mrb[0].mxu0 %v2236
        %v3489 = vpop.f32.mrb[0].mxu0
        %v3490 = vadd.f32 0.0, %v3489
        %v3491 = vpop.f32.mrb[0].mxu0
        %v3492 = vpop.f32.mrb[0].mxu0
        %v3493 = vadd.f32 0.0, %v3492
        %v3494 = vpop.f32.mrb[0].mxu0
        %3495 = vmatprep.mubr.bf16.mxu0 0
        %3496 = vmatmul.mubr.bf16.gmra.mrb[0].mxu0 %v2239
        %v3497 = vpop.f32.mrb[0].mxu0
        %v3498 = vadd.f32 0.0, %v3497
        %v3499 = vpop.f32.mrb[0].mxu0
        %v3500 = vpop.f32.mrb[0].mxu0
        %v3501 = vadd.f32 0.0, %v3500
        %v3502 = vpop.f32.mrb[0].mxu0
        %3503 = vmatprep.mubr.bf16.mxu0 0
        %3504 = vmatmul.mubr.bf16.gmra.mrb[0].mxu0 %v2242
        %v3505 = vpop.f32.mrb[0].mxu0
        %v3506 = vadd.f32 0.0, %v3505
        %v3507 = vpop.f32.mrb[0].mxu0
        %v3508 = vpop.f32.mrb[0].mxu0
        %v3509 = vadd.f32 0.0, %v3508
        %v3510 = vpop.f32.mrb[0].mxu0
        %3511 = vmatprep.mubr.bf16.mxu0 0
        %3512 = vmatmul.mubr.bf16.gmra.mrb[0].mxu0 %v2245
        %v3513 = vpop.f32.mrb[0].mxu0
        %v3514 = vadd.f32 0.0, %v3513
        %v3515 = vpop.f32.mrb[0].mxu0
        %v3516 = vpop.f32.mrb[0].mxu0
        %v3517 = vadd.f32 0.0, %v3516
        %v3518 = vpop.f32.mrb[0].mxu0
        %3519 = vmatprep.mubr.bf16.mxu0 0
        %3520 = vmatmul.mubr.bf16.gmra.mrb[0].mxu0 %v2248
        %v3521 = vpop.f32.mrb[0].mxu0
        %v3522 = vadd.f32 0.0, %v3521
        %v3523 = vpop.f32.mrb[0].mxu0
        %v3524 = vpop.f32.mrb[0].mxu0
        %v3525 = vadd.f32 0.0, %v3524
        %v3526 = vpop.f32.mrb[0].mxu0
        %3527 = vmatprep.mubr.bf16.mxu0 0
        %3528 = vmatmul.mubr.bf16.gmra.mrb[0].mxu0 %v2251
        %v3529 = vpop.f32.mrb[0].mxu0
        %v3530 = vadd.f32 0.0, %v3529
        %v3531 = vpop.f32.mrb[0].mxu0
        %v3532 = vpop.f32.mrb[0].mxu0
        %v3533 = vadd.f32 0.0, %v3532
        %v3534 = vpop.f32.mrb[0].mxu0
        %3535 = vmatprep.mubr.bf16.mxu0 0
        %3536 = vmatmul.mubr.bf16.gmra.mrb[0].mxu0 %v2254
        %v3537 = vpop.f32.mrb[0].mxu0
        %v3538 = vadd.f32 0.0, %v3537
        %v3539 = vpop.f32.mrb[0].mxu0
        %v3540 = vpop.f32.mrb[0].mxu0
        %v3541 = vadd.f32 0.0, %v3540
        %v3542 = vpop.f32.mrb[0].mxu0
        %3543 = vmatprep.mubr.bf16.mxu0 0
        %3544 = vmatmul.mubr.bf16.gmra.mrb[0].mxu0 %v2257
        %v3545 = vpop.f32.mrb[0].mxu0
        %v3546 = vadd.f32 0.0, %v3545
        %v3547 = vpop.f32.mrb[0].mxu0
        %v3548 = vpop.f32.mrb[0].mxu0
        %v3549 = vadd.f32 0.0, %v3548
        %v3550 = vpop.f32.mrb[0].mxu0
        %3551 = vmatprep.mubr.bf16.mxu0 0
        %3552 = vmatmul.mubr.bf16.gmra.mrb[0].mxu0 %v2260
        %v3553 = vpop.f32.mrb[0].mxu0
        %v3554 = vadd.f32 0.0, %v3553
        %v3555 = vpop.f32.mrb[0].mxu0
        %v3556 = vpop.f32.mrb[0].mxu0
        %v3557 = vadd.f32 0.0, %v3556
        %v3558 = vpop.f32.mrb[0].mxu0
        %3559 = vmatprep.mubr.bf16.mxu0 0
        %3560 = vmatmul.mubr.bf16.gmra.mrb[0].mxu0 %v2263
        %v3561 = vpop.f32.mrb[0].mxu0
        %v3562 = vadd.f32 0.0, %v3561
        %v3563 = vpop.f32.mrb[0].mxu0
        %v3564 = vpop.f32.mrb[0].mxu0
        %v3565 = vadd.f32 0.0, %v3564
        %v3566 = vpop.f32.mrb[0].mxu0
        %3567 = vmatprep.mubr.bf16.mxu0 0
        %3568 = vmatmul.mubr.bf16.gmra.mrb[0].mxu0 %v2266
        %v3569 = vpop.f32.mrb[0].mxu0
        %v3570 = vadd.f32 0.0, %v3569
        %v3571 = vpop.f32.mrb[0].mxu0
        %v3572 = vpop.f32.mrb[0].mxu0
        %v3573 = vadd.f32 0.0, %v3572
        %v3574 = vpop.f32.mrb[0].mxu0
        %3575 = vmatprep.mubr.bf16.mxu0 0
        %3576 = vmatmul.mubr.bf16.gmra.mrb[0].mxu0 %v2269
        %v3577 = vpop.f32.mrb[0].mxu0
        %v3578 = vadd.f32 0.0, %v3577
        %v3579 = vpop.f32.mrb[0].mxu0
        %v3580 = vpop.f32.mrb[0].mxu0
        %v3581 = vadd.f32 0.0, %v3580
        %v3582 = vpop.f32.mrb[0].mxu0
        %3583 = vmatprep.mubr.bf16.mxu0 0
        %3584 = vmatmul.mubr.bf16.gmra.mrb[0].mxu0 %v2272
        %v3585 = vpop.f32.mrb[0].mxu0
        %v3586 = vadd.f32 0.0, %v3585
        %v3587 = vpop.f32.mrb[0].mxu0
        %v3588 = vpop.f32.mrb[0].mxu0
        %v3589 = vadd.f32 0.0, %v3588
        %v3590 = vpop.f32.mrb[0].mxu0
        %3591 = vmatprep.mubr.bf16.mxu0 0
        %3592 = vmatmul.mubr.bf16.gmra.mrb[0].mxu0 %v2275
        %v3593 = vpop.f32.mrb[0].mxu0
        %v3594 = vadd.f32 0.0, %v3593
        %v3595 = vpop.f32.mrb[0].mxu0
        %v3596 = vpop.f32.mrb[0].mxu0
        %v3597 = vadd.f32 0.0, %v3596
        %v3598 = vpop.f32.mrb[0].mxu0
        %3599 = vmatprep.mubr.bf16.mxu0 0
        %3600 = vmatmul.mubr.bf16.gmra.mrb[0].mxu0 %v2278
        %v3601 = vpop.f32.mrb[0].mxu0
        %v3602 = vadd.f32 0.0, %v3601
        %v3603 = vpop.f32.mrb[0].mxu0
        %v3604 = vpop.f32.mrb[0].mxu0
        %v3605 = vadd.f32 0.0, %v3604
        %v3606 = vpop.f32.mrb[0].mxu0
        %3607 = vmatprep.mubr.bf16.mxu0 0
        %3608 = vmatmul.mubr.bf16.gmra.mrb[0].mxu0 %v2281
        %v3609 = vpop.f32.mrb[0].mxu0
        %v3610 = vadd.f32 0.0, %v3609
        %v3611 = vpop.f32.mrb[0].mxu0
        %v3612 = vpop.f32.mrb[0].mxu0
        %v3613 = vadd.f32 0.0, %v3612
        %v3614 = vpop.f32.mrb[0].mxu0
        %3615 = vmatprep.mubr.bf16.mxu0 0
        %3616 = vmatmul.mubr.bf16.gmra.mrb[0].mxu0 %v2284
        %v3617 = vpop.f32.mrb[0].mxu0
        %v3618 = vadd.f32 0.0, %v3617
        %v3619 = vpop.f32.mrb[0].mxu0
        %v3620 = vpop.f32.mrb[0].mxu0
        %v3621 = vadd.f32 0.0, %v3620
        %v3622 = vpop.f32.mrb[0].mxu0
        %3623 = vmatprep.mubr.bf16.mxu0 0
        %3624 = vmatmul.mubr.bf16.gmra.mrb[0].mxu0 %v2287
        %v3625 = vpop.f32.mrb[0].mxu0
        %v3626 = vadd.f32 0.0, %v3625
        %v3627 = vpop.f32.mrb[0].mxu0
        %v3628 = vpop.f32.mrb[0].mxu0
        %v3629 = vadd.f32 0.0, %v3628
        %v3630 = vpop.f32.mrb[0].mxu0
        %3631 = vmatprep.mubr.bf16.mxu0 0
        %3632 = vmatmul.mubr.bf16.gmra.mrb[0].mxu0 %v2290
        %v3633 = vpop.f32.mrb[0].mxu0
        %v3634 = vadd.f32 0.0, %v3633
        %v3635 = vpop.f32.mrb[0].mxu0
        %v3636 = vpop.f32.mrb[0].mxu0
        %v3637 = vadd.f32 0.0, %v3636
        %v3638 = vpop.f32.mrb[0].mxu0
        %3639 = vmatprep.mubr.bf16.mxu0 0
        %3640 = vmatmul.mubr.bf16.gmra.mrb[0].mxu0 %v2293
        %v3641 = vpop.f32.mrb[0].mxu0
        %v3642 = vadd.f32 0.0, %v3641
        %v3643 = vpop.f32.mrb[0].mxu0
        %v3644 = vpop.f32.mrb[0].mxu0
        %v3645 = vadd.f32 0.0, %v3644
        %v3646 = vpop.f32.mrb[0].mxu0
        %3647 = vmatprep.mubr.bf16.mxu0 0
        %3648 = vmatmul.mubr.bf16.gmra.mrb[0].mxu0 %v2296
        %v3649 = vpop.f32.mrb[0].mxu0
        %v3650 = vadd.f32 0.0, %v3649
        %v3651 = vpop.f32.mrb[0].mxu0
        %v3652 = vpop.f32.mrb[0].mxu0
        %v3653 = vadd.f32 0.0, %v3652
        %v3654 = vpop.f32.mrb[0].mxu0
        %3655 = vmatprep.mubr.bf16.mxu0 0
        %3656 = vmatmul.mubr.bf16.gmra.mrb[0].mxu0 %v2299
        %v3657 = vpop.f32.mrb[0].mxu0
        %v3658 = vadd.f32 0.0, %v3657
        %v3659 = vpop.f32.mrb[0].mxu0
        %v3660 = vpop.f32.mrb[0].mxu0
        %v3661 = vadd.f32 0.0, %v3660
        %v3662 = vpop.f32.mrb[0].mxu0
        %3663 = vmatprep.mubr.bf16.mxu0 0
        %3664 = vmatmul.mubr.bf16.gmra.mrb[0].mxu0 %v2302
        %v3665 = vpop.f32.mrb[0].mxu0
        %v3666 = vadd.f32 0.0, %v3665
        %v3667 = vpop.f32.mrb[0].mxu0
        %v3668 = vpop.f32.mrb[0].mxu0
        %v3669 = vadd.f32 0.0, %v3668
        %v3670 = vpop.f32.mrb[0].mxu0
        %3671 = vmatprep.mubr.bf16.mxu0 0
        %3672 = vmatmul.mubr.bf16.gmra.mrb[0].mxu0 %v2305
        %v3673 = vpop.f32.mrb[0].mxu0
        %v3674 = vadd.f32 0.0, %v3673
        %v3675 = vpop.f32.mrb[0].mxu0
        %v3676 = vpop.f32.mrb[0].mxu0
        %v3677 = vadd.f32 0.0, %v3676
        %v3678 = vpop.f32.mrb[0].mxu0
        %3679 = vmatprep.mubr.bf16.mxu0 0
        %3680 = vmatmul.mubr.bf16.gmra.mrb[0].mxu0 %v2308
        %v3681 = vpop.f32.mrb[0].mxu0
        %v3682 = vadd.f32 0.0, %v3681
        %v3683 = vpop.f32.mrb[0].mxu0
        %v3684 = vpop.f32.mrb[0].mxu0
        %v3685 = vadd.f32 0.0, %v3684
        %v3686 = vpop.f32.mrb[0].mxu0
        %3687 = vmatprep.mubr.bf16.mxu0 0
        %3688 = vmatmul.mubr.bf16.gmra.mrb[0].mxu0 %v2311
        %v3689 = vpop.f32.mrb[0].mxu0
        %v3690 = vadd.f32 0.0, %v3689
        %v3691 = vpop.f32.mrb[0].mxu0
        %v3692 = vpop.f32.mrb[0].mxu0
        %v3693 = vadd.f32 0.0, %v3692
        %v3694 = vpop.f32.mrb[0].mxu0
        %3695 = vmatprep.mubr.bf16.mxu0 0
        %3696 = vmatmul.mubr.bf16.gmra.mrb[0].mxu0 %v2314
        %v3697 = vpop.f32.mrb[0].mxu0
        %v3698 = vadd.f32 0.0, %v3697
        %v3699 = vpop.f32.mrb[0].mxu0
        %v3700 = vpop.f32.mrb[0].mxu0
        %v3701 = vadd.f32 0.0, %v3700
        %v3702 = vpop.f32.mrb[0].mxu0
        %3703 = vmatprep.mubr.bf16.mxu0 0
        %3704 = vmatmul.mubr.bf16.gmra.mrb[0].mxu0 %v2317
        %v3705 = vpop.f32.mrb[0].mxu0
        %v3706 = vadd.f32 0.0, %v3705
        %v3707 = vpop.f32.mrb[0].mxu0
        %v3708 = vpop.f32.mrb[0].mxu0
        %v3709 = vadd.f32 0.0, %v3708
        %v3710 = vpop.f32.mrb[0].mxu0
        %3711 = vmatprep.mubr.bf16.mxu0 0
        %3712 = vmatmul.mubr.bf16.gmra.mrb[0].mxu0 %v2320
        %v3713 = vpop.f32.mrb[0].mxu0
        %v3714 = vadd.f32 0.0, %v3713
        %v3715 = vpop.f32.mrb[0].mxu0
        %v3716 = vpop.f32.mrb[0].mxu0
        %v3717 = vadd.f32 0.0, %v3716
        %v3718 = vpop.f32.mrb[0].mxu0
        %3719 = vmatprep.mubr.bf16.mxu0 0
        %3720 = vmatmul.mubr.bf16.gmra.mrb[0].mxu0 %v2323
        %v3721 = vpop.f32.mrb[0].mxu0
        %v3722 = vadd.f32 0.0, %v3721
        %v3723 = vpop.f32.mrb[0].mxu0
        %v3724 = vpop.f32.mrb[0].mxu0
        %v3725 = vadd.f32 0.0, %v3724
        %v3726 = vpop.f32.mrb[0].mxu0
        %3727 = vmatprep.mubr.bf16.mxu0 0
        %3728 = vmatmul.mubr.bf16.gmra.mrb[0].mxu0 %v2326
        %v3729 = vpop.f32.mrb[0].mxu0
        %v3730 = vadd.f32 0.0, %v3729
        %v3731 = vpop.f32.mrb[0].mxu0
        %v3732 = vpop.f32.mrb[0].mxu0
        %v3733 = vadd.f32 0.0, %v3732
        %v3734 = vpop.f32.mrb[0].mxu0
        %3735 = vmatprep.mubr.bf16.mxu0 0
        %3736 = vmatmul.mubr.bf16.gmra.mrb[0].mxu0 %v2329
        %v3737 = vpop.f32.mrb[0].mxu0
        %v3738 = vadd.f32 0.0, %v3737
        %v3739 = vpop.f32.mrb[0].mxu0
        %v3740 = vpop.f32.mrb[0].mxu0
        %v3741 = vadd.f32 0.0, %v3740
        %v3742 = vpop.f32.mrb[0].mxu0
        %3743 = vmatprep.mubr.bf16.mxu0 0
        %3744 = vmatmul.mubr.bf16.gmra.mrb[0].mxu0 %v2332
        %v3745 = vpop.f32.mrb[0].mxu0
        %v3746 = vadd.f32 0.0, %v3745
        %v3747 = vpop.f32.mrb[0].mxu0
        %v3748 = vpop.f32.mrb[0].mxu0
        %v3749 = vadd.f32 0.0, %v3748
        %v3750 = vpop.f32.mrb[0].mxu0
        %3751 = vmatprep.mubr.bf16.mxu0 0
        %3752 = vmatmul.mubr.bf16.gmra.mrb[0].mxu0 %v2335
        %v3753 = vpop.f32.mrb[0].mxu0
        %v3754 = vadd.f32 0.0, %v3753
        %v3755 = vpop.f32.mrb[0].mxu0
        %v3756 = vpop.f32.mrb[0].mxu0
        %v3757 = vadd.f32 0.0, %v3756
        %v3758 = vpop.f32.mrb[0].mxu0
        %3759 = vmatprep.mubr.bf16.mxu0 0
        %3760 = vmatmul.mubr.bf16.gmra.mrb[0].mxu0 %v2338
        %v3761 = vpop.f32.mrb[0].mxu0
        %v3762 = vadd.f32 0.0, %v3761
        %v3763 = vpop.f32.mrb[0].mxu0
        %v3764 = vpop.f32.mrb[0].mxu0
        %v3765 = vadd.f32 0.0, %v3764
        %v3766 = vpop.f32.mrb[0].mxu0
        %3767 = vmatprep.mubr.bf16.mxu0 0
        %3768 = vmatmul.mubr.bf16.gmra.mrb[0].mxu0 %v2341
        %v3769 = vpop.f32.mrb[0].mxu0
        %v3770 = vadd.f32 0.0, %v3769
        %v3771 = vpop.f32.mrb[0].mxu0
        %v3772 = vpop.f32.mrb[0].mxu0
        %v3773 = vadd.f32 0.0, %v3772
        %v3774 = vpop.f32.mrb[0].mxu0
        %3775 = vmatprep.mubr.bf16.mxu0 0
        %3776 = vmatmul.mubr.bf16.gmra.mrb[0].mxu0 %v2344
        %v3777 = vpop.f32.mrb[0].mxu0
        %v3778 = vadd.f32 0.0, %v3777
        %v3779 = vpop.f32.mrb[0].mxu0
        %v3780 = vpop.f32.mrb[0].mxu0
        %v3781 = vadd.f32 0.0, %v3780
        %v3782 = vpop.f32.mrb[0].mxu0
        %3783 = vmatprep.mubr.bf16.mxu0 0
        %3784 = vmatmul.mubr.bf16.gmra.mrb[0].mxu0 %v2347
        %v3785 = vpop.f32.mrb[0].mxu0
        %v3786 = vadd.f32 0.0, %v3785
        %v3787 = vpop.f32.mrb[0].mxu0
        %v3788 = vpop.f32.mrb[0].mxu0
        %v3789 = vadd.f32 0.0, %v3788
        %v3790 = vpop.f32.mrb[0].mxu0
        %3791 = vmatprep.mubr.bf16.mxu0 0
        %3792 = vmatmul.mubr.bf16.gmra.mrb[0].mxu0 %v2350
        %v3793 = vpop.f32.mrb[0].mxu0
        %v3794 = vadd.f32 0.0, %v3793
        %v3795 = vpop.f32.mrb[0].mxu0
        %v3796 = vpop.f32.mrb[0].mxu0
        %v3797 = vadd.f32 0.0, %v3796
        %v3798 = vpop.f32.mrb[0].mxu0
        %3799 = vmatprep.mubr.bf16.mxu0 0
        %3800 = vmatmul.mubr.bf16.gmra.mrb[0].mxu0 %v2353
        %v3801 = vpop.f32.mrb[0].mxu0
        %v3802 = vadd.f32 0.0, %v3801
        %v3803 = vpop.f32.mrb[0].mxu0
        %v3804 = vpop.f32.mrb[0].mxu0
        %v3805 = vadd.f32 0.0, %v3804
        %v3806 = vpop.f32.mrb[0].mxu0
        %3807 = vmatprep.mubr.bf16.mxu0 0
        %3808 = vmatmul.mubr.bf16.gmra.mrb[0].mxu0 %v2356
        %v3809 = vpop.f32.mrb[0].mxu0
        %v3810 = vadd.f32 0.0, %v3809
        %v3811 = vpop.f32.mrb[0].mxu0
        %v3812 = vpop.f32.mrb[0].mxu0
        %v3813 = vadd.f32 0.0, %v3812
        %v3814 = vpop.f32.mrb[0].mxu0
        %3815 = vmatprep.mubr.bf16.mxu0 0
        %3816 = vmatmul.mubr.bf16.gmra.mrb[0].mxu0 %v2359
        %v3817 = vpop.f32.mrb[0].mxu0
        %v3818 = vadd.f32 0.0, %v3817
        %v3819 = vpop.f32.mrb[0].mxu0
        %v3820 = vpop.f32.mrb[0].mxu0
        %v3821 = vadd.f32 0.0, %v3820
        %v3822 = vpop.f32.mrb[0].mxu0
        %3823 = vmatprep.mubr.bf16.mxu0 0
        %3824 = vmatmul.mubr.bf16.gmra.mrb[0].mxu0 %v2362
        %v3825 = vpop.f32.mrb[0].mxu0
        %v3826 = vadd.f32 0.0, %v3825
        %v3827 = vpop.f32.mrb[0].mxu0
        %v3828 = vpop.f32.mrb[0].mxu0
        %v3829 = vadd.f32 0.0, %v3828
        %v3830 = vpop.f32.mrb[0].mxu0
        %3831 = vmatprep.mubr.bf16.mxu0 0
        %3832 = vmatmul.mubr.bf16.gmra.mrb[0].mxu0 %v2365
        %v3833 = vpop.f32.mrb[0].mxu0
        %v3834 = vadd.f32 0.0, %v3833
        %v3835 = vpop.f32.mrb[0].mxu0
        %v3836 = vpop.f32.mrb[0].mxu0
        %v3837 = vadd.f32 0.0, %v3836
        %v3838 = vpop.f32.mrb[0].mxu0
        %3839 = vmatprep.mubr.bf16.mxu0 0
        %3840 = vmatmul.mubr.bf16.gmra.mrb[0].mxu0 %v2368
        %v3841 = vpop.f32.mrb[0].mxu0
        %v3842 = vadd.f32 0.0, %v3841
        %v3843 = vpop.f32.mrb[0].mxu0
        %v3844 = vpop.f32.mrb[0].mxu0
        %v3845 = vadd.f32 0.0, %v3844
        %v3846 = vpop.f32.mrb[0].mxu0
        %3847 = vmatprep.mubr.bf16.mxu0 0
        %3848 = vmatmul.mubr.bf16.gmra.mrb[0].mxu0 %v2371
        %v3849 = vpop.f32.mrb[0].mxu0
        %v3850 = vadd.f32 0.0, %v3849
        %v3851 = vpop.f32.mrb[0].mxu0
        %v3852 = vpop.f32.mrb[0].mxu0
        %v3853 = vadd.f32 0.0, %v3852
        %v3854 = vpop.f32.mrb[0].mxu0
        %3855 = vmatprep.mubr.bf16.mxu0 0
        %3856 = vmatmul.mubr.bf16.gmra.mrb[0].mxu0 %v2374
        %v3857 = vpop.f32.mrb[0].mxu0
        %v3858 = vadd.f32 0.0, %v3857
        %v3859 = vpop.f32.mrb[0].mxu0
        %v3860 = vpop.f32.mrb[0].mxu0
        %v3861 = vadd.f32 0.0, %v3860
        %v3862 = vpop.f32.mrb[0].mxu0
        %3863 = vmatprep.mubr.bf16.mxu0 0
        %3864 = vmatmul.mubr.bf16.gmra.mrb[0].mxu0 %v2377
        %v3865 = vpop.f32.mrb[0].mxu0
        %v3866 = vadd.f32 0.0, %v3865
        %v3867 = vpop.f32.mrb[0].mxu0
        %v3868 = vpop.f32.mrb[0].mxu0
        %v3869 = vadd.f32 0.0, %v3868
        %v3870 = vpop.f32.mrb[0].mxu0
        %3871 = vmatprep.mubr.bf16.mxu0 0
        %3872 = vmatmul.mubr.bf16.gmra.mrb[0].mxu0 %v2380
        %v3873 = vpop.f32.mrb[0].mxu0
        %v3874 = vadd.f32 0.0, %v3873
        %v3875 = vpop.f32.mrb[0].mxu0
        %v3876 = vpop.f32.mrb[0].mxu0
        %v3877 = vadd.f32 0.0, %v3876
        %v3878 = vpop.f32.mrb[0].mxu0
        %3879 = vmatprep.mubr.bf16.mxu0 0
        %3880 = vmatmul.mubr.bf16.gmra.mrb[0].mxu0 %v2383
        %v3881 = vpop.f32.mrb[0].mxu0
        %v3882 = vadd.f32 0.0, %v3881
        %v3883 = vpop.f32.mrb[0].mxu0
        %v3884 = vpop.f32.mrb[0].mxu0
        %v3885 = vadd.f32 0.0, %v3884
        %v3886 = vpop.f32.mrb[0].mxu0
        %3887 = vmatprep.mubr.bf16.mxu0 0
        %3888 = vmatmul.mubr.bf16.gmra.mrb[0].mxu0 %v2386
        %v3889 = vpop.f32.mrb[0].mxu0
        %v3890 = vadd.f32 0.0, %v3889
        %v3891 = vpop.f32.mrb[0].mxu0
        %v3892 = vpop.f32.mrb[0].mxu0
        %v3893 = vadd.f32 0.0, %v3892
        %v3894 = vpop.f32.mrb[0].mxu0
        %3895 = vmatprep.mubr.bf16.mxu0 0
        %3896 = vmatmul.mubr.bf16.gmra.mrb[0].mxu0 %v2389
        %v3897 = vpop.f32.mrb[0].mxu0
        %v3898 = vadd.f32 0.0, %v3897
        %v3899 = vpop.f32.mrb[0].mxu0
        %v3900 = vpop.f32.mrb[0].mxu0
        %v3901 = vadd.f32 0.0, %v3900
        %v3902 = vpop.f32.mrb[0].mxu0
        %3903 = vmatprep.mubr.bf16.mxu0 0
        %3904 = vmatmul.mubr.bf16.gmra.mrb[0].mxu0 %v2392
        %v3905 = vpop.f32.mrb[0].mxu0
        %v3906 = vadd.f32 0.0, %v3905
        %v3907 = vpop.f32.mrb[0].mxu0
        %v3908 = vpop.f32.mrb[0].mxu0
        %v3909 = vadd.f32 0.0, %v3908
        %v3910 = vpop.f32.mrb[0].mxu0
        %3911 = vmatprep.mubr.bf16.mxu0 0
        %3912 = vmatmul.mubr.bf16.gmra.mrb[0].mxu0 %v2395
        %v3913 = vpop.f32.mrb[0].mxu0
        %v3914 = vadd.f32 0.0, %v3913
        %v3915 = vpop.f32.mrb[0].mxu0
        %v3916 = vpop.f32.mrb[0].mxu0
        %v3917 = vadd.f32 0.0, %v3916
        %v3918 = vpop.f32.mrb[0].mxu0
        %3919 = vmatprep.mubr.bf16.mxu0 0
        %3920 = vmatmul.mubr.bf16.gmra.mrb[0].mxu0 %v2398
        %v3921 = vpop.f32.mrb[0].mxu0
        %v3922 = vadd.f32 0.0, %v3921
        %v3923 = vpop.f32.mrb[0].mxu0
        %v3924 = vpop.f32.mrb[0].mxu0
        %v3925 = vadd.f32 0.0, %v3924
        %v3926 = vpop.f32.mrb[0].mxu0
        %3927 = vmatprep.mubr.bf16.mxu0 0
        %3928 = vmatmul.mubr.bf16.gmra.mrb[0].mxu0 %v2401
        %v3929 = vpop.f32.mrb[0].mxu0
        %v3930 = vadd.f32 0.0, %v3929
        %v3931 = vpop.f32.mrb[0].mxu0
        %v3932 = vpop.f32.mrb[0].mxu0
        %v3933 = vadd.f32 0.0, %v3932
        %v3934 = vpop.f32.mrb[0].mxu0
        %3935 = vmatprep.mubr.bf16.mxu0 0
        %3936 = vmatmul.mubr.bf16.gmra.mrb[0].mxu0 %v2404
        %v3937 = vpop.f32.mrb[0].mxu0
        %v3938 = vadd.f32 0.0, %v3937
        %v3939 = vpop.f32.mrb[0].mxu0
        %v3940 = vpop.f32.mrb[0].mxu0
        %v3941 = vadd.f32 0.0, %v3940
        %v3942 = vpop.f32.mrb[0].mxu0
        %3943 = vmatprep.mubr.bf16.mxu0 0
        %3944 = vmatmul.mubr.bf16.gmra.mrb[0].mxu0 %v2407
        %v3945 = vpop.f32.mrb[0].mxu0
        %v3946 = vadd.f32 0.0, %v3945
        %v3947 = vpop.f32.mrb[0].mxu0
        %v3948 = vpop.f32.mrb[0].mxu0
        %v3949 = vadd.f32 0.0, %v3948
        %v3950 = vpop.f32.mrb[0].mxu0
        %3951 = vmatprep.mubr.bf16.mxu0 0
        %3952 = vmatmul.mubr.bf16.gmra.mrb[0].mxu0 %v2410
        %v3953 = vpop.f32.mrb[0].mxu0
        %v3954 = vadd.f32 0.0, %v3953
        %v3955 = vpop.f32.mrb[0].mxu0
        %v3956 = vpop.f32.mrb[0].mxu0
        %v3957 = vadd.f32 0.0, %v3956
        %v3958 = vpop.f32.mrb[0].mxu0
        %3959 = vmatprep.mubr.bf16.mxu0 0
        %3960 = vmatmul.mubr.bf16.gmra.mrb[0].mxu0 %v2413
        %v3961 = vpop.f32.mrb[0].mxu0
        %v3962 = vadd.f32 0.0, %v3961
        %v3963 = vpop.f32.mrb[0].mxu0
        %v3964 = vpop.f32.mrb[0].mxu0
        %v3965 = vadd.f32 0.0, %v3964
        %v3966 = vpop.f32.mrb[0].mxu0
        %3967 = vmatprep.mubr.bf16.mxu0 0
        %3968 = vmatmul.mubr.bf16.gmra.mrb[0].mxu0 %v2416
        %v3969 = vpop.f32.mrb[0].mxu0
        %v3970 = vadd.f32 0.0, %v3969
        %v3971 = vpop.f32.mrb[0].mxu0
        %v3972 = vpop.f32.mrb[0].mxu0
        %v3973 = vadd.f32 0.0, %v3972
        %v3974 = vpop.f32.mrb[0].mxu0
        %3975 = vmatprep.mubr.bf16.mxu0 0
        %3976 = vmatmul.mubr.bf16.gmra.mrb[0].mxu0 %v2419
        %v3977 = vpop.f32.mrb[0].mxu0
        %v3978 = vadd.f32 0.0, %v3977
        %v3979 = vpop.f32.mrb[0].mxu0
        %v3980 = vpop.f32.mrb[0].mxu0
        %v3981 = vadd.f32 0.0, %v3980
        %v3982 = vpop.f32.mrb[0].mxu0
        %3983 = vmatprep.mubr.bf16.mxu0 0
        %3984 = vmatmul.mubr.bf16.gmra.mrb[0].mxu0 %v2422
        %v3985 = vpop.f32.mrb[0].mxu0
        %v3986 = vadd.f32 0.0, %v3985
        %v3987 = vpop.f32.mrb[0].mxu0
        %v3988 = vpop.f32.mrb[0].mxu0
        %v3989 = vadd.f32 0.0, %v3988
        %v3990 = vpop.f32.mrb[0].mxu0
        %3991 = vmatprep.mubr.bf16.mxu0 0
        %3992 = vmatmul.mubr.bf16.gmra.mrb[0].mxu0 %v2425
        %v3993 = vpop.f32.mrb[0].mxu0
        %v3994 = vadd.f32 0.0, %v3993
        %v3995 = vpop.f32.mrb[0].mxu0
        %v3996 = vpop.f32.mrb[0].mxu0
        %v3997 = vadd.f32 0.0, %v3996
        %v3998 = vpop.f32.mrb[0].mxu0
        %3999 = vmatprep.mubr.bf16.mxu0 0
        %4000 = vmatmul.mubr.bf16.gmra.mrb[0].mxu0 %v2428
        %v4001 = vpop.f32.mrb[0].mxu0
        %v4002 = vadd.f32 0.0, %v4001
        %v4003 = vpop.f32.mrb[0].mxu0
        %v4004 = vpop.f32.mrb[0].mxu0
        %v4005 = vadd.f32 0.0, %v4004
        %v4006 = vpop.f32.mrb[0].mxu0
        %4007 = vmatprep.mubr.bf16.mxu0 0
        %4008 = vmatmul.mubr.bf16.gmra.mrb[0].mxu0 %v2431
        %v4009 = vpop.f32.mrb[0].mxu0
        %v4010 = vadd.f32 0.0, %v4009
        %v4011 = vpop.f32.mrb[0].mxu0
        %v4012 = vpop.f32.mrb[0].mxu0
        %v4013 = vadd.f32 0.0, %v4012
        %v4014 = vpop.f32.mrb[0].mxu0
        %4015 = vmatprep.mubr.bf16.mxu0 0
        %4016 = vmatmul.mubr.bf16.gmra.mrb[0].mxu0 %v2434
        %v4017 = vpop.f32.mrb[0].mxu0
        %v4018 = vadd.f32 0.0, %v4017
        %v4019 = vpop.f32.mrb[0].mxu0
        %v4020 = vpop.f32.mrb[0].mxu0
        %v4021 = vadd.f32 0.0, %v4020
        %v4022 = vpop.f32.mrb[0].mxu0
        %4023 = vmatprep.mubr.bf16.mxu0 0
        %4024 = vmatmul.mubr.bf16.gmra.mrb[0].mxu0 %v2437
        %v4025 = vpop.f32.mrb[0].mxu0
        %v4026 = vadd.f32 0.0, %v4025
        %v4027 = vpop.f32.mrb[0].mxu0
        %v4028 = vpop.f32.mrb[0].mxu0
        %v4029 = vadd.f32 0.0, %v4028
        %v4030 = vpop.f32.mrb[0].mxu0
        %4031 = vmatprep.mubr.bf16.mxu0 0
        %4032 = vmatmul.mubr.bf16.gmra.mrb[0].mxu0 %v2440
        %v4033 = vpop.f32.mrb[0].mxu0
        %v4034 = vadd.f32 0.0, %v4033
        %v4035 = vpop.f32.mrb[0].mxu0
        %v4036 = vpop.f32.mrb[0].mxu0
        %v4037 = vadd.f32 0.0, %v4036
        %v4038 = vpop.f32.mrb[0].mxu0
        %4039 = vmatprep.mubr.bf16.mxu0 0
        %4040 = vmatmul.mubr.bf16.gmra.mrb[0].mxu0 %v2443
        %v4041 = vpop.f32.mrb[0].mxu0
        %v4042 = vadd.f32 0.0, %v4041
        %v4043 = vpop.f32.mrb[0].mxu0
        %v4044 = vpop.f32.mrb[0].mxu0
        %v4045 = vadd.f32 0.0, %v4044
        %v4046 = vpop.f32.mrb[0].mxu0
        %4047 = vmatprep.mubr.bf16.mxu0 0
        %4048 = vmatmul.mubr.bf16.gmra.mrb[0].mxu0 %v2446
        %v4049 = vpop.f32.mrb[0].mxu0
        %v4050 = vadd.f32 0.0, %v4049
        %v4051 = vpop.f32.mrb[0].mxu0
        %v4052 = vpop.f32.mrb[0].mxu0
        %v4053 = vadd.f32 0.0, %v4052
        %v4054 = vpop.f32.mrb[0].mxu0
        %4055 = vmatprep.mubr.bf16.mxu0 0
        %4056 = vmatmul.mubr.bf16.gmra.mrb[0].mxu0 %v2449
        %v4057 = vpop.f32.mrb[0].mxu0
        %v4058 = vadd.f32 0.0, %v4057
        %v4059 = vpop.f32.mrb[0].mxu0
        %v4060 = vpop.f32.mrb[0].mxu0
        %v4061 = vadd.f32 0.0, %v4060
        %v4062 = vpop.f32.mrb[0].mxu0
        %4063 = vmatprep.mubr.bf16.mxu0 0
        %4064 = vmatmul.mubr.bf16.gmra.mrb[0].mxu0 %v2452
        %v4065 = vpop.f32.mrb[0].mxu0
        %v4066 = vadd.f32 0.0, %v4065
        %v4067 = vpop.f32.mrb[0].mxu0
        %v4068 = vpop.f32.mrb[0].mxu0
        %v4069 = vadd.f32 0.0, %v4068
        %v4070 = vpop.f32.mrb[0].mxu0
        %4071 = vmatprep.mubr.bf16.mxu0 0
        %4072 = vmatmul.mubr.bf16.gmra.mrb[0].mxu0 %v2455
        %v4073 = vpop.f32.mrb[0].mxu0
        %v4074 = vadd.f32 0.0, %v4073
        %v4075 = vpop.f32.mrb[0].mxu0
        %v4076 = vpop.f32.mrb[0].mxu0
        %v4077 = vadd.f32 0.0, %v4076
        %v4078 = vpop.f32.mrb[0].mxu0
        %4079 = vmatprep.mubr.bf16.mxu0 0
        %4080 = vmatmul.mubr.bf16.gmra.mrb[0].mxu0 %v2458
        %v4081 = vpop.f32.mrb[0].mxu0
        %v4082 = vadd.f32 0.0, %v4081
        %v4083 = vpop.f32.mrb[0].mxu0
        %v4084 = vpop.f32.mrb[0].mxu0
        %v4085 = vadd.f32 0.0, %v4084
        %v4086 = vpop.f32.mrb[0].mxu0
        %4087 = vmatprep.mubr.bf16.mxu0 0
        %4088 = vmatmul.mubr.bf16.gmra.mrb[0].mxu0 %v2461
        %v4089 = vpop.f32.mrb[0].mxu0
        %v4090 = vadd.f32 0.0, %v4089
        %v4091 = vpop.f32.mrb[0].mxu0
        %v4092 = vpop.f32.mrb[0].mxu0
        %v4093 = vadd.f32 0.0, %v4092
        %v4094 = vpop.f32.mrb[0].mxu0
        %4095 = vmatprep.mubr.bf16.mxu0 0
        %4096 = vmatmul.mubr.bf16.gmra.mrb[0].mxu0 %v2464
        %v4097 = vpop.f32.mrb[0].mxu0
        %v4098 = vadd.f32 0.0, %v4097
        %v4099 = vpop.f32.mrb[0].mxu0
        %v4100 = vpop.f32.mrb[0].mxu0
        %v4101 = vadd.f32 0.0, %v4100
        %v4102 = vpop.f32.mrb[0].mxu0
        %4103 = vmatprep.mubr.bf16.mxu0 0
        %4104 = vmatmul.mubr.bf16.gmra.mrb[0].mxu0 %v2467
        %v4105 = vpop.f32.mrb[0].mxu0
        %v4106 = vadd.f32 0.0, %v4105
        %v4107 = vpop.f32.mrb[0].mxu0
        %v4108 = vpop.f32.mrb[0].mxu0
        %v4109 = vadd.f32 0.0, %v4108
        %v4110 = vpop.f32.mrb[0].mxu0
        %4111 = vmatprep.mubr.bf16.mxu0 0
        %4112 = vmatmul.mubr.bf16.gmra.mrb[0].mxu0 %v2470
        %v4113 = vpop.f32.mrb[0].mxu0
        %v4114 = vadd.f32 0.0, %v4113
        %v4115 = vpop.f32.mrb[0].mxu0
        %v4116 = vpop.f32.mrb[0].mxu0
        %v4117 = vadd.f32 0.0, %v4116
        %v4118 = vpop.f32.mrb[0].mxu0
        %4119 = vmatprep.mubr.bf16.mxu0 0
        %4120 = vmatmul.mubr.bf16.gmra.mrb[0].mxu0 %v2473
        %v4121 = vpop.f32.mrb[0].mxu0
        %v4122 = vadd.f32 0.0, %v4121
        %v4123 = vpop.f32.mrb[0].mxu0
        %v4124 = vpop.f32.mrb[0].mxu0
        %v4125 = vadd.f32 0.0, %v4124
        %v4126 = vpop.f32.mrb[0].mxu0
        %4127 = vmatprep.mubr.bf16.mxu0 0
        %4128 = vmatmul.mubr.bf16.gmra.mrb[0].mxu0 %v2476
        %v4129 = vpop.f32.mrb[0].mxu0
        %v4130 = vadd.f32 0.0, %v4129
        %v4131 = vpop.f32.mrb[0].mxu0
        %v4132 = vpop.f32.mrb[0].mxu0
        %v4133 = vadd.f32 0.0, %v4132
        %v4134 = vpop.f32.mrb[0].mxu0
        %4135 = vmatprep.mubr.bf16.mxu0 0
        %4136 = vmatmul.mubr.bf16.gmra.mrb[0].mxu0 %v2479
        %v4137 = vpop.f32.mrb[0].mxu0
        %v4138 = vadd.f32 0.0, %v4137
        %v4139 = vpop.f32.mrb[0].mxu0
        %v4140 = vpop.f32.mrb[0].mxu0
        %v4141 = vadd.f32 0.0, %v4140
        %v4142 = vpop.f32.mrb[0].mxu0
        %4143 = vmatprep.mubr.bf16.mxu0 0
        %4144 = vmatmul.mubr.bf16.gmra.mrb[0].mxu0 %v2482
        %v4145 = vpop.f32.mrb[0].mxu0
        %v4146 = vadd.f32 0.0, %v4145
        %v4147 = vpop.f32.mrb[0].mxu0
        %v4148 = vpop.f32.mrb[0].mxu0
        %v4149 = vadd.f32 0.0, %v4148
        %v4150 = vpop.f32.mrb[0].mxu0
        %4151 = vmatprep.mubr.bf16.mxu0 0
        %4152 = vmatmul.mubr.bf16.gmra.mrb[0].mxu0 %v2485
        %v4153 = vpop.f32.mrb[0].mxu0
        %v4154 = vadd.f32 0.0, %v4153
        %v4155 = vpop.f32.mrb[0].mxu0
        %v4156 = vpop.f32.mrb[0].mxu0
        %v4157 = vadd.f32 0.0, %v4156
        %v4158 = vpop.f32.mrb[0].mxu0
        %4159 = vmatprep.mubr.bf16.mxu0 0
        %4160 = vmatmul.mubr.bf16.gmra.mrb[0].mxu0 %v2488
        %v4161 = vpop.f32.mrb[0].mxu0
        %v4162 = vadd.f32 0.0, %v4161
        %v4163 = vpop.f32.mrb[0].mxu0
        %v4164 = vpop.f32.mrb[0].mxu0
        %v4165 = vadd.f32 0.0, %v4164
        %v4166 = vpop.f32.mrb[0].mxu0
        %4167 = vmatprep.mubr.bf16.mxu0 0
        %4168 = vmatmul.mubr.bf16.gmra.mrb[0].mxu0 %v2491
        %v4169 = vpop.f32.mrb[0].mxu0
        %v4170 = vadd.f32 0.0, %v4169
        %v4171 = vpop.f32.mrb[0].mxu0
        %v4172 = vpop.f32.mrb[0].mxu0
        %v4173 = vadd.f32 0.0, %v4172
        %v4174 = vpop.f32.mrb[0].mxu0
        %4175 = vmatprep.mubr.bf16.mxu0 0
        %4176 = vmatmul.mubr.bf16.gmra.mrb[0].mxu0 %v2494
        %v4177 = vpop.f32.mrb[0].mxu0
        %v4178 = vadd.f32 0.0, %v4177
        %v4179 = vpop.f32.mrb[0].mxu0
        %v4180 = vpop.f32.mrb[0].mxu0
        %v4181 = vadd.f32 0.0, %v4180
        %v4182 = vpop.f32.mrb[0].mxu0
        %4183 = vmatprep.mubr.bf16.mxu0 0
        %4184 = vmatmul.mubr.bf16.gmra.mrb[0].mxu0 %v2497
        %v4185 = vpop.f32.mrb[0].mxu0
        %v4186 = vadd.f32 0.0, %v4185
        %v4187 = vpop.f32.mrb[0].mxu0
        %v4188 = vpop.f32.mrb[0].mxu0
        %v4189 = vadd.f32 0.0, %v4188
        %v4190 = vpop.f32.mrb[0].mxu0
        %4191 = vmatprep.mubr.bf16.mxu0 0
        %4192 = vmatmul.mubr.bf16.gmra.mrb[0].mxu0 %v2500
        %v4193 = vpop.f32.mrb[0].mxu0
        %v4194 = vadd.f32 0.0, %v4193
        %v4195 = vpop.f32.mrb[0].mxu0
        %v4196 = vpop.f32.mrb[0].mxu0
        %v4197 = vadd.f32 0.0, %v4196
        %v4198 = vpop.f32.mrb[0].mxu0
        %4199 = vmatprep.mubr.bf16.mxu0 0
        %4200 = vmatmul.mubr.bf16.gmra.mrb[0].mxu0 %v2503
        %v4201 = vpop.f32.mrb[0].mxu0
        %v4202 = vadd.f32 0.0, %v4201
        %v4203 = vpop.f32.mrb[0].mxu0
        %v4204 = vpop.f32.mrb[0].mxu0
        %v4205 = vadd.f32 0.0, %v4204
        %v4206 = vpop.f32.mrb[0].mxu0
        %4207 = vmatprep.mubr.bf16.mxu0 0
        %4208 = vmatmul.mubr.bf16.gmra.mrb[0].mxu0 %v2506
        %v4209 = vpop.f32.mrb[0].mxu0
        %v4210 = vadd.f32 0.0, %v4209
        %v4211 = vpop.f32.mrb[0].mxu0
        %v4212 = vpop.f32.mrb[0].mxu0
        %v4213 = vadd.f32 0.0, %v4212
        %v4214 = vpop.f32.mrb[0].mxu0
        %4215 = vmatprep.mubr.bf16.mxu0 0
        %4216 = vmatmul.mubr.bf16.gmra.mrb[0].mxu0 %v2509
        %v4217 = vpop.f32.mrb[0].mxu0
        %v4218 = vadd.f32 0.0, %v4217
        %v4219 = vpop.f32.mrb[0].mxu0
        %v4220 = vpop.f32.mrb[0].mxu0
        %v4221 = vadd.f32 0.0, %v4220
        %v4222 = vpop.f32.mrb[0].mxu0
        %4223 = vmatprep.mubr.bf16.mxu0 0
        %4224 = vmatmul.mubr.bf16.gmra.mrb[0].mxu0 %v2512
        %v4225 = vpop.f32.mrb[0].mxu0
        %v4226 = vadd.f32 0.0, %v4225
        %v4227 = vpop.f32.mrb[0].mxu0
        %v4228 = vpop.f32.mrb[0].mxu0
        %v4229 = vadd.f32 0.0, %v4228
        %v4230 = vpop.f32.mrb[0].mxu0
        %4231 = vmatprep.mubr.bf16.mxu0 0
        %4232 = vmatmul.mubr.bf16.gmra.mrb[0].mxu0 %v2515
        %v4233 = vpop.f32.mrb[0].mxu0
        %v4234 = vadd.f32 0.0, %v4233
        %v4235 = vpop.f32.mrb[0].mxu0
        %v4236 = vpop.f32.mrb[0].mxu0
        %v4237 = vadd.f32 0.0, %v4236
        %v4238 = vpop.f32.mrb[0].mxu0
        %4239 = vmatprep.mubr.bf16.mxu0 0
        %4240 = vmatmul.mubr.bf16.gmra.mrb[0].mxu0 %v2518
        %v4241 = vpop.f32.mrb[0].mxu0
        %v4242 = vadd.f32 0.0, %v4241
        %v4243 = vpop.f32.mrb[0].mxu0
        %v4244 = vpop.f32.mrb[0].mxu0
        %v4245 = vadd.f32 0.0, %v4244
        %v4246 = vpop.f32.mrb[0].mxu0
        %4247 = vmatprep.mubr.bf16.mxu0 0
        %4248 = vmatmul.mubr.bf16.gmra.mrb[0].mxu0 %v2521
        %v4249 = vpop.f32.mrb[0].mxu0
        %v4250 = vadd.f32 0.0, %v4249
        %v4251 = vpop.f32.mrb[0].mxu0
        %v4252 = vpop.f32.mrb[0].mxu0
        %v4253 = vadd.f32 0.0, %v4252
        %v4254 = vpop.f32.mrb[0].mxu0
        %4255 = vmatprep.mubr.bf16.mxu0 0
        %4256 = vmatmul.mubr.bf16.gmra.mrb[0].mxu0 %v2524
        %v4257 = vpop.f32.mrb[0].mxu0
        %v4258 = vadd.f32 0.0, %v4257
        %v4259 = vpop.f32.mrb[0].mxu0
        %v4260 = vpop.f32.mrb[0].mxu0
        %v4261 = vadd.f32 0.0, %v4260
        %v4262 = vpop.f32.mrb[0].mxu0
        %4263 = vmatprep.mubr.bf16.mxu0 0
        %4264 = vmatmul.mubr.bf16.gmra.mrb[0].mxu0 %v2527
        %v4265 = vpop.f32.mrb[0].mxu0
        %v4266 = vadd.f32 0.0, %v4265
        %v4267 = vpop.f32.mrb[0].mxu0
        %v4268 = vpop.f32.mrb[0].mxu0
        %v4269 = vadd.f32 0.0, %v4268
        %v4270 = vpop.f32.mrb[0].mxu0
        %4271 = vmatprep.mubr.bf16.mxu0 0
        %4272 = vmatmul.mubr.bf16.gmra.mrb[0].mxu0 %v2530
        %v4273 = vpop.f32.mrb[0].mxu0
        %v4274 = vadd.f32 0.0, %v4273
        %v4275 = vpop.f32.mrb[0].mxu0
        %v4276 = vpop.f32.mrb[0].mxu0
        %v4277 = vadd.f32 0.0, %v4276
        %v4278 = vpop.f32.mrb[0].mxu0
        %4279 = vmatprep.mubr.bf16.mxu0 0
        %4280 = vmatmul.mubr.bf16.gmra.mrb[0].mxu0 %v2533
        %v4281 = vpop.f32.mrb[0].mxu0
        %v4282 = vadd.f32 0.0, %v4281
        %v4283 = vpop.f32.mrb[0].mxu0
        %v4284 = vpop.f32.mrb[0].mxu0
        %v4285 = vadd.f32 0.0, %v4284
        %v4286 = vpop.f32.mrb[0].mxu0
        %4287 = vmatprep.mubr.bf16.mxu0 0
        %4288 = vmatmul.mubr.bf16.gmra.mrb[0].mxu0 %v2536
        %v4289 = vpop.f32.mrb[0].mxu0
        %v4290 = vadd.f32 0.0, %v4289
        %v4291 = vpop.f32.mrb[0].mxu0
        %v4292 = vpop.f32.mrb[0].mxu0
        %v4293 = vadd.f32 0.0, %v4292
        %v4294 = vpop.f32.mrb[0].mxu0
        %4295 = vmatprep.mubr.bf16.mxu0 0
        %4296 = vmatmul.mubr.bf16.gmra.mrb[0].mxu0 %v2539
        %v4297 = vpop.f32.mrb[0].mxu0
        %v4298 = vadd.f32 0.0, %v4297
        %v4299 = vpop.f32.mrb[0].mxu0
        %v4300 = vpop.f32.mrb[0].mxu0
        %v4301 = vadd.f32 0.0, %v4300
        %v4302 = vpop.f32.mrb[0].mxu0
        %4303 = vmatprep.mubr.bf16.mxu0 0
        %4304 = vmatmul.mubr.bf16.gmra.mrb[0].mxu0 %v2542
        %v4305 = vpop.f32.mrb[0].mxu0
        %v4306 = vadd.f32 0.0, %v4305
        %v4307 = vpop.f32.mrb[0].mxu0
        %v4308 = vpop.f32.mrb[0].mxu0
        %v4309 = vadd.f32 0.0, %v4308
        %v4310 = vpop.f32.mrb[0].mxu0
        %4311 = vmatprep.mubr.bf16.mxu0 0
        %4312 = vmatmul.mubr.bf16.gmra.mrb[0].mxu0 %v2545
        %v4313 = vpop.f32.mrb[0].mxu0
        %v4314 = vadd.f32 0.0, %v4313
        %v4315 = vpop.f32.mrb[0].mxu0
        %v4316 = vpop.f32.mrb[0].mxu0
        %v4317 = vadd.f32 0.0, %v4316
        %v4318 = vpop.f32.mrb[0].mxu0
        %4319 = vmatprep.mubr.bf16.mxu0 0
        %4320 = vmatmul.mubr.bf16.gmra.mrb[0].mxu0 %v2548
        %v4321 = vpop.f32.mrb[0].mxu0
        %v4322 = vadd.f32 0.0, %v4321
        %v4323 = vpop.f32.mrb[0].mxu0
        %v4324 = vpop.f32.mrb[0].mxu0
        %v4325 = vadd.f32 0.0, %v4324
        %v4326 = vpop.f32.mrb[0].mxu0
        %4327 = vmatprep.mubr.bf16.mxu0 0
        %4328 = vmatmul.mubr.bf16.gmra.mrb[0].mxu0 %v2551
        %v4329 = vpop.f32.mrb[0].mxu0
        %v4330 = vadd.f32 0.0, %v4329
        %v4331 = vpop.f32.mrb[0].mxu0
        %v4332 = vpop.f32.mrb[0].mxu0
        %v4333 = vadd.f32 0.0, %v4332
        %v4334 = vpop.f32.mrb[0].mxu0
        %4335 = vmatprep.mubr.bf16.mxu0 0
        %4336 = vmatmul.mubr.bf16.gmra.mrb[0].mxu0 %v2554
        %v4337 = vpop.f32.mrb[0].mxu0
        %v4338 = vadd.f32 0.0, %v4337
        %v4339 = vpop.f32.mrb[0].mxu0
        %v4340 = vpop.f32.mrb[0].mxu0
        %v4341 = vadd.f32 0.0, %v4340
        %v4342 = vpop.f32.mrb[0].mxu0
        %4343 = vmatprep.mubr.bf16.mxu0 0
        %4344 = vmatmul.mubr.bf16.gmra.mrb[0].mxu0 %v2557
        %v4345 = vpop.f32.mrb[0].mxu0
        %v4346 = vadd.f32 0.0, %v4345
        %v4347 = vpop.f32.mrb[0].mxu0
        %v4348 = vpop.f32.mrb[0].mxu0
        %v4349 = vadd.f32 0.0, %v4348
        %v4350 = vpop.f32.mrb[0].mxu0
        %4351 = vmatprep.mubr.bf16.mxu0 0
        %4352 = vmatmul.mubr.bf16.gmra.mrb[0].mxu0 %v2560
        %v4353 = vpop.f32.mrb[0].mxu0
        %v4354 = vadd.f32 0.0, %v4353
        %v4355 = vpop.f32.mrb[0].mxu0
        %v4356 = vpop.f32.mrb[0].mxu0
        %v4357 = vadd.f32 0.0, %v4356
        %v4358 = vpop.f32.mrb[0].mxu0
        %4359 = vmatprep.mubr.bf16.mxu0 0
        %4360 = vmatmul.mubr.bf16.gmra.mrb[0].mxu0 %v2563
        %v4361 = vpop.f32.mrb[0].mxu0
        %v4362 = vadd.f32 0.0, %v4361
        %v4363 = vpop.f32.mrb[0].mxu0
        %v4364 = vpop.f32.mrb[0].mxu0
        %v4365 = vadd.f32 0.0, %v4364
        %v4366 = vpop.f32.mrb[0].mxu0
        %4367 = vmatprep.mubr.bf16.mxu0 0
        %4368 = vmatmul.mubr.bf16.gmra.mrb[0].mxu0 %v2566
        %v4369 = vpop.f32.mrb[0].mxu0
        %v4370 = vadd.f32 0.0, %v4369
        %v4371 = vpop.f32.mrb[0].mxu0
        %v4372 = vpop.f32.mrb[0].mxu0
        %v4373 = vadd.f32 0.0, %v4372
        %v4374 = vpop.f32.mrb[0].mxu0
        %4375 = vmatprep.mubr.bf16.mxu0 0
        %4376 = vmatmul.mubr.bf16.gmra.mrb[0].mxu0 %v2569
        %v4377 = vpop.f32.mrb[0].mxu0
        %v4378 = vadd.f32 0.0, %v4377
        %v4379 = vpop.f32.mrb[0].mxu0
        %v4380 = vpop.f32.mrb[0].mxu0
        %v4381 = vadd.f32 0.0, %v4380
        %v4382 = vpop.f32.mrb[0].mxu0
        %4383 = vmatprep.mubr.bf16.mxu0 0
        %4384 = vmatmul.mubr.bf16.gmra.mrb[0].mxu0 %v2572
        %v4385 = vpop.f32.mrb[0].mxu0
        %v4386 = vadd.f32 0.0, %v4385
        %v4387 = vpop.f32.mrb[0].mxu0
        %v4388 = vpop.f32.mrb[0].mxu0
        %v4389 = vadd.f32 0.0, %v4388
        %v4390 = vpop.f32.mrb[0].mxu0
        %4391 = vmatprep.mubr.bf16.mxu0 0
        %4392 = vmatmul.mubr.bf16.gmra.mrb[0].mxu0 %v2575
        %v4393 = vpop.f32.mrb[0].mxu0
        %v4394 = vadd.f32 0.0, %v4393
        %v4395 = vpop.f32.mrb[0].mxu0
        %v4396 = vpop.f32.mrb[0].mxu0
        %v4397 = vadd.f32 0.0, %v4396
        %v4398 = vpop.f32.mrb[0].mxu0
        %4399 = vmatprep.mubr.bf16.mxu0 0
        %4400 = vmatmul.mubr.bf16.gmra.mrb[0].mxu0 %v2578
        %v4401 = vpop.f32.mrb[0].mxu0
        %v4402 = vadd.f32 0.0, %v4401
        %v4403 = vpop.f32.mrb[0].mxu0
        %v4404 = vpop.f32.mrb[0].mxu0
        %v4405 = vadd.f32 0.0, %v4404
        %v4406 = vpop.f32.mrb[0].mxu0
        %4407 = vmatprep.mubr.bf16.mxu0 0
        %4408 = vmatmul.mubr.bf16.gmra.mrb[0].mxu0 %v2581
        %v4409 = vpop.f32.mrb[0].mxu0
        %v4410 = vadd.f32 0.0, %v4409
        %v4411 = vpop.f32.mrb[0].mxu0
        %v4412 = vpop.f32.mrb[0].mxu0
        %v4413 = vadd.f32 0.0, %v4412
        %v4414 = vpop.f32.mrb[0].mxu0
        %4415 = vmatprep.mubr.bf16.mxu0 0
        %4416 = vmatmul.mubr.bf16.gmra.mrb[0].mxu0 %v2584
        %v4417 = vpop.f32.mrb[0].mxu0
        %v4418 = vadd.f32 0.0, %v4417
        %v4419 = vpop.f32.mrb[0].mxu0
        %v4420 = vpop.f32.mrb[0].mxu0
        %v4421 = vadd.f32 0.0, %v4420
        %v4422 = vpop.f32.mrb[0].mxu0
        %4423 = vmatprep.mubr.bf16.mxu0 0
        %4424 = vmatmul.mubr.bf16.gmra.mrb[0].mxu0 %v2587
        %v4425 = vpop.f32.mrb[0].mxu0
        %v4426 = vadd.f32 0.0, %v4425
        %v4427 = vpop.f32.mrb[0].mxu0
        %v4428 = vpop.f32.mrb[0].mxu0
        %v4429 = vadd.f32 0.0, %v4428
        %v4430 = vpop.f32.mrb[0].mxu0
        %4431 = vmatprep.mubr.bf16.mxu0 0
        %4432 = vmatmul.mubr.bf16.gmra.mrb[0].mxu0 %v2590
        %v4433 = vpop.f32.mrb[0].mxu0
        %v4434 = vadd.f32 0.0, %v4433
        %v4435 = vpop.f32.mrb[0].mxu0
        %v4436 = vpop.f32.mrb[0].mxu0
        %v4437 = vadd.f32 0.0, %v4436
        %v4438 = vpop.f32.mrb[0].mxu0
        %4439 = vmatprep.mubr.bf16.mxu0 0
        %4440 = vmatmul.mubr.bf16.gmra.mrb[0].mxu0 %v2593
        %v4441 = vpop.f32.mrb[0].mxu0
        %v4442 = vadd.f32 0.0, %v4441
        %v4443 = vpop.f32.mrb[0].mxu0
        %v4444 = vpop.f32.mrb[0].mxu0
        %v4445 = vadd.f32 0.0, %v4444
        %v4446 = vpop.f32.mrb[0].mxu0
        %4447 = vmatprep.mubr.bf16.mxu0 0
        %4448 = vmatmul.mubr.bf16.gmra.mrb[0].mxu0 %v2596
        %v4449 = vpop.f32.mrb[0].mxu0
        %v4450 = vadd.f32 0.0, %v4449
        %v4451 = vpop.f32.mrb[0].mxu0
        %v4452 = vpop.f32.mrb[0].mxu0
        %v4453 = vadd.f32 0.0, %v4452
        %v4454 = vpop.f32.mrb[0].mxu0
        %4455 = vmatprep.mubr.bf16.mxu0 0
        %4456 = vmatmul.mubr.bf16.gmra.mrb[0].mxu0 %v2599
        %v4457 = vpop.f32.mrb[0].mxu0
        %v4458 = vadd.f32 0.0, %v4457
        %v4459 = vpop.f32.mrb[0].mxu0
        %v4460 = vpop.f32.mrb[0].mxu0
        %v4461 = vadd.f32 0.0, %v4460
        %v4462 = vpop.f32.mrb[0].mxu0
        %4463 = vmatprep.mubr.bf16.mxu0 0
        %4464 = vmatmul.mubr.bf16.gmra.mrb[0].mxu0 %v2602
        %v4465 = vpop.f32.mrb[0].mxu0
        %v4466 = vadd.f32 0.0, %v4465
        %v4467 = vpop.f32.mrb[0].mxu0
        %v4468 = vpop.f32.mrb[0].mxu0
        %v4469 = vadd.f32 0.0, %v4468
        %v4470 = vpop.f32.mrb[0].mxu0
        %4471 = vmatprep.mubr.bf16.mxu0 0
        %4472 = vmatmul.mubr.bf16.gmra.mrb[0].mxu0 %v2605
        %v4473 = vpop.f32.mrb[0].mxu0
        %v4474 = vadd.f32 0.0, %v4473
        %v4475 = vpop.f32.mrb[0].mxu0
        %v4476 = vpop.f32.mrb[0].mxu0
        %v4477 = vadd.f32 0.0, %v4476
        %v4478 = vpop.f32.mrb[0].mxu0
        %4479 = vmatprep.mubr.bf16.mxu0 0
        %4480 = vmatmul.mubr.bf16.gmra.mrb[0].mxu0 %v2608
        %v4481 = vpop.f32.mrb[0].mxu0
        %v4482 = vadd.f32 0.0, %v4481
        %v4483 = vpop.f32.mrb[0].mxu0
        %v4484 = vpop.f32.mrb[0].mxu0
        %v4485 = vadd.f32 0.0, %v4484
        %v4486 = vpop.f32.mrb[0].mxu0
        %4487 = vmatprep.mubr.bf16.mxu0 0
        %4488 = vmatmul.mubr.bf16.gmra.mrb[0].mxu0 %v2611
        %v4489 = vpop.f32.mrb[0].mxu0
        %v4490 = vadd.f32 0.0, %v4489
        %v4491 = vpop.f32.mrb[0].mxu0
        %v4492 = vpop.f32.mrb[0].mxu0
        %v4493 = vadd.f32 0.0, %v4492
        %v4494 = vpop.f32.mrb[0].mxu0
        %4495 = vmatprep.mubr.bf16.mxu0 0
        %4496 = vmatmul.mubr.bf16.gmra.mrb[0].mxu0 %v2614
        %v4497 = vpop.f32.mrb[0].mxu0
        %v4498 = vadd.f32 0.0, %v4497
        %v4499 = vpop.f32.mrb[0].mxu0
        %v4500 = vpop.f32.mrb[0].mxu0
        %v4501 = vadd.f32 0.0, %v4500
        %v4502 = vpop.f32.mrb[0].mxu0
        %4503 = vmatprep.mubr.bf16.mxu0 0
        %4504 = vmatmul.mubr.bf16.gmra.mrb[0].mxu0 %v2617
        %v4505 = vpop.f32.mrb[0].mxu0
        %v4506 = vadd.f32 0.0, %v4505
        %v4507 = vpop.f32.mrb[0].mxu0
        %v4508 = vpop.f32.mrb[0].mxu0
        %v4509 = vadd.f32 0.0, %v4508
        %v4510 = vpop.f32.mrb[0].mxu0
        %4511 = vmatprep.mubr.bf16.mxu0 0
        %4512 = vmatmul.mubr.bf16.gmra.mrb[0].mxu0 %v2620
        %v4513 = vpop.f32.mrb[0].mxu0
        %v4514 = vadd.f32 0.0, %v4513
        %v4515 = vpop.f32.mrb[0].mxu0
        %v4516 = vpop.f32.mrb[0].mxu0
        %v4517 = vadd.f32 0.0, %v4516
        %v4518 = vpop.f32.mrb[0].mxu0
        %4519 = vmatprep.mubr.bf16.mxu0 0
        %4520 = vmatmul.mubr.bf16.gmra.mrb[0].mxu0 %v2623
        %v4521 = vpop.f32.mrb[0].mxu0
        %v4522 = vadd.f32 0.0, %v4521
        %v4523 = vpop.f32.mrb[0].mxu0
        %v4524 = vpop.f32.mrb[0].mxu0
        %v4525 = vadd.f32 0.0, %v4524
        %v4526 = vpop.f32.mrb[0].mxu0
        %4527 = vmatprep.mubr.bf16.mxu0 0
        %4528 = vmatmul.mubr.bf16.gmra.mrb[0].mxu0 %v2626
        %v4529 = vpop.f32.mrb[0].mxu0
        %v4530 = vadd.f32 0.0, %v4529
        %v4531 = vpop.f32.mrb[0].mxu0
        %v4532 = vpop.f32.mrb[0].mxu0
        %v4533 = vadd.f32 0.0, %v4532
        %v4534 = vpop.f32.mrb[0].mxu0
        %4535 = vmatprep.mubr.bf16.mxu0 0
        %4536 = vmatmul.mubr.bf16.gmra.mrb[0].mxu0 %v2629
        %v4537 = vpop.f32.mrb[0].mxu0
        %v4538 = vadd.f32 0.0, %v4537
        %v4539 = vpop.f32.mrb[0].mxu0
        %v4540 = vpop.f32.mrb[0].mxu0
        %v4541 = vadd.f32 0.0, %v4540
        %v4542 = vpop.f32.mrb[0].mxu0
        %4543 = vmatprep.mubr.bf16.mxu0 0
        %4544 = vmatmul.mubr.bf16.gmra.mrb[0].mxu0 %v2632
        %v4545 = vpop.f32.mrb[0].mxu0
        %v4546 = vadd.f32 0.0, %v4545
        %v4547 = vpop.f32.mrb[0].mxu0
        %v4548 = vpop.f32.mrb[0].mxu0
        %v4549 = vadd.f32 0.0, %v4548
        %v4550 = vpop.f32.mrb[0].mxu0
        %4551 = vmatprep.mubr.bf16.mxu0 0
        %4552 = vmatmul.mubr.bf16.gmra.mrb[0].mxu0 %v2635
        %v4553 = vpop.f32.mrb[0].mxu0
        %v4554 = vadd.f32 0.0, %v4553
        %v4555 = vpop.f32.mrb[0].mxu0
        %v4556 = vpop.f32.mrb[0].mxu0
        %v4557 = vadd.f32 0.0, %v4556
        %v4558 = vpop.f32.mrb[0].mxu0
        %4559 = vmatprep.mubr.bf16.mxu0 0
        %4560 = vmatmul.mubr.bf16.gmra.mrb[0].mxu0 %v2638
        %v4561 = vpop.f32.mrb[0].mxu0
        %v4562 = vadd.f32 0.0, %v4561
        %v4563 = vpop.f32.mrb[0].mxu0
        %v4564 = vpop.f32.mrb[0].mxu0
        %v4565 = vadd.f32 0.0, %v4564
        %v4566 = vpop.f32.mrb[0].mxu0
        %4567 = vmatprep.mubr.bf16.mxu0 0
        %4568 = vmatmul.mubr.bf16.gmra.mrb[0].mxu0 %v2641
        %v4569 = vpop.f32.mrb[0].mxu0
        %v4570 = vadd.f32 0.0, %v4569
        %v4571 = vpop.f32.mrb[0].mxu0
        %v4572 = vpop.f32.mrb[0].mxu0
        %v4573 = vadd.f32 0.0, %v4572
        %v4574 = vpop.f32.mrb[0].mxu0
        %4575 = vmatprep.mubr.bf16.mxu0 0
        %4576 = vmatmul.mubr.bf16.gmra.mrb[0].mxu0 %v2644
        %v4577 = vpop.f32.mrb[0].mxu0
        %v4578 = vadd.f32 0.0, %v4577
        %v4579 = vpop.f32.mrb[0].mxu0
        %v4580 = vpop.f32.mrb[0].mxu0
        %v4581 = vadd.f32 0.0, %v4580
        %v4582 = vpop.f32.mrb[0].mxu0
        %4583 = vmatprep.mubr.bf16.mxu0 0
        %4584 = vmatmul.mubr.bf16.gmra.mrb[0].mxu0 %v2647
        %v4585 = vpop.f32.mrb[0].mxu0
        %v4586 = vadd.f32 0.0, %v4585
        %v4587 = vpop.f32.mrb[0].mxu0
        %v4588 = vpop.f32.mrb[0].mxu0
        %v4589 = vadd.f32 0.0, %v4588
        %v4590 = vpop.f32.mrb[0].mxu0
        %4591 = vmatprep.mubr.bf16.mxu0 0
        %4592 = vmatmul.mubr.bf16.gmra.mrb[0].mxu0 %v2650
        %v4593 = vpop.f32.mrb[0].mxu0
        %v4594 = vadd.f32 0.0, %v4593
        %v4595 = vpop.f32.mrb[0].mxu0
        %v4596 = vpop.f32.mrb[0].mxu0
        %v4597 = vadd.f32 0.0, %v4596
        %v4598 = vpop.f32.mrb[0].mxu0
        %4599 = vmatprep.mubr.bf16.mxu0 0
        %4600 = vmatmul.mubr.bf16.gmra.mrb[0].mxu0 %v2653
        %v4601 = vpop.f32.mrb[0].mxu0
        %v4602 = vadd.f32 0.0, %v4601
        %v4603 = vpop.f32.mrb[0].mxu0
        %v4604 = vpop.f32.mrb[0].mxu0
        %v4605 = vadd.f32 0.0, %v4604
        %v4606 = vpop.f32.mrb[0].mxu0
        %4607 = vmatprep.mubr.bf16.mxu0 0
        %4608 = vmatmul.mubr.bf16.gmra.mrb[0].mxu0 %v2656
        %v4609 = vpop.f32.mrb[0].mxu0
        %v4610 = vadd.f32 0.0, %v4609
        %v4611 = vpop.f32.mrb[0].mxu0
        %v4612 = vpop.f32.mrb[0].mxu0
        %v4613 = vadd.f32 0.0, %v4612
        %v4614 = vpop.f32.mrb[0].mxu0
        %4615 = vmatprep.mubr.bf16.mxu0 0
        %4616 = vmatmul.mubr.bf16.gmra.mrb[0].mxu0 %v2659
        %v4617 = vpop.f32.mrb[0].mxu0
        %v4618 = vadd.f32 0.0, %v4617
        %v4619 = vpop.f32.mrb[0].mxu0
        %v4620 = vpop.f32.mrb[0].mxu0
        %v4621 = vadd.f32 0.0, %v4620
        %v4622 = vpop.f32.mrb[0].mxu0
        %4623 = vmatprep.mubr.bf16.mxu0 0
        %4624 = vmatmul.mubr.bf16.gmra.mrb[0].mxu0 %v2662
        %v4625 = vpop.f32.mrb[0].mxu0
        %v4626 = vadd.f32 0.0, %v4625
        %v4627 = vpop.f32.mrb[0].mxu0
        %v4628 = vpop.f32.mrb[0].mxu0
        %v4629 = vadd.f32 0.0, %v4628
        %v4630 = vpop.f32.mrb[0].mxu0
        %4631 = vmatprep.mubr.bf16.mxu0 0
        %4632 = vmatmul.mubr.bf16.gmra.mrb[0].mxu0 %v2665
        %v4633 = vpop.f32.mrb[0].mxu0
        %v4634 = vadd.f32 0.0, %v4633
        %v4635 = vpop.f32.mrb[0].mxu0
        %v4636 = vpop.f32.mrb[0].mxu0
        %v4637 = vadd.f32 0.0, %v4636
        %v4638 = vpop.f32.mrb[0].mxu0
        %4639 = vmatprep.mubr.bf16.mxu0 0
        %4640 = vmatmul.mubr.bf16.gmra.mrb[0].mxu0 %v2668
        %v4641 = vpop.f32.mrb[0].mxu0
        %v4642 = vadd.f32 0.0, %v4641
        %v4643 = vpop.f32.mrb[0].mxu0
        %v4644 = vpop.f32.mrb[0].mxu0
        %v4645 = vadd.f32 0.0, %v4644
        %v4646 = vpop.f32.mrb[0].mxu0
        %4647 = vmatprep.mubr.bf16.mxu0 0
        %4648 = vmatmul.mubr.bf16.gmra.mrb[0].mxu0 %v2671
        %v4649 = vpop.f32.mrb[0].mxu0
        %v4650 = vadd.f32 0.0, %v4649
        %v4651 = vpop.f32.mrb[0].mxu0
        %v4652 = vpop.f32.mrb[0].mxu0
        %v4653 = vadd.f32 0.0, %v4652
        %v4654 = vpop.f32.mrb[0].mxu0
        %4655 = vmatprep.mubr.bf16.mxu0 0
        %4656 = vmatmul.mubr.bf16.gmra.mrb[0].mxu0 %v2674
        %v4657 = vpop.f32.mrb[0].mxu0
        %v4658 = vadd.f32 0.0, %v4657
        %v4659 = vpop.f32.mrb[0].mxu0
        %v4660 = vpop.f32.mrb[0].mxu0
        %v4661 = vadd.f32 0.0, %v4660
        %v4662 = vpop.f32.mrb[0].mxu0
        %4663 = vmatprep.mubr.bf16.mxu0 0
        %4664 = vmatmul.mubr.bf16.gmra.mrb[0].mxu0 %v2677
        %v4665 = vpop.f32.mrb[0].mxu0
        %v4666 = vadd.f32 0.0, %v4665
        %v4667 = vpop.f32.mrb[0].mxu0
        %v4668 = vpop.f32.mrb[0].mxu0
        %v4669 = vadd.f32 0.0, %v4668
        %v4670 = vpop.f32.mrb[0].mxu0
        %4671 = vmatprep.mubr.bf16.mxu0 0
        %4672 = vmatmul.mubr.bf16.gmra.mrb[0].mxu0 %v2680
        %v4673 = vpop.f32.mrb[0].mxu0
        %v4674 = vadd.f32 0.0, %v4673
        %v4675 = vpop.f32.mrb[0].mxu0
        %v4676 = vpop.f32.mrb[0].mxu0
        %v4677 = vadd.f32 0.0, %v4676
        %v4678 = vpop.f32.mrb[0].mxu0
        %4679 = vmatprep.mubr.bf16.mxu0 0
        %4680 = vmatmul.mubr.bf16.gmra.mrb[0].mxu0 %v2683
        %v4681 = vpop.f32.mrb[0].mxu0
        %v4682 = vadd.f32 0.0, %v4681
        %v4683 = vpop.f32.mrb[0].mxu0
        %v4684 = vpop.f32.mrb[0].mxu0
        %v4685 = vadd.f32 0.0, %v4684
        %v4686 = vpop.f32.mrb[0].mxu0
        %4687 = vmatprep.mubr.bf16.mxu0 0
        %4688 = vmatmul.mubr.bf16.gmra.mrb[0].mxu0 %v2686
        %v4689 = vpop.f32.mrb[0].mxu0
        %v4690 = vadd.f32 0.0, %v4689
        %v4691 = vpop.f32.mrb[0].mxu0
        %v4692 = vpop.f32.mrb[0].mxu0
        %v4693 = vadd.f32 0.0, %v4692
        %v4694 = vpop.f32.mrb[0].mxu0
        %4695 = vmatprep.mubr.bf16.mxu0 0
        %4696 = vmatmul.mubr.bf16.gmra.mrb[0].mxu0 %v2689
        %v4697 = vpop.f32.mrb[0].mxu0
        %v4698 = vadd.f32 0.0, %v4697
        %v4699 = vpop.f32.mrb[0].mxu0
        %v4700 = vpop.f32.mrb[0].mxu0
        %v4701 = vadd.f32 0.0, %v4700
        %v4702 = vpop.f32.mrb[0].mxu0
        %4703 = vmatprep.mubr.bf16.mxu0 0
        %4704 = vmatmul.mubr.bf16.gmra.mrb[0].mxu0 %v2692
        %v4705 = vpop.f32.mrb[0].mxu0
        %v4706 = vadd.f32 0.0, %v4705
        %v4707 = vpop.f32.mrb[0].mxu0
        %v4708 = vpop.f32.mrb[0].mxu0
        %v4709 = vadd.f32 0.0, %v4708
        %v4710 = vpop.f32.mrb[0].mxu0
        %4711 = vmatprep.mubr.bf16.mxu0 0
        %4712 = vmatmul.mubr.bf16.gmra.mrb[0].mxu0 %v2695
        %v4713 = vpop.f32.mrb[0].mxu0
        %v4714 = vadd.f32 0.0, %v4713
        %v4715 = vpop.f32.mrb[0].mxu0
        %v4716 = vpop.f32.mrb[0].mxu0
        %v4717 = vadd.f32 0.0, %v4716
        %v4718 = vpop.f32.mrb[0].mxu0
        %4719 = vmatprep.mubr.bf16.mxu0 0
        %4720 = vmatmul.mubr.bf16.gmra.mrb[0].mxu0 %v2698
        %v4721 = vpop.f32.mrb[0].mxu0
        %v4722 = vadd.f32 0.0, %v4721
        %v4723 = vpop.f32.mrb[0].mxu0
        %v4724 = vpop.f32.mrb[0].mxu0
        %v4725 = vadd.f32 0.0, %v4724
        %v4726 = vpop.f32.mrb[0].mxu0
        %4727 = vmatprep.mubr.bf16.mxu0 0
        %4728 = vmatmul.mubr.bf16.gmra.mrb[0].mxu0 %v2701
        %v4729 = vpop.f32.mrb[0].mxu0
        %v4730 = vadd.f32 0.0, %v4729
        %v4731 = vpop.f32.mrb[0].mxu0
        %v4732 = vpop.f32.mrb[0].mxu0
        %v4733 = vadd.f32 0.0, %v4732
        %v4734 = vpop.f32.mrb[0].mxu0
        %4735 = vmatprep.mubr.bf16.mxu0 0
        %4736 = vmatmul.mubr.bf16.gmra.mrb[0].mxu0 %v2704
        %v4737 = vpop.f32.mrb[0].mxu0
        %v4738 = vadd.f32 0.0, %v4737
        %v4739 = vpop.f32.mrb[0].mxu0
        %v4740 = vpop.f32.mrb[0].mxu0
        %v4741 = vadd.f32 0.0, %v4740
        %v4742 = vpop.f32.mrb[0].mxu0
        %4743 = vmatprep.mubr.bf16.mxu0 0
        %4744 = vmatmul.mubr.bf16.gmra.mrb[0].mxu0 %v2707
        %v4745 = vpop.f32.mrb[0].mxu0
        %v4746 = vadd.f32 0.0, %v4745
        %v4747 = vpop.f32.mrb[0].mxu0
        %v4748 = vpop.f32.mrb[0].mxu0
        %v4749 = vadd.f32 0.0, %v4748
        %v4750 = vpop.f32.mrb[0].mxu0
        %4751 = vmatprep.mubr.bf16.mxu0 0
        %4752 = vmatmul.mubr.bf16.gmra.mrb[0].mxu0 %v2710
        %v4753 = vpop.f32.mrb[0].mxu0
        %v4754 = vadd.f32 0.0, %v4753
        %v4755 = vpop.f32.mrb[0].mxu0
        %v4756 = vpop.f32.mrb[0].mxu0
        %v4757 = vadd.f32 0.0, %v4756
        %v4758 = vpop.f32.mrb[0].mxu0
        %4759 = vmatprep.mubr.bf16.mxu0 0
        %4760 = vmatmul.mubr.bf16.gmra.mrb[0].mxu0 %v2713
        %v4761 = vpop.f32.mrb[0].mxu0
        %v4762 = vadd.f32 0.0, %v4761
        %v4763 = vpop.f32.mrb[0].mxu0
        %v4764 = vpop.f32.mrb[0].mxu0
        %v4765 = vadd.f32 0.0, %v4764
        %v4766 = vpop.f32.mrb[0].mxu0
        %4767 = vmatprep.mubr.bf16.mxu0 0
        %4768 = vmatmul.mubr.bf16.gmra.mrb[0].mxu0 %v2716
        %v4769 = vpop.f32.mrb[0].mxu0
        %v4770 = vadd.f32 0.0, %v4769
        %v4771 = vpop.f32.mrb[0].mxu0
        %v4772 = vpop.f32.mrb[0].mxu0
        %v4773 = vadd.f32 0.0, %v4772
        %v4774 = vpop.f32.mrb[0].mxu0
        %4775 = vmatprep.mubr.bf16.mxu0 0
        %4776 = vmatmul.mubr.bf16.gmra.mrb[0].mxu0 %v2719
        %v4777 = vpop.f32.mrb[0].mxu0
        %v4778 = vadd.f32 0.0, %v4777
        %v4779 = vpop.f32.mrb[0].mxu0
        %v4780 = vpop.f32.mrb[0].mxu0
        %v4781 = vadd.f32 0.0, %v4780
        %v4782 = vpop.f32.mrb[0].mxu0
        %4783 = vmatprep.mubr.bf16.mxu0 0
        %4784 = vmatmul.mubr.bf16.gmra.mrb[0].mxu0 %v2722
        %v4785 = vpop.f32.mrb[0].mxu0
        %v4786 = vadd.f32 0.0, %v4785
        %v4787 = vpop.f32.mrb[0].mxu0
        %v4788 = vpop.f32.mrb[0].mxu0
        %v4789 = vadd.f32 0.0, %v4788
        %v4790 = vpop.f32.mrb[0].mxu0
        %4791 = vmatprep.mubr.bf16.mxu0 0
        %4792 = vmatmul.mubr.bf16.gmra.mrb[0].mxu0 %v2725
        %v4793 = vpop.f32.mrb[0].mxu0
        %v4794 = vadd.f32 0.0, %v4793
        %v4795 = vpop.f32.mrb[0].mxu0
        %v4796 = vpop.f32.mrb[0].mxu0
        %v4797 = vadd.f32 0.0, %v4796
        %v4798 = vpop.f32.mrb[0].mxu0
        %4799 = vmatprep.mubr.bf16.mxu0 0
        %4800 = vmatmul.mubr.bf16.gmra.mrb[0].mxu0 %v2728
        %v4801 = vpop.f32.mrb[0].mxu0
        %v4802 = vadd.f32 0.0, %v4801
        %v4803 = vpop.f32.mrb[0].mxu0
        %v4804 = vpop.f32.mrb[0].mxu0
        %v4805 = vadd.f32 0.0, %v4804
        %v4806 = vpop.f32.mrb[0].mxu0
        %4807 = vmatprep.mubr.bf16.mxu0 0
        %4808 = vmatmul.mubr.bf16.gmra.mrb[0].mxu0 %v2731
        %v4809 = vpop.f32.mrb[0].mxu0
        %v4810 = vadd.f32 0.0, %v4809
        %v4811 = vpop.f32.mrb[0].mxu0
        %v4812 = vpop.f32.mrb[0].mxu0
        %v4813 = vadd.f32 0.0, %v4812
        %v4814 = vpop.f32.mrb[0].mxu0
        %4815 = vmatprep.mubr.bf16.mxu0 0
        %4816 = vmatmul.mubr.bf16.gmra.mrb[0].mxu0 %v2734
        %v4817 = vpop.f32.mrb[0].mxu0
        %v4818 = vadd.f32 0.0, %v4817
        %v4819 = vpop.f32.mrb[0].mxu0
        %v4820 = vpop.f32.mrb[0].mxu0
        %v4821 = vadd.f32 0.0, %v4820
        %v4822 = vpop.f32.mrb[0].mxu0
        %4823 = vdwg.mxu0
        %vm4824 = vcmask 523264
        %v4825 = vsel %vm4824, %v2778, 0.0
        %v4826 = vsel %vm4824, %v2781, 0.0
        %v4827 = vadd.f32 %v4825, %v4826
        %v4828 = vsel %vm4824, %v2786, 0.0
        %v4829 = vadd.f32 %v4827, %v4828
        %v4830 = vsel %vm4824, %v2789, 0.0
        %v4831 = vadd.f32 %v4829, %v4830
        %v4832 = vsel %vm4824, %v2794, 0.0
        %v4833 = vadd.f32 %v4831, %v4832
        %v4834 = vsel %vm4824, %v2797, 0.0
        %v4835 = vadd.f32 %v4833, %v4834
        %v4836 = vsel %vm4824, %v2802, 0.0
        %v4837 = vadd.f32 %v4835, %v4836
        %v4838 = vsel %vm4824, %v2805, 0.0
        %v4839 = vadd.f32 %v4837, %v4838
        %v4840 = vsel %vm4824, %v2810, 0.0
        %v4841 = vadd.f32 %v4839, %v4840
        %v4842 = vsel %vm4824, %v2813, 0.0
        %v4843 = vadd.f32 %v4841, %v4842
        %v4844 = vsel %vm4824, %v2818, 0.0
        %v4845 = vadd.f32 %v4843, %v4844
        %v4846 = vsel %vm4824, %v2821, 0.0
        %v4847 = vadd.f32 %v4845, %v4846
        %v4848 = vsel %vm4824, %v2826, 0.0
        %v4849 = vadd.f32 %v4847, %v4848
        %v4850 = vsel %vm4824, %v2829, 0.0
        %v4851 = vadd.f32 %v4849, %v4850
        %v4852 = vsel %vm4824, %v2834, 0.0
        %v4853 = vadd.f32 %v4851, %v4852
        %v4854 = vsel %vm4824, %v2837, 0.0
        %v4855 = vadd.f32 %v4853, %v4854
        %v4856 = vsel %vm4824, %v2842, 0.0
        %v4857 = vadd.f32 %v4855, %v4856
        %v4858 = vsel %vm4824, %v2845, 0.0
        %v4859 = vadd.f32 %v4857, %v4858
        %v4860 = vsel %vm4824, %v2850, 0.0
        %v4861 = vadd.f32 %v4859, %v4860
        %v4862 = vsel %vm4824, %v2853, 0.0
        %v4863 = vadd.f32 %v4861, %v4862
        %v4864 = vsel %vm4824, %v2858, 0.0
        %v4865 = vadd.f32 %v4863, %v4864
        %v4866 = vsel %vm4824, %v2861, 0.0
        %v4867 = vadd.f32 %v4865, %v4866
        %v4868 = vsel %vm4824, %v2866, 0.0
        %v4869 = vadd.f32 %v4867, %v4868
        %v4870 = vsel %vm4824, %v2869, 0.0
        %v4871 = vadd.f32 %v4869, %v4870
        %v4872 = vsel %vm4824, %v2874, 0.0
        %v4873 = vadd.f32 %v4871, %v4872
        %v4874 = vsel %vm4824, %v2877, 0.0
        %v4875 = vadd.f32 %v4873, %v4874
        %v4876 = vsel %vm4824, %v2882, 0.0
        %v4877 = vadd.f32 %v4875, %v4876
        %v4878 = vsel %vm4824, %v2885, 0.0
        %v4879 = vadd.f32 %v4877, %v4878
        %v4880 = vsel %vm4824, %v2890, 0.0
        %v4881 = vadd.f32 %v4879, %v4880
        %v4882 = vsel %vm4824, %v2893, 0.0
        %v4883 = vadd.f32 %v4881, %v4882
        %v4884 = vsel %vm4824, %v2898, 0.0
        %v4885 = vadd.f32 %v4883, %v4884
        %v4886 = vsel %vm4824, %v2901, 0.0
        %v4887 = vadd.f32 %v4885, %v4886
        %v4888 = vsel %vm4824, %v2906, 0.0
        %v4889 = vadd.f32 %v4887, %v4888
        %v4890 = vsel %vm4824, %v2909, 0.0
        %v4891 = vadd.f32 %v4889, %v4890
        %v4892 = vsel %vm4824, %v2914, 0.0
        %v4893 = vadd.f32 %v4891, %v4892
        %v4894 = vsel %vm4824, %v2917, 0.0
        %v4895 = vadd.f32 %v4893, %v4894
        %v4896 = vsel %vm4824, %v2922, 0.0
        %v4897 = vadd.f32 %v4895, %v4896
        %v4898 = vsel %vm4824, %v2925, 0.0
        %v4899 = vadd.f32 %v4897, %v4898
        %v4900 = vsel %vm4824, %v2930, 0.0
        %v4901 = vadd.f32 %v4899, %v4900
        %v4902 = vsel %vm4824, %v2933, 0.0
        %v4903 = vadd.f32 %v4901, %v4902
        %v4904 = vsel %vm4824, %v2938, 0.0
        %v4905 = vadd.f32 %v4903, %v4904
        %v4906 = vsel %vm4824, %v2941, 0.0
        %v4907 = vadd.f32 %v4905, %v4906
        %v4908 = vsel %vm4824, %v2946, 0.0
        %v4909 = vadd.f32 %v4907, %v4908
        %v4910 = vsel %vm4824, %v2949, 0.0
        %v4911 = vadd.f32 %v4909, %v4910
        %v4912 = vsel %vm4824, %v2954, 0.0
        %v4913 = vadd.f32 %v4911, %v4912
        %v4914 = vsel %vm4824, %v2957, 0.0
        %v4915 = vadd.f32 %v4913, %v4914
        %v4916 = vsel %vm4824, %v2962, 0.0
        %v4917 = vadd.f32 %v4915, %v4916
        %v4918 = vsel %vm4824, %v2965, 0.0
        %v4919 = vadd.f32 %v4917, %v4918
        %v4920 = vsel %vm4824, %v2970, 0.0
        %v4921 = vadd.f32 %v4919, %v4920
        %v4922 = vsel %vm4824, %v2973, 0.0
        %v4923 = vadd.f32 %v4921, %v4922
        %v4924 = vsel %vm4824, %v2978, 0.0
        %v4925 = vadd.f32 %v4923, %v4924
        %v4926 = vsel %vm4824, %v2981, 0.0
        %v4927 = vadd.f32 %v4925, %v4926
        %v4928 = vsel %vm4824, %v2986, 0.0
        %v4929 = vadd.f32 %v4927, %v4928
        %v4930 = vsel %vm4824, %v2989, 0.0
        %v4931 = vadd.f32 %v4929, %v4930
        %v4932 = vsel %vm4824, %v2994, 0.0
        %v4933 = vadd.f32 %v4931, %v4932
        %v4934 = vsel %vm4824, %v2997, 0.0
        %v4935 = vadd.f32 %v4933, %v4934
        %v4936 = vsel %vm4824, %v3002, 0.0
        %v4937 = vadd.f32 %v4935, %v4936
        %v4938 = vsel %vm4824, %v3005, 0.0
        %v4939 = vadd.f32 %v4937, %v4938
        %v4940 = vsel %vm4824, %v3010, 0.0
        %v4941 = vadd.f32 %v4939, %v4940
        %v4942 = vsel %vm4824, %v3013, 0.0
        %v4943 = vadd.f32 %v4941, %v4942
        %v4944 = vsel %vm4824, %v3018, 0.0
        %v4945 = vadd.f32 %v4943, %v4944
        %v4946 = vsel %vm4824, %v3021, 0.0
        %v4947 = vadd.f32 %v4945, %v4946
        %v4948 = vsel %vm4824, %v3026, 0.0
        %v4949 = vadd.f32 %v4947, %v4948
        %v4950 = vsel %vm4824, %v3029, 0.0
        %v4951 = vadd.f32 %v4949, %v4950
        %v4952 = vsel %vm4824, %v3034, 0.0
        %v4953 = vadd.f32 %v4951, %v4952
        %v4954 = vsel %vm4824, %v3037, 0.0
        %v4955 = vadd.f32 %v4953, %v4954
        %v4956 = vsel %vm4824, %v3042, 0.0
        %v4957 = vadd.f32 %v4955, %v4956
        %v4958 = vsel %vm4824, %v3045, 0.0
        %v4959 = vadd.f32 %v4957, %v4958
        %v4960 = vsel %vm4824, %v3050, 0.0
        %v4961 = vadd.f32 %v4959, %v4960
        %v4962 = vsel %vm4824, %v3053, 0.0
        %v4963 = vadd.f32 %v4961, %v4962
        %v4964 = vsel %vm4824, %v3058, 0.0
        %v4965 = vadd.f32 %v4963, %v4964
        %v4966 = vsel %vm4824, %v3061, 0.0
        %v4967 = vadd.f32 %v4965, %v4966
        %v4968 = vsel %vm4824, %v3066, 0.0
        %v4969 = vadd.f32 %v4967, %v4968
        %v4970 = vsel %vm4824, %v3069, 0.0
        %v4971 = vadd.f32 %v4969, %v4970
        %v4972 = vsel %vm4824, %v3074, 0.0
        %v4973 = vadd.f32 %v4971, %v4972
        %v4974 = vsel %vm4824, %v3077, 0.0
        %v4975 = vadd.f32 %v4973, %v4974
        %v4976 = vsel %vm4824, %v3082, 0.0
        %v4977 = vadd.f32 %v4975, %v4976
        %v4978 = vsel %vm4824, %v3085, 0.0
        %v4979 = vadd.f32 %v4977, %v4978
        %v4980 = vsel %vm4824, %v3090, 0.0
        %v4981 = vadd.f32 %v4979, %v4980
        %v4982 = vsel %vm4824, %v3093, 0.0
        %v4983 = vadd.f32 %v4981, %v4982
        %v4984 = vsel %vm4824, %v3098, 0.0
        %v4985 = vadd.f32 %v4983, %v4984
        %v4986 = vsel %vm4824, %v3101, 0.0
        %v4987 = vadd.f32 %v4985, %v4986
        %v4988 = vsel %vm4824, %v3106, 0.0
        %v4989 = vadd.f32 %v4987, %v4988
        %v4990 = vsel %vm4824, %v3109, 0.0
        %v4991 = vadd.f32 %v4989, %v4990
        %v4992 = vsel %vm4824, %v3114, 0.0
        %v4993 = vadd.f32 %v4991, %v4992
        %v4994 = vsel %vm4824, %v3117, 0.0
        %v4995 = vadd.f32 %v4993, %v4994
        %v4996 = vsel %vm4824, %v3122, 0.0
        %v4997 = vadd.f32 %v4995, %v4996
        %v4998 = vsel %vm4824, %v3125, 0.0
        %v4999 = vadd.f32 %v4997, %v4998
        %v5000 = vsel %vm4824, %v3130, 0.0
        %v5001 = vadd.f32 %v4999, %v5000
        %v5002 = vsel %vm4824, %v3133, 0.0
        %v5003 = vadd.f32 %v5001, %v5002
        %v5004 = vsel %vm4824, %v3138, 0.0
        %v5005 = vadd.f32 %v5003, %v5004
        %v5006 = vsel %vm4824, %v3141, 0.0
        %v5007 = vadd.f32 %v5005, %v5006
        %v5008 = vsel %vm4824, %v3146, 0.0
        %v5009 = vadd.f32 %v5007, %v5008
        %v5010 = vsel %vm4824, %v3149, 0.0
        %v5011 = vadd.f32 %v5009, %v5010
        %v5012 = vsel %vm4824, %v3154, 0.0
        %v5013 = vadd.f32 %v5011, %v5012
        %v5014 = vsel %vm4824, %v3157, 0.0
        %v5015 = vadd.f32 %v5013, %v5014
        %v5016 = vsel %vm4824, %v3162, 0.0
        %v5017 = vadd.f32 %v5015, %v5016
        %v5018 = vsel %vm4824, %v3165, 0.0
        %v5019 = vadd.f32 %v5017, %v5018
        %v5020 = vsel %vm4824, %v3170, 0.0
        %v5021 = vadd.f32 %v5019, %v5020
        %v5022 = vsel %vm4824, %v3173, 0.0
        %v5023 = vadd.f32 %v5021, %v5022
        %v5024 = vsel %vm4824, %v3178, 0.0
        %v5025 = vadd.f32 %v5023, %v5024
        %v5026 = vsel %vm4824, %v3181, 0.0
        %v5027 = vadd.f32 %v5025, %v5026
        %v5028 = vsel %vm4824, %v3186, 0.0
        %v5029 = vadd.f32 %v5027, %v5028
        %v5030 = vsel %vm4824, %v3189, 0.0
        %v5031 = vadd.f32 %v5029, %v5030
        %v5032 = vsel %vm4824, %v3194, 0.0
        %v5033 = vadd.f32 %v5031, %v5032
        %v5034 = vsel %vm4824, %v3197, 0.0
        %v5035 = vadd.f32 %v5033, %v5034
        %v5036 = vsel %vm4824, %v3202, 0.0
        %v5037 = vadd.f32 %v5035, %v5036
        %v5038 = vsel %vm4824, %v3205, 0.0
        %v5039 = vadd.f32 %v5037, %v5038
        %v5040 = vsel %vm4824, %v3210, 0.0
        %v5041 = vadd.f32 %v5039, %v5040
        %v5042 = vsel %vm4824, %v3213, 0.0
        %v5043 = vadd.f32 %v5041, %v5042
        %v5044 = vsel %vm4824, %v3218, 0.0
        %v5045 = vadd.f32 %v5043, %v5044
        %v5046 = vsel %vm4824, %v3221, 0.0
        %v5047 = vadd.f32 %v5045, %v5046
        %v5048 = vsel %vm4824, %v3226, 0.0
        %v5049 = vadd.f32 %v5047, %v5048
        %v5050 = vsel %vm4824, %v3229, 0.0
        %v5051 = vadd.f32 %v5049, %v5050
        %v5052 = vsel %vm4824, %v3234, 0.0
        %v5053 = vadd.f32 %v5051, %v5052
        %v5054 = vsel %vm4824, %v3237, 0.0
        %v5055 = vadd.f32 %v5053, %v5054
        %v5056 = vsel %vm4824, %v3242, 0.0
        %v5057 = vadd.f32 %v5055, %v5056
        %v5058 = vsel %vm4824, %v3245, 0.0
        %v5059 = vadd.f32 %v5057, %v5058
        %v5060 = vsel %vm4824, %v3250, 0.0
        %v5061 = vadd.f32 %v5059, %v5060
        %v5062 = vsel %vm4824, %v3253, 0.0
        %v5063 = vadd.f32 %v5061, %v5062
        %v5064 = vsel %vm4824, %v3258, 0.0
        %v5065 = vadd.f32 %v5063, %v5064
        %v5066 = vsel %vm4824, %v3261, 0.0
        %v5067 = vadd.f32 %v5065, %v5066
        %v5068 = vsel %vm4824, %v3266, 0.0
        %v5069 = vadd.f32 %v5067, %v5068
        %v5070 = vsel %vm4824, %v3269, 0.0
        %v5071 = vadd.f32 %v5069, %v5070
        %v5072 = vsel %vm4824, %v3274, 0.0
        %v5073 = vadd.f32 %v5071, %v5072
        %v5074 = vsel %vm4824, %v3277, 0.0
        %v5075 = vadd.f32 %v5073, %v5074
        %v5076 = vsel %vm4824, %v3282, 0.0
        %v5077 = vadd.f32 %v5075, %v5076
        %v5078 = vsel %vm4824, %v3285, 0.0
        %v5079 = vadd.f32 %v5077, %v5078
        %v5080 = vsel %vm4824, %v3290, 0.0
        %v5081 = vadd.f32 %v5079, %v5080
        %v5082 = vsel %vm4824, %v3293, 0.0
        %v5083 = vadd.f32 %v5081, %v5082
        %v5084 = vsel %vm4824, %v3298, 0.0
        %v5085 = vadd.f32 %v5083, %v5084
        %v5086 = vsel %vm4824, %v3301, 0.0
        %v5087 = vadd.f32 %v5085, %v5086
        %v5088 = vsel %vm4824, %v3306, 0.0
        %v5089 = vadd.f32 %v5087, %v5088
        %v5090 = vsel %vm4824, %v3309, 0.0
        %v5091 = vadd.f32 %v5089, %v5090
        %v5092 = vsel %vm4824, %v3314, 0.0
        %v5093 = vadd.f32 %v5091, %v5092
        %v5094 = vsel %vm4824, %v3317, 0.0
        %v5095 = vadd.f32 %v5093, %v5094
        %v5096 = vsel %vm4824, %v3322, 0.0
        %v5097 = vadd.f32 %v5095, %v5096
        %v5098 = vsel %vm4824, %v3325, 0.0
        %v5099 = vadd.f32 %v5097, %v5098
        %v5100 = vsel %vm4824, %v3330, 0.0
        %v5101 = vadd.f32 %v5099, %v5100
        %v5102 = vsel %vm4824, %v3333, 0.0
        %v5103 = vadd.f32 %v5101, %v5102
        %v5104 = vsel %vm4824, %v3338, 0.0
        %v5105 = vadd.f32 %v5103, %v5104
        %v5106 = vsel %vm4824, %v3341, 0.0
        %v5107 = vadd.f32 %v5105, %v5106
        %v5108 = vsel %vm4824, %v3346, 0.0
        %v5109 = vadd.f32 %v5107, %v5108
        %v5110 = vsel %vm4824, %v3349, 0.0
        %v5111 = vadd.f32 %v5109, %v5110
        %v5112 = vsel %vm4824, %v3354, 0.0
        %v5113 = vadd.f32 %v5111, %v5112
        %v5114 = vsel %vm4824, %v3357, 0.0
        %v5115 = vadd.f32 %v5113, %v5114
        %v5116 = vsel %vm4824, %v3362, 0.0
        %v5117 = vadd.f32 %v5115, %v5116
        %v5118 = vsel %vm4824, %v3365, 0.0
        %v5119 = vadd.f32 %v5117, %v5118
        %v5120 = vsel %vm4824, %v3370, 0.0
        %v5121 = vadd.f32 %v5119, %v5120
        %v5122 = vsel %vm4824, %v3373, 0.0
        %v5123 = vadd.f32 %v5121, %v5122
        %v5124 = vsel %vm4824, %v3378, 0.0
        %v5125 = vadd.f32 %v5123, %v5124
        %v5126 = vsel %vm4824, %v3381, 0.0
        %v5127 = vadd.f32 %v5125, %v5126
        %v5128 = vsel %vm4824, %v3386, 0.0
        %v5129 = vadd.f32 %v5127, %v5128
        %v5130 = vsel %vm4824, %v3389, 0.0
        %v5131 = vadd.f32 %v5129, %v5130
        %v5132 = vsel %vm4824, %v3394, 0.0
        %v5133 = vadd.f32 %v5131, %v5132
        %v5134 = vsel %vm4824, %v3397, 0.0
        %v5135 = vadd.f32 %v5133, %v5134
        %v5136 = vsel %vm4824, %v3402, 0.0
        %v5137 = vadd.f32 %v5135, %v5136
        %v5138 = vsel %vm4824, %v3405, 0.0
        %v5139 = vadd.f32 %v5137, %v5138
        %v5140 = vsel %vm4824, %v3410, 0.0
        %v5141 = vadd.f32 %v5139, %v5140
        %v5142 = vsel %vm4824, %v3413, 0.0
        %v5143 = vadd.f32 %v5141, %v5142
        %v5144 = vsel %vm4824, %v3418, 0.0
        %v5145 = vadd.f32 %v5143, %v5144
        %v5146 = vsel %vm4824, %v3421, 0.0
        %v5147 = vadd.f32 %v5145, %v5146
        %v5148 = vsel %vm4824, %v3426, 0.0
        %v5149 = vadd.f32 %v5147, %v5148
        %v5150 = vsel %vm4824, %v3429, 0.0
        %v5151 = vadd.f32 %v5149, %v5150
        %v5152 = vsel %vm4824, %v3434, 0.0
        %v5153 = vadd.f32 %v5151, %v5152
        %v5154 = vsel %vm4824, %v3437, 0.0
        %v5155 = vadd.f32 %v5153, %v5154
        %v5156 = vsel %vm4824, %v3442, 0.0
        %v5157 = vadd.f32 %v5155, %v5156
        %v5158 = vsel %vm4824, %v3445, 0.0
        %v5159 = vadd.f32 %v5157, %v5158
        %v5160 = vsel %vm4824, %v3450, 0.0
        %v5161 = vadd.f32 %v5159, %v5160
        %v5162 = vsel %vm4824, %v3453, 0.0
        %v5163 = vadd.f32 %v5161, %v5162
        %v5164 = vsel %vm4824, %v3458, 0.0
        %v5165 = vadd.f32 %v5163, %v5164
        %v5166 = vsel %vm4824, %v3461, 0.0
        %v5167 = vadd.f32 %v5165, %v5166
        %v5168 = vsel %vm4824, %v3466, 0.0
        %v5169 = vadd.f32 %v5167, %v5168
        %v5170 = vsel %vm4824, %v3469, 0.0
        %v5171 = vadd.f32 %v5169, %v5170
        %v5172 = vsel %vm4824, %v3474, 0.0
        %v5173 = vadd.f32 %v5171, %v5172
        %v5174 = vsel %vm4824, %v3477, 0.0
        %v5175 = vadd.f32 %v5173, %v5174
        %v5176 = vsel %vm4824, %v3482, 0.0
        %v5177 = vadd.f32 %v5175, %v5176
        %v5178 = vsel %vm4824, %v3485, 0.0
        %v5179 = vadd.f32 %v5177, %v5178
        %v5180 = vsel %vm4824, %v3490, 0.0
        %v5181 = vadd.f32 %v5179, %v5180
        %v5182 = vsel %vm4824, %v3493, 0.0
        %v5183 = vadd.f32 %v5181, %v5182
        %v5184 = vsel %vm4824, %v3498, 0.0
        %v5185 = vadd.f32 %v5183, %v5184
        %v5186 = vsel %vm4824, %v3501, 0.0
        %v5187 = vadd.f32 %v5185, %v5186
        %v5188 = vsel %vm4824, %v3506, 0.0
        %v5189 = vadd.f32 %v5187, %v5188
        %v5190 = vsel %vm4824, %v3509, 0.0
        %v5191 = vadd.f32 %v5189, %v5190
        %v5192 = vsel %vm4824, %v3514, 0.0
        %v5193 = vadd.f32 %v5191, %v5192
        %v5194 = vsel %vm4824, %v3517, 0.0
        %v5195 = vadd.f32 %v5193, %v5194
        %v5196 = vsel %vm4824, %v3522, 0.0
        %v5197 = vadd.f32 %v5195, %v5196
        %v5198 = vsel %vm4824, %v3525, 0.0
        %v5199 = vadd.f32 %v5197, %v5198
        %v5200 = vsel %vm4824, %v3530, 0.0
        %v5201 = vadd.f32 %v5199, %v5200
        %v5202 = vsel %vm4824, %v3533, 0.0
        %v5203 = vadd.f32 %v5201, %v5202
        %v5204 = vsel %vm4824, %v3538, 0.0
        %v5205 = vadd.f32 %v5203, %v5204
        %v5206 = vsel %vm4824, %v3541, 0.0
        %v5207 = vadd.f32 %v5205, %v5206
        %v5208 = vsel %vm4824, %v3546, 0.0
        %v5209 = vadd.f32 %v5207, %v5208
        %v5210 = vsel %vm4824, %v3549, 0.0
        %v5211 = vadd.f32 %v5209, %v5210
        %v5212 = vsel %vm4824, %v3554, 0.0
        %v5213 = vadd.f32 %v5211, %v5212
        %v5214 = vsel %vm4824, %v3557, 0.0
        %v5215 = vadd.f32 %v5213, %v5214
        %v5216 = vsel %vm4824, %v3562, 0.0
        %v5217 = vadd.f32 %v5215, %v5216
        %v5218 = vsel %vm4824, %v3565, 0.0
        %v5219 = vadd.f32 %v5217, %v5218
        %v5220 = vsel %vm4824, %v3570, 0.0
        %v5221 = vadd.f32 %v5219, %v5220
        %v5222 = vsel %vm4824, %v3573, 0.0
        %v5223 = vadd.f32 %v5221, %v5222
        %v5224 = vsel %vm4824, %v3578, 0.0
        %v5225 = vadd.f32 %v5223, %v5224
        %v5226 = vsel %vm4824, %v3581, 0.0
        %v5227 = vadd.f32 %v5225, %v5226
        %v5228 = vsel %vm4824, %v3586, 0.0
        %v5229 = vadd.f32 %v5227, %v5228
        %v5230 = vsel %vm4824, %v3589, 0.0
        %v5231 = vadd.f32 %v5229, %v5230
        %v5232 = vsel %vm4824, %v3594, 0.0
        %v5233 = vadd.f32 %v5231, %v5232
        %v5234 = vsel %vm4824, %v3597, 0.0
        %v5235 = vadd.f32 %v5233, %v5234
        %v5236 = vsel %vm4824, %v3602, 0.0
        %v5237 = vadd.f32 %v5235, %v5236
        %v5238 = vsel %vm4824, %v3605, 0.0
        %v5239 = vadd.f32 %v5237, %v5238
        %v5240 = vsel %vm4824, %v3610, 0.0
        %v5241 = vadd.f32 %v5239, %v5240
        %v5242 = vsel %vm4824, %v3613, 0.0
        %v5243 = vadd.f32 %v5241, %v5242
        %v5244 = vsel %vm4824, %v3618, 0.0
        %v5245 = vadd.f32 %v5243, %v5244
        %v5246 = vsel %vm4824, %v3621, 0.0
        %v5247 = vadd.f32 %v5245, %v5246
        %v5248 = vsel %vm4824, %v3626, 0.0
        %v5249 = vadd.f32 %v5247, %v5248
        %v5250 = vsel %vm4824, %v3629, 0.0
        %v5251 = vadd.f32 %v5249, %v5250
        %v5252 = vsel %vm4824, %v3634, 0.0
        %v5253 = vadd.f32 %v5251, %v5252
        %v5254 = vsel %vm4824, %v3637, 0.0
        %v5255 = vadd.f32 %v5253, %v5254
        %v5256 = vsel %vm4824, %v3642, 0.0
        %v5257 = vadd.f32 %v5255, %v5256
        %v5258 = vsel %vm4824, %v3645, 0.0
        %v5259 = vadd.f32 %v5257, %v5258
        %v5260 = vsel %vm4824, %v3650, 0.0
        %v5261 = vadd.f32 %v5259, %v5260
        %v5262 = vsel %vm4824, %v3653, 0.0
        %v5263 = vadd.f32 %v5261, %v5262
        %v5264 = vsel %vm4824, %v3658, 0.0
        %v5265 = vadd.f32 %v5263, %v5264
        %v5266 = vsel %vm4824, %v3661, 0.0
        %v5267 = vadd.f32 %v5265, %v5266
        %v5268 = vsel %vm4824, %v3666, 0.0
        %v5269 = vadd.f32 %v5267, %v5268
        %v5270 = vsel %vm4824, %v3669, 0.0
        %v5271 = vadd.f32 %v5269, %v5270
        %v5272 = vsel %vm4824, %v3674, 0.0
        %v5273 = vadd.f32 %v5271, %v5272
        %v5274 = vsel %vm4824, %v3677, 0.0
        %v5275 = vadd.f32 %v5273, %v5274
        %v5276 = vsel %vm4824, %v3682, 0.0
        %v5277 = vadd.f32 %v5275, %v5276
        %v5278 = vsel %vm4824, %v3685, 0.0
        %v5279 = vadd.f32 %v5277, %v5278
        %v5280 = vsel %vm4824, %v3690, 0.0
        %v5281 = vadd.f32 %v5279, %v5280
        %v5282 = vsel %vm4824, %v3693, 0.0
        %v5283 = vadd.f32 %v5281, %v5282
        %v5284 = vsel %vm4824, %v3698, 0.0
        %v5285 = vadd.f32 %v5283, %v5284
        %v5286 = vsel %vm4824, %v3701, 0.0
        %v5287 = vadd.f32 %v5285, %v5286
        %v5288 = vsel %vm4824, %v3706, 0.0
        %v5289 = vadd.f32 %v5287, %v5288
        %v5290 = vsel %vm4824, %v3709, 0.0
        %v5291 = vadd.f32 %v5289, %v5290
        %v5292 = vsel %vm4824, %v3714, 0.0
        %v5293 = vadd.f32 %v5291, %v5292
        %v5294 = vsel %vm4824, %v3717, 0.0
        %v5295 = vadd.f32 %v5293, %v5294
        %v5296 = vsel %vm4824, %v3722, 0.0
        %v5297 = vadd.f32 %v5295, %v5296
        %v5298 = vsel %vm4824, %v3725, 0.0
        %v5299 = vadd.f32 %v5297, %v5298
        %v5300 = vsel %vm4824, %v3730, 0.0
        %v5301 = vadd.f32 %v5299, %v5300
        %v5302 = vsel %vm4824, %v3733, 0.0
        %v5303 = vadd.f32 %v5301, %v5302
        %v5304 = vsel %vm4824, %v3738, 0.0
        %v5305 = vadd.f32 %v5303, %v5304
        %v5306 = vsel %vm4824, %v3741, 0.0
        %v5307 = vadd.f32 %v5305, %v5306
        %v5308 = vsel %vm4824, %v3746, 0.0
        %v5309 = vadd.f32 %v5307, %v5308
        %v5310 = vsel %vm4824, %v3749, 0.0
        %v5311 = vadd.f32 %v5309, %v5310
        %v5312 = vsel %vm4824, %v3754, 0.0
        %v5313 = vadd.f32 %v5311, %v5312
        %v5314 = vsel %vm4824, %v3757, 0.0
        %v5315 = vadd.f32 %v5313, %v5314
        %v5316 = vsel %vm4824, %v3762, 0.0
        %v5317 = vadd.f32 %v5315, %v5316
        %v5318 = vsel %vm4824, %v3765, 0.0
        %v5319 = vadd.f32 %v5317, %v5318
        %v5320 = vsel %vm4824, %v3770, 0.0
        %v5321 = vadd.f32 %v5319, %v5320
        %v5322 = vsel %vm4824, %v3773, 0.0
        %v5323 = vadd.f32 %v5321, %v5322
        %v5324 = vsel %vm4824, %v3778, 0.0
        %v5325 = vadd.f32 %v5323, %v5324
        %v5326 = vsel %vm4824, %v3781, 0.0
        %v5327 = vadd.f32 %v5325, %v5326
        %v5328 = vsel %vm4824, %v3786, 0.0
        %v5329 = vadd.f32 %v5327, %v5328
        %v5330 = vsel %vm4824, %v3789, 0.0
        %v5331 = vadd.f32 %v5329, %v5330
        %v5332 = vsel %vm4824, %v3794, 0.0
        %v5333 = vadd.f32 %v5331, %v5332
        %v5334 = vsel %vm4824, %v3797, 0.0
        %v5335 = vadd.f32 %v5333, %v5334
        %v5336 = vsel %vm4824, %v3802, 0.0
        %v5337 = vadd.f32 %v5335, %v5336
        %v5338 = vsel %vm4824, %v3805, 0.0
        %v5339 = vadd.f32 %v5337, %v5338
        %v5340 = vsel %vm4824, %v3810, 0.0
        %v5341 = vadd.f32 %v5339, %v5340
        %v5342 = vsel %vm4824, %v3813, 0.0
        %v5343 = vadd.f32 %v5341, %v5342
        %v5344 = vsel %vm4824, %v3818, 0.0
        %v5345 = vadd.f32 %v5343, %v5344
        %v5346 = vsel %vm4824, %v3821, 0.0
        %v5347 = vadd.f32 %v5345, %v5346
        %v5348 = vsel %vm4824, %v3826, 0.0
        %v5349 = vadd.f32 %v5347, %v5348
        %v5350 = vsel %vm4824, %v3829, 0.0
        %v5351 = vadd.f32 %v5349, %v5350
        %v5352 = vsel %vm4824, %v3834, 0.0
        %v5353 = vadd.f32 %v5351, %v5352
        %v5354 = vsel %vm4824, %v3837, 0.0
        %v5355 = vadd.f32 %v5353, %v5354
        %v5356 = vsel %vm4824, %v3842, 0.0
        %v5357 = vadd.f32 %v5355, %v5356
        %v5358 = vsel %vm4824, %v3845, 0.0
        %v5359 = vadd.f32 %v5357, %v5358
        %v5360 = vsel %vm4824, %v3850, 0.0
        %v5361 = vadd.f32 %v5359, %v5360
        %v5362 = vsel %vm4824, %v3853, 0.0
        %v5363 = vadd.f32 %v5361, %v5362
        %v5364 = vsel %vm4824, %v3858, 0.0
        %v5365 = vadd.f32 %v5363, %v5364
        %v5366 = vsel %vm4824, %v3861, 0.0
        %v5367 = vadd.f32 %v5365, %v5366
        %v5368 = vsel %vm4824, %v3866, 0.0
        %v5369 = vadd.f32 %v5367, %v5368
        %v5370 = vsel %vm4824, %v3869, 0.0
        %v5371 = vadd.f32 %v5369, %v5370
        %v5372 = vsel %vm4824, %v3874, 0.0
        %v5373 = vadd.f32 %v5371, %v5372
        %v5374 = vsel %vm4824, %v3877, 0.0
        %v5375 = vadd.f32 %v5373, %v5374
        %v5376 = vsel %vm4824, %v3882, 0.0
        %v5377 = vadd.f32 %v5375, %v5376
        %v5378 = vsel %vm4824, %v3885, 0.0
        %v5379 = vadd.f32 %v5377, %v5378
        %v5380 = vsel %vm4824, %v3890, 0.0
        %v5381 = vadd.f32 %v5379, %v5380
        %v5382 = vsel %vm4824, %v3893, 0.0
        %v5383 = vadd.f32 %v5381, %v5382
        %v5384 = vsel %vm4824, %v3898, 0.0
        %v5385 = vadd.f32 %v5383, %v5384
        %v5386 = vsel %vm4824, %v3901, 0.0
        %v5387 = vadd.f32 %v5385, %v5386
        %v5388 = vsel %vm4824, %v3906, 0.0
        %v5389 = vadd.f32 %v5387, %v5388
        %v5390 = vsel %vm4824, %v3909, 0.0
        %v5391 = vadd.f32 %v5389, %v5390
        %v5392 = vsel %vm4824, %v3914, 0.0
        %v5393 = vadd.f32 %v5391, %v5392
        %v5394 = vsel %vm4824, %v3917, 0.0
        %v5395 = vadd.f32 %v5393, %v5394
        %v5396 = vsel %vm4824, %v3922, 0.0
        %v5397 = vadd.f32 %v5395, %v5396
        %v5398 = vsel %vm4824, %v3925, 0.0
        %v5399 = vadd.f32 %v5397, %v5398
        %v5400 = vsel %vm4824, %v3930, 0.0
        %v5401 = vadd.f32 %v5399, %v5400
        %v5402 = vsel %vm4824, %v3933, 0.0
        %v5403 = vadd.f32 %v5401, %v5402
        %v5404 = vsel %vm4824, %v3938, 0.0
        %v5405 = vadd.f32 %v5403, %v5404
        %v5406 = vsel %vm4824, %v3941, 0.0
        %v5407 = vadd.f32 %v5405, %v5406
        %v5408 = vsel %vm4824, %v3946, 0.0
        %v5409 = vadd.f32 %v5407, %v5408
        %v5410 = vsel %vm4824, %v3949, 0.0
        %v5411 = vadd.f32 %v5409, %v5410
        %v5412 = vsel %vm4824, %v3954, 0.0
        %v5413 = vadd.f32 %v5411, %v5412
        %v5414 = vsel %vm4824, %v3957, 0.0
        %v5415 = vadd.f32 %v5413, %v5414
        %v5416 = vsel %vm4824, %v3962, 0.0
        %v5417 = vadd.f32 %v5415, %v5416
        %v5418 = vsel %vm4824, %v3965, 0.0
        %v5419 = vadd.f32 %v5417, %v5418
        %v5420 = vsel %vm4824, %v3970, 0.0
        %v5421 = vadd.f32 %v5419, %v5420
        %v5422 = vsel %vm4824, %v3973, 0.0
        %v5423 = vadd.f32 %v5421, %v5422
        %v5424 = vsel %vm4824, %v3978, 0.0
        %v5425 = vadd.f32 %v5423, %v5424
        %v5426 = vsel %vm4824, %v3981, 0.0
        %v5427 = vadd.f32 %v5425, %v5426
        %v5428 = vsel %vm4824, %v3986, 0.0
        %v5429 = vadd.f32 %v5427, %v5428
        %v5430 = vsel %vm4824, %v3989, 0.0
        %v5431 = vadd.f32 %v5429, %v5430
        %v5432 = vsel %vm4824, %v3994, 0.0
        %v5433 = vadd.f32 %v5431, %v5432
        %v5434 = vsel %vm4824, %v3997, 0.0
        %v5435 = vadd.f32 %v5433, %v5434
        %v5436 = vsel %vm4824, %v4002, 0.0
        %v5437 = vadd.f32 %v5435, %v5436
        %v5438 = vsel %vm4824, %v4005, 0.0
        %v5439 = vadd.f32 %v5437, %v5438
        %v5440 = vsel %vm4824, %v4010, 0.0
        %v5441 = vadd.f32 %v5439, %v5440
        %v5442 = vsel %vm4824, %v4013, 0.0
        %v5443 = vadd.f32 %v5441, %v5442
        %v5444 = vsel %vm4824, %v4018, 0.0
        %v5445 = vadd.f32 %v5443, %v5444
        %v5446 = vsel %vm4824, %v4021, 0.0
        %v5447 = vadd.f32 %v5445, %v5446
        %v5448 = vsel %vm4824, %v4026, 0.0
        %v5449 = vadd.f32 %v5447, %v5448
        %v5450 = vsel %vm4824, %v4029, 0.0
        %v5451 = vadd.f32 %v5449, %v5450
        %v5452 = vsel %vm4824, %v4034, 0.0
        %v5453 = vadd.f32 %v5451, %v5452
        %v5454 = vsel %vm4824, %v4037, 0.0
        %v5455 = vadd.f32 %v5453, %v5454
        %v5456 = vsel %vm4824, %v4042, 0.0
        %v5457 = vadd.f32 %v5455, %v5456
        %v5458 = vsel %vm4824, %v4045, 0.0
        %v5459 = vadd.f32 %v5457, %v5458
        %v5460 = vsel %vm4824, %v4050, 0.0
        %v5461 = vadd.f32 %v5459, %v5460
        %v5462 = vsel %vm4824, %v4053, 0.0
        %v5463 = vadd.f32 %v5461, %v5462
        %v5464 = vsel %vm4824, %v4058, 0.0
        %v5465 = vadd.f32 %v5463, %v5464
        %v5466 = vsel %vm4824, %v4061, 0.0
        %v5467 = vadd.f32 %v5465, %v5466
        %v5468 = vsel %vm4824, %v4066, 0.0
        %v5469 = vadd.f32 %v5467, %v5468
        %v5470 = vsel %vm4824, %v4069, 0.0
        %v5471 = vadd.f32 %v5469, %v5470
        %v5472 = vsel %vm4824, %v4074, 0.0
        %v5473 = vadd.f32 %v5471, %v5472
        %v5474 = vsel %vm4824, %v4077, 0.0
        %v5475 = vadd.f32 %v5473, %v5474
        %v5476 = vsel %vm4824, %v4082, 0.0
        %v5477 = vadd.f32 %v5475, %v5476
        %v5478 = vsel %vm4824, %v4085, 0.0
        %v5479 = vadd.f32 %v5477, %v5478
        %v5480 = vsel %vm4824, %v4090, 0.0
        %v5481 = vadd.f32 %v5479, %v5480
        %v5482 = vsel %vm4824, %v4093, 0.0
        %v5483 = vadd.f32 %v5481, %v5482
        %v5484 = vsel %vm4824, %v4098, 0.0
        %v5485 = vadd.f32 %v5483, %v5484
        %v5486 = vsel %vm4824, %v4101, 0.0
        %v5487 = vadd.f32 %v5485, %v5486
        %v5488 = vsel %vm4824, %v4106, 0.0
        %v5489 = vadd.f32 %v5487, %v5488
        %v5490 = vsel %vm4824, %v4109, 0.0
        %v5491 = vadd.f32 %v5489, %v5490
        %v5492 = vsel %vm4824, %v4114, 0.0
        %v5493 = vadd.f32 %v5491, %v5492
        %v5494 = vsel %vm4824, %v4117, 0.0
        %v5495 = vadd.f32 %v5493, %v5494
        %v5496 = vsel %vm4824, %v4122, 0.0
        %v5497 = vadd.f32 %v5495, %v5496
        %v5498 = vsel %vm4824, %v4125, 0.0
        %v5499 = vadd.f32 %v5497, %v5498
        %v5500 = vsel %vm4824, %v4130, 0.0
        %v5501 = vadd.f32 %v5499, %v5500
        %v5502 = vsel %vm4824, %v4133, 0.0
        %v5503 = vadd.f32 %v5501, %v5502
        %v5504 = vsel %vm4824, %v4138, 0.0
        %v5505 = vadd.f32 %v5503, %v5504
        %v5506 = vsel %vm4824, %v4141, 0.0
        %v5507 = vadd.f32 %v5505, %v5506
        %v5508 = vsel %vm4824, %v4146, 0.0
        %v5509 = vadd.f32 %v5507, %v5508
        %v5510 = vsel %vm4824, %v4149, 0.0
        %v5511 = vadd.f32 %v5509, %v5510
        %v5512 = vsel %vm4824, %v4154, 0.0
        %v5513 = vadd.f32 %v5511, %v5512
        %v5514 = vsel %vm4824, %v4157, 0.0
        %v5515 = vadd.f32 %v5513, %v5514
        %v5516 = vsel %vm4824, %v4162, 0.0
        %v5517 = vadd.f32 %v5515, %v5516
        %v5518 = vsel %vm4824, %v4165, 0.0
        %v5519 = vadd.f32 %v5517, %v5518
        %v5520 = vsel %vm4824, %v4170, 0.0
        %v5521 = vadd.f32 %v5519, %v5520
        %v5522 = vsel %vm4824, %v4173, 0.0
        %v5523 = vadd.f32 %v5521, %v5522
        %v5524 = vsel %vm4824, %v4178, 0.0
        %v5525 = vadd.f32 %v5523, %v5524
        %v5526 = vsel %vm4824, %v4181, 0.0
        %v5527 = vadd.f32 %v5525, %v5526
        %v5528 = vsel %vm4824, %v4186, 0.0
        %v5529 = vadd.f32 %v5527, %v5528
        %v5530 = vsel %vm4824, %v4189, 0.0
        %v5531 = vadd.f32 %v5529, %v5530
        %v5532 = vsel %vm4824, %v4194, 0.0
        %v5533 = vadd.f32 %v5531, %v5532
        %v5534 = vsel %vm4824, %v4197, 0.0
        %v5535 = vadd.f32 %v5533, %v5534
        %v5536 = vsel %vm4824, %v4202, 0.0
        %v5537 = vadd.f32 %v5535, %v5536
        %v5538 = vsel %vm4824, %v4205, 0.0
        %v5539 = vadd.f32 %v5537, %v5538
        %v5540 = vsel %vm4824, %v4210, 0.0
        %v5541 = vadd.f32 %v5539, %v5540
        %v5542 = vsel %vm4824, %v4213, 0.0
        %v5543 = vadd.f32 %v5541, %v5542
        %v5544 = vsel %vm4824, %v4218, 0.0
        %v5545 = vadd.f32 %v5543, %v5544
        %v5546 = vsel %vm4824, %v4221, 0.0
        %v5547 = vadd.f32 %v5545, %v5546
        %v5548 = vsel %vm4824, %v4226, 0.0
        %v5549 = vadd.f32 %v5547, %v5548
        %v5550 = vsel %vm4824, %v4229, 0.0
        %v5551 = vadd.f32 %v5549, %v5550
        %v5552 = vsel %vm4824, %v4234, 0.0
        %v5553 = vadd.f32 %v5551, %v5552
        %v5554 = vsel %vm4824, %v4237, 0.0
        %v5555 = vadd.f32 %v5553, %v5554
        %v5556 = vsel %vm4824, %v4242, 0.0
        %v5557 = vadd.f32 %v5555, %v5556
        %v5558 = vsel %vm4824, %v4245, 0.0
        %v5559 = vadd.f32 %v5557, %v5558
        %v5560 = vsel %vm4824, %v4250, 0.0
        %v5561 = vadd.f32 %v5559, %v5560
        %v5562 = vsel %vm4824, %v4253, 0.0
        %v5563 = vadd.f32 %v5561, %v5562
        %v5564 = vsel %vm4824, %v4258, 0.0
        %v5565 = vadd.f32 %v5563, %v5564
        %v5566 = vsel %vm4824, %v4261, 0.0
        %v5567 = vadd.f32 %v5565, %v5566
        %v5568 = vsel %vm4824, %v4266, 0.0
        %v5569 = vadd.f32 %v5567, %v5568
        %v5570 = vsel %vm4824, %v4269, 0.0
        %v5571 = vadd.f32 %v5569, %v5570
        %v5572 = vsel %vm4824, %v4274, 0.0
        %v5573 = vadd.f32 %v5571, %v5572
        %v5574 = vsel %vm4824, %v4277, 0.0
        %v5575 = vadd.f32 %v5573, %v5574
        %v5576 = vsel %vm4824, %v4282, 0.0
        %v5577 = vadd.f32 %v5575, %v5576
        %v5578 = vsel %vm4824, %v4285, 0.0
        %v5579 = vadd.f32 %v5577, %v5578
        %v5580 = vsel %vm4824, %v4290, 0.0
        %v5581 = vadd.f32 %v5579, %v5580
        %v5582 = vsel %vm4824, %v4293, 0.0
        %v5583 = vadd.f32 %v5581, %v5582
        %v5584 = vsel %vm4824, %v4298, 0.0
        %v5585 = vadd.f32 %v5583, %v5584
        %v5586 = vsel %vm4824, %v4301, 0.0
        %v5587 = vadd.f32 %v5585, %v5586
        %v5588 = vsel %vm4824, %v4306, 0.0
        %v5589 = vadd.f32 %v5587, %v5588
        %v5590 = vsel %vm4824, %v4309, 0.0
        %v5591 = vadd.f32 %v5589, %v5590
        %v5592 = vsel %vm4824, %v4314, 0.0
        %v5593 = vadd.f32 %v5591, %v5592
        %v5594 = vsel %vm4824, %v4317, 0.0
        %v5595 = vadd.f32 %v5593, %v5594
        %v5596 = vsel %vm4824, %v4322, 0.0
        %v5597 = vadd.f32 %v5595, %v5596
        %v5598 = vsel %vm4824, %v4325, 0.0
        %v5599 = vadd.f32 %v5597, %v5598
        %v5600 = vsel %vm4824, %v4330, 0.0
        %v5601 = vadd.f32 %v5599, %v5600
        %v5602 = vsel %vm4824, %v4333, 0.0
        %v5603 = vadd.f32 %v5601, %v5602
        %v5604 = vsel %vm4824, %v4338, 0.0
        %v5605 = vadd.f32 %v5603, %v5604
        %v5606 = vsel %vm4824, %v4341, 0.0
        %v5607 = vadd.f32 %v5605, %v5606
        %v5608 = vsel %vm4824, %v4346, 0.0
        %v5609 = vadd.f32 %v5607, %v5608
        %v5610 = vsel %vm4824, %v4349, 0.0
        %v5611 = vadd.f32 %v5609, %v5610
        %v5612 = vsel %vm4824, %v4354, 0.0
        %v5613 = vadd.f32 %v5611, %v5612
        %v5614 = vsel %vm4824, %v4357, 0.0
        %v5615 = vadd.f32 %v5613, %v5614
        %v5616 = vsel %vm4824, %v4362, 0.0
        %v5617 = vadd.f32 %v5615, %v5616
        %v5618 = vsel %vm4824, %v4365, 0.0
        %v5619 = vadd.f32 %v5617, %v5618
        %v5620 = vsel %vm4824, %v4370, 0.0
        %v5621 = vadd.f32 %v5619, %v5620
        %v5622 = vsel %vm4824, %v4373, 0.0
        %v5623 = vadd.f32 %v5621, %v5622
        %v5624 = vsel %vm4824, %v4378, 0.0
        %v5625 = vadd.f32 %v5623, %v5624
        %v5626 = vsel %vm4824, %v4381, 0.0
        %v5627 = vadd.f32 %v5625, %v5626
        %v5628 = vsel %vm4824, %v4386, 0.0
        %v5629 = vadd.f32 %v5627, %v5628
        %v5630 = vsel %vm4824, %v4389, 0.0
        %v5631 = vadd.f32 %v5629, %v5630
        %v5632 = vsel %vm4824, %v4394, 0.0
        %v5633 = vadd.f32 %v5631, %v5632
        %v5634 = vsel %vm4824, %v4397, 0.0
        %v5635 = vadd.f32 %v5633, %v5634
        %v5636 = vsel %vm4824, %v4402, 0.0
        %v5637 = vadd.f32 %v5635, %v5636
        %v5638 = vsel %vm4824, %v4405, 0.0
        %v5639 = vadd.f32 %v5637, %v5638
        %v5640 = vsel %vm4824, %v4410, 0.0
        %v5641 = vadd.f32 %v5639, %v5640
        %v5642 = vsel %vm4824, %v4413, 0.0
        %v5643 = vadd.f32 %v5641, %v5642
        %v5644 = vsel %vm4824, %v4418, 0.0
        %v5645 = vadd.f32 %v5643, %v5644
        %v5646 = vsel %vm4824, %v4421, 0.0
        %v5647 = vadd.f32 %v5645, %v5646
        %v5648 = vsel %vm4824, %v4426, 0.0
        %v5649 = vadd.f32 %v5647, %v5648
        %v5650 = vsel %vm4824, %v4429, 0.0
        %v5651 = vadd.f32 %v5649, %v5650
        %v5652 = vsel %vm4824, %v4434, 0.0
        %v5653 = vadd.f32 %v5651, %v5652
        %v5654 = vsel %vm4824, %v4437, 0.0
        %v5655 = vadd.f32 %v5653, %v5654
        %v5656 = vsel %vm4824, %v4442, 0.0
        %v5657 = vadd.f32 %v5655, %v5656
        %v5658 = vsel %vm4824, %v4445, 0.0
        %v5659 = vadd.f32 %v5657, %v5658
        %v5660 = vsel %vm4824, %v4450, 0.0
        %v5661 = vadd.f32 %v5659, %v5660
        %v5662 = vsel %vm4824, %v4453, 0.0
        %v5663 = vadd.f32 %v5661, %v5662
        %v5664 = vsel %vm4824, %v4458, 0.0
        %v5665 = vadd.f32 %v5663, %v5664
        %v5666 = vsel %vm4824, %v4461, 0.0
        %v5667 = vadd.f32 %v5665, %v5666
        %v5668 = vsel %vm4824, %v4466, 0.0
        %v5669 = vadd.f32 %v5667, %v5668
        %v5670 = vsel %vm4824, %v4469, 0.0
        %v5671 = vadd.f32 %v5669, %v5670
        %v5672 = vsel %vm4824, %v4474, 0.0
        %v5673 = vadd.f32 %v5671, %v5672
        %v5674 = vsel %vm4824, %v4477, 0.0
        %v5675 = vadd.f32 %v5673, %v5674
        %v5676 = vsel %vm4824, %v4482, 0.0
        %v5677 = vadd.f32 %v5675, %v5676
        %v5678 = vsel %vm4824, %v4485, 0.0
        %v5679 = vadd.f32 %v5677, %v5678
        %v5680 = vsel %vm4824, %v4490, 0.0
        %v5681 = vadd.f32 %v5679, %v5680
        %v5682 = vsel %vm4824, %v4493, 0.0
        %v5683 = vadd.f32 %v5681, %v5682
        %v5684 = vsel %vm4824, %v4498, 0.0
        %v5685 = vadd.f32 %v5683, %v5684
        %v5686 = vsel %vm4824, %v4501, 0.0
        %v5687 = vadd.f32 %v5685, %v5686
        %v5688 = vsel %vm4824, %v4506, 0.0
        %v5689 = vadd.f32 %v5687, %v5688
        %v5690 = vsel %vm4824, %v4509, 0.0
        %v5691 = vadd.f32 %v5689, %v5690
        %v5692 = vsel %vm4824, %v4514, 0.0
        %v5693 = vadd.f32 %v5691, %v5692
        %v5694 = vsel %vm4824, %v4517, 0.0
        %v5695 = vadd.f32 %v5693, %v5694
        %v5696 = vsel %vm4824, %v4522, 0.0
        %v5697 = vadd.f32 %v5695, %v5696
        %v5698 = vsel %vm4824, %v4525, 0.0
        %v5699 = vadd.f32 %v5697, %v5698
        %v5700 = vsel %vm4824, %v4530, 0.0
        %v5701 = vadd.f32 %v5699, %v5700
        %v5702 = vsel %vm4824, %v4533, 0.0
        %v5703 = vadd.f32 %v5701, %v5702
        %v5704 = vsel %vm4824, %v4538, 0.0
        %v5705 = vadd.f32 %v5703, %v5704
        %v5706 = vsel %vm4824, %v4541, 0.0
        %v5707 = vadd.f32 %v5705, %v5706
        %v5708 = vsel %vm4824, %v4546, 0.0
        %v5709 = vadd.f32 %v5707, %v5708
        %v5710 = vsel %vm4824, %v4549, 0.0
        %v5711 = vadd.f32 %v5709, %v5710
        %v5712 = vsel %vm4824, %v4554, 0.0
        %v5713 = vadd.f32 %v5711, %v5712
        %v5714 = vsel %vm4824, %v4557, 0.0
        %v5715 = vadd.f32 %v5713, %v5714
        %v5716 = vsel %vm4824, %v4562, 0.0
        %v5717 = vadd.f32 %v5715, %v5716
        %v5718 = vsel %vm4824, %v4565, 0.0
        %v5719 = vadd.f32 %v5717, %v5718
        %v5720 = vsel %vm4824, %v4570, 0.0
        %v5721 = vadd.f32 %v5719, %v5720
        %v5722 = vsel %vm4824, %v4573, 0.0
        %v5723 = vadd.f32 %v5721, %v5722
        %v5724 = vsel %vm4824, %v4578, 0.0
        %v5725 = vadd.f32 %v5723, %v5724
        %v5726 = vsel %vm4824, %v4581, 0.0
        %v5727 = vadd.f32 %v5725, %v5726
        %v5728 = vsel %vm4824, %v4586, 0.0
        %v5729 = vadd.f32 %v5727, %v5728
        %v5730 = vsel %vm4824, %v4589, 0.0
        %v5731 = vadd.f32 %v5729, %v5730
        %v5732 = vsel %vm4824, %v4594, 0.0
        %v5733 = vadd.f32 %v5731, %v5732
        %v5734 = vsel %vm4824, %v4597, 0.0
        %v5735 = vadd.f32 %v5733, %v5734
        %v5736 = vsel %vm4824, %v4602, 0.0
        %v5737 = vadd.f32 %v5735, %v5736
        %v5738 = vsel %vm4824, %v4605, 0.0
        %v5739 = vadd.f32 %v5737, %v5738
        %v5740 = vsel %vm4824, %v4610, 0.0
        %v5741 = vadd.f32 %v5739, %v5740
        %v5742 = vsel %vm4824, %v4613, 0.0
        %v5743 = vadd.f32 %v5741, %v5742
        %v5744 = vsel %vm4824, %v4618, 0.0
        %v5745 = vadd.f32 %v5743, %v5744
        %v5746 = vsel %vm4824, %v4621, 0.0
        %v5747 = vadd.f32 %v5745, %v5746
        %v5748 = vsel %vm4824, %v4626, 0.0
        %v5749 = vadd.f32 %v5747, %v5748
        %v5750 = vsel %vm4824, %v4629, 0.0
        %v5751 = vadd.f32 %v5749, %v5750
        %v5752 = vsel %vm4824, %v4634, 0.0
        %v5753 = vadd.f32 %v5751, %v5752
        %v5754 = vsel %vm4824, %v4637, 0.0
        %v5755 = vadd.f32 %v5753, %v5754
        %v5756 = vsel %vm4824, %v4642, 0.0
        %v5757 = vadd.f32 %v5755, %v5756
        %v5758 = vsel %vm4824, %v4645, 0.0
        %v5759 = vadd.f32 %v5757, %v5758
        %v5760 = vsel %vm4824, %v4650, 0.0
        %v5761 = vadd.f32 %v5759, %v5760
        %v5762 = vsel %vm4824, %v4653, 0.0
        %v5763 = vadd.f32 %v5761, %v5762
        %v5764 = vsel %vm4824, %v4658, 0.0
        %v5765 = vadd.f32 %v5763, %v5764
        %v5766 = vsel %vm4824, %v4661, 0.0
        %v5767 = vadd.f32 %v5765, %v5766
        %v5768 = vsel %vm4824, %v4666, 0.0
        %v5769 = vadd.f32 %v5767, %v5768
        %v5770 = vsel %vm4824, %v4669, 0.0
        %v5771 = vadd.f32 %v5769, %v5770
        %v5772 = vsel %vm4824, %v4674, 0.0
        %v5773 = vadd.f32 %v5771, %v5772
        %v5774 = vsel %vm4824, %v4677, 0.0
        %v5775 = vadd.f32 %v5773, %v5774
        %v5776 = vsel %vm4824, %v4682, 0.0
        %v5777 = vadd.f32 %v5775, %v5776
        %v5778 = vsel %vm4824, %v4685, 0.0
        %v5779 = vadd.f32 %v5777, %v5778
        %v5780 = vsel %vm4824, %v4690, 0.0
        %v5781 = vadd.f32 %v5779, %v5780
        %v5782 = vsel %vm4824, %v4693, 0.0
        %v5783 = vadd.f32 %v5781, %v5782
        %v5784 = vsel %vm4824, %v4698, 0.0
        %v5785 = vadd.f32 %v5783, %v5784
        %v5786 = vsel %vm4824, %v4701, 0.0
        %v5787 = vadd.f32 %v5785, %v5786
        %v5788 = vsel %vm4824, %v4706, 0.0
        %v5789 = vadd.f32 %v5787, %v5788
        %v5790 = vsel %vm4824, %v4709, 0.0
        %v5791 = vadd.f32 %v5789, %v5790
        %v5792 = vsel %vm4824, %v4714, 0.0
        %v5793 = vadd.f32 %v5791, %v5792
        %v5794 = vsel %vm4824, %v4717, 0.0
        %v5795 = vadd.f32 %v5793, %v5794
        %v5796 = vsel %vm4824, %v4722, 0.0
        %v5797 = vadd.f32 %v5795, %v5796
        %v5798 = vsel %vm4824, %v4725, 0.0
        %v5799 = vadd.f32 %v5797, %v5798
        %v5800 = vsel %vm4824, %v4730, 0.0
        %v5801 = vadd.f32 %v5799, %v5800
        %v5802 = vsel %vm4824, %v4733, 0.0
        %v5803 = vadd.f32 %v5801, %v5802
        %v5804 = vsel %vm4824, %v4738, 0.0
        %v5805 = vadd.f32 %v5803, %v5804
        %v5806 = vsel %vm4824, %v4741, 0.0
        %v5807 = vadd.f32 %v5805, %v5806
        %v5808 = vsel %vm4824, %v4746, 0.0
        %v5809 = vadd.f32 %v5807, %v5808
        %v5810 = vsel %vm4824, %v4749, 0.0
        %v5811 = vadd.f32 %v5809, %v5810
        %v5812 = vsel %vm4824, %v4754, 0.0
        %v5813 = vadd.f32 %v5811, %v5812
        %v5814 = vsel %vm4824, %v4757, 0.0
        %v5815 = vadd.f32 %v5813, %v5814
        %v5816 = vsel %vm4824, %v4762, 0.0
        %v5817 = vadd.f32 %v5815, %v5816
        %v5818 = vsel %vm4824, %v4765, 0.0
        %v5819 = vadd.f32 %v5817, %v5818
        %v5820 = vsel %vm4824, %v4770, 0.0
        %v5821 = vadd.f32 %v5819, %v5820
        %v5822 = vsel %vm4824, %v4773, 0.0
        %v5823 = vadd.f32 %v5821, %v5822
        %v5824 = vsel %vm4824, %v4778, 0.0
        %v5825 = vadd.f32 %v5823, %v5824
        %v5826 = vsel %vm4824, %v4781, 0.0
        %v5827 = vadd.f32 %v5825, %v5826
        %v5828 = vsel %vm4824, %v4786, 0.0
        %v5829 = vadd.f32 %v5827, %v5828
        %v5830 = vsel %vm4824, %v4789, 0.0
        %v5831 = vadd.f32 %v5829, %v5830
        %v5832 = vsel %vm4824, %v4794, 0.0
        %v5833 = vadd.f32 %v5831, %v5832
        %v5834 = vsel %vm4824, %v4797, 0.0
        %v5835 = vadd.f32 %v5833, %v5834
        %v5836 = vsel %vm4824, %v4802, 0.0
        %v5837 = vadd.f32 %v5835, %v5836
        %v5838 = vsel %vm4824, %v4805, 0.0
        %v5839 = vadd.f32 %v5837, %v5838
        %v5840 = vsel %vm4824, %v4810, 0.0
        %v5841 = vadd.f32 %v5839, %v5840
        %v5842 = vsel %vm4824, %v4813, 0.0
        %v5843 = vadd.f32 %v5841, %v5842
        %v5844 = vsel %vm4824, %v4818, 0.0
        %v5845 = vadd.f32 %v5843, %v5844
        %v5846 = vsel %vm4824, %v4821, 0.0
        %v5847 = vadd.f32 %v5845, %v5846
        %v5848 = vrot.slane %v5847, 4
        %v5849 = vadd.f32 %v5847, %v5848
        %v5850 = vrot.slane %v5849, 2
        %v5851 = vadd.f32 %v5849, %v5850
        %v5852 = vrot.slane %v5851, 1
        %v5853 = vadd.f32 %v5851, %v5852
        %v5854 = vrcp.pop 4096.0
        %v5855 = vmul.f32 %v5853, %v5854
        %v5856 = vsub.f32 %v2778, %v5855
        %v5857 = vsub.f32 %v2781, %v5855
        %v5858 = vsub.f32 %v2786, %v5855
        %v5859 = vsub.f32 %v2789, %v5855
        %v5860 = vsub.f32 %v2794, %v5855
        %v5861 = vsub.f32 %v2797, %v5855
        %v5862 = vsub.f32 %v2802, %v5855
        %v5863 = vsub.f32 %v2805, %v5855
        %v5864 = vsub.f32 %v2810, %v5855
        %v5865 = vsub.f32 %v2813, %v5855
        %v5866 = vsub.f32 %v2818, %v5855
        %v5867 = vsub.f32 %v2821, %v5855
        %v5868 = vsub.f32 %v2826, %v5855
        %v5869 = vsub.f32 %v2829, %v5855
        %v5870 = vsub.f32 %v2834, %v5855
        %v5871 = vsub.f32 %v2837, %v5855
        %v5872 = vsub.f32 %v2842, %v5855
        %v5873 = vsub.f32 %v2845, %v5855
        %v5874 = vsub.f32 %v2850, %v5855
        %v5875 = vsub.f32 %v2853, %v5855
        %v5876 = vsub.f32 %v2858, %v5855
        %v5877 = vsub.f32 %v2861, %v5855
        %v5878 = vsub.f32 %v2866, %v5855
        %v5879 = vsub.f32 %v2869, %v5855
        %v5880 = vsub.f32 %v2874, %v5855
        %v5881 = vsub.f32 %v2877, %v5855
        %v5882 = vsub.f32 %v2882, %v5855
        %v5883 = vsub.f32 %v2885, %v5855
        %v5884 = vsub.f32 %v2890, %v5855
        %v5885 = vsub.f32 %v2893, %v5855
        %v5886 = vsub.f32 %v2898, %v5855
        %v5887 = vsub.f32 %v2901, %v5855
        %v5888 = vsub.f32 %v2906, %v5855
        %v5889 = vsub.f32 %v2909, %v5855
        %v5890 = vsub.f32 %v2914, %v5855
        %v5891 = vsub.f32 %v2917, %v5855
        %v5892 = vsub.f32 %v2922, %v5855
        %v5893 = vsub.f32 %v2925, %v5855
        %v5894 = vsub.f32 %v2930, %v5855
        %v5895 = vsub.f32 %v2933, %v5855
        %v5896 = vsub.f32 %v2938, %v5855
        %v5897 = vsub.f32 %v2941, %v5855
        %v5898 = vsub.f32 %v2946, %v5855
        %v5899 = vsub.f32 %v2949, %v5855
        %v5900 = vsub.f32 %v2954, %v5855
        %v5901 = vsub.f32 %v2957, %v5855
        %v5902 = vsub.f32 %v2962, %v5855
        %v5903 = vsub.f32 %v2965, %v5855
        %v5904 = vsub.f32 %v2970, %v5855
        %v5905 = vsub.f32 %v2973, %v5855
        %v5906 = vsub.f32 %v2978, %v5855
        %v5907 = vsub.f32 %v2981, %v5855
        %v5908 = vsub.f32 %v2986, %v5855
        %v5909 = vsub.f32 %v2989, %v5855
        %v5910 = vsub.f32 %v2994, %v5855
        %v5911 = vsub.f32 %v2997, %v5855
        %v5912 = vsub.f32 %v3002, %v5855
        %v5913 = vsub.f32 %v3005, %v5855
        %v5914 = vsub.f32 %v3010, %v5855
        %v5915 = vsub.f32 %v3013, %v5855
        %v5916 = vsub.f32 %v3018, %v5855
        %v5917 = vsub.f32 %v3021, %v5855
        %v5918 = vsub.f32 %v3026, %v5855
        %v5919 = vsub.f32 %v3029, %v5855
        %v5920 = vsub.f32 %v3034, %v5855
        %v5921 = vsub.f32 %v3037, %v5855
        %v5922 = vsub.f32 %v3042, %v5855
        %v5923 = vsub.f32 %v3045, %v5855
        %v5924 = vsub.f32 %v3050, %v5855
        %v5925 = vsub.f32 %v3053, %v5855
        %v5926 = vsub.f32 %v3058, %v5855
        %v5927 = vsub.f32 %v3061, %v5855
        %v5928 = vsub.f32 %v3066, %v5855
        %v5929 = vsub.f32 %v3069, %v5855
        %v5930 = vsub.f32 %v3074, %v5855
        %v5931 = vsub.f32 %v3077, %v5855
        %v5932 = vsub.f32 %v3082, %v5855
        %v5933 = vsub.f32 %v3085, %v5855
        %v5934 = vsub.f32 %v3090, %v5855
        %v5935 = vsub.f32 %v3093, %v5855
        %v5936 = vsub.f32 %v3098, %v5855
        %v5937 = vsub.f32 %v3101, %v5855
        %v5938 = vsub.f32 %v3106, %v5855
        %v5939 = vsub.f32 %v3109, %v5855
        %v5940 = vsub.f32 %v3114, %v5855
        %v5941 = vsub.f32 %v3117, %v5855
        %v5942 = vsub.f32 %v3122, %v5855
        %v5943 = vsub.f32 %v3125, %v5855
        %v5944 = vsub.f32 %v3130, %v5855
        %v5945 = vsub.f32 %v3133, %v5855
        %v5946 = vsub.f32 %v3138, %v5855
        %v5947 = vsub.f32 %v3141, %v5855
        %v5948 = vsub.f32 %v3146, %v5855
        %v5949 = vsub.f32 %v3149, %v5855
        %v5950 = vsub.f32 %v3154, %v5855
        %v5951 = vsub.f32 %v3157, %v5855
        %v5952 = vsub.f32 %v3162, %v5855
        %v5953 = vsub.f32 %v3165, %v5855
        %v5954 = vsub.f32 %v3170, %v5855
        %v5955 = vsub.f32 %v3173, %v5855
        %v5956 = vsub.f32 %v3178, %v5855
        %v5957 = vsub.f32 %v3181, %v5855
        %v5958 = vsub.f32 %v3186, %v5855
        %v5959 = vsub.f32 %v3189, %v5855
        %v5960 = vsub.f32 %v3194, %v5855
        %v5961 = vsub.f32 %v3197, %v5855
        %v5962 = vsub.f32 %v3202, %v5855
        %v5963 = vsub.f32 %v3205, %v5855
        %v5964 = vsub.f32 %v3210, %v5855
        %v5965 = vsub.f32 %v3213, %v5855
        %v5966 = vsub.f32 %v3218, %v5855
        %v5967 = vsub.f32 %v3221, %v5855
        %v5968 = vsub.f32 %v3226, %v5855
        %v5969 = vsub.f32 %v3229, %v5855
        %v5970 = vsub.f32 %v3234, %v5855
        %v5971 = vsub.f32 %v3237, %v5855
        %v5972 = vsub.f32 %v3242, %v5855
        %v5973 = vsub.f32 %v3245, %v5855
        %v5974 = vsub.f32 %v3250, %v5855
        %v5975 = vsub.f32 %v3253, %v5855
        %v5976 = vsub.f32 %v3258, %v5855
        %v5977 = vsub.f32 %v3261, %v5855
        %v5978 = vsub.f32 %v3266, %v5855
        %v5979 = vsub.f32 %v3269, %v5855
        %v5980 = vsub.f32 %v3274, %v5855
        %v5981 = vsub.f32 %v3277, %v5855
        %v5982 = vsub.f32 %v3282, %v5855
        %v5983 = vsub.f32 %v3285, %v5855
        %v5984 = vsub.f32 %v3290, %v5855
        %v5985 = vsub.f32 %v3293, %v5855
        %v5986 = vsub.f32 %v3298, %v5855
        %v5987 = vsub.f32 %v3301, %v5855
        %v5988 = vsub.f32 %v3306, %v5855
        %v5989 = vsub.f32 %v3309, %v5855
        %v5990 = vsub.f32 %v3314, %v5855
        %v5991 = vsub.f32 %v3317, %v5855
        %v5992 = vsub.f32 %v3322, %v5855
        %v5993 = vsub.f32 %v3325, %v5855
        %v5994 = vsub.f32 %v3330, %v5855
        %v5995 = vsub.f32 %v3333, %v5855
        %v5996 = vsub.f32 %v3338, %v5855
        %v5997 = vsub.f32 %v3341, %v5855
        %v5998 = vsub.f32 %v3346, %v5855
        %v5999 = vsub.f32 %v3349, %v5855
        %v6000 = vsub.f32 %v3354, %v5855
        %v6001 = vsub.f32 %v3357, %v5855
        %v6002 = vsub.f32 %v3362, %v5855
        %v6003 = vsub.f32 %v3365, %v5855
        %v6004 = vsub.f32 %v3370, %v5855
        %v6005 = vsub.f32 %v3373, %v5855
        %v6006 = vsub.f32 %v3378, %v5855
        %v6007 = vsub.f32 %v3381, %v5855
        %v6008 = vsub.f32 %v3386, %v5855
        %v6009 = vsub.f32 %v3389, %v5855
        %v6010 = vsub.f32 %v3394, %v5855
        %v6011 = vsub.f32 %v3397, %v5855
        %v6012 = vsub.f32 %v3402, %v5855
        %v6013 = vsub.f32 %v3405, %v5855
        %v6014 = vsub.f32 %v3410, %v5855
        %v6015 = vsub.f32 %v3413, %v5855
        %v6016 = vsub.f32 %v3418, %v5855
        %v6017 = vsub.f32 %v3421, %v5855
        %v6018 = vsub.f32 %v3426, %v5855
        %v6019 = vsub.f32 %v3429, %v5855
        %v6020 = vsub.f32 %v3434, %v5855
        %v6021 = vsub.f32 %v3437, %v5855
        %v6022 = vsub.f32 %v3442, %v5855
        %v6023 = vsub.f32 %v3445, %v5855
        %v6024 = vsub.f32 %v3450, %v5855
        %v6025 = vsub.f32 %v3453, %v5855
        %v6026 = vsub.f32 %v3458, %v5855
        %v6027 = vsub.f32 %v3461, %v5855
        %v6028 = vsub.f32 %v3466, %v5855
        %v6029 = vsub.f32 %v3469, %v5855
        %v6030 = vsub.f32 %v3474, %v5855
        %v6031 = vsub.f32 %v3477, %v5855
        %v6032 = vsub.f32 %v3482, %v5855
        %v6033 = vsub.f32 %v3485, %v5855
        %v6034 = vsub.f32 %v3490, %v5855
        %v6035 = vsub.f32 %v3493, %v5855
        %v6036 = vsub.f32 %v3498, %v5855
        %v6037 = vsub.f32 %v3501, %v5855
        %v6038 = vsub.f32 %v3506, %v5855
        %v6039 = vsub.f32 %v3509, %v5855
        %v6040 = vsub.f32 %v3514, %v5855
        %v6041 = vsub.f32 %v3517, %v5855
        %v6042 = vsub.f32 %v3522, %v5855
        %v6043 = vsub.f32 %v3525, %v5855
        %v6044 = vsub.f32 %v3530, %v5855
        %v6045 = vsub.f32 %v3533, %v5855
        %v6046 = vsub.f32 %v3538, %v5855
        %v6047 = vsub.f32 %v3541, %v5855
        %v6048 = vsub.f32 %v3546, %v5855
        %v6049 = vsub.f32 %v3549, %v5855
        %v6050 = vsub.f32 %v3554, %v5855
        %v6051 = vsub.f32 %v3557, %v5855
        %v6052 = vsub.f32 %v3562, %v5855
        %v6053 = vsub.f32 %v3565, %v5855
        %v6054 = vsub.f32 %v3570, %v5855
        %v6055 = vsub.f32 %v3573, %v5855
        %v6056 = vsub.f32 %v3578, %v5855
        %v6057 = vsub.f32 %v3581, %v5855
        %v6058 = vsub.f32 %v3586, %v5855
        %v6059 = vsub.f32 %v3589, %v5855
        %v6060 = vsub.f32 %v3594, %v5855
        %v6061 = vsub.f32 %v3597, %v5855
        %v6062 = vsub.f32 %v3602, %v5855
        %v6063 = vsub.f32 %v3605, %v5855
        %v6064 = vsub.f32 %v3610, %v5855
        %v6065 = vsub.f32 %v3613, %v5855
        %v6066 = vsub.f32 %v3618, %v5855
        %v6067 = vsub.f32 %v3621, %v5855
        %v6068 = vsub.f32 %v3626, %v5855
        %v6069 = vsub.f32 %v3629, %v5855
        %v6070 = vsub.f32 %v3634, %v5855
        %v6071 = vsub.f32 %v3637, %v5855
        %v6072 = vsub.f32 %v3642, %v5855
        %v6073 = vsub.f32 %v3645, %v5855
        %v6074 = vsub.f32 %v3650, %v5855
        %v6075 = vsub.f32 %v3653, %v5855
        %v6076 = vsub.f32 %v3658, %v5855
        %v6077 = vsub.f32 %v3661, %v5855
        %v6078 = vsub.f32 %v3666, %v5855
        %v6079 = vsub.f32 %v3669, %v5855
        %v6080 = vsub.f32 %v3674, %v5855
        %v6081 = vsub.f32 %v3677, %v5855
        %v6082 = vsub.f32 %v3682, %v5855
        %v6083 = vsub.f32 %v3685, %v5855
        %v6084 = vsub.f32 %v3690, %v5855
        %v6085 = vsub.f32 %v3693, %v5855
        %v6086 = vsub.f32 %v3698, %v5855
        %v6087 = vsub.f32 %v3701, %v5855
        %v6088 = vsub.f32 %v3706, %v5855
        %v6089 = vsub.f32 %v3709, %v5855
        %v6090 = vsub.f32 %v3714, %v5855
        %v6091 = vsub.f32 %v3717, %v5855
        %v6092 = vsub.f32 %v3722, %v5855
        %v6093 = vsub.f32 %v3725, %v5855
        %v6094 = vsub.f32 %v3730, %v5855
        %v6095 = vsub.f32 %v3733, %v5855
        %v6096 = vsub.f32 %v3738, %v5855
        %v6097 = vsub.f32 %v3741, %v5855
        %v6098 = vsub.f32 %v3746, %v5855
        %v6099 = vsub.f32 %v3749, %v5855
        %v6100 = vsub.f32 %v3754, %v5855
        %v6101 = vsub.f32 %v3757, %v5855
        %v6102 = vsub.f32 %v3762, %v5855
        %v6103 = vsub.f32 %v3765, %v5855
        %v6104 = vsub.f32 %v3770, %v5855
        %v6105 = vsub.f32 %v3773, %v5855
        %v6106 = vsub.f32 %v3778, %v5855
        %v6107 = vsub.f32 %v3781, %v5855
        %v6108 = vsub.f32 %v3786, %v5855
        %v6109 = vsub.f32 %v3789, %v5855
        %v6110 = vsub.f32 %v3794, %v5855
        %v6111 = vsub.f32 %v3797, %v5855
        %v6112 = vsub.f32 %v3802, %v5855
        %v6113 = vsub.f32 %v3805, %v5855
        %v6114 = vsub.f32 %v3810, %v5855
        %v6115 = vsub.f32 %v3813, %v5855
        %v6116 = vsub.f32 %v3818, %v5855
        %v6117 = vsub.f32 %v3821, %v5855
        %v6118 = vsub.f32 %v3826, %v5855
        %v6119 = vsub.f32 %v3829, %v5855
        %v6120 = vsub.f32 %v3834, %v5855
        %v6121 = vsub.f32 %v3837, %v5855
        %v6122 = vsub.f32 %v3842, %v5855
        %v6123 = vsub.f32 %v3845, %v5855
        %v6124 = vsub.f32 %v3850, %v5855
        %v6125 = vsub.f32 %v3853, %v5855
        %v6126 = vsub.f32 %v3858, %v5855
        %v6127 = vsub.f32 %v3861, %v5855
        %v6128 = vsub.f32 %v3866, %v5855
        %v6129 = vsub.f32 %v3869, %v5855
        %v6130 = vsub.f32 %v3874, %v5855
        %v6131 = vsub.f32 %v3877, %v5855
        %v6132 = vsub.f32 %v3882, %v5855
        %v6133 = vsub.f32 %v3885, %v5855
        %v6134 = vsub.f32 %v3890, %v5855
        %v6135 = vsub.f32 %v3893, %v5855
        %v6136 = vsub.f32 %v3898, %v5855
        %v6137 = vsub.f32 %v3901, %v5855
        %v6138 = vsub.f32 %v3906, %v5855
        %v6139 = vsub.f32 %v3909, %v5855
        %v6140 = vsub.f32 %v3914, %v5855
        %v6141 = vsub.f32 %v3917, %v5855
        %v6142 = vsub.f32 %v3922, %v5855
        %v6143 = vsub.f32 %v3925, %v5855
        %v6144 = vsub.f32 %v3930, %v5855
        %v6145 = vsub.f32 %v3933, %v5855
        %v6146 = vsub.f32 %v3938, %v5855
        %v6147 = vsub.f32 %v3941, %v5855
        %v6148 = vsub.f32 %v3946, %v5855
        %v6149 = vsub.f32 %v3949, %v5855
        %v6150 = vsub.f32 %v3954, %v5855
        %v6151 = vsub.f32 %v3957, %v5855
        %v6152 = vsub.f32 %v3962, %v5855
        %v6153 = vsub.f32 %v3965, %v5855
        %v6154 = vsub.f32 %v3970, %v5855
        %v6155 = vsub.f32 %v3973, %v5855
        %v6156 = vsub.f32 %v3978, %v5855
        %v6157 = vsub.f32 %v3981, %v5855
        %v6158 = vsub.f32 %v3986, %v5855
        %v6159 = vsub.f32 %v3989, %v5855
        %v6160 = vsub.f32 %v3994, %v5855
        %v6161 = vsub.f32 %v3997, %v5855
        %v6162 = vsub.f32 %v4002, %v5855
        %v6163 = vsub.f32 %v4005, %v5855
        %v6164 = vsub.f32 %v4010, %v5855
        %v6165 = vsub.f32 %v4013, %v5855
        %v6166 = vsub.f32 %v4018, %v5855
        %v6167 = vsub.f32 %v4021, %v5855
        %v6168 = vsub.f32 %v4026, %v5855
        %v6169 = vsub.f32 %v4029, %v5855
        %v6170 = vsub.f32 %v4034, %v5855
        %v6171 = vsub.f32 %v4037, %v5855
        %v6172 = vsub.f32 %v4042, %v5855
        %v6173 = vsub.f32 %v4045, %v5855
        %v6174 = vsub.f32 %v4050, %v5855
        %v6175 = vsub.f32 %v4053, %v5855
        %v6176 = vsub.f32 %v4058, %v5855
        %v6177 = vsub.f32 %v4061, %v5855
        %v6178 = vsub.f32 %v4066, %v5855
        %v6179 = vsub.f32 %v4069, %v5855
        %v6180 = vsub.f32 %v4074, %v5855
        %v6181 = vsub.f32 %v4077, %v5855
        %v6182 = vsub.f32 %v4082, %v5855
        %v6183 = vsub.f32 %v4085, %v5855
        %v6184 = vsub.f32 %v4090, %v5855
        %v6185 = vsub.f32 %v4093, %v5855
        %v6186 = vsub.f32 %v4098, %v5855
        %v6187 = vsub.f32 %v4101, %v5855
        %v6188 = vsub.f32 %v4106, %v5855
        %v6189 = vsub.f32 %v4109, %v5855
        %v6190 = vsub.f32 %v4114, %v5855
        %v6191 = vsub.f32 %v4117, %v5855
        %v6192 = vsub.f32 %v4122, %v5855
        %v6193 = vsub.f32 %v4125, %v5855
        %v6194 = vsub.f32 %v4130, %v5855
        %v6195 = vsub.f32 %v4133, %v5855
        %v6196 = vsub.f32 %v4138, %v5855
        %v6197 = vsub.f32 %v4141, %v5855
        %v6198 = vsub.f32 %v4146, %v5855
        %v6199 = vsub.f32 %v4149, %v5855
        %v6200 = vsub.f32 %v4154, %v5855
        %v6201 = vsub.f32 %v4157, %v5855
        %v6202 = vsub.f32 %v4162, %v5855
        %v6203 = vsub.f32 %v4165, %v5855
        %v6204 = vsub.f32 %v4170, %v5855
        %v6205 = vsub.f32 %v4173, %v5855
        %v6206 = vsub.f32 %v4178, %v5855
        %v6207 = vsub.f32 %v4181, %v5855
        %v6208 = vsub.f32 %v4186, %v5855
        %v6209 = vsub.f32 %v4189, %v5855
        %v6210 = vsub.f32 %v4194, %v5855
        %v6211 = vsub.f32 %v4197, %v5855
        %v6212 = vsub.f32 %v4202, %v5855
        %v6213 = vsub.f32 %v4205, %v5855
        %v6214 = vsub.f32 %v4210, %v5855
        %v6215 = vsub.f32 %v4213, %v5855
        %v6216 = vsub.f32 %v4218, %v5855
        %v6217 = vsub.f32 %v4221, %v5855
        %v6218 = vsub.f32 %v4226, %v5855
        %v6219 = vsub.f32 %v4229, %v5855
        %v6220 = vsub.f32 %v4234, %v5855
        %v6221 = vsub.f32 %v4237, %v5855
        %v6222 = vsub.f32 %v4242, %v5855
        %v6223 = vsub.f32 %v4245, %v5855
        %v6224 = vsub.f32 %v4250, %v5855
        %v6225 = vsub.f32 %v4253, %v5855
        %v6226 = vsub.f32 %v4258, %v5855
        %v6227 = vsub.f32 %v4261, %v5855
        %v6228 = vsub.f32 %v4266, %v5855
        %v6229 = vsub.f32 %v4269, %v5855
        %v6230 = vsub.f32 %v4274, %v5855
        %v6231 = vsub.f32 %v4277, %v5855
        %v6232 = vsub.f32 %v4282, %v5855
        %v6233 = vsub.f32 %v4285, %v5855
        %v6234 = vsub.f32 %v4290, %v5855
        %v6235 = vsub.f32 %v4293, %v5855
        %v6236 = vsub.f32 %v4298, %v5855
        %v6237 = vsub.f32 %v4301, %v5855
        %v6238 = vsub.f32 %v4306, %v5855
        %v6239 = vsub.f32 %v4309, %v5855
        %v6240 = vsub.f32 %v4314, %v5855
        %v6241 = vsub.f32 %v4317, %v5855
        %v6242 = vsub.f32 %v4322, %v5855
        %v6243 = vsub.f32 %v4325, %v5855
        %v6244 = vsub.f32 %v4330, %v5855
        %v6245 = vsub.f32 %v4333, %v5855
        %v6246 = vsub.f32 %v4338, %v5855
        %v6247 = vsub.f32 %v4341, %v5855
        %v6248 = vsub.f32 %v4346, %v5855
        %v6249 = vsub.f32 %v4349, %v5855
        %v6250 = vsub.f32 %v4354, %v5855
        %v6251 = vsub.f32 %v4357, %v5855
        %v6252 = vsub.f32 %v4362, %v5855
        %v6253 = vsub.f32 %v4365, %v5855
        %v6254 = vsub.f32 %v4370, %v5855
        %v6255 = vsub.f32 %v4373, %v5855
        %v6256 = vsub.f32 %v4378, %v5855
        %v6257 = vsub.f32 %v4381, %v5855
        %v6258 = vsub.f32 %v4386, %v5855
        %v6259 = vsub.f32 %v4389, %v5855
        %v6260 = vsub.f32 %v4394, %v5855
        %v6261 = vsub.f32 %v4397, %v5855
        %v6262 = vsub.f32 %v4402, %v5855
        %v6263 = vsub.f32 %v4405, %v5855
        %v6264 = vsub.f32 %v4410, %v5855
        %v6265 = vsub.f32 %v4413, %v5855
        %v6266 = vsub.f32 %v4418, %v5855
        %v6267 = vsub.f32 %v4421, %v5855
        %v6268 = vsub.f32 %v4426, %v5855
        %v6269 = vsub.f32 %v4429, %v5855
        %v6270 = vsub.f32 %v4434, %v5855
        %v6271 = vsub.f32 %v4437, %v5855
        %v6272 = vsub.f32 %v4442, %v5855
        %v6273 = vsub.f32 %v4445, %v5855
        %v6274 = vsub.f32 %v4450, %v5855
        %v6275 = vsub.f32 %v4453, %v5855
        %v6276 = vsub.f32 %v4458, %v5855
        %v6277 = vsub.f32 %v4461, %v5855
        %v6278 = vsub.f32 %v4466, %v5855
        %v6279 = vsub.f32 %v4469, %v5855
        %v6280 = vsub.f32 %v4474, %v5855
        %v6281 = vsub.f32 %v4477, %v5855
        %v6282 = vsub.f32 %v4482, %v5855
        %v6283 = vsub.f32 %v4485, %v5855
        %v6284 = vsub.f32 %v4490, %v5855
        %v6285 = vsub.f32 %v4493, %v5855
        %v6286 = vsub.f32 %v4498, %v5855
        %v6287 = vsub.f32 %v4501, %v5855
        %v6288 = vsub.f32 %v4506, %v5855
        %v6289 = vsub.f32 %v4509, %v5855
        %v6290 = vsub.f32 %v4514, %v5855
        %v6291 = vsub.f32 %v4517, %v5855
        %v6292 = vsub.f32 %v4522, %v5855
        %v6293 = vsub.f32 %v4525, %v5855
        %v6294 = vsub.f32 %v4530, %v5855
        %v6295 = vsub.f32 %v4533, %v5855
        %v6296 = vsub.f32 %v4538, %v5855
        %v6297 = vsub.f32 %v4541, %v5855
        %v6298 = vsub.f32 %v4546, %v5855
        %v6299 = vsub.f32 %v4549, %v5855
        %v6300 = vsub.f32 %v4554, %v5855
        %v6301 = vsub.f32 %v4557, %v5855
        %v6302 = vsub.f32 %v4562, %v5855
        %v6303 = vsub.f32 %v4565, %v5855
        %v6304 = vsub.f32 %v4570, %v5855
        %v6305 = vsub.f32 %v4573, %v5855
        %v6306 = vsub.f32 %v4578, %v5855
        %v6307 = vsub.f32 %v4581, %v5855
        %v6308 = vsub.f32 %v4586, %v5855
        %v6309 = vsub.f32 %v4589, %v5855
        %v6310 = vsub.f32 %v4594, %v5855
        %v6311 = vsub.f32 %v4597, %v5855
        %v6312 = vsub.f32 %v4602, %v5855
        %v6313 = vsub.f32 %v4605, %v5855
        %v6314 = vsub.f32 %v4610, %v5855
        %v6315 = vsub.f32 %v4613, %v5855
        %v6316 = vsub.f32 %v4618, %v5855
        %v6317 = vsub.f32 %v4621, %v5855
        %v6318 = vsub.f32 %v4626, %v5855
        %v6319 = vsub.f32 %v4629, %v5855
        %v6320 = vsub.f32 %v4634, %v5855
        %v6321 = vsub.f32 %v4637, %v5855
        %v6322 = vsub.f32 %v4642, %v5855
        %v6323 = vsub.f32 %v4645, %v5855
        %v6324 = vsub.f32 %v4650, %v5855
        %v6325 = vsub.f32 %v4653, %v5855
        %v6326 = vsub.f32 %v4658, %v5855
        %v6327 = vsub.f32 %v4661, %v5855
        %v6328 = vsub.f32 %v4666, %v5855
        %v6329 = vsub.f32 %v4669, %v5855
        %v6330 = vsub.f32 %v4674, %v5855
        %v6331 = vsub.f32 %v4677, %v5855
        %v6332 = vsub.f32 %v4682, %v5855
        %v6333 = vsub.f32 %v4685, %v5855
        %v6334 = vsub.f32 %v4690, %v5855
        %v6335 = vsub.f32 %v4693, %v5855
        %v6336 = vsub.f32 %v4698, %v5855
        %v6337 = vsub.f32 %v4701, %v5855
        %v6338 = vsub.f32 %v4706, %v5855
        %v6339 = vsub.f32 %v4709, %v5855
        %v6340 = vsub.f32 %v4714, %v5855
        %v6341 = vsub.f32 %v4717, %v5855
        %v6342 = vsub.f32 %v4722, %v5855
        %v6343 = vsub.f32 %v4725, %v5855
        %v6344 = vsub.f32 %v4730, %v5855
        %v6345 = vsub.f32 %v4733, %v5855
        %v6346 = vsub.f32 %v4738, %v5855
        %v6347 = vsub.f32 %v4741, %v5855
        %v6348 = vsub.f32 %v4746, %v5855
        %v6349 = vsub.f32 %v4749, %v5855
        %v6350 = vsub.f32 %v4754, %v5855
        %v6351 = vsub.f32 %v4757, %v5855
        %v6352 = vsub.f32 %v4762, %v5855
        %v6353 = vsub.f32 %v4765, %v5855
        %v6354 = vsub.f32 %v4770, %v5855
        %v6355 = vsub.f32 %v4773, %v5855
        %v6356 = vsub.f32 %v4778, %v5855
        %v6357 = vsub.f32 %v4781, %v5855
        %v6358 = vsub.f32 %v4786, %v5855
        %v6359 = vsub.f32 %v4789, %v5855
        %v6360 = vsub.f32 %v4794, %v5855
        %v6361 = vsub.f32 %v4797, %v5855
        %v6362 = vsub.f32 %v4802, %v5855
        %v6363 = vsub.f32 %v4805, %v5855
        %v6364 = vsub.f32 %v4810, %v5855
        %v6365 = vsub.f32 %v4813, %v5855
        %v6366 = vsub.f32 %v4818, %v5855
        %v6367 = vsub.f32 %v4821, %v5855
        %v6368 = vmul.f32 %v5856, %v5856
        %v6369 = vmul.f32 %v5857, %v5857
        %v6370 = vmul.f32 %v5858, %v5858
        %v6371 = vmul.f32 %v5859, %v5859
        %v6372 = vmul.f32 %v5860, %v5860
        %v6373 = vmul.f32 %v5861, %v5861
        %v6374 = vmul.f32 %v5862, %v5862
        %v6375 = vmul.f32 %v5863, %v5863
        %v6376 = vmul.f32 %v5864, %v5864
        %v6377 = vmul.f32 %v5865, %v5865
        %v6378 = vmul.f32 %v5866, %v5866
        %v6379 = vmul.f32 %v5867, %v5867
        %v6380 = vmul.f32 %v5868, %v5868
        %v6381 = vmul.f32 %v5869, %v5869
        %v6382 = vmul.f32 %v5870, %v5870
        %v6383 = vmul.f32 %v5871, %v5871
        %v6384 = vmul.f32 %v5872, %v5872
        %v6385 = vmul.f32 %v5873, %v5873
        %v6386 = vmul.f32 %v5874, %v5874
        %v6387 = vmul.f32 %v5875, %v5875
        %v6388 = vmul.f32 %v5876, %v5876
        %v6389 = vmul.f32 %v5877, %v5877
        %v6390 = vmul.f32 %v5878, %v5878
        %v6391 = vmul.f32 %v5879, %v5879
        %v6392 = vmul.f32 %v5880, %v5880
        %v6393 = vmul.f32 %v5881, %v5881
        %v6394 = vmul.f32 %v5882, %v5882
        %v6395 = vmul.f32 %v5883, %v5883
        %v6396 = vmul.f32 %v5884, %v5884
        %v6397 = vmul.f32 %v5885, %v5885
        %v6398 = vmul.f32 %v5886, %v5886
        %v6399 = vmul.f32 %v5887, %v5887
        %v6400 = vmul.f32 %v5888, %v5888
        %v6401 = vmul.f32 %v5889, %v5889
        %v6402 = vmul.f32 %v5890, %v5890
        %v6403 = vmul.f32 %v5891, %v5891
        %v6404 = vmul.f32 %v5892, %v5892
        %v6405 = vmul.f32 %v5893, %v5893
        %v6406 = vmul.f32 %v5894, %v5894
        %v6407 = vmul.f32 %v5895, %v5895
        %v6408 = vmul.f32 %v5896, %v5896
        %v6409 = vmul.f32 %v5897, %v5897
        %v6410 = vmul.f32 %v5898, %v5898
        %v6411 = vmul.f32 %v5899, %v5899
        %v6412 = vmul.f32 %v5900, %v5900
        %v6413 = vmul.f32 %v5901, %v5901
        %v6414 = vmul.f32 %v5902, %v5902
        %v6415 = vmul.f32 %v5903, %v5903
        %v6416 = vmul.f32 %v5904, %v5904
        %v6417 = vmul.f32 %v5905, %v5905
        %v6418 = vmul.f32 %v5906, %v5906
        %v6419 = vmul.f32 %v5907, %v5907
        %v6420 = vmul.f32 %v5908, %v5908
        %v6421 = vmul.f32 %v5909, %v5909
        %v6422 = vmul.f32 %v5910, %v5910
        %v6423 = vmul.f32 %v5911, %v5911
        %v6424 = vmul.f32 %v5912, %v5912
        %v6425 = vmul.f32 %v5913, %v5913
        %v6426 = vmul.f32 %v5914, %v5914
        %v6427 = vmul.f32 %v5915, %v5915
        %v6428 = vmul.f32 %v5916, %v5916
        %v6429 = vmul.f32 %v5917, %v5917
        %v6430 = vmul.f32 %v5918, %v5918
        %v6431 = vmul.f32 %v5919, %v5919
        %v6432 = vmul.f32 %v5920, %v5920
        %v6433 = vmul.f32 %v5921, %v5921
        %v6434 = vmul.f32 %v5922, %v5922
        %v6435 = vmul.f32 %v5923, %v5923
        %v6436 = vmul.f32 %v5924, %v5924
        %v6437 = vmul.f32 %v5925, %v5925
        %v6438 = vmul.f32 %v5926, %v5926
        %v6439 = vmul.f32 %v5927, %v5927
        %v6440 = vmul.f32 %v5928, %v5928
        %v6441 = vmul.f32 %v5929, %v5929
        %v6442 = vmul.f32 %v5930, %v5930
        %v6443 = vmul.f32 %v5931, %v5931
        %v6444 = vmul.f32 %v5932, %v5932
        %v6445 = vmul.f32 %v5933, %v5933
        %v6446 = vmul.f32 %v5934, %v5934
        %v6447 = vmul.f32 %v5935, %v5935
        %v6448 = vmul.f32 %v5936, %v5936
        %v6449 = vmul.f32 %v5937, %v5937
        %v6450 = vmul.f32 %v5938, %v5938
        %v6451 = vmul.f32 %v5939, %v5939
        %v6452 = vmul.f32 %v5940, %v5940
        %v6453 = vmul.f32 %v5941, %v5941
        %v6454 = vmul.f32 %v5942, %v5942
        %v6455 = vmul.f32 %v5943, %v5943
        %v6456 = vmul.f32 %v5944, %v5944
        %v6457 = vmul.f32 %v5945, %v5945
        %v6458 = vmul.f32 %v5946, %v5946
        %v6459 = vmul.f32 %v5947, %v5947
        %v6460 = vmul.f32 %v5948, %v5948
        %v6461 = vmul.f32 %v5949, %v5949
        %v6462 = vmul.f32 %v5950, %v5950
        %v6463 = vmul.f32 %v5951, %v5951
        %v6464 = vmul.f32 %v5952, %v5952
        %v6465 = vmul.f32 %v5953, %v5953
        %v6466 = vmul.f32 %v5954, %v5954
        %v6467 = vmul.f32 %v5955, %v5955
        %v6468 = vmul.f32 %v5956, %v5956
        %v6469 = vmul.f32 %v5957, %v5957
        %v6470 = vmul.f32 %v5958, %v5958
        %v6471 = vmul.f32 %v5959, %v5959
        %v6472 = vmul.f32 %v5960, %v5960
        %v6473 = vmul.f32 %v5961, %v5961
        %v6474 = vmul.f32 %v5962, %v5962
        %v6475 = vmul.f32 %v5963, %v5963
        %v6476 = vmul.f32 %v5964, %v5964
        %v6477 = vmul.f32 %v5965, %v5965
        %v6478 = vmul.f32 %v5966, %v5966
        %v6479 = vmul.f32 %v5967, %v5967
        %v6480 = vmul.f32 %v5968, %v5968
        %v6481 = vmul.f32 %v5969, %v5969
        %v6482 = vmul.f32 %v5970, %v5970
        %v6483 = vmul.f32 %v5971, %v5971
        %v6484 = vmul.f32 %v5972, %v5972
        %v6485 = vmul.f32 %v5973, %v5973
        %v6486 = vmul.f32 %v5974, %v5974
        %v6487 = vmul.f32 %v5975, %v5975
        %v6488 = vmul.f32 %v5976, %v5976
        %v6489 = vmul.f32 %v5977, %v5977
        %v6490 = vmul.f32 %v5978, %v5978
        %v6491 = vmul.f32 %v5979, %v5979
        %v6492 = vmul.f32 %v5980, %v5980
        %v6493 = vmul.f32 %v5981, %v5981
        %v6494 = vmul.f32 %v5982, %v5982
        %v6495 = vmul.f32 %v5983, %v5983
        %v6496 = vmul.f32 %v5984, %v5984
        %v6497 = vmul.f32 %v5985, %v5985
        %v6498 = vmul.f32 %v5986, %v5986
        %v6499 = vmul.f32 %v5987, %v5987
        %v6500 = vmul.f32 %v5988, %v5988
        %v6501 = vmul.f32 %v5989, %v5989
        %v6502 = vmul.f32 %v5990, %v5990
        %v6503 = vmul.f32 %v5991, %v5991
        %v6504 = vmul.f32 %v5992, %v5992
        %v6505 = vmul.f32 %v5993, %v5993
        %v6506 = vmul.f32 %v5994, %v5994
        %v6507 = vmul.f32 %v5995, %v5995
        %v6508 = vmul.f32 %v5996, %v5996
        %v6509 = vmul.f32 %v5997, %v5997
        %v6510 = vmul.f32 %v5998, %v5998
        %v6511 = vmul.f32 %v5999, %v5999
        %v6512 = vmul.f32 %v6000, %v6000
        %v6513 = vmul.f32 %v6001, %v6001
        %v6514 = vmul.f32 %v6002, %v6002
        %v6515 = vmul.f32 %v6003, %v6003
        %v6516 = vmul.f32 %v6004, %v6004
        %v6517 = vmul.f32 %v6005, %v6005
        %v6518 = vmul.f32 %v6006, %v6006
        %v6519 = vmul.f32 %v6007, %v6007
        %v6520 = vmul.f32 %v6008, %v6008
        %v6521 = vmul.f32 %v6009, %v6009
        %v6522 = vmul.f32 %v6010, %v6010
        %v6523 = vmul.f32 %v6011, %v6011
        %v6524 = vmul.f32 %v6012, %v6012
        %v6525 = vmul.f32 %v6013, %v6013
        %v6526 = vmul.f32 %v6014, %v6014
        %v6527 = vmul.f32 %v6015, %v6015
        %v6528 = vmul.f32 %v6016, %v6016
        %v6529 = vmul.f32 %v6017, %v6017
        %v6530 = vmul.f32 %v6018, %v6018
        %v6531 = vmul.f32 %v6019, %v6019
        %v6532 = vmul.f32 %v6020, %v6020
        %v6533 = vmul.f32 %v6021, %v6021
        %v6534 = vmul.f32 %v6022, %v6022
        %v6535 = vmul.f32 %v6023, %v6023
        %v6536 = vmul.f32 %v6024, %v6024
        %v6537 = vmul.f32 %v6025, %v6025
        %v6538 = vmul.f32 %v6026, %v6026
        %v6539 = vmul.f32 %v6027, %v6027
        %v6540 = vmul.f32 %v6028, %v6028
        %v6541 = vmul.f32 %v6029, %v6029
        %v6542 = vmul.f32 %v6030, %v6030
        %v6543 = vmul.f32 %v6031, %v6031
        %v6544 = vmul.f32 %v6032, %v6032
        %v6545 = vmul.f32 %v6033, %v6033
        %v6546 = vmul.f32 %v6034, %v6034
        %v6547 = vmul.f32 %v6035, %v6035
        %v6548 = vmul.f32 %v6036, %v6036
        %v6549 = vmul.f32 %v6037, %v6037
        %v6550 = vmul.f32 %v6038, %v6038
        %v6551 = vmul.f32 %v6039, %v6039
        %v6552 = vmul.f32 %v6040, %v6040
        %v6553 = vmul.f32 %v6041, %v6041
        %v6554 = vmul.f32 %v6042, %v6042
        %v6555 = vmul.f32 %v6043, %v6043
        %v6556 = vmul.f32 %v6044, %v6044
        %v6557 = vmul.f32 %v6045, %v6045
        %v6558 = vmul.f32 %v6046, %v6046
        %v6559 = vmul.f32 %v6047, %v6047
        %v6560 = vmul.f32 %v6048, %v6048
        %v6561 = vmul.f32 %v6049, %v6049
        %v6562 = vmul.f32 %v6050, %v6050
        %v6563 = vmul.f32 %v6051, %v6051
        %v6564 = vmul.f32 %v6052, %v6052
        %v6565 = vmul.f32 %v6053, %v6053
        %v6566 = vmul.f32 %v6054, %v6054
        %v6567 = vmul.f32 %v6055, %v6055
        %v6568 = vmul.f32 %v6056, %v6056
        %v6569 = vmul.f32 %v6057, %v6057
        %v6570 = vmul.f32 %v6058, %v6058
        %v6571 = vmul.f32 %v6059, %v6059
        %v6572 = vmul.f32 %v6060, %v6060
        %v6573 = vmul.f32 %v6061, %v6061
        %v6574 = vmul.f32 %v6062, %v6062
        %v6575 = vmul.f32 %v6063, %v6063
        %v6576 = vmul.f32 %v6064, %v6064
        %v6577 = vmul.f32 %v6065, %v6065
        %v6578 = vmul.f32 %v6066, %v6066
        %v6579 = vmul.f32 %v6067, %v6067
        %v6580 = vmul.f32 %v6068, %v6068
        %v6581 = vmul.f32 %v6069, %v6069
        %v6582 = vmul.f32 %v6070, %v6070
        %v6583 = vmul.f32 %v6071, %v6071
        %v6584 = vmul.f32 %v6072, %v6072
        %v6585 = vmul.f32 %v6073, %v6073
        %v6586 = vmul.f32 %v6074, %v6074
        %v6587 = vmul.f32 %v6075, %v6075
        %v6588 = vmul.f32 %v6076, %v6076
        %v6589 = vmul.f32 %v6077, %v6077
        %v6590 = vmul.f32 %v6078, %v6078
        %v6591 = vmul.f32 %v6079, %v6079
        %v6592 = vmul.f32 %v6080, %v6080
        %v6593 = vmul.f32 %v6081, %v6081
        %v6594 = vmul.f32 %v6082, %v6082
        %v6595 = vmul.f32 %v6083, %v6083
        %v6596 = vmul.f32 %v6084, %v6084
        %v6597 = vmul.f32 %v6085, %v6085
        %v6598 = vmul.f32 %v6086, %v6086
        %v6599 = vmul.f32 %v6087, %v6087
        %v6600 = vmul.f32 %v6088, %v6088
        %v6601 = vmul.f32 %v6089, %v6089
        %v6602 = vmul.f32 %v6090, %v6090
        %v6603 = vmul.f32 %v6091, %v6091
        %v6604 = vmul.f32 %v6092, %v6092
        %v6605 = vmul.f32 %v6093, %v6093
        %v6606 = vmul.f32 %v6094, %v6094
        %v6607 = vmul.f32 %v6095, %v6095
        %v6608 = vmul.f32 %v6096, %v6096
        %v6609 = vmul.f32 %v6097, %v6097
        %v6610 = vmul.f32 %v6098, %v6098
        %v6611 = vmul.f32 %v6099, %v6099
        %v6612 = vmul.f32 %v6100, %v6100
        %v6613 = vmul.f32 %v6101, %v6101
        %v6614 = vmul.f32 %v6102, %v6102
        %v6615 = vmul.f32 %v6103, %v6103
        %v6616 = vmul.f32 %v6104, %v6104
        %v6617 = vmul.f32 %v6105, %v6105
        %v6618 = vmul.f32 %v6106, %v6106
        %v6619 = vmul.f32 %v6107, %v6107
        %v6620 = vmul.f32 %v6108, %v6108
        %v6621 = vmul.f32 %v6109, %v6109
        %v6622 = vmul.f32 %v6110, %v6110
        %v6623 = vmul.f32 %v6111, %v6111
        %v6624 = vmul.f32 %v6112, %v6112
        %v6625 = vmul.f32 %v6113, %v6113
        %v6626 = vmul.f32 %v6114, %v6114
        %v6627 = vmul.f32 %v6115, %v6115
        %v6628 = vmul.f32 %v6116, %v6116
        %v6629 = vmul.f32 %v6117, %v6117
        %v6630 = vmul.f32 %v6118, %v6118
        %v6631 = vmul.f32 %v6119, %v6119
        %v6632 = vmul.f32 %v6120, %v6120
        %v6633 = vmul.f32 %v6121, %v6121
        %v6634 = vmul.f32 %v6122, %v6122
        %v6635 = vmul.f32 %v6123, %v6123
        %v6636 = vmul.f32 %v6124, %v6124
        %v6637 = vmul.f32 %v6125, %v6125
        %v6638 = vmul.f32 %v6126, %v6126
        %v6639 = vmul.f32 %v6127, %v6127
        %v6640 = vmul.f32 %v6128, %v6128
        %v6641 = vmul.f32 %v6129, %v6129
        %v6642 = vmul.f32 %v6130, %v6130
        %v6643 = vmul.f32 %v6131, %v6131
        %v6644 = vmul.f32 %v6132, %v6132
        %v6645 = vmul.f32 %v6133, %v6133
        %v6646 = vmul.f32 %v6134, %v6134
        %v6647 = vmul.f32 %v6135, %v6135
        %v6648 = vmul.f32 %v6136, %v6136
        %v6649 = vmul.f32 %v6137, %v6137
        %v6650 = vmul.f32 %v6138, %v6138
        %v6651 = vmul.f32 %v6139, %v6139
        %v6652 = vmul.f32 %v6140, %v6140
        %v6653 = vmul.f32 %v6141, %v6141
        %v6654 = vmul.f32 %v6142, %v6142
        %v6655 = vmul.f32 %v6143, %v6143
        %v6656 = vmul.f32 %v6144, %v6144
        %v6657 = vmul.f32 %v6145, %v6145
        %v6658 = vmul.f32 %v6146, %v6146
        %v6659 = vmul.f32 %v6147, %v6147
        %v6660 = vmul.f32 %v6148, %v6148
        %v6661 = vmul.f32 %v6149, %v6149
        %v6662 = vmul.f32 %v6150, %v6150
        %v6663 = vmul.f32 %v6151, %v6151
        %v6664 = vmul.f32 %v6152, %v6152
        %v6665 = vmul.f32 %v6153, %v6153
        %v6666 = vmul.f32 %v6154, %v6154
        %v6667 = vmul.f32 %v6155, %v6155
        %v6668 = vmul.f32 %v6156, %v6156
        %v6669 = vmul.f32 %v6157, %v6157
        %v6670 = vmul.f32 %v6158, %v6158
        %v6671 = vmul.f32 %v6159, %v6159
        %v6672 = vmul.f32 %v6160, %v6160
        %v6673 = vmul.f32 %v6161, %v6161
        %v6674 = vmul.f32 %v6162, %v6162
        %v6675 = vmul.f32 %v6163, %v6163
        %v6676 = vmul.f32 %v6164, %v6164
        %v6677 = vmul.f32 %v6165, %v6165
        %v6678 = vmul.f32 %v6166, %v6166
        %v6679 = vmul.f32 %v6167, %v6167
        %v6680 = vmul.f32 %v6168, %v6168
        %v6681 = vmul.f32 %v6169, %v6169
        %v6682 = vmul.f32 %v6170, %v6170
        %v6683 = vmul.f32 %v6171, %v6171
        %v6684 = vmul.f32 %v6172, %v6172
        %v6685 = vmul.f32 %v6173, %v6173
        %v6686 = vmul.f32 %v6174, %v6174
        %v6687 = vmul.f32 %v6175, %v6175
        %v6688 = vmul.f32 %v6176, %v6176
        %v6689 = vmul.f32 %v6177, %v6177
        %v6690 = vmul.f32 %v6178, %v6178
        %v6691 = vmul.f32 %v6179, %v6179
        %v6692 = vmul.f32 %v6180, %v6180
        %v6693 = vmul.f32 %v6181, %v6181
        %v6694 = vmul.f32 %v6182, %v6182
        %v6695 = vmul.f32 %v6183, %v6183
        %v6696 = vmul.f32 %v6184, %v6184
        %v6697 = vmul.f32 %v6185, %v6185
        %v6698 = vmul.f32 %v6186, %v6186
        %v6699 = vmul.f32 %v6187, %v6187
        %v6700 = vmul.f32 %v6188, %v6188
        %v6701 = vmul.f32 %v6189, %v6189
        %v6702 = vmul.f32 %v6190, %v6190
        %v6703 = vmul.f32 %v6191, %v6191
        %v6704 = vmul.f32 %v6192, %v6192
        %v6705 = vmul.f32 %v6193, %v6193
        %v6706 = vmul.f32 %v6194, %v6194
        %v6707 = vmul.f32 %v6195, %v6195
        %v6708 = vmul.f32 %v6196, %v6196
        %v6709 = vmul.f32 %v6197, %v6197
        %v6710 = vmul.f32 %v6198, %v6198
        %v6711 = vmul.f32 %v6199, %v6199
        %v6712 = vmul.f32 %v6200, %v6200
        %v6713 = vmul.f32 %v6201, %v6201
        %v6714 = vmul.f32 %v6202, %v6202
        %v6715 = vmul.f32 %v6203, %v6203
        %v6716 = vmul.f32 %v6204, %v6204
        %v6717 = vmul.f32 %v6205, %v6205
        %v6718 = vmul.f32 %v6206, %v6206
        %v6719 = vmul.f32 %v6207, %v6207
        %v6720 = vmul.f32 %v6208, %v6208
        %v6721 = vmul.f32 %v6209, %v6209
        %v6722 = vmul.f32 %v6210, %v6210
        %v6723 = vmul.f32 %v6211, %v6211
        %v6724 = vmul.f32 %v6212, %v6212
        %v6725 = vmul.f32 %v6213, %v6213
        %v6726 = vmul.f32 %v6214, %v6214
        %v6727 = vmul.f32 %v6215, %v6215
        %v6728 = vmul.f32 %v6216, %v6216
        %v6729 = vmul.f32 %v6217, %v6217
        %v6730 = vmul.f32 %v6218, %v6218
        %v6731 = vmul.f32 %v6219, %v6219
        %v6732 = vmul.f32 %v6220, %v6220
        %v6733 = vmul.f32 %v6221, %v6221
        %v6734 = vmul.f32 %v6222, %v6222
        %v6735 = vmul.f32 %v6223, %v6223
        %v6736 = vmul.f32 %v6224, %v6224
        %v6737 = vmul.f32 %v6225, %v6225
        %v6738 = vmul.f32 %v6226, %v6226
        %v6739 = vmul.f32 %v6227, %v6227
        %v6740 = vmul.f32 %v6228, %v6228
        %v6741 = vmul.f32 %v6229, %v6229
        %v6742 = vmul.f32 %v6230, %v6230
        %v6743 = vmul.f32 %v6231, %v6231
        %v6744 = vmul.f32 %v6232, %v6232
        %v6745 = vmul.f32 %v6233, %v6233
        %v6746 = vmul.f32 %v6234, %v6234
        %v6747 = vmul.f32 %v6235, %v6235
        %v6748 = vmul.f32 %v6236, %v6236
        %v6749 = vmul.f32 %v6237, %v6237
        %v6750 = vmul.f32 %v6238, %v6238
        %v6751 = vmul.f32 %v6239, %v6239
        %v6752 = vmul.f32 %v6240, %v6240
        %v6753 = vmul.f32 %v6241, %v6241
        %v6754 = vmul.f32 %v6242, %v6242
        %v6755 = vmul.f32 %v6243, %v6243
        %v6756 = vmul.f32 %v6244, %v6244
        %v6757 = vmul.f32 %v6245, %v6245
        %v6758 = vmul.f32 %v6246, %v6246
        %v6759 = vmul.f32 %v6247, %v6247
        %v6760 = vmul.f32 %v6248, %v6248
        %v6761 = vmul.f32 %v6249, %v6249
        %v6762 = vmul.f32 %v6250, %v6250
        %v6763 = vmul.f32 %v6251, %v6251
        %v6764 = vmul.f32 %v6252, %v6252
        %v6765 = vmul.f32 %v6253, %v6253
        %v6766 = vmul.f32 %v6254, %v6254
        %v6767 = vmul.f32 %v6255, %v6255
        %v6768 = vmul.f32 %v6256, %v6256
        %v6769 = vmul.f32 %v6257, %v6257
        %v6770 = vmul.f32 %v6258, %v6258
        %v6771 = vmul.f32 %v6259, %v6259
        %v6772 = vmul.f32 %v6260, %v6260
        %v6773 = vmul.f32 %v6261, %v6261
        %v6774 = vmul.f32 %v6262, %v6262
        %v6775 = vmul.f32 %v6263, %v6263
        %v6776 = vmul.f32 %v6264, %v6264
        %v6777 = vmul.f32 %v6265, %v6265
        %v6778 = vmul.f32 %v6266, %v6266
        %v6779 = vmul.f32 %v6267, %v6267
        %v6780 = vmul.f32 %v6268, %v6268
        %v6781 = vmul.f32 %v6269, %v6269
        %v6782 = vmul.f32 %v6270, %v6270
        %v6783 = vmul.f32 %v6271, %v6271
        %v6784 = vmul.f32 %v6272, %v6272
        %v6785 = vmul.f32 %v6273, %v6273
        %v6786 = vmul.f32 %v6274, %v6274
        %v6787 = vmul.f32 %v6275, %v6275
        %v6788 = vmul.f32 %v6276, %v6276
        %v6789 = vmul.f32 %v6277, %v6277
        %v6790 = vmul.f32 %v6278, %v6278
        %v6791 = vmul.f32 %v6279, %v6279
        %v6792 = vmul.f32 %v6280, %v6280
        %v6793 = vmul.f32 %v6281, %v6281
        %v6794 = vmul.f32 %v6282, %v6282
        %v6795 = vmul.f32 %v6283, %v6283
        %v6796 = vmul.f32 %v6284, %v6284
        %v6797 = vmul.f32 %v6285, %v6285
        %v6798 = vmul.f32 %v6286, %v6286
        %v6799 = vmul.f32 %v6287, %v6287
        %v6800 = vmul.f32 %v6288, %v6288
        %v6801 = vmul.f32 %v6289, %v6289
        %v6802 = vmul.f32 %v6290, %v6290
        %v6803 = vmul.f32 %v6291, %v6291
        %v6804 = vmul.f32 %v6292, %v6292
        %v6805 = vmul.f32 %v6293, %v6293
        %v6806 = vmul.f32 %v6294, %v6294
        %v6807 = vmul.f32 %v6295, %v6295
        %v6808 = vmul.f32 %v6296, %v6296
        %v6809 = vmul.f32 %v6297, %v6297
        %v6810 = vmul.f32 %v6298, %v6298
        %v6811 = vmul.f32 %v6299, %v6299
        %v6812 = vmul.f32 %v6300, %v6300
        %v6813 = vmul.f32 %v6301, %v6301
        %v6814 = vmul.f32 %v6302, %v6302
        %v6815 = vmul.f32 %v6303, %v6303
        %v6816 = vmul.f32 %v6304, %v6304
        %v6817 = vmul.f32 %v6305, %v6305
        %v6818 = vmul.f32 %v6306, %v6306
        %v6819 = vmul.f32 %v6307, %v6307
        %v6820 = vmul.f32 %v6308, %v6308
        %v6821 = vmul.f32 %v6309, %v6309
        %v6822 = vmul.f32 %v6310, %v6310
        %v6823 = vmul.f32 %v6311, %v6311
        %v6824 = vmul.f32 %v6312, %v6312
        %v6825 = vmul.f32 %v6313, %v6313
        %v6826 = vmul.f32 %v6314, %v6314
        %v6827 = vmul.f32 %v6315, %v6315
        %v6828 = vmul.f32 %v6316, %v6316
        %v6829 = vmul.f32 %v6317, %v6317
        %v6830 = vmul.f32 %v6318, %v6318
        %v6831 = vmul.f32 %v6319, %v6319
        %v6832 = vmul.f32 %v6320, %v6320
        %v6833 = vmul.f32 %v6321, %v6321
        %v6834 = vmul.f32 %v6322, %v6322
        %v6835 = vmul.f32 %v6323, %v6323
        %v6836 = vmul.f32 %v6324, %v6324
        %v6837 = vmul.f32 %v6325, %v6325
        %v6838 = vmul.f32 %v6326, %v6326
        %v6839 = vmul.f32 %v6327, %v6327
        %v6840 = vmul.f32 %v6328, %v6328
        %v6841 = vmul.f32 %v6329, %v6329
        %v6842 = vmul.f32 %v6330, %v6330
        %v6843 = vmul.f32 %v6331, %v6331
        %v6844 = vmul.f32 %v6332, %v6332
        %v6845 = vmul.f32 %v6333, %v6333
        %v6846 = vmul.f32 %v6334, %v6334
        %v6847 = vmul.f32 %v6335, %v6335
        %v6848 = vmul.f32 %v6336, %v6336
        %v6849 = vmul.f32 %v6337, %v6337
        %v6850 = vmul.f32 %v6338, %v6338
        %v6851 = vmul.f32 %v6339, %v6339
        %v6852 = vmul.f32 %v6340, %v6340
        %v6853 = vmul.f32 %v6341, %v6341
        %v6854 = vmul.f32 %v6342, %v6342
        %v6855 = vmul.f32 %v6343, %v6343
        %v6856 = vmul.f32 %v6344, %v6344
        %v6857 = vmul.f32 %v6345, %v6345
        %v6858 = vmul.f32 %v6346, %v6346
        %v6859 = vmul.f32 %v6347, %v6347
        %v6860 = vmul.f32 %v6348, %v6348
        %v6861 = vmul.f32 %v6349, %v6349
        %v6862 = vmul.f32 %v6350, %v6350
        %v6863 = vmul.f32 %v6351, %v6351
        %v6864 = vmul.f32 %v6352, %v6352
        %v6865 = vmul.f32 %v6353, %v6353
        %v6866 = vmul.f32 %v6354, %v6354
        %v6867 = vmul.f32 %v6355, %v6355
        %v6868 = vmul.f32 %v6356, %v6356
        %v6869 = vmul.f32 %v6357, %v6357
        %v6870 = vmul.f32 %v6358, %v6358
        %v6871 = vmul.f32 %v6359, %v6359
        %v6872 = vmul.f32 %v6360, %v6360
        %v6873 = vmul.f32 %v6361, %v6361
        %v6874 = vmul.f32 %v6362, %v6362
        %v6875 = vmul.f32 %v6363, %v6363
        %v6876 = vmul.f32 %v6364, %v6364
        %v6877 = vmul.f32 %v6365, %v6365
        %v6878 = vmul.f32 %v6366, %v6366
        %v6879 = vmul.f32 %v6367, %v6367
        %v6880 = vsel %vm4824, %v6368, 0.0
        %v6881 = vsel %vm4824, %v6369, 0.0
        %v6882 = vadd.f32 %v6880, %v6881
        %v6883 = vsel %vm4824, %v6370, 0.0
        %v6884 = vadd.f32 %v6882, %v6883
        %v6885 = vsel %vm4824, %v6371, 0.0
        %v6886 = vadd.f32 %v6884, %v6885
        %v6887 = vsel %vm4824, %v6372, 0.0
        %v6888 = vadd.f32 %v6886, %v6887
        %v6889 = vsel %vm4824, %v6373, 0.0
        %v6890 = vadd.f32 %v6888, %v6889
        %v6891 = vsel %vm4824, %v6374, 0.0
        %v6892 = vadd.f32 %v6890, %v6891
        %v6893 = vsel %vm4824, %v6375, 0.0
        %v6894 = vadd.f32 %v6892, %v6893
        %v6895 = vsel %vm4824, %v6376, 0.0
        %v6896 = vadd.f32 %v6894, %v6895
        %v6897 = vsel %vm4824, %v6377, 0.0
        %v6898 = vadd.f32 %v6896, %v6897
        %v6899 = vsel %vm4824, %v6378, 0.0
        %v6900 = vadd.f32 %v6898, %v6899
        %v6901 = vsel %vm4824, %v6379, 0.0
        %v6902 = vadd.f32 %v6900, %v6901
        %v6903 = vsel %vm4824, %v6380, 0.0
        %v6904 = vadd.f32 %v6902, %v6903
        %v6905 = vsel %vm4824, %v6381, 0.0
        %v6906 = vadd.f32 %v6904, %v6905
        %v6907 = vsel %vm4824, %v6382, 0.0
        %v6908 = vadd.f32 %v6906, %v6907
        %v6909 = vsel %vm4824, %v6383, 0.0
        %v6910 = vadd.f32 %v6908, %v6909
        %v6911 = vsel %vm4824, %v6384, 0.0
        %v6912 = vadd.f32 %v6910, %v6911
        %v6913 = vsel %vm4824, %v6385, 0.0
        %v6914 = vadd.f32 %v6912, %v6913
        %v6915 = vsel %vm4824, %v6386, 0.0
        %v6916 = vadd.f32 %v6914, %v6915
        %v6917 = vsel %vm4824, %v6387, 0.0
        %v6918 = vadd.f32 %v6916, %v6917
        %v6919 = vsel %vm4824, %v6388, 0.0
        %v6920 = vadd.f32 %v6918, %v6919
        %v6921 = vsel %vm4824, %v6389, 0.0
        %v6922 = vadd.f32 %v6920, %v6921
        %v6923 = vsel %vm4824, %v6390, 0.0
        %v6924 = vadd.f32 %v6922, %v6923
        %v6925 = vsel %vm4824, %v6391, 0.0
        %v6926 = vadd.f32 %v6924, %v6925
        %v6927 = vsel %vm4824, %v6392, 0.0
        %v6928 = vadd.f32 %v6926, %v6927
        %v6929 = vsel %vm4824, %v6393, 0.0
        %v6930 = vadd.f32 %v6928, %v6929
        %v6931 = vsel %vm4824, %v6394, 0.0
        %v6932 = vadd.f32 %v6930, %v6931
        %v6933 = vsel %vm4824, %v6395, 0.0
        %v6934 = vadd.f32 %v6932, %v6933
        %v6935 = vsel %vm4824, %v6396, 0.0
        %v6936 = vadd.f32 %v6934, %v6935
        %v6937 = vsel %vm4824, %v6397, 0.0
        %v6938 = vadd.f32 %v6936, %v6937
        %v6939 = vsel %vm4824, %v6398, 0.0
        %v6940 = vadd.f32 %v6938, %v6939
        %v6941 = vsel %vm4824, %v6399, 0.0
        %v6942 = vadd.f32 %v6940, %v6941
        %v6943 = vsel %vm4824, %v6400, 0.0
        %v6944 = vadd.f32 %v6942, %v6943
        %v6945 = vsel %vm4824, %v6401, 0.0
        %v6946 = vadd.f32 %v6944, %v6945
        %v6947 = vsel %vm4824, %v6402, 0.0
        %v6948 = vadd.f32 %v6946, %v6947
        %v6949 = vsel %vm4824, %v6403, 0.0
        %v6950 = vadd.f32 %v6948, %v6949
        %v6951 = vsel %vm4824, %v6404, 0.0
        %v6952 = vadd.f32 %v6950, %v6951
        %v6953 = vsel %vm4824, %v6405, 0.0
        %v6954 = vadd.f32 %v6952, %v6953
        %v6955 = vsel %vm4824, %v6406, 0.0
        %v6956 = vadd.f32 %v6954, %v6955
        %v6957 = vsel %vm4824, %v6407, 0.0
        %v6958 = vadd.f32 %v6956, %v6957
        %v6959 = vsel %vm4824, %v6408, 0.0
        %v6960 = vadd.f32 %v6958, %v6959
        %v6961 = vsel %vm4824, %v6409, 0.0
        %v6962 = vadd.f32 %v6960, %v6961
        %v6963 = vsel %vm4824, %v6410, 0.0
        %v6964 = vadd.f32 %v6962, %v6963
        %v6965 = vsel %vm4824, %v6411, 0.0
        %v6966 = vadd.f32 %v6964, %v6965
        %v6967 = vsel %vm4824, %v6412, 0.0
        %v6968 = vadd.f32 %v6966, %v6967
        %v6969 = vsel %vm4824, %v6413, 0.0
        %v6970 = vadd.f32 %v6968, %v6969
        %v6971 = vsel %vm4824, %v6414, 0.0
        %v6972 = vadd.f32 %v6970, %v6971
        %v6973 = vsel %vm4824, %v6415, 0.0
        %v6974 = vadd.f32 %v6972, %v6973
        %v6975 = vsel %vm4824, %v6416, 0.0
        %v6976 = vadd.f32 %v6974, %v6975
        %v6977 = vsel %vm4824, %v6417, 0.0
        %v6978 = vadd.f32 %v6976, %v6977
        %v6979 = vsel %vm4824, %v6418, 0.0
        %v6980 = vadd.f32 %v6978, %v6979
        %v6981 = vsel %vm4824, %v6419, 0.0
        %v6982 = vadd.f32 %v6980, %v6981
        %v6983 = vsel %vm4824, %v6420, 0.0
        %v6984 = vadd.f32 %v6982, %v6983
        %v6985 = vsel %vm4824, %v6421, 0.0
        %v6986 = vadd.f32 %v6984, %v6985
        %v6987 = vsel %vm4824, %v6422, 0.0
        %v6988 = vadd.f32 %v6986, %v6987
        %v6989 = vsel %vm4824, %v6423, 0.0
        %v6990 = vadd.f32 %v6988, %v6989
        %v6991 = vsel %vm4824, %v6424, 0.0
        %v6992 = vadd.f32 %v6990, %v6991
        %v6993 = vsel %vm4824, %v6425, 0.0
        %v6994 = vadd.f32 %v6992, %v6993
        %v6995 = vsel %vm4824, %v6426, 0.0
        %v6996 = vadd.f32 %v6994, %v6995
        %v6997 = vsel %vm4824, %v6427, 0.0
        %v6998 = vadd.f32 %v6996, %v6997
        %v6999 = vsel %vm4824, %v6428, 0.0
        %v7000 = vadd.f32 %v6998, %v6999
        %v7001 = vsel %vm4824, %v6429, 0.0
        %v7002 = vadd.f32 %v7000, %v7001
        %v7003 = vsel %vm4824, %v6430, 0.0
        %v7004 = vadd.f32 %v7002, %v7003
        %v7005 = vsel %vm4824, %v6431, 0.0
        %v7006 = vadd.f32 %v7004, %v7005
        %v7007 = vsel %vm4824, %v6432, 0.0
        %v7008 = vadd.f32 %v7006, %v7007
        %v7009 = vsel %vm4824, %v6433, 0.0
        %v7010 = vadd.f32 %v7008, %v7009
        %v7011 = vsel %vm4824, %v6434, 0.0
        %v7012 = vadd.f32 %v7010, %v7011
        %v7013 = vsel %vm4824, %v6435, 0.0
        %v7014 = vadd.f32 %v7012, %v7013
        %v7015 = vsel %vm4824, %v6436, 0.0
        %v7016 = vadd.f32 %v7014, %v7015
        %v7017 = vsel %vm4824, %v6437, 0.0
        %v7018 = vadd.f32 %v7016, %v7017
        %v7019 = vsel %vm4824, %v6438, 0.0
        %v7020 = vadd.f32 %v7018, %v7019
        %v7021 = vsel %vm4824, %v6439, 0.0
        %v7022 = vadd.f32 %v7020, %v7021
        %v7023 = vsel %vm4824, %v6440, 0.0
        %v7024 = vadd.f32 %v7022, %v7023
        %v7025 = vsel %vm4824, %v6441, 0.0
        %v7026 = vadd.f32 %v7024, %v7025
        %v7027 = vsel %vm4824, %v6442, 0.0
        %v7028 = vadd.f32 %v7026, %v7027
        %v7029 = vsel %vm4824, %v6443, 0.0
        %v7030 = vadd.f32 %v7028, %v7029
        %v7031 = vsel %vm4824, %v6444, 0.0
        %v7032 = vadd.f32 %v7030, %v7031
        %v7033 = vsel %vm4824, %v6445, 0.0
        %v7034 = vadd.f32 %v7032, %v7033
        %v7035 = vsel %vm4824, %v6446, 0.0
        %v7036 = vadd.f32 %v7034, %v7035
        %v7037 = vsel %vm4824, %v6447, 0.0
        %v7038 = vadd.f32 %v7036, %v7037
        %v7039 = vsel %vm4824, %v6448, 0.0
        %v7040 = vadd.f32 %v7038, %v7039
        %v7041 = vsel %vm4824, %v6449, 0.0
        %v7042 = vadd.f32 %v7040, %v7041
        %v7043 = vsel %vm4824, %v6450, 0.0
        %v7044 = vadd.f32 %v7042, %v7043
        %v7045 = vsel %vm4824, %v6451, 0.0
        %v7046 = vadd.f32 %v7044, %v7045
        %v7047 = vsel %vm4824, %v6452, 0.0
        %v7048 = vadd.f32 %v7046, %v7047
        %v7049 = vsel %vm4824, %v6453, 0.0
        %v7050 = vadd.f32 %v7048, %v7049
        %v7051 = vsel %vm4824, %v6454, 0.0
        %v7052 = vadd.f32 %v7050, %v7051
        %v7053 = vsel %vm4824, %v6455, 0.0
        %v7054 = vadd.f32 %v7052, %v7053
        %v7055 = vsel %vm4824, %v6456, 0.0
        %v7056 = vadd.f32 %v7054, %v7055
        %v7057 = vsel %vm4824, %v6457, 0.0
        %v7058 = vadd.f32 %v7056, %v7057
        %v7059 = vsel %vm4824, %v6458, 0.0
        %v7060 = vadd.f32 %v7058, %v7059
        %v7061 = vsel %vm4824, %v6459, 0.0
        %v7062 = vadd.f32 %v7060, %v7061
        %v7063 = vsel %vm4824, %v6460, 0.0
        %v7064 = vadd.f32 %v7062, %v7063
        %v7065 = vsel %vm4824, %v6461, 0.0
        %v7066 = vadd.f32 %v7064, %v7065
        %v7067 = vsel %vm4824, %v6462, 0.0
        %v7068 = vadd.f32 %v7066, %v7067
        %v7069 = vsel %vm4824, %v6463, 0.0
        %v7070 = vadd.f32 %v7068, %v7069
        %v7071 = vsel %vm4824, %v6464, 0.0
        %v7072 = vadd.f32 %v7070, %v7071
        %v7073 = vsel %vm4824, %v6465, 0.0
        %v7074 = vadd.f32 %v7072, %v7073
        %v7075 = vsel %vm4824, %v6466, 0.0
        %v7076 = vadd.f32 %v7074, %v7075
        %v7077 = vsel %vm4824, %v6467, 0.0
        %v7078 = vadd.f32 %v7076, %v7077
        %v7079 = vsel %vm4824, %v6468, 0.0
        %v7080 = vadd.f32 %v7078, %v7079
        %v7081 = vsel %vm4824, %v6469, 0.0
        %v7082 = vadd.f32 %v7080, %v7081
        %v7083 = vsel %vm4824, %v6470, 0.0
        %v7084 = vadd.f32 %v7082, %v7083
        %v7085 = vsel %vm4824, %v6471, 0.0
        %v7086 = vadd.f32 %v7084, %v7085
        %v7087 = vsel %vm4824, %v6472, 0.0
        %v7088 = vadd.f32 %v7086, %v7087
        %v7089 = vsel %vm4824, %v6473, 0.0
        %v7090 = vadd.f32 %v7088, %v7089
        %v7091 = vsel %vm4824, %v6474, 0.0
        %v7092 = vadd.f32 %v7090, %v7091
        %v7093 = vsel %vm4824, %v6475, 0.0
        %v7094 = vadd.f32 %v7092, %v7093
        %v7095 = vsel %vm4824, %v6476, 0.0
        %v7096 = vadd.f32 %v7094, %v7095
        %v7097 = vsel %vm4824, %v6477, 0.0
        %v7098 = vadd.f32 %v7096, %v7097
        %v7099 = vsel %vm4824, %v6478, 0.0
        %v7100 = vadd.f32 %v7098, %v7099
        %v7101 = vsel %vm4824, %v6479, 0.0
        %v7102 = vadd.f32 %v7100, %v7101
        %v7103 = vsel %vm4824, %v6480, 0.0
        %v7104 = vadd.f32 %v7102, %v7103
        %v7105 = vsel %vm4824, %v6481, 0.0
        %v7106 = vadd.f32 %v7104, %v7105
        %v7107 = vsel %vm4824, %v6482, 0.0
        %v7108 = vadd.f32 %v7106, %v7107
        %v7109 = vsel %vm4824, %v6483, 0.0
        %v7110 = vadd.f32 %v7108, %v7109
        %v7111 = vsel %vm4824, %v6484, 0.0
        %v7112 = vadd.f32 %v7110, %v7111
        %v7113 = vsel %vm4824, %v6485, 0.0
        %v7114 = vadd.f32 %v7112, %v7113
        %v7115 = vsel %vm4824, %v6486, 0.0
        %v7116 = vadd.f32 %v7114, %v7115
        %v7117 = vsel %vm4824, %v6487, 0.0
        %v7118 = vadd.f32 %v7116, %v7117
        %v7119 = vsel %vm4824, %v6488, 0.0
        %v7120 = vadd.f32 %v7118, %v7119
        %v7121 = vsel %vm4824, %v6489, 0.0
        %v7122 = vadd.f32 %v7120, %v7121
        %v7123 = vsel %vm4824, %v6490, 0.0
        %v7124 = vadd.f32 %v7122, %v7123
        %v7125 = vsel %vm4824, %v6491, 0.0
        %v7126 = vadd.f32 %v7124, %v7125
        %v7127 = vsel %vm4824, %v6492, 0.0
        %v7128 = vadd.f32 %v7126, %v7127
        %v7129 = vsel %vm4824, %v6493, 0.0
        %v7130 = vadd.f32 %v7128, %v7129
        %v7131 = vsel %vm4824, %v6494, 0.0
        %v7132 = vadd.f32 %v7130, %v7131
        %v7133 = vsel %vm4824, %v6495, 0.0
        %v7134 = vadd.f32 %v7132, %v7133
        %v7135 = vsel %vm4824, %v6496, 0.0
        %v7136 = vadd.f32 %v7134, %v7135
        %v7137 = vsel %vm4824, %v6497, 0.0
        %v7138 = vadd.f32 %v7136, %v7137
        %v7139 = vsel %vm4824, %v6498, 0.0
        %v7140 = vadd.f32 %v7138, %v7139
        %v7141 = vsel %vm4824, %v6499, 0.0
        %v7142 = vadd.f32 %v7140, %v7141
        %v7143 = vsel %vm4824, %v6500, 0.0
        %v7144 = vadd.f32 %v7142, %v7143
        %v7145 = vsel %vm4824, %v6501, 0.0
        %v7146 = vadd.f32 %v7144, %v7145
        %v7147 = vsel %vm4824, %v6502, 0.0
        %v7148 = vadd.f32 %v7146, %v7147
        %v7149 = vsel %vm4824, %v6503, 0.0
        %v7150 = vadd.f32 %v7148, %v7149
        %v7151 = vsel %vm4824, %v6504, 0.0
        %v7152 = vadd.f32 %v7150, %v7151
        %v7153 = vsel %vm4824, %v6505, 0.0
        %v7154 = vadd.f32 %v7152, %v7153
        %v7155 = vsel %vm4824, %v6506, 0.0
        %v7156 = vadd.f32 %v7154, %v7155
        %v7157 = vsel %vm4824, %v6507, 0.0
        %v7158 = vadd.f32 %v7156, %v7157
        %v7159 = vsel %vm4824, %v6508, 0.0
        %v7160 = vadd.f32 %v7158, %v7159
        %v7161 = vsel %vm4824, %v6509, 0.0
        %v7162 = vadd.f32 %v7160, %v7161
        %v7163 = vsel %vm4824, %v6510, 0.0
        %v7164 = vadd.f32 %v7162, %v7163
        %v7165 = vsel %vm4824, %v6511, 0.0
        %v7166 = vadd.f32 %v7164, %v7165
        %v7167 = vsel %vm4824, %v6512, 0.0
        %v7168 = vadd.f32 %v7166, %v7167
        %v7169 = vsel %vm4824, %v6513, 0.0
        %v7170 = vadd.f32 %v7168, %v7169
        %v7171 = vsel %vm4824, %v6514, 0.0
        %v7172 = vadd.f32 %v7170, %v7171
        %v7173 = vsel %vm4824, %v6515, 0.0
        %v7174 = vadd.f32 %v7172, %v7173
        %v7175 = vsel %vm4824, %v6516, 0.0
        %v7176 = vadd.f32 %v7174, %v7175
        %v7177 = vsel %vm4824, %v6517, 0.0
        %v7178 = vadd.f32 %v7176, %v7177
        %v7179 = vsel %vm4824, %v6518, 0.0
        %v7180 = vadd.f32 %v7178, %v7179
        %v7181 = vsel %vm4824, %v6519, 0.0
        %v7182 = vadd.f32 %v7180, %v7181
        %v7183 = vsel %vm4824, %v6520, 0.0
        %v7184 = vadd.f32 %v7182, %v7183
        %v7185 = vsel %vm4824, %v6521, 0.0
        %v7186 = vadd.f32 %v7184, %v7185
        %v7187 = vsel %vm4824, %v6522, 0.0
        %v7188 = vadd.f32 %v7186, %v7187
        %v7189 = vsel %vm4824, %v6523, 0.0
        %v7190 = vadd.f32 %v7188, %v7189
        %v7191 = vsel %vm4824, %v6524, 0.0
        %v7192 = vadd.f32 %v7190, %v7191
        %v7193 = vsel %vm4824, %v6525, 0.0
        %v7194 = vadd.f32 %v7192, %v7193
        %v7195 = vsel %vm4824, %v6526, 0.0
        %v7196 = vadd.f32 %v7194, %v7195
        %v7197 = vsel %vm4824, %v6527, 0.0
        %v7198 = vadd.f32 %v7196, %v7197
        %v7199 = vsel %vm4824, %v6528, 0.0
        %v7200 = vadd.f32 %v7198, %v7199
        %v7201 = vsel %vm4824, %v6529, 0.0
        %v7202 = vadd.f32 %v7200, %v7201
        %v7203 = vsel %vm4824, %v6530, 0.0
        %v7204 = vadd.f32 %v7202, %v7203
        %v7205 = vsel %vm4824, %v6531, 0.0
        %v7206 = vadd.f32 %v7204, %v7205
        %v7207 = vsel %vm4824, %v6532, 0.0
        %v7208 = vadd.f32 %v7206, %v7207
        %v7209 = vsel %vm4824, %v6533, 0.0
        %v7210 = vadd.f32 %v7208, %v7209
        %v7211 = vsel %vm4824, %v6534, 0.0
        %v7212 = vadd.f32 %v7210, %v7211
        %v7213 = vsel %vm4824, %v6535, 0.0
        %v7214 = vadd.f32 %v7212, %v7213
        %v7215 = vsel %vm4824, %v6536, 0.0
        %v7216 = vadd.f32 %v7214, %v7215
        %v7217 = vsel %vm4824, %v6537, 0.0
        %v7218 = vadd.f32 %v7216, %v7217
        %v7219 = vsel %vm4824, %v6538, 0.0
        %v7220 = vadd.f32 %v7218, %v7219
        %v7221 = vsel %vm4824, %v6539, 0.0
        %v7222 = vadd.f32 %v7220, %v7221
        %v7223 = vsel %vm4824, %v6540, 0.0
        %v7224 = vadd.f32 %v7222, %v7223
        %v7225 = vsel %vm4824, %v6541, 0.0
        %v7226 = vadd.f32 %v7224, %v7225
        %v7227 = vsel %vm4824, %v6542, 0.0
        %v7228 = vadd.f32 %v7226, %v7227
        %v7229 = vsel %vm4824, %v6543, 0.0
        %v7230 = vadd.f32 %v7228, %v7229
        %v7231 = vsel %vm4824, %v6544, 0.0
        %v7232 = vadd.f32 %v7230, %v7231
        %v7233 = vsel %vm4824, %v6545, 0.0
        %v7234 = vadd.f32 %v7232, %v7233
        %v7235 = vsel %vm4824, %v6546, 0.0
        %v7236 = vadd.f32 %v7234, %v7235
        %v7237 = vsel %vm4824, %v6547, 0.0
        %v7238 = vadd.f32 %v7236, %v7237
        %v7239 = vsel %vm4824, %v6548, 0.0
        %v7240 = vadd.f32 %v7238, %v7239
        %v7241 = vsel %vm4824, %v6549, 0.0
        %v7242 = vadd.f32 %v7240, %v7241
        %v7243 = vsel %vm4824, %v6550, 0.0
        %v7244 = vadd.f32 %v7242, %v7243
        %v7245 = vsel %vm4824, %v6551, 0.0
        %v7246 = vadd.f32 %v7244, %v7245
        %v7247 = vsel %vm4824, %v6552, 0.0
        %v7248 = vadd.f32 %v7246, %v7247
        %v7249 = vsel %vm4824, %v6553, 0.0
        %v7250 = vadd.f32 %v7248, %v7249
        %v7251 = vsel %vm4824, %v6554, 0.0
        %v7252 = vadd.f32 %v7250, %v7251
        %v7253 = vsel %vm4824, %v6555, 0.0
        %v7254 = vadd.f32 %v7252, %v7253
        %v7255 = vsel %vm4824, %v6556, 0.0
        %v7256 = vadd.f32 %v7254, %v7255
        %v7257 = vsel %vm4824, %v6557, 0.0
        %v7258 = vadd.f32 %v7256, %v7257
        %v7259 = vsel %vm4824, %v6558, 0.0
        %v7260 = vadd.f32 %v7258, %v7259
        %v7261 = vsel %vm4824, %v6559, 0.0
        %v7262 = vadd.f32 %v7260, %v7261
        %v7263 = vsel %vm4824, %v6560, 0.0
        %v7264 = vadd.f32 %v7262, %v7263
        %v7265 = vsel %vm4824, %v6561, 0.0
        %v7266 = vadd.f32 %v7264, %v7265
        %v7267 = vsel %vm4824, %v6562, 0.0
        %v7268 = vadd.f32 %v7266, %v7267
        %v7269 = vsel %vm4824, %v6563, 0.0
        %v7270 = vadd.f32 %v7268, %v7269
        %v7271 = vsel %vm4824, %v6564, 0.0
        %v7272 = vadd.f32 %v7270, %v7271
        %v7273 = vsel %vm4824, %v6565, 0.0
        %v7274 = vadd.f32 %v7272, %v7273
        %v7275 = vsel %vm4824, %v6566, 0.0
        %v7276 = vadd.f32 %v7274, %v7275
        %v7277 = vsel %vm4824, %v6567, 0.0
        %v7278 = vadd.f32 %v7276, %v7277
        %v7279 = vsel %vm4824, %v6568, 0.0
        %v7280 = vadd.f32 %v7278, %v7279
        %v7281 = vsel %vm4824, %v6569, 0.0
        %v7282 = vadd.f32 %v7280, %v7281
        %v7283 = vsel %vm4824, %v6570, 0.0
        %v7284 = vadd.f32 %v7282, %v7283
        %v7285 = vsel %vm4824, %v6571, 0.0
        %v7286 = vadd.f32 %v7284, %v7285
        %v7287 = vsel %vm4824, %v6572, 0.0
        %v7288 = vadd.f32 %v7286, %v7287
        %v7289 = vsel %vm4824, %v6573, 0.0
        %v7290 = vadd.f32 %v7288, %v7289
        %v7291 = vsel %vm4824, %v6574, 0.0
        %v7292 = vadd.f32 %v7290, %v7291
        %v7293 = vsel %vm4824, %v6575, 0.0
        %v7294 = vadd.f32 %v7292, %v7293
        %v7295 = vsel %vm4824, %v6576, 0.0
        %v7296 = vadd.f32 %v7294, %v7295
        %v7297 = vsel %vm4824, %v6577, 0.0
        %v7298 = vadd.f32 %v7296, %v7297
        %v7299 = vsel %vm4824, %v6578, 0.0
        %v7300 = vadd.f32 %v7298, %v7299
        %v7301 = vsel %vm4824, %v6579, 0.0
        %v7302 = vadd.f32 %v7300, %v7301
        %v7303 = vsel %vm4824, %v6580, 0.0
        %v7304 = vadd.f32 %v7302, %v7303
        %v7305 = vsel %vm4824, %v6581, 0.0
        %v7306 = vadd.f32 %v7304, %v7305
        %v7307 = vsel %vm4824, %v6582, 0.0
        %v7308 = vadd.f32 %v7306, %v7307
        %v7309 = vsel %vm4824, %v6583, 0.0
        %v7310 = vadd.f32 %v7308, %v7309
        %v7311 = vsel %vm4824, %v6584, 0.0
        %v7312 = vadd.f32 %v7310, %v7311
        %v7313 = vsel %vm4824, %v6585, 0.0
        %v7314 = vadd.f32 %v7312, %v7313
        %v7315 = vsel %vm4824, %v6586, 0.0
        %v7316 = vadd.f32 %v7314, %v7315
        %v7317 = vsel %vm4824, %v6587, 0.0
        %v7318 = vadd.f32 %v7316, %v7317
        %v7319 = vsel %vm4824, %v6588, 0.0
        %v7320 = vadd.f32 %v7318, %v7319
        %v7321 = vsel %vm4824, %v6589, 0.0
        %v7322 = vadd.f32 %v7320, %v7321
        %v7323 = vsel %vm4824, %v6590, 0.0
        %v7324 = vadd.f32 %v7322, %v7323
        %v7325 = vsel %vm4824, %v6591, 0.0
        %v7326 = vadd.f32 %v7324, %v7325
        %v7327 = vsel %vm4824, %v6592, 0.0
        %v7328 = vadd.f32 %v7326, %v7327
        %v7329 = vsel %vm4824, %v6593, 0.0
        %v7330 = vadd.f32 %v7328, %v7329
        %v7331 = vsel %vm4824, %v6594, 0.0
        %v7332 = vadd.f32 %v7330, %v7331
        %v7333 = vsel %vm4824, %v6595, 0.0
        %v7334 = vadd.f32 %v7332, %v7333
        %v7335 = vsel %vm4824, %v6596, 0.0
        %v7336 = vadd.f32 %v7334, %v7335
        %v7337 = vsel %vm4824, %v6597, 0.0
        %v7338 = vadd.f32 %v7336, %v7337
        %v7339 = vsel %vm4824, %v6598, 0.0
        %v7340 = vadd.f32 %v7338, %v7339
        %v7341 = vsel %vm4824, %v6599, 0.0
        %v7342 = vadd.f32 %v7340, %v7341
        %v7343 = vsel %vm4824, %v6600, 0.0
        %v7344 = vadd.f32 %v7342, %v7343
        %v7345 = vsel %vm4824, %v6601, 0.0
        %v7346 = vadd.f32 %v7344, %v7345
        %v7347 = vsel %vm4824, %v6602, 0.0
        %v7348 = vadd.f32 %v7346, %v7347
        %v7349 = vsel %vm4824, %v6603, 0.0
        %v7350 = vadd.f32 %v7348, %v7349
        %v7351 = vsel %vm4824, %v6604, 0.0
        %v7352 = vadd.f32 %v7350, %v7351
        %v7353 = vsel %vm4824, %v6605, 0.0
        %v7354 = vadd.f32 %v7352, %v7353
        %v7355 = vsel %vm4824, %v6606, 0.0
        %v7356 = vadd.f32 %v7354, %v7355
        %v7357 = vsel %vm4824, %v6607, 0.0
        %v7358 = vadd.f32 %v7356, %v7357
        %v7359 = vsel %vm4824, %v6608, 0.0
        %v7360 = vadd.f32 %v7358, %v7359
        %v7361 = vsel %vm4824, %v6609, 0.0
        %v7362 = vadd.f32 %v7360, %v7361
        %v7363 = vsel %vm4824, %v6610, 0.0
        %v7364 = vadd.f32 %v7362, %v7363
        %v7365 = vsel %vm4824, %v6611, 0.0
        %v7366 = vadd.f32 %v7364, %v7365
        %v7367 = vsel %vm4824, %v6612, 0.0
        %v7368 = vadd.f32 %v7366, %v7367
        %v7369 = vsel %vm4824, %v6613, 0.0
        %v7370 = vadd.f32 %v7368, %v7369
        %v7371 = vsel %vm4824, %v6614, 0.0
        %v7372 = vadd.f32 %v7370, %v7371
        %v7373 = vsel %vm4824, %v6615, 0.0
        %v7374 = vadd.f32 %v7372, %v7373
        %v7375 = vsel %vm4824, %v6616, 0.0
        %v7376 = vadd.f32 %v7374, %v7375
        %v7377 = vsel %vm4824, %v6617, 0.0
        %v7378 = vadd.f32 %v7376, %v7377
        %v7379 = vsel %vm4824, %v6618, 0.0
        %v7380 = vadd.f32 %v7378, %v7379
        %v7381 = vsel %vm4824, %v6619, 0.0
        %v7382 = vadd.f32 %v7380, %v7381
        %v7383 = vsel %vm4824, %v6620, 0.0
        %v7384 = vadd.f32 %v7382, %v7383
        %v7385 = vsel %vm4824, %v6621, 0.0
        %v7386 = vadd.f32 %v7384, %v7385
        %v7387 = vsel %vm4824, %v6622, 0.0
        %v7388 = vadd.f32 %v7386, %v7387
        %v7389 = vsel %vm4824, %v6623, 0.0
        %v7390 = vadd.f32 %v7388, %v7389
        %v7391 = vsel %vm4824, %v6624, 0.0
        %v7392 = vadd.f32 %v7390, %v7391
        %v7393 = vsel %vm4824, %v6625, 0.0
        %v7394 = vadd.f32 %v7392, %v7393
        %v7395 = vsel %vm4824, %v6626, 0.0
        %v7396 = vadd.f32 %v7394, %v7395
        %v7397 = vsel %vm4824, %v6627, 0.0
        %v7398 = vadd.f32 %v7396, %v7397
        %v7399 = vsel %vm4824, %v6628, 0.0
        %v7400 = vadd.f32 %v7398, %v7399
        %v7401 = vsel %vm4824, %v6629, 0.0
        %v7402 = vadd.f32 %v7400, %v7401
        %v7403 = vsel %vm4824, %v6630, 0.0
        %v7404 = vadd.f32 %v7402, %v7403
        %v7405 = vsel %vm4824, %v6631, 0.0
        %v7406 = vadd.f32 %v7404, %v7405
        %v7407 = vsel %vm4824, %v6632, 0.0
        %v7408 = vadd.f32 %v7406, %v7407
        %v7409 = vsel %vm4824, %v6633, 0.0
        %v7410 = vadd.f32 %v7408, %v7409
        %v7411 = vsel %vm4824, %v6634, 0.0
        %v7412 = vadd.f32 %v7410, %v7411
        %v7413 = vsel %vm4824, %v6635, 0.0
        %v7414 = vadd.f32 %v7412, %v7413
        %v7415 = vsel %vm4824, %v6636, 0.0
        %v7416 = vadd.f32 %v7414, %v7415
        %v7417 = vsel %vm4824, %v6637, 0.0
        %v7418 = vadd.f32 %v7416, %v7417
        %v7419 = vsel %vm4824, %v6638, 0.0
        %v7420 = vadd.f32 %v7418, %v7419
        %v7421 = vsel %vm4824, %v6639, 0.0
        %v7422 = vadd.f32 %v7420, %v7421
        %v7423 = vsel %vm4824, %v6640, 0.0
        %v7424 = vadd.f32 %v7422, %v7423
        %v7425 = vsel %vm4824, %v6641, 0.0
        %v7426 = vadd.f32 %v7424, %v7425
        %v7427 = vsel %vm4824, %v6642, 0.0
        %v7428 = vadd.f32 %v7426, %v7427
        %v7429 = vsel %vm4824, %v6643, 0.0
        %v7430 = vadd.f32 %v7428, %v7429
        %v7431 = vsel %vm4824, %v6644, 0.0
        %v7432 = vadd.f32 %v7430, %v7431
        %v7433 = vsel %vm4824, %v6645, 0.0
        %v7434 = vadd.f32 %v7432, %v7433
        %v7435 = vsel %vm4824, %v6646, 0.0
        %v7436 = vadd.f32 %v7434, %v7435
        %v7437 = vsel %vm4824, %v6647, 0.0
        %v7438 = vadd.f32 %v7436, %v7437
        %v7439 = vsel %vm4824, %v6648, 0.0
        %v7440 = vadd.f32 %v7438, %v7439
        %v7441 = vsel %vm4824, %v6649, 0.0
        %v7442 = vadd.f32 %v7440, %v7441
        %v7443 = vsel %vm4824, %v6650, 0.0
        %v7444 = vadd.f32 %v7442, %v7443
        %v7445 = vsel %vm4824, %v6651, 0.0
        %v7446 = vadd.f32 %v7444, %v7445
        %v7447 = vsel %vm4824, %v6652, 0.0
        %v7448 = vadd.f32 %v7446, %v7447
        %v7449 = vsel %vm4824, %v6653, 0.0
        %v7450 = vadd.f32 %v7448, %v7449
        %v7451 = vsel %vm4824, %v6654, 0.0
        %v7452 = vadd.f32 %v7450, %v7451
        %v7453 = vsel %vm4824, %v6655, 0.0
        %v7454 = vadd.f32 %v7452, %v7453
        %v7455 = vsel %vm4824, %v6656, 0.0
        %v7456 = vadd.f32 %v7454, %v7455
        %v7457 = vsel %vm4824, %v6657, 0.0
        %v7458 = vadd.f32 %v7456, %v7457
        %v7459 = vsel %vm4824, %v6658, 0.0
        %v7460 = vadd.f32 %v7458, %v7459
        %v7461 = vsel %vm4824, %v6659, 0.0
        %v7462 = vadd.f32 %v7460, %v7461
        %v7463 = vsel %vm4824, %v6660, 0.0
        %v7464 = vadd.f32 %v7462, %v7463
        %v7465 = vsel %vm4824, %v6661, 0.0
        %v7466 = vadd.f32 %v7464, %v7465
        %v7467 = vsel %vm4824, %v6662, 0.0
        %v7468 = vadd.f32 %v7466, %v7467
        %v7469 = vsel %vm4824, %v6663, 0.0
        %v7470 = vadd.f32 %v7468, %v7469
        %v7471 = vsel %vm4824, %v6664, 0.0
        %v7472 = vadd.f32 %v7470, %v7471
        %v7473 = vsel %vm4824, %v6665, 0.0
        %v7474 = vadd.f32 %v7472, %v7473
        %v7475 = vsel %vm4824, %v6666, 0.0
        %v7476 = vadd.f32 %v7474, %v7475
        %v7477 = vsel %vm4824, %v6667, 0.0
        %v7478 = vadd.f32 %v7476, %v7477
        %v7479 = vsel %vm4824, %v6668, 0.0
        %v7480 = vadd.f32 %v7478, %v7479
        %v7481 = vsel %vm4824, %v6669, 0.0
        %v7482 = vadd.f32 %v7480, %v7481
        %v7483 = vsel %vm4824, %v6670, 0.0
        %v7484 = vadd.f32 %v7482, %v7483
        %v7485 = vsel %vm4824, %v6671, 0.0
        %v7486 = vadd.f32 %v7484, %v7485
        %v7487 = vsel %vm4824, %v6672, 0.0
        %v7488 = vadd.f32 %v7486, %v7487
        %v7489 = vsel %vm4824, %v6673, 0.0
        %v7490 = vadd.f32 %v7488, %v7489
        %v7491 = vsel %vm4824, %v6674, 0.0
        %v7492 = vadd.f32 %v7490, %v7491
        %v7493 = vsel %vm4824, %v6675, 0.0
        %v7494 = vadd.f32 %v7492, %v7493
        %v7495 = vsel %vm4824, %v6676, 0.0
        %v7496 = vadd.f32 %v7494, %v7495
        %v7497 = vsel %vm4824, %v6677, 0.0
        %v7498 = vadd.f32 %v7496, %v7497
        %v7499 = vsel %vm4824, %v6678, 0.0
        %v7500 = vadd.f32 %v7498, %v7499
        %v7501 = vsel %vm4824, %v6679, 0.0
        %v7502 = vadd.f32 %v7500, %v7501
        %v7503 = vsel %vm4824, %v6680, 0.0
        %v7504 = vadd.f32 %v7502, %v7503
        %v7505 = vsel %vm4824, %v6681, 0.0
        %v7506 = vadd.f32 %v7504, %v7505
        %v7507 = vsel %vm4824, %v6682, 0.0
        %v7508 = vadd.f32 %v7506, %v7507
        %v7509 = vsel %vm4824, %v6683, 0.0
        %v7510 = vadd.f32 %v7508, %v7509
        %v7511 = vsel %vm4824, %v6684, 0.0
        %v7512 = vadd.f32 %v7510, %v7511
        %v7513 = vsel %vm4824, %v6685, 0.0
        %v7514 = vadd.f32 %v7512, %v7513
        %v7515 = vsel %vm4824, %v6686, 0.0
        %v7516 = vadd.f32 %v7514, %v7515
        %v7517 = vsel %vm4824, %v6687, 0.0
        %v7518 = vadd.f32 %v7516, %v7517
        %v7519 = vsel %vm4824, %v6688, 0.0
        %v7520 = vadd.f32 %v7518, %v7519
        %v7521 = vsel %vm4824, %v6689, 0.0
        %v7522 = vadd.f32 %v7520, %v7521
        %v7523 = vsel %vm4824, %v6690, 0.0
        %v7524 = vadd.f32 %v7522, %v7523
        %v7525 = vsel %vm4824, %v6691, 0.0
        %v7526 = vadd.f32 %v7524, %v7525
        %v7527 = vsel %vm4824, %v6692, 0.0
        %v7528 = vadd.f32 %v7526, %v7527
        %v7529 = vsel %vm4824, %v6693, 0.0
        %v7530 = vadd.f32 %v7528, %v7529
        %v7531 = vsel %vm4824, %v6694, 0.0
        %v7532 = vadd.f32 %v7530, %v7531
        %v7533 = vsel %vm4824, %v6695, 0.0
        %v7534 = vadd.f32 %v7532, %v7533
        %v7535 = vsel %vm4824, %v6696, 0.0
        %v7536 = vadd.f32 %v7534, %v7535
        %v7537 = vsel %vm4824, %v6697, 0.0
        %v7538 = vadd.f32 %v7536, %v7537
        %v7539 = vsel %vm4824, %v6698, 0.0
        %v7540 = vadd.f32 %v7538, %v7539
        %v7541 = vsel %vm4824, %v6699, 0.0
        %v7542 = vadd.f32 %v7540, %v7541
        %v7543 = vsel %vm4824, %v6700, 0.0
        %v7544 = vadd.f32 %v7542, %v7543
        %v7545 = vsel %vm4824, %v6701, 0.0
        %v7546 = vadd.f32 %v7544, %v7545
        %v7547 = vsel %vm4824, %v6702, 0.0
        %v7548 = vadd.f32 %v7546, %v7547
        %v7549 = vsel %vm4824, %v6703, 0.0
        %v7550 = vadd.f32 %v7548, %v7549
        %v7551 = vsel %vm4824, %v6704, 0.0
        %v7552 = vadd.f32 %v7550, %v7551
        %v7553 = vsel %vm4824, %v6705, 0.0
        %v7554 = vadd.f32 %v7552, %v7553
        %v7555 = vsel %vm4824, %v6706, 0.0
        %v7556 = vadd.f32 %v7554, %v7555
        %v7557 = vsel %vm4824, %v6707, 0.0
        %v7558 = vadd.f32 %v7556, %v7557
        %v7559 = vsel %vm4824, %v6708, 0.0
        %v7560 = vadd.f32 %v7558, %v7559
        %v7561 = vsel %vm4824, %v6709, 0.0
        %v7562 = vadd.f32 %v7560, %v7561
        %v7563 = vsel %vm4824, %v6710, 0.0
        %v7564 = vadd.f32 %v7562, %v7563
        %v7565 = vsel %vm4824, %v6711, 0.0
        %v7566 = vadd.f32 %v7564, %v7565
        %v7567 = vsel %vm4824, %v6712, 0.0
        %v7568 = vadd.f32 %v7566, %v7567
        %v7569 = vsel %vm4824, %v6713, 0.0
        %v7570 = vadd.f32 %v7568, %v7569
        %v7571 = vsel %vm4824, %v6714, 0.0
        %v7572 = vadd.f32 %v7570, %v7571
        %v7573 = vsel %vm4824, %v6715, 0.0
        %v7574 = vadd.f32 %v7572, %v7573
        %v7575 = vsel %vm4824, %v6716, 0.0
        %v7576 = vadd.f32 %v7574, %v7575
        %v7577 = vsel %vm4824, %v6717, 0.0
        %v7578 = vadd.f32 %v7576, %v7577
        %v7579 = vsel %vm4824, %v6718, 0.0
        %v7580 = vadd.f32 %v7578, %v7579
        %v7581 = vsel %vm4824, %v6719, 0.0
        %v7582 = vadd.f32 %v7580, %v7581
        %v7583 = vsel %vm4824, %v6720, 0.0
        %v7584 = vadd.f32 %v7582, %v7583
        %v7585 = vsel %vm4824, %v6721, 0.0
        %v7586 = vadd.f32 %v7584, %v7585
        %v7587 = vsel %vm4824, %v6722, 0.0
        %v7588 = vadd.f32 %v7586, %v7587
        %v7589 = vsel %vm4824, %v6723, 0.0
        %v7590 = vadd.f32 %v7588, %v7589
        %v7591 = vsel %vm4824, %v6724, 0.0
        %v7592 = vadd.f32 %v7590, %v7591
        %v7593 = vsel %vm4824, %v6725, 0.0
        %v7594 = vadd.f32 %v7592, %v7593
        %v7595 = vsel %vm4824, %v6726, 0.0
        %v7596 = vadd.f32 %v7594, %v7595
        %v7597 = vsel %vm4824, %v6727, 0.0
        %v7598 = vadd.f32 %v7596, %v7597
        %v7599 = vsel %vm4824, %v6728, 0.0
        %v7600 = vadd.f32 %v7598, %v7599
        %v7601 = vsel %vm4824, %v6729, 0.0
        %v7602 = vadd.f32 %v7600, %v7601
        %v7603 = vsel %vm4824, %v6730, 0.0
        %v7604 = vadd.f32 %v7602, %v7603
        %v7605 = vsel %vm4824, %v6731, 0.0
        %v7606 = vadd.f32 %v7604, %v7605
        %v7607 = vsel %vm4824, %v6732, 0.0
        %v7608 = vadd.f32 %v7606, %v7607
        %v7609 = vsel %vm4824, %v6733, 0.0
        %v7610 = vadd.f32 %v7608, %v7609
        %v7611 = vsel %vm4824, %v6734, 0.0
        %v7612 = vadd.f32 %v7610, %v7611
        %v7613 = vsel %vm4824, %v6735, 0.0
        %v7614 = vadd.f32 %v7612, %v7613
        %v7615 = vsel %vm4824, %v6736, 0.0
        %v7616 = vadd.f32 %v7614, %v7615
        %v7617 = vsel %vm4824, %v6737, 0.0
        %v7618 = vadd.f32 %v7616, %v7617
        %v7619 = vsel %vm4824, %v6738, 0.0
        %v7620 = vadd.f32 %v7618, %v7619
        %v7621 = vsel %vm4824, %v6739, 0.0
        %v7622 = vadd.f32 %v7620, %v7621
        %v7623 = vsel %vm4824, %v6740, 0.0
        %v7624 = vadd.f32 %v7622, %v7623
        %v7625 = vsel %vm4824, %v6741, 0.0
        %v7626 = vadd.f32 %v7624, %v7625
        %v7627 = vsel %vm4824, %v6742, 0.0
        %v7628 = vadd.f32 %v7626, %v7627
        %v7629 = vsel %vm4824, %v6743, 0.0
        %v7630 = vadd.f32 %v7628, %v7629
        %v7631 = vsel %vm4824, %v6744, 0.0
        %v7632 = vadd.f32 %v7630, %v7631
        %v7633 = vsel %vm4824, %v6745, 0.0
        %v7634 = vadd.f32 %v7632, %v7633
        %v7635 = vsel %vm4824, %v6746, 0.0
        %v7636 = vadd.f32 %v7634, %v7635
        %v7637 = vsel %vm4824, %v6747, 0.0
        %v7638 = vadd.f32 %v7636, %v7637
        %v7639 = vsel %vm4824, %v6748, 0.0
        %v7640 = vadd.f32 %v7638, %v7639
        %v7641 = vsel %vm4824, %v6749, 0.0
        %v7642 = vadd.f32 %v7640, %v7641
        %v7643 = vsel %vm4824, %v6750, 0.0
        %v7644 = vadd.f32 %v7642, %v7643
        %v7645 = vsel %vm4824, %v6751, 0.0
        %v7646 = vadd.f32 %v7644, %v7645
        %v7647 = vsel %vm4824, %v6752, 0.0
        %v7648 = vadd.f32 %v7646, %v7647
        %v7649 = vsel %vm4824, %v6753, 0.0
        %v7650 = vadd.f32 %v7648, %v7649
        %v7651 = vsel %vm4824, %v6754, 0.0
        %v7652 = vadd.f32 %v7650, %v7651
        %v7653 = vsel %vm4824, %v6755, 0.0
        %v7654 = vadd.f32 %v7652, %v7653
        %v7655 = vsel %vm4824, %v6756, 0.0
        %v7656 = vadd.f32 %v7654, %v7655
        %v7657 = vsel %vm4824, %v6757, 0.0
        %v7658 = vadd.f32 %v7656, %v7657
        %v7659 = vsel %vm4824, %v6758, 0.0
        %v7660 = vadd.f32 %v7658, %v7659
        %v7661 = vsel %vm4824, %v6759, 0.0
        %v7662 = vadd.f32 %v7660, %v7661
        %v7663 = vsel %vm4824, %v6760, 0.0
        %v7664 = vadd.f32 %v7662, %v7663
        %v7665 = vsel %vm4824, %v6761, 0.0
        %v7666 = vadd.f32 %v7664, %v7665
        %v7667 = vsel %vm4824, %v6762, 0.0
        %v7668 = vadd.f32 %v7666, %v7667
        %v7669 = vsel %vm4824, %v6763, 0.0
        %v7670 = vadd.f32 %v7668, %v7669
        %v7671 = vsel %vm4824, %v6764, 0.0
        %v7672 = vadd.f32 %v7670, %v7671
        %v7673 = vsel %vm4824, %v6765, 0.0
        %v7674 = vadd.f32 %v7672, %v7673
        %v7675 = vsel %vm4824, %v6766, 0.0
        %v7676 = vadd.f32 %v7674, %v7675
        %v7677 = vsel %vm4824, %v6767, 0.0
        %v7678 = vadd.f32 %v7676, %v7677
        %v7679 = vsel %vm4824, %v6768, 0.0
        %v7680 = vadd.f32 %v7678, %v7679
        %v7681 = vsel %vm4824, %v6769, 0.0
        %v7682 = vadd.f32 %v7680, %v7681
        %v7683 = vsel %vm4824, %v6770, 0.0
        %v7684 = vadd.f32 %v7682, %v7683
        %v7685 = vsel %vm4824, %v6771, 0.0
        %v7686 = vadd.f32 %v7684, %v7685
        %v7687 = vsel %vm4824, %v6772, 0.0
        %v7688 = vadd.f32 %v7686, %v7687
        %v7689 = vsel %vm4824, %v6773, 0.0
        %v7690 = vadd.f32 %v7688, %v7689
        %v7691 = vsel %vm4824, %v6774, 0.0
        %v7692 = vadd.f32 %v7690, %v7691
        %v7693 = vsel %vm4824, %v6775, 0.0
        %v7694 = vadd.f32 %v7692, %v7693
        %v7695 = vsel %vm4824, %v6776, 0.0
        %v7696 = vadd.f32 %v7694, %v7695
        %v7697 = vsel %vm4824, %v6777, 0.0
        %v7698 = vadd.f32 %v7696, %v7697
        %v7699 = vsel %vm4824, %v6778, 0.0
        %v7700 = vadd.f32 %v7698, %v7699
        %v7701 = vsel %vm4824, %v6779, 0.0
        %v7702 = vadd.f32 %v7700, %v7701
        %v7703 = vsel %vm4824, %v6780, 0.0
        %v7704 = vadd.f32 %v7702, %v7703
        %v7705 = vsel %vm4824, %v6781, 0.0
        %v7706 = vadd.f32 %v7704, %v7705
        %v7707 = vsel %vm4824, %v6782, 0.0
        %v7708 = vadd.f32 %v7706, %v7707
        %v7709 = vsel %vm4824, %v6783, 0.0
        %v7710 = vadd.f32 %v7708, %v7709
        %v7711 = vsel %vm4824, %v6784, 0.0
        %v7712 = vadd.f32 %v7710, %v7711
        %v7713 = vsel %vm4824, %v6785, 0.0
        %v7714 = vadd.f32 %v7712, %v7713
        %v7715 = vsel %vm4824, %v6786, 0.0
        %v7716 = vadd.f32 %v7714, %v7715
        %v7717 = vsel %vm4824, %v6787, 0.0
        %v7718 = vadd.f32 %v7716, %v7717
        %v7719 = vsel %vm4824, %v6788, 0.0
        %v7720 = vadd.f32 %v7718, %v7719
        %v7721 = vsel %vm4824, %v6789, 0.0
        %v7722 = vadd.f32 %v7720, %v7721
        %v7723 = vsel %vm4824, %v6790, 0.0
        %v7724 = vadd.f32 %v7722, %v7723
        %v7725 = vsel %vm4824, %v6791, 0.0
        %v7726 = vadd.f32 %v7724, %v7725
        %v7727 = vsel %vm4824, %v6792, 0.0
        %v7728 = vadd.f32 %v7726, %v7727
        %v7729 = vsel %vm4824, %v6793, 0.0
        %v7730 = vadd.f32 %v7728, %v7729
        %v7731 = vsel %vm4824, %v6794, 0.0
        %v7732 = vadd.f32 %v7730, %v7731
        %v7733 = vsel %vm4824, %v6795, 0.0
        %v7734 = vadd.f32 %v7732, %v7733
        %v7735 = vsel %vm4824, %v6796, 0.0
        %v7736 = vadd.f32 %v7734, %v7735
        %v7737 = vsel %vm4824, %v6797, 0.0
        %v7738 = vadd.f32 %v7736, %v7737
        %v7739 = vsel %vm4824, %v6798, 0.0
        %v7740 = vadd.f32 %v7738, %v7739
        %v7741 = vsel %vm4824, %v6799, 0.0
        %v7742 = vadd.f32 %v7740, %v7741
        %v7743 = vsel %vm4824, %v6800, 0.0
        %v7744 = vadd.f32 %v7742, %v7743
        %v7745 = vsel %vm4824, %v6801, 0.0
        %v7746 = vadd.f32 %v7744, %v7745
        %v7747 = vsel %vm4824, %v6802, 0.0
        %v7748 = vadd.f32 %v7746, %v7747
        %v7749 = vsel %vm4824, %v6803, 0.0
        %v7750 = vadd.f32 %v7748, %v7749
        %v7751 = vsel %vm4824, %v6804, 0.0
        %v7752 = vadd.f32 %v7750, %v7751
        %v7753 = vsel %vm4824, %v6805, 0.0
        %v7754 = vadd.f32 %v7752, %v7753
        %v7755 = vsel %vm4824, %v6806, 0.0
        %v7756 = vadd.f32 %v7754, %v7755
        %v7757 = vsel %vm4824, %v6807, 0.0
        %v7758 = vadd.f32 %v7756, %v7757
        %v7759 = vsel %vm4824, %v6808, 0.0
        %v7760 = vadd.f32 %v7758, %v7759
        %v7761 = vsel %vm4824, %v6809, 0.0
        %v7762 = vadd.f32 %v7760, %v7761
        %v7763 = vsel %vm4824, %v6810, 0.0
        %v7764 = vadd.f32 %v7762, %v7763
        %v7765 = vsel %vm4824, %v6811, 0.0
        %v7766 = vadd.f32 %v7764, %v7765
        %v7767 = vsel %vm4824, %v6812, 0.0
        %v7768 = vadd.f32 %v7766, %v7767
        %v7769 = vsel %vm4824, %v6813, 0.0
        %v7770 = vadd.f32 %v7768, %v7769
        %v7771 = vsel %vm4824, %v6814, 0.0
        %v7772 = vadd.f32 %v7770, %v7771
        %v7773 = vsel %vm4824, %v6815, 0.0
        %v7774 = vadd.f32 %v7772, %v7773
        %v7775 = vsel %vm4824, %v6816, 0.0
        %v7776 = vadd.f32 %v7774, %v7775
        %v7777 = vsel %vm4824, %v6817, 0.0
        %v7778 = vadd.f32 %v7776, %v7777
        %v7779 = vsel %vm4824, %v6818, 0.0
        %v7780 = vadd.f32 %v7778, %v7779
        %v7781 = vsel %vm4824, %v6819, 0.0
        %v7782 = vadd.f32 %v7780, %v7781
        %v7783 = vsel %vm4824, %v6820, 0.0
        %v7784 = vadd.f32 %v7782, %v7783
        %v7785 = vsel %vm4824, %v6821, 0.0
        %v7786 = vadd.f32 %v7784, %v7785
        %v7787 = vsel %vm4824, %v6822, 0.0
        %v7788 = vadd.f32 %v7786, %v7787
        %v7789 = vsel %vm4824, %v6823, 0.0
        %v7790 = vadd.f32 %v7788, %v7789
        %v7791 = vsel %vm4824, %v6824, 0.0
        %v7792 = vadd.f32 %v7790, %v7791
        %v7793 = vsel %vm4824, %v6825, 0.0
        %v7794 = vadd.f32 %v7792, %v7793
        %v7795 = vsel %vm4824, %v6826, 0.0
        %v7796 = vadd.f32 %v7794, %v7795
        %v7797 = vsel %vm4824, %v6827, 0.0
        %v7798 = vadd.f32 %v7796, %v7797
        %v7799 = vsel %vm4824, %v6828, 0.0
        %v7800 = vadd.f32 %v7798, %v7799
        %v7801 = vsel %vm4824, %v6829, 0.0
        %v7802 = vadd.f32 %v7800, %v7801
        %v7803 = vsel %vm4824, %v6830, 0.0
        %v7804 = vadd.f32 %v7802, %v7803
        %v7805 = vsel %vm4824, %v6831, 0.0
        %v7806 = vadd.f32 %v7804, %v7805
        %v7807 = vsel %vm4824, %v6832, 0.0
        %v7808 = vadd.f32 %v7806, %v7807
        %v7809 = vsel %vm4824, %v6833, 0.0
        %v7810 = vadd.f32 %v7808, %v7809
        %v7811 = vsel %vm4824, %v6834, 0.0
        %v7812 = vadd.f32 %v7810, %v7811
        %v7813 = vsel %vm4824, %v6835, 0.0
        %v7814 = vadd.f32 %v7812, %v7813
        %v7815 = vsel %vm4824, %v6836, 0.0
        %v7816 = vadd.f32 %v7814, %v7815
        %v7817 = vsel %vm4824, %v6837, 0.0
        %v7818 = vadd.f32 %v7816, %v7817
        %v7819 = vsel %vm4824, %v6838, 0.0
        %v7820 = vadd.f32 %v7818, %v7819
        %v7821 = vsel %vm4824, %v6839, 0.0
        %v7822 = vadd.f32 %v7820, %v7821
        %v7823 = vsel %vm4824, %v6840, 0.0
        %v7824 = vadd.f32 %v7822, %v7823
        %v7825 = vsel %vm4824, %v6841, 0.0
        %v7826 = vadd.f32 %v7824, %v7825
        %v7827 = vsel %vm4824, %v6842, 0.0
        %v7828 = vadd.f32 %v7826, %v7827
        %v7829 = vsel %vm4824, %v6843, 0.0
        %v7830 = vadd.f32 %v7828, %v7829
        %v7831 = vsel %vm4824, %v6844, 0.0
        %v7832 = vadd.f32 %v7830, %v7831
        %v7833 = vsel %vm4824, %v6845, 0.0
        %v7834 = vadd.f32 %v7832, %v7833
        %v7835 = vsel %vm4824, %v6846, 0.0
        %v7836 = vadd.f32 %v7834, %v7835
        %v7837 = vsel %vm4824, %v6847, 0.0
        %v7838 = vadd.f32 %v7836, %v7837
        %v7839 = vsel %vm4824, %v6848, 0.0
        %v7840 = vadd.f32 %v7838, %v7839
        %v7841 = vsel %vm4824, %v6849, 0.0
        %v7842 = vadd.f32 %v7840, %v7841
        %v7843 = vsel %vm4824, %v6850, 0.0
        %v7844 = vadd.f32 %v7842, %v7843
        %v7845 = vsel %vm4824, %v6851, 0.0
        %v7846 = vadd.f32 %v7844, %v7845
        %v7847 = vsel %vm4824, %v6852, 0.0
        %v7848 = vadd.f32 %v7846, %v7847
        %v7849 = vsel %vm4824, %v6853, 0.0
        %v7850 = vadd.f32 %v7848, %v7849
        %v7851 = vsel %vm4824, %v6854, 0.0
        %v7852 = vadd.f32 %v7850, %v7851
        %v7853 = vsel %vm4824, %v6855, 0.0
        %v7854 = vadd.f32 %v7852, %v7853
        %v7855 = vsel %vm4824, %v6856, 0.0
        %v7856 = vadd.f32 %v7854, %v7855
        %v7857 = vsel %vm4824, %v6857, 0.0
        %v7858 = vadd.f32 %v7856, %v7857
        %v7859 = vsel %vm4824, %v6858, 0.0
        %v7860 = vadd.f32 %v7858, %v7859
        %v7861 = vsel %vm4824, %v6859, 0.0
        %v7862 = vadd.f32 %v7860, %v7861
        %v7863 = vsel %vm4824, %v6860, 0.0
        %v7864 = vadd.f32 %v7862, %v7863
        %v7865 = vsel %vm4824, %v6861, 0.0
        %v7866 = vadd.f32 %v7864, %v7865
        %v7867 = vsel %vm4824, %v6862, 0.0
        %v7868 = vadd.f32 %v7866, %v7867
        %v7869 = vsel %vm4824, %v6863, 0.0
        %v7870 = vadd.f32 %v7868, %v7869
        %v7871 = vsel %vm4824, %v6864, 0.0
        %v7872 = vadd.f32 %v7870, %v7871
        %v7873 = vsel %vm4824, %v6865, 0.0
        %v7874 = vadd.f32 %v7872, %v7873
        %v7875 = vsel %vm4824, %v6866, 0.0
        %v7876 = vadd.f32 %v7874, %v7875
        %v7877 = vsel %vm4824, %v6867, 0.0
        %v7878 = vadd.f32 %v7876, %v7877
        %v7879 = vsel %vm4824, %v6868, 0.0
        %v7880 = vadd.f32 %v7878, %v7879
        %v7881 = vsel %vm4824, %v6869, 0.0
        %v7882 = vadd.f32 %v7880, %v7881
        %v7883 = vsel %vm4824, %v6870, 0.0
        %v7884 = vadd.f32 %v7882, %v7883
        %v7885 = vsel %vm4824, %v6871, 0.0
        %v7886 = vadd.f32 %v7884, %v7885
        %v7887 = vsel %vm4824, %v6872, 0.0
        %v7888 = vadd.f32 %v7886, %v7887
        %v7889 = vsel %vm4824, %v6873, 0.0
        %v7890 = vadd.f32 %v7888, %v7889
        %v7891 = vsel %vm4824, %v6874, 0.0
        %v7892 = vadd.f32 %v7890, %v7891
        %v7893 = vsel %vm4824, %v6875, 0.0
        %v7894 = vadd.f32 %v7892, %v7893
        %v7895 = vsel %vm4824, %v6876, 0.0
        %v7896 = vadd.f32 %v7894, %v7895
        %v7897 = vsel %vm4824, %v6877, 0.0
        %v7898 = vadd.f32 %v7896, %v7897
        %v7899 = vsel %vm4824, %v6878, 0.0
        %v7900 = vadd.f32 %v7898, %v7899
        %v7901 = vsel %vm4824, %v6879, 0.0
        %v7902 = vadd.f32 %v7900, %v7901
        %v7903 = vrot.slane %v7902, 4
        %v7904 = vadd.f32 %v7902, %v7903
        %v7905 = vrot.slane %v7904, 2
        %v7906 = vadd.f32 %v7904, %v7905
        %v7907 = vrot.slane %v7906, 1
        %v7908 = vadd.f32 %v7906, %v7907
        %v7909 = vmul.f32 %v7908, %v5854
        %v7910 = vadd.f32 %v7909, 1e-05
        %v7911 = vrsqrt.pop %v7910
        %v7912 = vmul.f32 %v5856, %v7911
        %v7913 = vmul.f32 %v5857, %v7911
        %v7914 = vmul.f32 %v5858, %v7911
        %v7915 = vmul.f32 %v5859, %v7911
        %v7916 = vmul.f32 %v5860, %v7911
        %v7917 = vmul.f32 %v5861, %v7911
        %v7918 = vmul.f32 %v5862, %v7911
        %v7919 = vmul.f32 %v5863, %v7911
        %v7920 = vmul.f32 %v5864, %v7911
        %v7921 = vmul.f32 %v5865, %v7911
        %v7922 = vmul.f32 %v5866, %v7911
        %v7923 = vmul.f32 %v5867, %v7911
        %v7924 = vmul.f32 %v5868, %v7911
        %v7925 = vmul.f32 %v5869, %v7911
        %v7926 = vmul.f32 %v5870, %v7911
        %v7927 = vmul.f32 %v5871, %v7911
        %v7928 = vmul.f32 %v5872, %v7911
        %v7929 = vmul.f32 %v5873, %v7911
        %v7930 = vmul.f32 %v5874, %v7911
        %v7931 = vmul.f32 %v5875, %v7911
        %v7932 = vmul.f32 %v5876, %v7911
        %v7933 = vmul.f32 %v5877, %v7911
        %v7934 = vmul.f32 %v5878, %v7911
        %v7935 = vmul.f32 %v5879, %v7911
        %v7936 = vmul.f32 %v5880, %v7911
        %v7937 = vmul.f32 %v5881, %v7911
        %v7938 = vmul.f32 %v5882, %v7911
        %v7939 = vmul.f32 %v5883, %v7911
        %v7940 = vmul.f32 %v5884, %v7911
        %v7941 = vmul.f32 %v5885, %v7911
        %v7942 = vmul.f32 %v5886, %v7911
        %v7943 = vmul.f32 %v5887, %v7911
        %v7944 = vmul.f32 %v5888, %v7911
        %v7945 = vmul.f32 %v5889, %v7911
        %v7946 = vmul.f32 %v5890, %v7911
        %v7947 = vmul.f32 %v5891, %v7911
        %v7948 = vmul.f32 %v5892, %v7911
        %v7949 = vmul.f32 %v5893, %v7911
        %v7950 = vmul.f32 %v5894, %v7911
        %v7951 = vmul.f32 %v5895, %v7911
        %v7952 = vmul.f32 %v5896, %v7911
        %v7953 = vmul.f32 %v5897, %v7911
        %v7954 = vmul.f32 %v5898, %v7911
        %v7955 = vmul.f32 %v5899, %v7911
        %v7956 = vmul.f32 %v5900, %v7911
        %v7957 = vmul.f32 %v5901, %v7911
        %v7958 = vmul.f32 %v5902, %v7911
        %v7959 = vmul.f32 %v5903, %v7911
        %v7960 = vmul.f32 %v5904, %v7911
        %v7961 = vmul.f32 %v5905, %v7911
        %v7962 = vmul.f32 %v5906, %v7911
        %v7963 = vmul.f32 %v5907, %v7911
        %v7964 = vmul.f32 %v5908, %v7911
        %v7965 = vmul.f32 %v5909, %v7911
        %v7966 = vmul.f32 %v5910, %v7911
        %v7967 = vmul.f32 %v5911, %v7911
        %v7968 = vmul.f32 %v5912, %v7911
        %v7969 = vmul.f32 %v5913, %v7911
        %v7970 = vmul.f32 %v5914, %v7911
        %v7971 = vmul.f32 %v5915, %v7911
        %v7972 = vmul.f32 %v5916, %v7911
        %v7973 = vmul.f32 %v5917, %v7911
        %v7974 = vmul.f32 %v5918, %v7911
        %v7975 = vmul.f32 %v5919, %v7911
        %v7976 = vmul.f32 %v5920, %v7911
        %v7977 = vmul.f32 %v5921, %v7911
        %v7978 = vmul.f32 %v5922, %v7911
        %v7979 = vmul.f32 %v5923, %v7911
        %v7980 = vmul.f32 %v5924, %v7911
        %v7981 = vmul.f32 %v5925, %v7911
        %v7982 = vmul.f32 %v5926, %v7911
        %v7983 = vmul.f32 %v5927, %v7911
        %v7984 = vmul.f32 %v5928, %v7911
        %v7985 = vmul.f32 %v5929, %v7911
        %v7986 = vmul.f32 %v5930, %v7911
        %v7987 = vmul.f32 %v5931, %v7911
        %v7988 = vmul.f32 %v5932, %v7911
        %v7989 = vmul.f32 %v5933, %v7911
        %v7990 = vmul.f32 %v5934, %v7911
        %v7991 = vmul.f32 %v5935, %v7911
        %v7992 = vmul.f32 %v5936, %v7911
        %v7993 = vmul.f32 %v5937, %v7911
        %v7994 = vmul.f32 %v5938, %v7911
        %v7995 = vmul.f32 %v5939, %v7911
        %v7996 = vmul.f32 %v5940, %v7911
        %v7997 = vmul.f32 %v5941, %v7911
        %v7998 = vmul.f32 %v5942, %v7911
        %v7999 = vmul.f32 %v5943, %v7911
        %v8000 = vmul.f32 %v5944, %v7911
        %v8001 = vmul.f32 %v5945, %v7911
        %v8002 = vmul.f32 %v5946, %v7911
        %v8003 = vmul.f32 %v5947, %v7911
        %v8004 = vmul.f32 %v5948, %v7911
        %v8005 = vmul.f32 %v5949, %v7911
        %v8006 = vmul.f32 %v5950, %v7911
        %v8007 = vmul.f32 %v5951, %v7911
        %v8008 = vmul.f32 %v5952, %v7911
        %v8009 = vmul.f32 %v5953, %v7911
        %v8010 = vmul.f32 %v5954, %v7911
        %v8011 = vmul.f32 %v5955, %v7911
        %v8012 = vmul.f32 %v5956, %v7911
        %v8013 = vmul.f32 %v5957, %v7911
        %v8014 = vmul.f32 %v5958, %v7911
        %v8015 = vmul.f32 %v5959, %v7911
        %v8016 = vmul.f32 %v5960, %v7911
        %v8017 = vmul.f32 %v5961, %v7911
        %v8018 = vmul.f32 %v5962, %v7911
        %v8019 = vmul.f32 %v5963, %v7911
        %v8020 = vmul.f32 %v5964, %v7911
        %v8021 = vmul.f32 %v5965, %v7911
        %v8022 = vmul.f32 %v5966, %v7911
        %v8023 = vmul.f32 %v5967, %v7911
        %v8024 = vmul.f32 %v5968, %v7911
        %v8025 = vmul.f32 %v5969, %v7911
        %v8026 = vmul.f32 %v5970, %v7911
        %v8027 = vmul.f32 %v5971, %v7911
        %v8028 = vmul.f32 %v5972, %v7911
        %v8029 = vmul.f32 %v5973, %v7911
        %v8030 = vmul.f32 %v5974, %v7911
        %v8031 = vmul.f32 %v5975, %v7911
        %v8032 = vmul.f32 %v5976, %v7911
        %v8033 = vmul.f32 %v5977, %v7911
        %v8034 = vmul.f32 %v5978, %v7911
        %v8035 = vmul.f32 %v5979, %v7911
        %v8036 = vmul.f32 %v5980, %v7911
        %v8037 = vmul.f32 %v5981, %v7911
        %v8038 = vmul.f32 %v5982, %v7911
        %v8039 = vmul.f32 %v5983, %v7911
        %v8040 = vmul.f32 %v5984, %v7911
        %v8041 = vmul.f32 %v5985, %v7911
        %v8042 = vmul.f32 %v5986, %v7911
        %v8043 = vmul.f32 %v5987, %v7911
        %v8044 = vmul.f32 %v5988, %v7911
        %v8045 = vmul.f32 %v5989, %v7911
        %v8046 = vmul.f32 %v5990, %v7911
        %v8047 = vmul.f32 %v5991, %v7911
        %v8048 = vmul.f32 %v5992, %v7911
        %v8049 = vmul.f32 %v5993, %v7911
        %v8050 = vmul.f32 %v5994, %v7911
        %v8051 = vmul.f32 %v5995, %v7911
        %v8052 = vmul.f32 %v5996, %v7911
        %v8053 = vmul.f32 %v5997, %v7911
        %v8054 = vmul.f32 %v5998, %v7911
        %v8055 = vmul.f32 %v5999, %v7911
        %v8056 = vmul.f32 %v6000, %v7911
        %v8057 = vmul.f32 %v6001, %v7911
        %v8058 = vmul.f32 %v6002, %v7911
        %v8059 = vmul.f32 %v6003, %v7911
        %v8060 = vmul.f32 %v6004, %v7911
        %v8061 = vmul.f32 %v6005, %v7911
        %v8062 = vmul.f32 %v6006, %v7911
        %v8063 = vmul.f32 %v6007, %v7911
        %v8064 = vmul.f32 %v6008, %v7911
        %v8065 = vmul.f32 %v6009, %v7911
        %v8066 = vmul.f32 %v6010, %v7911
        %v8067 = vmul.f32 %v6011, %v7911
        %v8068 = vmul.f32 %v6012, %v7911
        %v8069 = vmul.f32 %v6013, %v7911
        %v8070 = vmul.f32 %v6014, %v7911
        %v8071 = vmul.f32 %v6015, %v7911
        %v8072 = vmul.f32 %v6016, %v7911
        %v8073 = vmul.f32 %v6017, %v7911
        %v8074 = vmul.f32 %v6018, %v7911
        %v8075 = vmul.f32 %v6019, %v7911
        %v8076 = vmul.f32 %v6020, %v7911
        %v8077 = vmul.f32 %v6021, %v7911
        %v8078 = vmul.f32 %v6022, %v7911
        %v8079 = vmul.f32 %v6023, %v7911
        %v8080 = vmul.f32 %v6024, %v7911
        %v8081 = vmul.f32 %v6025, %v7911
        %v8082 = vmul.f32 %v6026, %v7911
        %v8083 = vmul.f32 %v6027, %v7911
        %v8084 = vmul.f32 %v6028, %v7911
        %v8085 = vmul.f32 %v6029, %v7911
        %v8086 = vmul.f32 %v6030, %v7911
        %v8087 = vmul.f32 %v6031, %v7911
        %v8088 = vmul.f32 %v6032, %v7911
        %v8089 = vmul.f32 %v6033, %v7911
        %v8090 = vmul.f32 %v6034, %v7911
        %v8091 = vmul.f32 %v6035, %v7911
        %v8092 = vmul.f32 %v6036, %v7911
        %v8093 = vmul.f32 %v6037, %v7911
        %v8094 = vmul.f32 %v6038, %v7911
        %v8095 = vmul.f32 %v6039, %v7911
        %v8096 = vmul.f32 %v6040, %v7911
        %v8097 = vmul.f32 %v6041, %v7911
        %v8098 = vmul.f32 %v6042, %v7911
        %v8099 = vmul.f32 %v6043, %v7911
        %v8100 = vmul.f32 %v6044, %v7911
        %v8101 = vmul.f32 %v6045, %v7911
        %v8102 = vmul.f32 %v6046, %v7911
        %v8103 = vmul.f32 %v6047, %v7911
        %v8104 = vmul.f32 %v6048, %v7911
        %v8105 = vmul.f32 %v6049, %v7911
        %v8106 = vmul.f32 %v6050, %v7911
        %v8107 = vmul.f32 %v6051, %v7911
        %v8108 = vmul.f32 %v6052, %v7911
        %v8109 = vmul.f32 %v6053, %v7911
        %v8110 = vmul.f32 %v6054, %v7911
        %v8111 = vmul.f32 %v6055, %v7911
        %v8112 = vmul.f32 %v6056, %v7911
        %v8113 = vmul.f32 %v6057, %v7911
        %v8114 = vmul.f32 %v6058, %v7911
        %v8115 = vmul.f32 %v6059, %v7911
        %v8116 = vmul.f32 %v6060, %v7911
        %v8117 = vmul.f32 %v6061, %v7911
        %v8118 = vmul.f32 %v6062, %v7911
        %v8119 = vmul.f32 %v6063, %v7911
        %v8120 = vmul.f32 %v6064, %v7911
        %v8121 = vmul.f32 %v6065, %v7911
        %v8122 = vmul.f32 %v6066, %v7911
        %v8123 = vmul.f32 %v6067, %v7911
        %v8124 = vmul.f32 %v6068, %v7911
        %v8125 = vmul.f32 %v6069, %v7911
        %v8126 = vmul.f32 %v6070, %v7911
        %v8127 = vmul.f32 %v6071, %v7911
        %v8128 = vmul.f32 %v6072, %v7911
        %v8129 = vmul.f32 %v6073, %v7911
        %v8130 = vmul.f32 %v6074, %v7911
        %v8131 = vmul.f32 %v6075, %v7911
        %v8132 = vmul.f32 %v6076, %v7911
        %v8133 = vmul.f32 %v6077, %v7911
        %v8134 = vmul.f32 %v6078, %v7911
        %v8135 = vmul.f32 %v6079, %v7911
        %v8136 = vmul.f32 %v6080, %v7911
        %v8137 = vmul.f32 %v6081, %v7911
        %v8138 = vmul.f32 %v6082, %v7911
        %v8139 = vmul.f32 %v6083, %v7911
        %v8140 = vmul.f32 %v6084, %v7911
        %v8141 = vmul.f32 %v6085, %v7911
        %v8142 = vmul.f32 %v6086, %v7911
        %v8143 = vmul.f32 %v6087, %v7911
        %v8144 = vmul.f32 %v6088, %v7911
        %v8145 = vmul.f32 %v6089, %v7911
        %v8146 = vmul.f32 %v6090, %v7911
        %v8147 = vmul.f32 %v6091, %v7911
        %v8148 = vmul.f32 %v6092, %v7911
        %v8149 = vmul.f32 %v6093, %v7911
        %v8150 = vmul.f32 %v6094, %v7911
        %v8151 = vmul.f32 %v6095, %v7911
        %v8152 = vmul.f32 %v6096, %v7911
        %v8153 = vmul.f32 %v6097, %v7911
        %v8154 = vmul.f32 %v6098, %v7911
        %v8155 = vmul.f32 %v6099, %v7911
        %v8156 = vmul.f32 %v6100, %v7911
        %v8157 = vmul.f32 %v6101, %v7911
        %v8158 = vmul.f32 %v6102, %v7911
        %v8159 = vmul.f32 %v6103, %v7911
        %v8160 = vmul.f32 %v6104, %v7911
        %v8161 = vmul.f32 %v6105, %v7911
        %v8162 = vmul.f32 %v6106, %v7911
        %v8163 = vmul.f32 %v6107, %v7911
        %v8164 = vmul.f32 %v6108, %v7911
        %v8165 = vmul.f32 %v6109, %v7911
        %v8166 = vmul.f32 %v6110, %v7911
        %v8167 = vmul.f32 %v6111, %v7911
        %v8168 = vmul.f32 %v6112, %v7911
        %v8169 = vmul.f32 %v6113, %v7911
        %v8170 = vmul.f32 %v6114, %v7911
        %v8171 = vmul.f32 %v6115, %v7911
        %v8172 = vmul.f32 %v6116, %v7911
        %v8173 = vmul.f32 %v6117, %v7911
        %v8174 = vmul.f32 %v6118, %v7911
        %v8175 = vmul.f32 %v6119, %v7911
        %v8176 = vmul.f32 %v6120, %v7911
        %v8177 = vmul.f32 %v6121, %v7911
        %v8178 = vmul.f32 %v6122, %v7911
        %v8179 = vmul.f32 %v6123, %v7911
        %v8180 = vmul.f32 %v6124, %v7911
        %v8181 = vmul.f32 %v6125, %v7911
        %v8182 = vmul.f32 %v6126, %v7911
        %v8183 = vmul.f32 %v6127, %v7911
        %v8184 = vmul.f32 %v6128, %v7911
        %v8185 = vmul.f32 %v6129, %v7911
        %v8186 = vmul.f32 %v6130, %v7911
        %v8187 = vmul.f32 %v6131, %v7911
        %v8188 = vmul.f32 %v6132, %v7911
        %v8189 = vmul.f32 %v6133, %v7911
        %v8190 = vmul.f32 %v6134, %v7911
        %v8191 = vmul.f32 %v6135, %v7911
        %v8192 = vmul.f32 %v6136, %v7911
        %v8193 = vmul.f32 %v6137, %v7911
        %v8194 = vmul.f32 %v6138, %v7911
        %v8195 = vmul.f32 %v6139, %v7911
        %v8196 = vmul.f32 %v6140, %v7911
        %v8197 = vmul.f32 %v6141, %v7911
        %v8198 = vmul.f32 %v6142, %v7911
        %v8199 = vmul.f32 %v6143, %v7911
        %v8200 = vmul.f32 %v6144, %v7911
        %v8201 = vmul.f32 %v6145, %v7911
        %v8202 = vmul.f32 %v6146, %v7911
        %v8203 = vmul.f32 %v6147, %v7911
        %v8204 = vmul.f32 %v6148, %v7911
        %v8205 = vmul.f32 %v6149, %v7911
        %v8206 = vmul.f32 %v6150, %v7911
        %v8207 = vmul.f32 %v6151, %v7911
        %v8208 = vmul.f32 %v6152, %v7911
        %v8209 = vmul.f32 %v6153, %v7911
        %v8210 = vmul.f32 %v6154, %v7911
        %v8211 = vmul.f32 %v6155, %v7911
        %v8212 = vmul.f32 %v6156, %v7911
        %v8213 = vmul.f32 %v6157, %v7911
        %v8214 = vmul.f32 %v6158, %v7911
        %v8215 = vmul.f32 %v6159, %v7911
        %v8216 = vmul.f32 %v6160, %v7911
        %v8217 = vmul.f32 %v6161, %v7911
        %v8218 = vmul.f32 %v6162, %v7911
        %v8219 = vmul.f32 %v6163, %v7911
        %v8220 = vmul.f32 %v6164, %v7911
        %v8221 = vmul.f32 %v6165, %v7911
        %v8222 = vmul.f32 %v6166, %v7911
        %v8223 = vmul.f32 %v6167, %v7911
        %v8224 = vmul.f32 %v6168, %v7911
        %v8225 = vmul.f32 %v6169, %v7911
        %v8226 = vmul.f32 %v6170, %v7911
        %v8227 = vmul.f32 %v6171, %v7911
        %v8228 = vmul.f32 %v6172, %v7911
        %v8229 = vmul.f32 %v6173, %v7911
        %v8230 = vmul.f32 %v6174, %v7911
        %v8231 = vmul.f32 %v6175, %v7911
        %v8232 = vmul.f32 %v6176, %v7911
        %v8233 = vmul.f32 %v6177, %v7911
        %v8234 = vmul.f32 %v6178, %v7911
        %v8235 = vmul.f32 %v6179, %v7911
        %v8236 = vmul.f32 %v6180, %v7911
        %v8237 = vmul.f32 %v6181, %v7911
        %v8238 = vmul.f32 %v6182, %v7911
        %v8239 = vmul.f32 %v6183, %v7911
        %v8240 = vmul.f32 %v6184, %v7911
        %v8241 = vmul.f32 %v6185, %v7911
        %v8242 = vmul.f32 %v6186, %v7911
        %v8243 = vmul.f32 %v6187, %v7911
        %v8244 = vmul.f32 %v6188, %v7911
        %v8245 = vmul.f32 %v6189, %v7911
        %v8246 = vmul.f32 %v6190, %v7911
        %v8247 = vmul.f32 %v6191, %v7911
        %v8248 = vmul.f32 %v6192, %v7911
        %v8249 = vmul.f32 %v6193, %v7911
        %v8250 = vmul.f32 %v6194, %v7911
        %v8251 = vmul.f32 %v6195, %v7911
        %v8252 = vmul.f32 %v6196, %v7911
        %v8253 = vmul.f32 %v6197, %v7911
        %v8254 = vmul.f32 %v6198, %v7911
        %v8255 = vmul.f32 %v6199, %v7911
        %v8256 = vmul.f32 %v6200, %v7911
        %v8257 = vmul.f32 %v6201, %v7911
        %v8258 = vmul.f32 %v6202, %v7911
        %v8259 = vmul.f32 %v6203, %v7911
        %v8260 = vmul.f32 %v6204, %v7911
        %v8261 = vmul.f32 %v6205, %v7911
        %v8262 = vmul.f32 %v6206, %v7911
        %v8263 = vmul.f32 %v6207, %v7911
        %v8264 = vmul.f32 %v6208, %v7911
        %v8265 = vmul.f32 %v6209, %v7911
        %v8266 = vmul.f32 %v6210, %v7911
        %v8267 = vmul.f32 %v6211, %v7911
        %v8268 = vmul.f32 %v6212, %v7911
        %v8269 = vmul.f32 %v6213, %v7911
        %v8270 = vmul.f32 %v6214, %v7911
        %v8271 = vmul.f32 %v6215, %v7911
        %v8272 = vmul.f32 %v6216, %v7911
        %v8273 = vmul.f32 %v6217, %v7911
        %v8274 = vmul.f32 %v6218, %v7911
        %v8275 = vmul.f32 %v6219, %v7911
        %v8276 = vmul.f32 %v6220, %v7911
        %v8277 = vmul.f32 %v6221, %v7911
        %v8278 = vmul.f32 %v6222, %v7911
        %v8279 = vmul.f32 %v6223, %v7911
        %v8280 = vmul.f32 %v6224, %v7911
        %v8281 = vmul.f32 %v6225, %v7911
        %v8282 = vmul.f32 %v6226, %v7911
        %v8283 = vmul.f32 %v6227, %v7911
        %v8284 = vmul.f32 %v6228, %v7911
        %v8285 = vmul.f32 %v6229, %v7911
        %v8286 = vmul.f32 %v6230, %v7911
        %v8287 = vmul.f32 %v6231, %v7911
        %v8288 = vmul.f32 %v6232, %v7911
        %v8289 = vmul.f32 %v6233, %v7911
        %v8290 = vmul.f32 %v6234, %v7911
        %v8291 = vmul.f32 %v6235, %v7911
        %v8292 = vmul.f32 %v6236, %v7911
        %v8293 = vmul.f32 %v6237, %v7911
        %v8294 = vmul.f32 %v6238, %v7911
        %v8295 = vmul.f32 %v6239, %v7911
        %v8296 = vmul.f32 %v6240, %v7911
        %v8297 = vmul.f32 %v6241, %v7911
        %v8298 = vmul.f32 %v6242, %v7911
        %v8299 = vmul.f32 %v6243, %v7911
        %v8300 = vmul.f32 %v6244, %v7911
        %v8301 = vmul.f32 %v6245, %v7911
        %v8302 = vmul.f32 %v6246, %v7911
        %v8303 = vmul.f32 %v6247, %v7911
        %v8304 = vmul.f32 %v6248, %v7911
        %v8305 = vmul.f32 %v6249, %v7911
        %v8306 = vmul.f32 %v6250, %v7911
        %v8307 = vmul.f32 %v6251, %v7911
        %v8308 = vmul.f32 %v6252, %v7911
        %v8309 = vmul.f32 %v6253, %v7911
        %v8310 = vmul.f32 %v6254, %v7911
        %v8311 = vmul.f32 %v6255, %v7911
        %v8312 = vmul.f32 %v6256, %v7911
        %v8313 = vmul.f32 %v6257, %v7911
        %v8314 = vmul.f32 %v6258, %v7911
        %v8315 = vmul.f32 %v6259, %v7911
        %v8316 = vmul.f32 %v6260, %v7911
        %v8317 = vmul.f32 %v6261, %v7911
        %v8318 = vmul.f32 %v6262, %v7911
        %v8319 = vmul.f32 %v6263, %v7911
        %v8320 = vmul.f32 %v6264, %v7911
        %v8321 = vmul.f32 %v6265, %v7911
        %v8322 = vmul.f32 %v6266, %v7911
        %v8323 = vmul.f32 %v6267, %v7911
        %v8324 = vmul.f32 %v6268, %v7911
        %v8325 = vmul.f32 %v6269, %v7911
        %v8326 = vmul.f32 %v6270, %v7911
        %v8327 = vmul.f32 %v6271, %v7911
        %v8328 = vmul.f32 %v6272, %v7911
        %v8329 = vmul.f32 %v6273, %v7911
        %v8330 = vmul.f32 %v6274, %v7911
        %v8331 = vmul.f32 %v6275, %v7911
        %v8332 = vmul.f32 %v6276, %v7911
        %v8333 = vmul.f32 %v6277, %v7911
        %v8334 = vmul.f32 %v6278, %v7911
        %v8335 = vmul.f32 %v6279, %v7911
        %v8336 = vmul.f32 %v6280, %v7911
        %v8337 = vmul.f32 %v6281, %v7911
        %v8338 = vmul.f32 %v6282, %v7911
        %v8339 = vmul.f32 %v6283, %v7911
        %v8340 = vmul.f32 %v6284, %v7911
        %v8341 = vmul.f32 %v6285, %v7911
        %v8342 = vmul.f32 %v6286, %v7911
        %v8343 = vmul.f32 %v6287, %v7911
        %v8344 = vmul.f32 %v6288, %v7911
        %v8345 = vmul.f32 %v6289, %v7911
        %v8346 = vmul.f32 %v6290, %v7911
        %v8347 = vmul.f32 %v6291, %v7911
        %v8348 = vmul.f32 %v6292, %v7911
        %v8349 = vmul.f32 %v6293, %v7911
        %v8350 = vmul.f32 %v6294, %v7911
        %v8351 = vmul.f32 %v6295, %v7911
        %v8352 = vmul.f32 %v6296, %v7911
        %v8353 = vmul.f32 %v6297, %v7911
        %v8354 = vmul.f32 %v6298, %v7911
        %v8355 = vmul.f32 %v6299, %v7911
        %v8356 = vmul.f32 %v6300, %v7911
        %v8357 = vmul.f32 %v6301, %v7911
        %v8358 = vmul.f32 %v6302, %v7911
        %v8359 = vmul.f32 %v6303, %v7911
        %v8360 = vmul.f32 %v6304, %v7911
        %v8361 = vmul.f32 %v6305, %v7911
        %v8362 = vmul.f32 %v6306, %v7911
        %v8363 = vmul.f32 %v6307, %v7911
        %v8364 = vmul.f32 %v6308, %v7911
        %v8365 = vmul.f32 %v6309, %v7911
        %v8366 = vmul.f32 %v6310, %v7911
        %v8367 = vmul.f32 %v6311, %v7911
        %v8368 = vmul.f32 %v6312, %v7911
        %v8369 = vmul.f32 %v6313, %v7911
        %v8370 = vmul.f32 %v6314, %v7911
        %v8371 = vmul.f32 %v6315, %v7911
        %v8372 = vmul.f32 %v6316, %v7911
        %v8373 = vmul.f32 %v6317, %v7911
        %v8374 = vmul.f32 %v6318, %v7911
        %v8375 = vmul.f32 %v6319, %v7911
        %v8376 = vmul.f32 %v6320, %v7911
        %v8377 = vmul.f32 %v6321, %v7911
        %v8378 = vmul.f32 %v6322, %v7911
        %v8379 = vmul.f32 %v6323, %v7911
        %v8380 = vmul.f32 %v6324, %v7911
        %v8381 = vmul.f32 %v6325, %v7911
        %v8382 = vmul.f32 %v6326, %v7911
        %v8383 = vmul.f32 %v6327, %v7911
        %v8384 = vmul.f32 %v6328, %v7911
        %v8385 = vmul.f32 %v6329, %v7911
        %v8386 = vmul.f32 %v6330, %v7911
        %v8387 = vmul.f32 %v6331, %v7911
        %v8388 = vmul.f32 %v6332, %v7911
        %v8389 = vmul.f32 %v6333, %v7911
        %v8390 = vmul.f32 %v6334, %v7911
        %v8391 = vmul.f32 %v6335, %v7911
        %v8392 = vmul.f32 %v6336, %v7911
        %v8393 = vmul.f32 %v6337, %v7911
        %v8394 = vmul.f32 %v6338, %v7911
        %v8395 = vmul.f32 %v6339, %v7911
        %v8396 = vmul.f32 %v6340, %v7911
        %v8397 = vmul.f32 %v6341, %v7911
        %v8398 = vmul.f32 %v6342, %v7911
        %v8399 = vmul.f32 %v6343, %v7911
        %v8400 = vmul.f32 %v6344, %v7911
        %v8401 = vmul.f32 %v6345, %v7911
        %v8402 = vmul.f32 %v6346, %v7911
        %v8403 = vmul.f32 %v6347, %v7911
        %v8404 = vmul.f32 %v6348, %v7911
        %v8405 = vmul.f32 %v6349, %v7911
        %v8406 = vmul.f32 %v6350, %v7911
        %v8407 = vmul.f32 %v6351, %v7911
        %v8408 = vmul.f32 %v6352, %v7911
        %v8409 = vmul.f32 %v6353, %v7911
        %v8410 = vmul.f32 %v6354, %v7911
        %v8411 = vmul.f32 %v6355, %v7911
        %v8412 = vmul.f32 %v6356, %v7911
        %v8413 = vmul.f32 %v6357, %v7911
        %v8414 = vmul.f32 %v6358, %v7911
        %v8415 = vmul.f32 %v6359, %v7911
        %v8416 = vmul.f32 %v6360, %v7911
        %v8417 = vmul.f32 %v6361, %v7911
        %v8418 = vmul.f32 %v6362, %v7911
        %v8419 = vmul.f32 %v6363, %v7911
        %v8420 = vmul.f32 %v6364, %v7911
        %v8421 = vmul.f32 %v6365, %v7911
        %v8422 = vmul.f32 %v6366, %v7911
        %v8423 = vmul.f32 %v6367, %v7911
        %v8424 = vmax.f32 %v7912, 0.0
        %v8425 = vmax.f32 %v7913, 0.0
        %v8426 = vmax.f32 %v7914, 0.0
        %v8427 = vmax.f32 %v7915, 0.0
        %v8428 = vmax.f32 %v7916, 0.0
        %v8429 = vmax.f32 %v7917, 0.0
        %v8430 = vmax.f32 %v7918, 0.0
        %v8431 = vmax.f32 %v7919, 0.0
        %v8432 = vmax.f32 %v7920, 0.0
        %v8433 = vmax.f32 %v7921, 0.0
        %v8434 = vmax.f32 %v7922, 0.0
        %v8435 = vmax.f32 %v7923, 0.0
        %v8436 = vmax.f32 %v7924, 0.0
        %v8437 = vmax.f32 %v7925, 0.0
        %v8438 = vmax.f32 %v7926, 0.0
        %v8439 = vmax.f32 %v7927, 0.0
        %v8440 = vmax.f32 %v7928, 0.0
        %v8441 = vmax.f32 %v7929, 0.0
        %v8442 = vmax.f32 %v7930, 0.0
        %v8443 = vmax.f32 %v7931, 0.0
        %v8444 = vmax.f32 %v7932, 0.0
        %v8445 = vmax.f32 %v7933, 0.0
        %v8446 = vmax.f32 %v7934, 0.0
        %v8447 = vmax.f32 %v7935, 0.0
        %v8448 = vmax.f32 %v7936, 0.0
        %v8449 = vmax.f32 %v7937, 0.0
        %v8450 = vmax.f32 %v7938, 0.0
        %v8451 = vmax.f32 %v7939, 0.0
        %v8452 = vmax.f32 %v7940, 0.0
        %v8453 = vmax.f32 %v7941, 0.0
        %v8454 = vmax.f32 %v7942, 0.0
        %v8455 = vmax.f32 %v7943, 0.0
        %v8456 = vmax.f32 %v7944, 0.0
        %v8457 = vmax.f32 %v7945, 0.0
        %v8458 = vmax.f32 %v7946, 0.0
        %v8459 = vmax.f32 %v7947, 0.0
        %v8460 = vmax.f32 %v7948, 0.0
        %v8461 = vmax.f32 %v7949, 0.0
        %v8462 = vmax.f32 %v7950, 0.0
        %v8463 = vmax.f32 %v7951, 0.0
        %v8464 = vmax.f32 %v7952, 0.0
        %v8465 = vmax.f32 %v7953, 0.0
        %v8466 = vmax.f32 %v7954, 0.0
        %v8467 = vmax.f32 %v7955, 0.0
        %v8468 = vmax.f32 %v7956, 0.0
        %v8469 = vmax.f32 %v7957, 0.0
        %v8470 = vmax.f32 %v7958, 0.0
        %v8471 = vmax.f32 %v7959, 0.0
        %v8472 = vmax.f32 %v7960, 0.0
        %v8473 = vmax.f32 %v7961, 0.0
        %v8474 = vmax.f32 %v7962, 0.0
        %v8475 = vmax.f32 %v7963, 0.0
        %v8476 = vmax.f32 %v7964, 0.0
        %v8477 = vmax.f32 %v7965, 0.0
        %v8478 = vmax.f32 %v7966, 0.0
        %v8479 = vmax.f32 %v7967, 0.0
        %v8480 = vmax.f32 %v7968, 0.0
        %v8481 = vmax.f32 %v7969, 0.0
        %v8482 = vmax.f32 %v7970, 0.0
        %v8483 = vmax.f32 %v7971, 0.0
        %v8484 = vmax.f32 %v7972, 0.0
        %v8485 = vmax.f32 %v7973, 0.0
        %v8486 = vmax.f32 %v7974, 0.0
        %v8487 = vmax.f32 %v7975, 0.0
        %v8488 = vmax.f32 %v7976, 0.0
        %v8489 = vmax.f32 %v7977, 0.0
        %v8490 = vmax.f32 %v7978, 0.0
        %v8491 = vmax.f32 %v7979, 0.0
        %v8492 = vmax.f32 %v7980, 0.0
        %v8493 = vmax.f32 %v7981, 0.0
        %v8494 = vmax.f32 %v7982, 0.0
        %v8495 = vmax.f32 %v7983, 0.0
        %v8496 = vmax.f32 %v7984, 0.0
        %v8497 = vmax.f32 %v7985, 0.0
        %v8498 = vmax.f32 %v7986, 0.0
        %v8499 = vmax.f32 %v7987, 0.0
        %v8500 = vmax.f32 %v7988, 0.0
        %v8501 = vmax.f32 %v7989, 0.0
        %v8502 = vmax.f32 %v7990, 0.0
        %v8503 = vmax.f32 %v7991, 0.0
        %v8504 = vmax.f32 %v7992, 0.0
        %v8505 = vmax.f32 %v7993, 0.0
        %v8506 = vmax.f32 %v7994, 0.0
        %v8507 = vmax.f32 %v7995, 0.0
        %v8508 = vmax.f32 %v7996, 0.0
        %v8509 = vmax.f32 %v7997, 0.0
        %v8510 = vmax.f32 %v7998, 0.0
        %v8511 = vmax.f32 %v7999, 0.0
        %v8512 = vmax.f32 %v8000, 0.0
        %v8513 = vmax.f32 %v8001, 0.0
        %v8514 = vmax.f32 %v8002, 0.0
        %v8515 = vmax.f32 %v8003, 0.0
        %v8516 = vmax.f32 %v8004, 0.0
        %v8517 = vmax.f32 %v8005, 0.0
        %v8518 = vmax.f32 %v8006, 0.0
        %v8519 = vmax.f32 %v8007, 0.0
        %v8520 = vmax.f32 %v8008, 0.0
        %v8521 = vmax.f32 %v8009, 0.0
        %v8522 = vmax.f32 %v8010, 0.0
        %v8523 = vmax.f32 %v8011, 0.0
        %v8524 = vmax.f32 %v8012, 0.0
        %v8525 = vmax.f32 %v8013, 0.0
        %v8526 = vmax.f32 %v8014, 0.0
        %v8527 = vmax.f32 %v8015, 0.0
        %v8528 = vmax.f32 %v8016, 0.0
        %v8529 = vmax.f32 %v8017, 0.0
        %v8530 = vmax.f32 %v8018, 0.0
        %v8531 = vmax.f32 %v8019, 0.0
        %v8532 = vmax.f32 %v8020, 0.0
        %v8533 = vmax.f32 %v8021, 0.0
        %v8534 = vmax.f32 %v8022, 0.0
        %v8535 = vmax.f32 %v8023, 0.0
        %v8536 = vmax.f32 %v8024, 0.0
        %v8537 = vmax.f32 %v8025, 0.0
        %v8538 = vmax.f32 %v8026, 0.0
        %v8539 = vmax.f32 %v8027, 0.0
        %v8540 = vmax.f32 %v8028, 0.0
        %v8541 = vmax.f32 %v8029, 0.0
        %v8542 = vmax.f32 %v8030, 0.0
        %v8543 = vmax.f32 %v8031, 0.0
        %v8544 = vmax.f32 %v8032, 0.0
        %v8545 = vmax.f32 %v8033, 0.0
        %v8546 = vmax.f32 %v8034, 0.0
        %v8547 = vmax.f32 %v8035, 0.0
        %v8548 = vmax.f32 %v8036, 0.0
        %v8549 = vmax.f32 %v8037, 0.0
        %v8550 = vmax.f32 %v8038, 0.0
        %v8551 = vmax.f32 %v8039, 0.0
        %v8552 = vmax.f32 %v8040, 0.0
        %v8553 = vmax.f32 %v8041, 0.0
        %v8554 = vmax.f32 %v8042, 0.0
        %v8555 = vmax.f32 %v8043, 0.0
        %v8556 = vmax.f32 %v8044, 0.0
        %v8557 = vmax.f32 %v8045, 0.0
        %v8558 = vmax.f32 %v8046, 0.0
        %v8559 = vmax.f32 %v8047, 0.0
        %v8560 = vmax.f32 %v8048, 0.0
        %v8561 = vmax.f32 %v8049, 0.0
        %v8562 = vmax.f32 %v8050, 0.0
        %v8563 = vmax.f32 %v8051, 0.0
        %v8564 = vmax.f32 %v8052, 0.0
        %v8565 = vmax.f32 %v8053, 0.0
        %v8566 = vmax.f32 %v8054, 0.0
        %v8567 = vmax.f32 %v8055, 0.0
        %v8568 = vmax.f32 %v8056, 0.0
        %v8569 = vmax.f32 %v8057, 0.0
        %v8570 = vmax.f32 %v8058, 0.0
        %v8571 = vmax.f32 %v8059, 0.0
        %v8572 = vmax.f32 %v8060, 0.0
        %v8573 = vmax.f32 %v8061, 0.0
        %v8574 = vmax.f32 %v8062, 0.0
        %v8575 = vmax.f32 %v8063, 0.0
        %v8576 = vmax.f32 %v8064, 0.0
        %v8577 = vmax.f32 %v8065, 0.0
        %v8578 = vmax.f32 %v8066, 0.0
        %v8579 = vmax.f32 %v8067, 0.0
        %v8580 = vmax.f32 %v8068, 0.0
        %v8581 = vmax.f32 %v8069, 0.0
        %v8582 = vmax.f32 %v8070, 0.0
        %v8583 = vmax.f32 %v8071, 0.0
        %v8584 = vmax.f32 %v8072, 0.0
        %v8585 = vmax.f32 %v8073, 0.0
        %v8586 = vmax.f32 %v8074, 0.0
        %v8587 = vmax.f32 %v8075, 0.0
        %v8588 = vmax.f32 %v8076, 0.0
        %v8589 = vmax.f32 %v8077, 0.0
        %v8590 = vmax.f32 %v8078, 0.0
        %v8591 = vmax.f32 %v8079, 0.0
        %v8592 = vmax.f32 %v8080, 0.0
        %v8593 = vmax.f32 %v8081, 0.0
        %v8594 = vmax.f32 %v8082, 0.0
        %v8595 = vmax.f32 %v8083, 0.0
        %v8596 = vmax.f32 %v8084, 0.0
        %v8597 = vmax.f32 %v8085, 0.0
        %v8598 = vmax.f32 %v8086, 0.0
        %v8599 = vmax.f32 %v8087, 0.0
        %v8600 = vmax.f32 %v8088, 0.0
        %v8601 = vmax.f32 %v8089, 0.0
        %v8602 = vmax.f32 %v8090, 0.0
        %v8603 = vmax.f32 %v8091, 0.0
        %v8604 = vmax.f32 %v8092, 0.0
        %v8605 = vmax.f32 %v8093, 0.0
        %v8606 = vmax.f32 %v8094, 0.0
        %v8607 = vmax.f32 %v8095, 0.0
        %v8608 = vmax.f32 %v8096, 0.0
        %v8609 = vmax.f32 %v8097, 0.0
        %v8610 = vmax.f32 %v8098, 0.0
        %v8611 = vmax.f32 %v8099, 0.0
        %v8612 = vmax.f32 %v8100, 0.0
        %v8613 = vmax.f32 %v8101, 0.0
        %v8614 = vmax.f32 %v8102, 0.0
        %v8615 = vmax.f32 %v8103, 0.0
        %v8616 = vmax.f32 %v8104, 0.0
        %v8617 = vmax.f32 %v8105, 0.0
        %v8618 = vmax.f32 %v8106, 0.0
        %v8619 = vmax.f32 %v8107, 0.0
        %v8620 = vmax.f32 %v8108, 0.0
        %v8621 = vmax.f32 %v8109, 0.0
        %v8622 = vmax.f32 %v8110, 0.0
        %v8623 = vmax.f32 %v8111, 0.0
        %v8624 = vmax.f32 %v8112, 0.0
        %v8625 = vmax.f32 %v8113, 0.0
        %v8626 = vmax.f32 %v8114, 0.0
        %v8627 = vmax.f32 %v8115, 0.0
        %v8628 = vmax.f32 %v8116, 0.0
        %v8629 = vmax.f32 %v8117, 0.0
        %v8630 = vmax.f32 %v8118, 0.0
        %v8631 = vmax.f32 %v8119, 0.0
        %v8632 = vmax.f32 %v8120, 0.0
        %v8633 = vmax.f32 %v8121, 0.0
        %v8634 = vmax.f32 %v8122, 0.0
        %v8635 = vmax.f32 %v8123, 0.0
        %v8636 = vmax.f32 %v8124, 0.0
        %v8637 = vmax.f32 %v8125, 0.0
        %v8638 = vmax.f32 %v8126, 0.0
        %v8639 = vmax.f32 %v8127, 0.0
        %v8640 = vmax.f32 %v8128, 0.0
        %v8641 = vmax.f32 %v8129, 0.0
        %v8642 = vmax.f32 %v8130, 0.0
        %v8643 = vmax.f32 %v8131, 0.0
        %v8644 = vmax.f32 %v8132, 0.0
        %v8645 = vmax.f32 %v8133, 0.0
        %v8646 = vmax.f32 %v8134, 0.0
        %v8647 = vmax.f32 %v8135, 0.0
        %v8648 = vmax.f32 %v8136, 0.0
        %v8649 = vmax.f32 %v8137, 0.0
        %v8650 = vmax.f32 %v8138, 0.0
        %v8651 = vmax.f32 %v8139, 0.0
        %v8652 = vmax.f32 %v8140, 0.0
        %v8653 = vmax.f32 %v8141, 0.0
        %v8654 = vmax.f32 %v8142, 0.0
        %v8655 = vmax.f32 %v8143, 0.0
        %v8656 = vmax.f32 %v8144, 0.0
        %v8657 = vmax.f32 %v8145, 0.0
        %v8658 = vmax.f32 %v8146, 0.0
        %v8659 = vmax.f32 %v8147, 0.0
        %v8660 = vmax.f32 %v8148, 0.0
        %v8661 = vmax.f32 %v8149, 0.0
        %v8662 = vmax.f32 %v8150, 0.0
        %v8663 = vmax.f32 %v8151, 0.0
        %v8664 = vmax.f32 %v8152, 0.0
        %v8665 = vmax.f32 %v8153, 0.0
        %v8666 = vmax.f32 %v8154, 0.0
        %v8667 = vmax.f32 %v8155, 0.0
        %v8668 = vmax.f32 %v8156, 0.0
        %v8669 = vmax.f32 %v8157, 0.0
        %v8670 = vmax.f32 %v8158, 0.0
        %v8671 = vmax.f32 %v8159, 0.0
        %v8672 = vmax.f32 %v8160, 0.0
        %v8673 = vmax.f32 %v8161, 0.0
        %v8674 = vmax.f32 %v8162, 0.0
        %v8675 = vmax.f32 %v8163, 0.0
        %v8676 = vmax.f32 %v8164, 0.0
        %v8677 = vmax.f32 %v8165, 0.0
        %v8678 = vmax.f32 %v8166, 0.0
        %v8679 = vmax.f32 %v8167, 0.0
        %v8680 = vmax.f32 %v8168, 0.0
        %v8681 = vmax.f32 %v8169, 0.0
        %v8682 = vmax.f32 %v8170, 0.0
        %v8683 = vmax.f32 %v8171, 0.0
        %v8684 = vmax.f32 %v8172, 0.0
        %v8685 = vmax.f32 %v8173, 0.0
        %v8686 = vmax.f32 %v8174, 0.0
        %v8687 = vmax.f32 %v8175, 0.0
        %v8688 = vmax.f32 %v8176, 0.0
        %v8689 = vmax.f32 %v8177, 0.0
        %v8690 = vmax.f32 %v8178, 0.0
        %v8691 = vmax.f32 %v8179, 0.0
        %v8692 = vmax.f32 %v8180, 0.0
        %v8693 = vmax.f32 %v8181, 0.0
        %v8694 = vmax.f32 %v8182, 0.0
        %v8695 = vmax.f32 %v8183, 0.0
        %v8696 = vmax.f32 %v8184, 0.0
        %v8697 = vmax.f32 %v8185, 0.0
        %v8698 = vmax.f32 %v8186, 0.0
        %v8699 = vmax.f32 %v8187, 0.0
        %v8700 = vmax.f32 %v8188, 0.0
        %v8701 = vmax.f32 %v8189, 0.0
        %v8702 = vmax.f32 %v8190, 0.0
        %v8703 = vmax.f32 %v8191, 0.0
        %v8704 = vmax.f32 %v8192, 0.0
        %v8705 = vmax.f32 %v8193, 0.0
        %v8706 = vmax.f32 %v8194, 0.0
        %v8707 = vmax.f32 %v8195, 0.0
        %v8708 = vmax.f32 %v8196, 0.0
        %v8709 = vmax.f32 %v8197, 0.0
        %v8710 = vmax.f32 %v8198, 0.0
        %v8711 = vmax.f32 %v8199, 0.0
        %v8712 = vmax.f32 %v8200, 0.0
        %v8713 = vmax.f32 %v8201, 0.0
        %v8714 = vmax.f32 %v8202, 0.0
        %v8715 = vmax.f32 %v8203, 0.0
        %v8716 = vmax.f32 %v8204, 0.0
        %v8717 = vmax.f32 %v8205, 0.0
        %v8718 = vmax.f32 %v8206, 0.0
        %v8719 = vmax.f32 %v8207, 0.0
        %v8720 = vmax.f32 %v8208, 0.0
        %v8721 = vmax.f32 %v8209, 0.0
        %v8722 = vmax.f32 %v8210, 0.0
        %v8723 = vmax.f32 %v8211, 0.0
        %v8724 = vmax.f32 %v8212, 0.0
        %v8725 = vmax.f32 %v8213, 0.0
        %v8726 = vmax.f32 %v8214, 0.0
        %v8727 = vmax.f32 %v8215, 0.0
        %v8728 = vmax.f32 %v8216, 0.0
        %v8729 = vmax.f32 %v8217, 0.0
        %v8730 = vmax.f32 %v8218, 0.0
        %v8731 = vmax.f32 %v8219, 0.0
        %v8732 = vmax.f32 %v8220, 0.0
        %v8733 = vmax.f32 %v8221, 0.0
        %v8734 = vmax.f32 %v8222, 0.0
        %v8735 = vmax.f32 %v8223, 0.0
        %v8736 = vmax.f32 %v8224, 0.0
        %v8737 = vmax.f32 %v8225, 0.0
        %v8738 = vmax.f32 %v8226, 0.0
        %v8739 = vmax.f32 %v8227, 0.0
        %v8740 = vmax.f32 %v8228, 0.0
        %v8741 = vmax.f32 %v8229, 0.0
        %v8742 = vmax.f32 %v8230, 0.0
        %v8743 = vmax.f32 %v8231, 0.0
        %v8744 = vmax.f32 %v8232, 0.0
        %v8745 = vmax.f32 %v8233, 0.0
        %v8746 = vmax.f32 %v8234, 0.0
        %v8747 = vmax.f32 %v8235, 0.0
        %v8748 = vmax.f32 %v8236, 0.0
        %v8749 = vmax.f32 %v8237, 0.0
        %v8750 = vmax.f32 %v8238, 0.0
        %v8751 = vmax.f32 %v8239, 0.0
        %v8752 = vmax.f32 %v8240, 0.0
        %v8753 = vmax.f32 %v8241, 0.0
        %v8754 = vmax.f32 %v8242, 0.0
        %v8755 = vmax.f32 %v8243, 0.0
        %v8756 = vmax.f32 %v8244, 0.0
        %v8757 = vmax.f32 %v8245, 0.0
        %v8758 = vmax.f32 %v8246, 0.0
        %v8759 = vmax.f32 %v8247, 0.0
        %v8760 = vmax.f32 %v8248, 0.0
        %v8761 = vmax.f32 %v8249, 0.0
        %v8762 = vmax.f32 %v8250, 0.0
        %v8763 = vmax.f32 %v8251, 0.0
        %v8764 = vmax.f32 %v8252, 0.0
        %v8765 = vmax.f32 %v8253, 0.0
        %v8766 = vmax.f32 %v8254, 0.0
        %v8767 = vmax.f32 %v8255, 0.0
        %v8768 = vmax.f32 %v8256, 0.0
        %v8769 = vmax.f32 %v8257, 0.0
        %v8770 = vmax.f32 %v8258, 0.0
        %v8771 = vmax.f32 %v8259, 0.0
        %v8772 = vmax.f32 %v8260, 0.0
        %v8773 = vmax.f32 %v8261, 0.0
        %v8774 = vmax.f32 %v8262, 0.0
        %v8775 = vmax.f32 %v8263, 0.0
        %v8776 = vmax.f32 %v8264, 0.0
        %v8777 = vmax.f32 %v8265, 0.0
        %v8778 = vmax.f32 %v8266, 0.0
        %v8779 = vmax.f32 %v8267, 0.0
        %v8780 = vmax.f32 %v8268, 0.0
        %v8781 = vmax.f32 %v8269, 0.0
        %v8782 = vmax.f32 %v8270, 0.0
        %v8783 = vmax.f32 %v8271, 0.0
        %v8784 = vmax.f32 %v8272, 0.0
        %v8785 = vmax.f32 %v8273, 0.0
        %v8786 = vmax.f32 %v8274, 0.0
        %v8787 = vmax.f32 %v8275, 0.0
        %v8788 = vmax.f32 %v8276, 0.0
        %v8789 = vmax.f32 %v8277, 0.0
        %v8790 = vmax.f32 %v8278, 0.0
        %v8791 = vmax.f32 %v8279, 0.0
        %v8792 = vmax.f32 %v8280, 0.0
        %v8793 = vmax.f32 %v8281, 0.0
        %v8794 = vmax.f32 %v8282, 0.0
        %v8795 = vmax.f32 %v8283, 0.0
        %v8796 = vmax.f32 %v8284, 0.0
        %v8797 = vmax.f32 %v8285, 0.0
        %v8798 = vmax.f32 %v8286, 0.0
        %v8799 = vmax.f32 %v8287, 0.0
        %v8800 = vmax.f32 %v8288, 0.0
        %v8801 = vmax.f32 %v8289, 0.0
        %v8802 = vmax.f32 %v8290, 0.0
        %v8803 = vmax.f32 %v8291, 0.0
        %v8804 = vmax.f32 %v8292, 0.0
        %v8805 = vmax.f32 %v8293, 0.0
        %v8806 = vmax.f32 %v8294, 0.0
        %v8807 = vmax.f32 %v8295, 0.0
        %v8808 = vmax.f32 %v8296, 0.0
        %v8809 = vmax.f32 %v8297, 0.0
        %v8810 = vmax.f32 %v8298, 0.0
        %v8811 = vmax.f32 %v8299, 0.0
        %v8812 = vmax.f32 %v8300, 0.0
        %v8813 = vmax.f32 %v8301, 0.0
        %v8814 = vmax.f32 %v8302, 0.0
        %v8815 = vmax.f32 %v8303, 0.0
        %v8816 = vmax.f32 %v8304, 0.0
        %v8817 = vmax.f32 %v8305, 0.0
        %v8818 = vmax.f32 %v8306, 0.0
        %v8819 = vmax.f32 %v8307, 0.0
        %v8820 = vmax.f32 %v8308, 0.0
        %v8821 = vmax.f32 %v8309, 0.0
        %v8822 = vmax.f32 %v8310, 0.0
        %v8823 = vmax.f32 %v8311, 0.0
        %v8824 = vmax.f32 %v8312, 0.0
        %v8825 = vmax.f32 %v8313, 0.0
        %v8826 = vmax.f32 %v8314, 0.0
        %v8827 = vmax.f32 %v8315, 0.0
        %v8828 = vmax.f32 %v8316, 0.0
        %v8829 = vmax.f32 %v8317, 0.0
        %v8830 = vmax.f32 %v8318, 0.0
        %v8831 = vmax.f32 %v8319, 0.0
        %v8832 = vmax.f32 %v8320, 0.0
        %v8833 = vmax.f32 %v8321, 0.0
        %v8834 = vmax.f32 %v8322, 0.0
        %v8835 = vmax.f32 %v8323, 0.0
        %v8836 = vmax.f32 %v8324, 0.0
        %v8837 = vmax.f32 %v8325, 0.0
        %v8838 = vmax.f32 %v8326, 0.0
        %v8839 = vmax.f32 %v8327, 0.0
        %v8840 = vmax.f32 %v8328, 0.0
        %v8841 = vmax.f32 %v8329, 0.0
        %v8842 = vmax.f32 %v8330, 0.0
        %v8843 = vmax.f32 %v8331, 0.0
        %v8844 = vmax.f32 %v8332, 0.0
        %v8845 = vmax.f32 %v8333, 0.0
        %v8846 = vmax.f32 %v8334, 0.0
        %v8847 = vmax.f32 %v8335, 0.0
        %v8848 = vmax.f32 %v8336, 0.0
        %v8849 = vmax.f32 %v8337, 0.0
        %v8850 = vmax.f32 %v8338, 0.0
        %v8851 = vmax.f32 %v8339, 0.0
        %v8852 = vmax.f32 %v8340, 0.0
        %v8853 = vmax.f32 %v8341, 0.0
        %v8854 = vmax.f32 %v8342, 0.0
        %v8855 = vmax.f32 %v8343, 0.0
        %v8856 = vmax.f32 %v8344, 0.0
        %v8857 = vmax.f32 %v8345, 0.0
        %v8858 = vmax.f32 %v8346, 0.0
        %v8859 = vmax.f32 %v8347, 0.0
        %v8860 = vmax.f32 %v8348, 0.0
        %v8861 = vmax.f32 %v8349, 0.0
        %v8862 = vmax.f32 %v8350, 0.0
        %v8863 = vmax.f32 %v8351, 0.0
        %v8864 = vmax.f32 %v8352, 0.0
        %v8865 = vmax.f32 %v8353, 0.0
        %v8866 = vmax.f32 %v8354, 0.0
        %v8867 = vmax.f32 %v8355, 0.0
        %v8868 = vmax.f32 %v8356, 0.0
        %v8869 = vmax.f32 %v8357, 0.0
        %v8870 = vmax.f32 %v8358, 0.0
        %v8871 = vmax.f32 %v8359, 0.0
        %v8872 = vmax.f32 %v8360, 0.0
        %v8873 = vmax.f32 %v8361, 0.0
        %v8874 = vmax.f32 %v8362, 0.0
        %v8875 = vmax.f32 %v8363, 0.0
        %v8876 = vmax.f32 %v8364, 0.0
        %v8877 = vmax.f32 %v8365, 0.0
        %v8878 = vmax.f32 %v8366, 0.0
        %v8879 = vmax.f32 %v8367, 0.0
        %v8880 = vmax.f32 %v8368, 0.0
        %v8881 = vmax.f32 %v8369, 0.0
        %v8882 = vmax.f32 %v8370, 0.0
        %v8883 = vmax.f32 %v8371, 0.0
        %v8884 = vmax.f32 %v8372, 0.0
        %v8885 = vmax.f32 %v8373, 0.0
        %v8886 = vmax.f32 %v8374, 0.0
        %v8887 = vmax.f32 %v8375, 0.0
        %v8888 = vmax.f32 %v8376, 0.0
        %v8889 = vmax.f32 %v8377, 0.0
        %v8890 = vmax.f32 %v8378, 0.0
        %v8891 = vmax.f32 %v8379, 0.0
        %v8892 = vmax.f32 %v8380, 0.0
        %v8893 = vmax.f32 %v8381, 0.0
        %v8894 = vmax.f32 %v8382, 0.0
        %v8895 = vmax.f32 %v8383, 0.0
        %v8896 = vmax.f32 %v8384, 0.0
        %v8897 = vmax.f32 %v8385, 0.0
        %v8898 = vmax.f32 %v8386, 0.0
        %v8899 = vmax.f32 %v8387, 0.0
        %v8900 = vmax.f32 %v8388, 0.0
        %v8901 = vmax.f32 %v8389, 0.0
        %v8902 = vmax.f32 %v8390, 0.0
        %v8903 = vmax.f32 %v8391, 0.0
        %v8904 = vmax.f32 %v8392, 0.0
        %v8905 = vmax.f32 %v8393, 0.0
        %v8906 = vmax.f32 %v8394, 0.0
        %v8907 = vmax.f32 %v8395, 0.0
        %v8908 = vmax.f32 %v8396, 0.0
        %v8909 = vmax.f32 %v8397, 0.0
        %v8910 = vmax.f32 %v8398, 0.0
        %v8911 = vmax.f32 %v8399, 0.0
        %v8912 = vmax.f32 %v8400, 0.0
        %v8913 = vmax.f32 %v8401, 0.0
        %v8914 = vmax.f32 %v8402, 0.0
        %v8915 = vmax.f32 %v8403, 0.0
        %v8916 = vmax.f32 %v8404, 0.0
        %v8917 = vmax.f32 %v8405, 0.0
        %v8918 = vmax.f32 %v8406, 0.0
        %v8919 = vmax.f32 %v8407, 0.0
        %v8920 = vmax.f32 %v8408, 0.0
        %v8921 = vmax.f32 %v8409, 0.0
        %v8922 = vmax.f32 %v8410, 0.0
        %v8923 = vmax.f32 %v8411, 0.0
        %v8924 = vmax.f32 %v8412, 0.0
        %v8925 = vmax.f32 %v8413, 0.0
        %v8926 = vmax.f32 %v8414, 0.0
        %v8927 = vmax.f32 %v8415, 0.0
        %v8928 = vmax.f32 %v8416, 0.0
        %v8929 = vmax.f32 %v8417, 0.0
        %v8930 = vmax.f32 %v8418, 0.0
        %v8931 = vmax.f32 %v8419, 0.0
        %v8932 = vmax.f32 %v8420, 0.0
        %v8933 = vmax.f32 %v8421, 0.0
        %v8934 = vmax.f32 %v8422, 0.0
        %v8935 = vmax.f32 %v8423, 0.0
        %v8936 = vpack.c.bf16 %v8425, %v8424
        %v8937 = vpack.c.bf16 %v8427, %v8426
        %v8938 = vpack.c.bf16 %v8429, %v8428
        %v8939 = vpack.c.bf16 %v8431, %v8430
        %v8940 = vpack.c.bf16 %v8433, %v8432
        %v8941 = vpack.c.bf16 %v8435, %v8434
        %v8942 = vpack.c.bf16 %v8437, %v8436
        %v8943 = vpack.c.bf16 %v8439, %v8438
        %v8944 = vpack.c.bf16 %v8441, %v8440
        %v8945 = vpack.c.bf16 %v8443, %v8442
        %v8946 = vpack.c.bf16 %v8445, %v8444
        %v8947 = vpack.c.bf16 %v8447, %v8446
        %v8948 = vpack.c.bf16 %v8449, %v8448
        %v8949 = vpack.c.bf16 %v8451, %v8450
        %v8950 = vpack.c.bf16 %v8453, %v8452
        %v8951 = vpack.c.bf16 %v8455, %v8454
        %v8952 = vpack.c.bf16 %v8457, %v8456
        %v8953 = vpack.c.bf16 %v8459, %v8458
        %v8954 = vpack.c.bf16 %v8461, %v8460
        %v8955 = vpack.c.bf16 %v8463, %v8462
        %v8956 = vpack.c.bf16 %v8465, %v8464
        %v8957 = vpack.c.bf16 %v8467, %v8466
        %v8958 = vpack.c.bf16 %v8469, %v8468
        %v8959 = vpack.c.bf16 %v8471, %v8470
        %v8960 = vpack.c.bf16 %v8473, %v8472
        %v8961 = vpack.c.bf16 %v8475, %v8474
        %v8962 = vpack.c.bf16 %v8477, %v8476
        %v8963 = vpack.c.bf16 %v8479, %v8478
        %v8964 = vpack.c.bf16 %v8481, %v8480
        %v8965 = vpack.c.bf16 %v8483, %v8482
        %v8966 = vpack.c.bf16 %v8485, %v8484
        %v8967 = vpack.c.bf16 %v8487, %v8486
        %v8968 = vpack.c.bf16 %v8489, %v8488
        %v8969 = vpack.c.bf16 %v8491, %v8490
        %v8970 = vpack.c.bf16 %v8493, %v8492
        %v8971 = vpack.c.bf16 %v8495, %v8494
        %v8972 = vpack.c.bf16 %v8497, %v8496
        %v8973 = vpack.c.bf16 %v8499, %v8498
        %v8974 = vpack.c.bf16 %v8501, %v8500
        %v8975 = vpack.c.bf16 %v8503, %v8502
        %v8976 = vpack.c.bf16 %v8505, %v8504
        %v8977 = vpack.c.bf16 %v8507, %v8506
        %v8978 = vpack.c.bf16 %v8509, %v8508
        %v8979 = vpack.c.bf16 %v8511, %v8510
        %v8980 = vpack.c.bf16 %v8513, %v8512
        %v8981 = vpack.c.bf16 %v8515, %v8514
        %v8982 = vpack.c.bf16 %v8517, %v8516
        %v8983 = vpack.c.bf16 %v8519, %v8518
        %v8984 = vpack.c.bf16 %v8521, %v8520
        %v8985 = vpack.c.bf16 %v8523, %v8522
        %v8986 = vpack.c.bf16 %v8525, %v8524
        %v8987 = vpack.c.bf16 %v8527, %v8526
        %v8988 = vpack.c.bf16 %v8529, %v8528
        %v8989 = vpack.c.bf16 %v8531, %v8530
        %v8990 = vpack.c.bf16 %v8533, %v8532
        %v8991 = vpack.c.bf16 %v8535, %v8534
        %v8992 = vpack.c.bf16 %v8537, %v8536
        %v8993 = vpack.c.bf16 %v8539, %v8538
        %v8994 = vpack.c.bf16 %v8541, %v8540
        %v8995 = vpack.c.bf16 %v8543, %v8542
        %v8996 = vpack.c.bf16 %v8545, %v8544
        %v8997 = vpack.c.bf16 %v8547, %v8546
        %v8998 = vpack.c.bf16 %v8549, %v8548
        %v8999 = vpack.c.bf16 %v8551, %v8550
        %v9000 = vpack.c.bf16 %v8553, %v8552
        %v9001 = vpack.c.bf16 %v8555, %v8554
        %v9002 = vpack.c.bf16 %v8557, %v8556
        %v9003 = vpack.c.bf16 %v8559, %v8558
        %v9004 = vpack.c.bf16 %v8561, %v8560
        %v9005 = vpack.c.bf16 %v8563, %v8562
        %v9006 = vpack.c.bf16 %v8565, %v8564
        %v9007 = vpack.c.bf16 %v8567, %v8566
        %v9008 = vpack.c.bf16 %v8569, %v8568
        %v9009 = vpack.c.bf16 %v8571, %v8570
        %v9010 = vpack.c.bf16 %v8573, %v8572
        %v9011 = vpack.c.bf16 %v8575, %v8574
        %v9012 = vpack.c.bf16 %v8577, %v8576
        %v9013 = vpack.c.bf16 %v8579, %v8578
        %v9014 = vpack.c.bf16 %v8581, %v8580
        %v9015 = vpack.c.bf16 %v8583, %v8582
        %v9016 = vpack.c.bf16 %v8585, %v8584
        %v9017 = vpack.c.bf16 %v8587, %v8586
        %v9018 = vpack.c.bf16 %v8589, %v8588
        %v9019 = vpack.c.bf16 %v8591, %v8590
        %v9020 = vpack.c.bf16 %v8593, %v8592
        %v9021 = vpack.c.bf16 %v8595, %v8594
        %v9022 = vpack.c.bf16 %v8597, %v8596
        %v9023 = vpack.c.bf16 %v8599, %v8598
        %v9024 = vpack.c.bf16 %v8601, %v8600
        %v9025 = vpack.c.bf16 %v8603, %v8602
        %v9026 = vpack.c.bf16 %v8605, %v8604
        %v9027 = vpack.c.bf16 %v8607, %v8606
        %v9028 = vpack.c.bf16 %v8609, %v8608
        %v9029 = vpack.c.bf16 %v8611, %v8610
        %v9030 = vpack.c.bf16 %v8613, %v8612
        %v9031 = vpack.c.bf16 %v8615, %v8614
        %v9032 = vpack.c.bf16 %v8617, %v8616
        %v9033 = vpack.c.bf16 %v8619, %v8618
        %v9034 = vpack.c.bf16 %v8621, %v8620
        %v9035 = vpack.c.bf16 %v8623, %v8622
        %v9036 = vpack.c.bf16 %v8625, %v8624
        %v9037 = vpack.c.bf16 %v8627, %v8626
        %v9038 = vpack.c.bf16 %v8629, %v8628
        %v9039 = vpack.c.bf16 %v8631, %v8630
        %v9040 = vpack.c.bf16 %v8633, %v8632
        %v9041 = vpack.c.bf16 %v8635, %v8634
        %v9042 = vpack.c.bf16 %v8637, %v8636
        %v9043 = vpack.c.bf16 %v8639, %v8638
        %v9044 = vpack.c.bf16 %v8641, %v8640
        %v9045 = vpack.c.bf16 %v8643, %v8642
        %v9046 = vpack.c.bf16 %v8645, %v8644
        %v9047 = vpack.c.bf16 %v8647, %v8646
        %v9048 = vpack.c.bf16 %v8649, %v8648
        %v9049 = vpack.c.bf16 %v8651, %v8650
        %v9050 = vpack.c.bf16 %v8653, %v8652
        %v9051 = vpack.c.bf16 %v8655, %v8654
        %v9052 = vpack.c.bf16 %v8657, %v8656
        %v9053 = vpack.c.bf16 %v8659, %v8658
        %v9054 = vpack.c.bf16 %v8661, %v8660
        %v9055 = vpack.c.bf16 %v8663, %v8662
        %v9056 = vpack.c.bf16 %v8665, %v8664
        %v9057 = vpack.c.bf16 %v8667, %v8666
        %v9058 = vpack.c.bf16 %v8669, %v8668
        %v9059 = vpack.c.bf16 %v8671, %v8670
        %v9060 = vpack.c.bf16 %v8673, %v8672
        %v9061 = vpack.c.bf16 %v8675, %v8674
        %v9062 = vpack.c.bf16 %v8677, %v8676
        %v9063 = vpack.c.bf16 %v8679, %v8678
        %v9064 = vpack.c.bf16 %v8681, %v8680
        %v9065 = vpack.c.bf16 %v8683, %v8682
        %v9066 = vpack.c.bf16 %v8685, %v8684
        %v9067 = vpack.c.bf16 %v8687, %v8686
        %v9068 = vpack.c.bf16 %v8689, %v8688
        %v9069 = vpack.c.bf16 %v8691, %v8690
        %v9070 = vpack.c.bf16 %v8693, %v8692
        %v9071 = vpack.c.bf16 %v8695, %v8694
        %v9072 = vpack.c.bf16 %v8697, %v8696
        %v9073 = vpack.c.bf16 %v8699, %v8698
        %v9074 = vpack.c.bf16 %v8701, %v8700
        %v9075 = vpack.c.bf16 %v8703, %v8702
        %v9076 = vpack.c.bf16 %v8705, %v8704
        %v9077 = vpack.c.bf16 %v8707, %v8706
        %v9078 = vpack.c.bf16 %v8709, %v8708
        %v9079 = vpack.c.bf16 %v8711, %v8710
        %v9080 = vpack.c.bf16 %v8713, %v8712
        %v9081 = vpack.c.bf16 %v8715, %v8714
        %v9082 = vpack.c.bf16 %v8717, %v8716
        %v9083 = vpack.c.bf16 %v8719, %v8718
        %v9084 = vpack.c.bf16 %v8721, %v8720
        %v9085 = vpack.c.bf16 %v8723, %v8722
        %v9086 = vpack.c.bf16 %v8725, %v8724
        %v9087 = vpack.c.bf16 %v8727, %v8726
        %v9088 = vpack.c.bf16 %v8729, %v8728
        %v9089 = vpack.c.bf16 %v8731, %v8730
        %v9090 = vpack.c.bf16 %v8733, %v8732
        %v9091 = vpack.c.bf16 %v8735, %v8734
        %v9092 = vpack.c.bf16 %v8737, %v8736
        %v9093 = vpack.c.bf16 %v8739, %v8738
        %v9094 = vpack.c.bf16 %v8741, %v8740
        %v9095 = vpack.c.bf16 %v8743, %v8742
        %v9096 = vpack.c.bf16 %v8745, %v8744
        %v9097 = vpack.c.bf16 %v8747, %v8746
        %v9098 = vpack.c.bf16 %v8749, %v8748
        %v9099 = vpack.c.bf16 %v8751, %v8750
        %v9100 = vpack.c.bf16 %v8753, %v8752
        %v9101 = vpack.c.bf16 %v8755, %v8754
        %v9102 = vpack.c.bf16 %v8757, %v8756
        %v9103 = vpack.c.bf16 %v8759, %v8758
        %v9104 = vpack.c.bf16 %v8761, %v8760
        %v9105 = vpack.c.bf16 %v8763, %v8762
        %v9106 = vpack.c.bf16 %v8765, %v8764
        %v9107 = vpack.c.bf16 %v8767, %v8766
        %v9108 = vpack.c.bf16 %v8769, %v8768
        %v9109 = vpack.c.bf16 %v8771, %v8770
        %v9110 = vpack.c.bf16 %v8773, %v8772
        %v9111 = vpack.c.bf16 %v8775, %v8774
        %v9112 = vpack.c.bf16 %v8777, %v8776
        %v9113 = vpack.c.bf16 %v8779, %v8778
        %v9114 = vpack.c.bf16 %v8781, %v8780
        %v9115 = vpack.c.bf16 %v8783, %v8782
        %v9116 = vpack.c.bf16 %v8785, %v8784
        %v9117 = vpack.c.bf16 %v8787, %v8786
        %v9118 = vpack.c.bf16 %v8789, %v8788
        %v9119 = vpack.c.bf16 %v8791, %v8790
        %v9120 = vpack.c.bf16 %v8793, %v8792
        %v9121 = vpack.c.bf16 %v8795, %v8794
        %v9122 = vpack.c.bf16 %v8797, %v8796
        %v9123 = vpack.c.bf16 %v8799, %v8798
        %v9124 = vpack.c.bf16 %v8801, %v8800
        %v9125 = vpack.c.bf16 %v8803, %v8802
        %v9126 = vpack.c.bf16 %v8805, %v8804
        %v9127 = vpack.c.bf16 %v8807, %v8806
        %v9128 = vpack.c.bf16 %v8809, %v8808
        %v9129 = vpack.c.bf16 %v8811, %v8810
        %v9130 = vpack.c.bf16 %v8813, %v8812
        %v9131 = vpack.c.bf16 %v8815, %v8814
        %v9132 = vpack.c.bf16 %v8817, %v8816
        %v9133 = vpack.c.bf16 %v8819, %v8818
        %v9134 = vpack.c.bf16 %v8821, %v8820
        %v9135 = vpack.c.bf16 %v8823, %v8822
        %v9136 = vpack.c.bf16 %v8825, %v8824
        %v9137 = vpack.c.bf16 %v8827, %v8826
        %v9138 = vpack.c.bf16 %v8829, %v8828
        %v9139 = vpack.c.bf16 %v8831, %v8830
        %v9140 = vpack.c.bf16 %v8833, %v8832
        %v9141 = vpack.c.bf16 %v8835, %v8834
        %v9142 = vpack.c.bf16 %v8837, %v8836
        %v9143 = vpack.c.bf16 %v8839, %v8838
        %v9144 = vpack.c.bf16 %v8841, %v8840
        %v9145 = vpack.c.bf16 %v8843, %v8842
        %v9146 = vpack.c.bf16 %v8845, %v8844
        %v9147 = vpack.c.bf16 %v8847, %v8846
        %v9148 = vpack.c.bf16 %v8849, %v8848
        %v9149 = vpack.c.bf16 %v8851, %v8850
        %v9150 = vpack.c.bf16 %v8853, %v8852
        %v9151 = vpack.c.bf16 %v8855, %v8854
        %v9152 = vpack.c.bf16 %v8857, %v8856
        %v9153 = vpack.c.bf16 %v8859, %v8858
        %v9154 = vpack.c.bf16 %v8861, %v8860
        %v9155 = vpack.c.bf16 %v8863, %v8862
        %v9156 = vpack.c.bf16 %v8865, %v8864
        %v9157 = vpack.c.bf16 %v8867, %v8866
        %v9158 = vpack.c.bf16 %v8869, %v8868
        %v9159 = vpack.c.bf16 %v8871, %v8870
        %v9160 = vpack.c.bf16 %v8873, %v8872
        %v9161 = vpack.c.bf16 %v8875, %v8874
        %v9162 = vpack.c.bf16 %v8877, %v8876
        %v9163 = vpack.c.bf16 %v8879, %v8878
        %v9164 = vpack.c.bf16 %v8881, %v8880
        %v9165 = vpack.c.bf16 %v8883, %v8882
        %v9166 = vpack.c.bf16 %v8885, %v8884
        %v9167 = vpack.c.bf16 %v8887, %v8886
        %v9168 = vpack.c.bf16 %v8889, %v8888
        %v9169 = vpack.c.bf16 %v8891, %v8890
        %v9170 = vpack.c.bf16 %v8893, %v8892
        %v9171 = vpack.c.bf16 %v8895, %v8894
        %v9172 = vpack.c.bf16 %v8897, %v8896
        %v9173 = vpack.c.bf16 %v8899, %v8898
        %v9174 = vpack.c.bf16 %v8901, %v8900
        %v9175 = vpack.c.bf16 %v8903, %v8902
        %v9176 = vpack.c.bf16 %v8905, %v8904
        %v9177 = vpack.c.bf16 %v8907, %v8906
        %v9178 = vpack.c.bf16 %v8909, %v8908
        %v9179 = vpack.c.bf16 %v8911, %v8910
        %v9180 = vpack.c.bf16 %v8913, %v8912
        %v9181 = vpack.c.bf16 %v8915, %v8914
        %v9182 = vpack.c.bf16 %v8917, %v8916
        %v9183 = vpack.c.bf16 %v8919, %v8918
        %v9184 = vpack.c.bf16 %v8921, %v8920
        %v9185 = vpack.c.bf16 %v8923, %v8922
        %v9186 = vpack.c.bf16 %v8925, %v8924
        %v9187 = vpack.c.bf16 %v8927, %v8926
        %v9188 = vpack.c.bf16 %v8929, %v8928
        %v9189 = vpack.c.bf16 %v8931, %v8930
        %v9190 = vpack.c.bf16 %v8933, %v8932
        %v9191 = vpack.c.bf16 %v8935, %v8934
        %v9448 = vunpack.c.l.b16 %v8936
        %v9449 = vunpack.c.h.b16 %v8936
        %v9450 = vunpack.c.l.b16 %v8937
        %v9451 = vunpack.c.h.b16 %v8937
        %v9452 = vunpack.c.l.b16 %v8938
        %v9453 = vunpack.c.h.b16 %v8938
        %v9454 = vunpack.c.l.b16 %v8939
        %v9455 = vunpack.c.h.b16 %v8939
        %v9456 = vunpack.c.l.b16 %v8940
        %v9457 = vunpack.c.h.b16 %v8940
        %v9458 = vunpack.c.l.b16 %v8941
        %v9459 = vunpack.c.h.b16 %v8941
        %v9460 = vunpack.c.l.b16 %v8942
        %v9461 = vunpack.c.h.b16 %v8942
        %v9462 = vunpack.c.l.b16 %v8943
        %v9463 = vunpack.c.h.b16 %v8943
        %v9464 = vunpack.c.l.b16 %v8944
        %v9465 = vunpack.c.h.b16 %v8944
        %v9466 = vunpack.c.l.b16 %v8945
        %v9467 = vunpack.c.h.b16 %v8945
        %v9468 = vunpack.c.l.b16 %v8946
        %v9469 = vunpack.c.h.b16 %v8946
        %v9470 = vunpack.c.l.b16 %v8947
        %v9471 = vunpack.c.h.b16 %v8947
        %v9472 = vunpack.c.l.b16 %v8948
        %v9473 = vunpack.c.h.b16 %v8948
        %v9474 = vunpack.c.l.b16 %v8949
        %v9475 = vunpack.c.h.b16 %v8949
        %v9476 = vunpack.c.l.b16 %v8950
        %v9477 = vunpack.c.h.b16 %v8950
        %v9478 = vunpack.c.l.b16 %v8951
        %v9479 = vunpack.c.h.b16 %v8951
        %v9480 = vunpack.c.l.b16 %v8952
        %v9481 = vunpack.c.h.b16 %v8952
        %v9482 = vunpack.c.l.b16 %v8953
        %v9483 = vunpack.c.h.b16 %v8953
        %v9484 = vunpack.c.l.b16 %v8954
        %v9485 = vunpack.c.h.b16 %v8954
        %v9486 = vunpack.c.l.b16 %v8955
        %v9487 = vunpack.c.h.b16 %v8955
        %v9488 = vunpack.c.l.b16 %v8956
        %v9489 = vunpack.c.h.b16 %v8956
        %v9490 = vunpack.c.l.b16 %v8957
        %v9491 = vunpack.c.h.b16 %v8957
        %v9492 = vunpack.c.l.b16 %v8958
        %v9493 = vunpack.c.h.b16 %v8958
        %v9494 = vunpack.c.l.b16 %v8959
        %v9495 = vunpack.c.h.b16 %v8959
        %v9496 = vunpack.c.l.b16 %v8960
        %v9497 = vunpack.c.h.b16 %v8960
        %v9498 = vunpack.c.l.b16 %v8961
        %v9499 = vunpack.c.h.b16 %v8961
        %v9500 = vunpack.c.l.b16 %v8962
        %v9501 = vunpack.c.h.b16 %v8962
        %v9502 = vunpack.c.l.b16 %v8963
        %v9503 = vunpack.c.h.b16 %v8963
        %v9504 = vunpack.c.l.b16 %v8964
        %v9505 = vunpack.c.h.b16 %v8964
        %v9506 = vunpack.c.l.b16 %v8965
        %v9507 = vunpack.c.h.b16 %v8965
        %v9508 = vunpack.c.l.b16 %v8966
        %v9509 = vunpack.c.h.b16 %v8966
        %v9510 = vunpack.c.l.b16 %v8967
        %v9511 = vunpack.c.h.b16 %v8967
        %v9512 = vunpack.c.l.b16 %v8968
        %v9513 = vunpack.c.h.b16 %v8968
        %v9514 = vunpack.c.l.b16 %v8969
        %v9515 = vunpack.c.h.b16 %v8969
        %v9516 = vunpack.c.l.b16 %v8970
        %v9517 = vunpack.c.h.b16 %v8970
        %v9518 = vunpack.c.l.b16 %v8971
        %v9519 = vunpack.c.h.b16 %v8971
        %v9520 = vunpack.c.l.b16 %v8972
        %v9521 = vunpack.c.h.b16 %v8972
        %v9522 = vunpack.c.l.b16 %v8973
        %v9523 = vunpack.c.h.b16 %v8973
        %v9524 = vunpack.c.l.b16 %v8974
        %v9525 = vunpack.c.h.b16 %v8974
        %v9526 = vunpack.c.l.b16 %v8975
        %v9527 = vunpack.c.h.b16 %v8975
        %v9528 = vunpack.c.l.b16 %v8976
        %v9529 = vunpack.c.h.b16 %v8976
        %v9530 = vunpack.c.l.b16 %v8977
        %v9531 = vunpack.c.h.b16 %v8977
        %v9532 = vunpack.c.l.b16 %v8978
        %v9533 = vunpack.c.h.b16 %v8978
        %v9534 = vunpack.c.l.b16 %v8979
        %v9535 = vunpack.c.h.b16 %v8979
        %v9536 = vunpack.c.l.b16 %v8980
        %v9537 = vunpack.c.h.b16 %v8980
        %v9538 = vunpack.c.l.b16 %v8981
        %v9539 = vunpack.c.h.b16 %v8981
        %v9540 = vunpack.c.l.b16 %v8982
        %v9541 = vunpack.c.h.b16 %v8982
        %v9542 = vunpack.c.l.b16 %v8983
        %v9543 = vunpack.c.h.b16 %v8983
        %v9544 = vunpack.c.l.b16 %v8984
        %v9545 = vunpack.c.h.b16 %v8984
        %v9546 = vunpack.c.l.b16 %v8985
        %v9547 = vunpack.c.h.b16 %v8985
        %v9548 = vunpack.c.l.b16 %v8986
        %v9549 = vunpack.c.h.b16 %v8986
        %v9550 = vunpack.c.l.b16 %v8987
        %v9551 = vunpack.c.h.b16 %v8987
        %v9552 = vunpack.c.l.b16 %v8988
        %v9553 = vunpack.c.h.b16 %v8988
        %v9554 = vunpack.c.l.b16 %v8989
        %v9555 = vunpack.c.h.b16 %v8989
        %v9556 = vunpack.c.l.b16 %v8990
        %v9557 = vunpack.c.h.b16 %v8990
        %v9558 = vunpack.c.l.b16 %v8991
        %v9559 = vunpack.c.h.b16 %v8991
        %v9560 = vunpack.c.l.b16 %v8992
        %v9561 = vunpack.c.h.b16 %v8992
        %v9562 = vunpack.c.l.b16 %v8993
        %v9563 = vunpack.c.h.b16 %v8993
        %v9564 = vunpack.c.l.b16 %v8994
        %v9565 = vunpack.c.h.b16 %v8994
        %v9566 = vunpack.c.l.b16 %v8995
        %v9567 = vunpack.c.h.b16 %v8995
        %v9568 = vunpack.c.l.b16 %v8996
        %v9569 = vunpack.c.h.b16 %v8996
        %v9570 = vunpack.c.l.b16 %v8997
        %v9571 = vunpack.c.h.b16 %v8997
        %v9572 = vunpack.c.l.b16 %v8998
        %v9573 = vunpack.c.h.b16 %v8998
        %v9574 = vunpack.c.l.b16 %v8999
        %v9575 = vunpack.c.h.b16 %v8999
        %v9576 = vunpack.c.l.b16 %v9000
        %v9577 = vunpack.c.h.b16 %v9000
        %v9578 = vunpack.c.l.b16 %v9001
        %v9579 = vunpack.c.h.b16 %v9001
        %v9580 = vunpack.c.l.b16 %v9002
        %v9581 = vunpack.c.h.b16 %v9002
        %v9582 = vunpack.c.l.b16 %v9003
        %v9583 = vunpack.c.h.b16 %v9003
        %v9584 = vunpack.c.l.b16 %v9004
        %v9585 = vunpack.c.h.b16 %v9004
        %v9586 = vunpack.c.l.b16 %v9005
        %v9587 = vunpack.c.h.b16 %v9005
        %v9588 = vunpack.c.l.b16 %v9006
        %v9589 = vunpack.c.h.b16 %v9006
        %v9590 = vunpack.c.l.b16 %v9007
        %v9591 = vunpack.c.h.b16 %v9007
        %v9592 = vunpack.c.l.b16 %v9008
        %v9593 = vunpack.c.h.b16 %v9008
        %v9594 = vunpack.c.l.b16 %v9009
        %v9595 = vunpack.c.h.b16 %v9009
        %v9596 = vunpack.c.l.b16 %v9010
        %v9597 = vunpack.c.h.b16 %v9010
        %v9598 = vunpack.c.l.b16 %v9011
        %v9599 = vunpack.c.h.b16 %v9011
        %v9600 = vunpack.c.l.b16 %v9012
        %v9601 = vunpack.c.h.b16 %v9012
        %v9602 = vunpack.c.l.b16 %v9013
        %v9603 = vunpack.c.h.b16 %v9013
        %v9604 = vunpack.c.l.b16 %v9014
        %v9605 = vunpack.c.h.b16 %v9014
        %v9606 = vunpack.c.l.b16 %v9015
        %v9607 = vunpack.c.h.b16 %v9015
        %v9608 = vunpack.c.l.b16 %v9016
        %v9609 = vunpack.c.h.b16 %v9016
        %v9610 = vunpack.c.l.b16 %v9017
        %v9611 = vunpack.c.h.b16 %v9017
        %v9612 = vunpack.c.l.b16 %v9018
        %v9613 = vunpack.c.h.b16 %v9018
        %v9614 = vunpack.c.l.b16 %v9019
        %v9615 = vunpack.c.h.b16 %v9019
        %v9616 = vunpack.c.l.b16 %v9020
        %v9617 = vunpack.c.h.b16 %v9020
        %v9618 = vunpack.c.l.b16 %v9021
        %v9619 = vunpack.c.h.b16 %v9021
        %v9620 = vunpack.c.l.b16 %v9022
        %v9621 = vunpack.c.h.b16 %v9022
        %v9622 = vunpack.c.l.b16 %v9023
        %v9623 = vunpack.c.h.b16 %v9023
        %v9624 = vunpack.c.l.b16 %v9024
        %v9625 = vunpack.c.h.b16 %v9024
        %v9626 = vunpack.c.l.b16 %v9025
        %v9627 = vunpack.c.h.b16 %v9025
        %v9628 = vunpack.c.l.b16 %v9026
        %v9629 = vunpack.c.h.b16 %v9026
        %v9630 = vunpack.c.l.b16 %v9027
        %v9631 = vunpack.c.h.b16 %v9027
        %v9632 = vunpack.c.l.b16 %v9028
        %v9633 = vunpack.c.h.b16 %v9028
        %v9634 = vunpack.c.l.b16 %v9029
        %v9635 = vunpack.c.h.b16 %v9029
        %v9636 = vunpack.c.l.b16 %v9030
        %v9637 = vunpack.c.h.b16 %v9030
        %v9638 = vunpack.c.l.b16 %v9031
        %v9639 = vunpack.c.h.b16 %v9031
        %v9640 = vunpack.c.l.b16 %v9032
        %v9641 = vunpack.c.h.b16 %v9032
        %v9642 = vunpack.c.l.b16 %v9033
        %v9643 = vunpack.c.h.b16 %v9033
        %v9644 = vunpack.c.l.b16 %v9034
        %v9645 = vunpack.c.h.b16 %v9034
        %v9646 = vunpack.c.l.b16 %v9035
        %v9647 = vunpack.c.h.b16 %v9035
        %v9648 = vunpack.c.l.b16 %v9036
        %v9649 = vunpack.c.h.b16 %v9036
        %v9650 = vunpack.c.l.b16 %v9037
        %v9651 = vunpack.c.h.b16 %v9037
        %v9652 = vunpack.c.l.b16 %v9038
        %v9653 = vunpack.c.h.b16 %v9038
        %v9654 = vunpack.c.l.b16 %v9039
        %v9655 = vunpack.c.h.b16 %v9039
        %v9656 = vunpack.c.l.b16 %v9040
        %v9657 = vunpack.c.h.b16 %v9040
        %v9658 = vunpack.c.l.b16 %v9041
        %v9659 = vunpack.c.h.b16 %v9041
        %v9660 = vunpack.c.l.b16 %v9042
        %v9661 = vunpack.c.h.b16 %v9042
        %v9662 = vunpack.c.l.b16 %v9043
        %v9663 = vunpack.c.h.b16 %v9043
        %v9664 = vunpack.c.l.b16 %v9044
        %v9665 = vunpack.c.h.b16 %v9044
        %v9666 = vunpack.c.l.b16 %v9045
        %v9667 = vunpack.c.h.b16 %v9045
        %v9668 = vunpack.c.l.b16 %v9046
        %v9669 = vunpack.c.h.b16 %v9046
        %v9670 = vunpack.c.l.b16 %v9047
        %v9671 = vunpack.c.h.b16 %v9047
        %v9672 = vunpack.c.l.b16 %v9048
        %v9673 = vunpack.c.h.b16 %v9048
        %v9674 = vunpack.c.l.b16 %v9049
        %v9675 = vunpack.c.h.b16 %v9049
        %v9676 = vunpack.c.l.b16 %v9050
        %v9677 = vunpack.c.h.b16 %v9050
        %v9678 = vunpack.c.l.b16 %v9051
        %v9679 = vunpack.c.h.b16 %v9051
        %v9680 = vunpack.c.l.b16 %v9052
        %v9681 = vunpack.c.h.b16 %v9052
        %v9682 = vunpack.c.l.b16 %v9053
        %v9683 = vunpack.c.h.b16 %v9053
        %v9684 = vunpack.c.l.b16 %v9054
        %v9685 = vunpack.c.h.b16 %v9054
        %v9686 = vunpack.c.l.b16 %v9055
        %v9687 = vunpack.c.h.b16 %v9055
        %v9688 = vunpack.c.l.b16 %v9056
        %v9689 = vunpack.c.h.b16 %v9056
        %v9690 = vunpack.c.l.b16 %v9057
        %v9691 = vunpack.c.h.b16 %v9057
        %v9692 = vunpack.c.l.b16 %v9058
        %v9693 = vunpack.c.h.b16 %v9058
        %v9694 = vunpack.c.l.b16 %v9059
        %v9695 = vunpack.c.h.b16 %v9059
        %v9696 = vunpack.c.l.b16 %v9060
        %v9697 = vunpack.c.h.b16 %v9060
        %v9698 = vunpack.c.l.b16 %v9061
        %v9699 = vunpack.c.h.b16 %v9061
        %v9700 = vunpack.c.l.b16 %v9062
        %v9701 = vunpack.c.h.b16 %v9062
        %v9702 = vunpack.c.l.b16 %v9063
        %v9703 = vunpack.c.h.b16 %v9063
        %v9704 = vunpack.c.l.b16 %v9064
        %v9705 = vunpack.c.h.b16 %v9064
        %v9706 = vunpack.c.l.b16 %v9065
        %v9707 = vunpack.c.h.b16 %v9065
        %v9708 = vunpack.c.l.b16 %v9066
        %v9709 = vunpack.c.h.b16 %v9066
        %v9710 = vunpack.c.l.b16 %v9067
        %v9711 = vunpack.c.h.b16 %v9067
        %v9712 = vunpack.c.l.b16 %v9068
        %v9713 = vunpack.c.h.b16 %v9068
        %v9714 = vunpack.c.l.b16 %v9069
        %v9715 = vunpack.c.h.b16 %v9069
        %v9716 = vunpack.c.l.b16 %v9070
        %v9717 = vunpack.c.h.b16 %v9070
        %v9718 = vunpack.c.l.b16 %v9071
        %v9719 = vunpack.c.h.b16 %v9071
        %v9720 = vunpack.c.l.b16 %v9072
        %v9721 = vunpack.c.h.b16 %v9072
        %v9722 = vunpack.c.l.b16 %v9073
        %v9723 = vunpack.c.h.b16 %v9073
        %v9724 = vunpack.c.l.b16 %v9074
        %v9725 = vunpack.c.h.b16 %v9074
        %v9726 = vunpack.c.l.b16 %v9075
        %v9727 = vunpack.c.h.b16 %v9075
        %v9728 = vunpack.c.l.b16 %v9076
        %v9729 = vunpack.c.h.b16 %v9076
        %v9730 = vunpack.c.l.b16 %v9077
        %v9731 = vunpack.c.h.b16 %v9077
        %v9732 = vunpack.c.l.b16 %v9078
        %v9733 = vunpack.c.h.b16 %v9078
        %v9734 = vunpack.c.l.b16 %v9079
        %v9735 = vunpack.c.h.b16 %v9079
        %v9736 = vunpack.c.l.b16 %v9080
        %v9737 = vunpack.c.h.b16 %v9080
        %v9738 = vunpack.c.l.b16 %v9081
        %v9739 = vunpack.c.h.b16 %v9081
        %v9740 = vunpack.c.l.b16 %v9082
        %v9741 = vunpack.c.h.b16 %v9082
        %v9742 = vunpack.c.l.b16 %v9083
        %v9743 = vunpack.c.h.b16 %v9083
        %v9744 = vunpack.c.l.b16 %v9084
        %v9745 = vunpack.c.h.b16 %v9084
        %v9746 = vunpack.c.l.b16 %v9085
        %v9747 = vunpack.c.h.b16 %v9085
        %v9748 = vunpack.c.l.b16 %v9086
        %v9749 = vunpack.c.h.b16 %v9086
        %v9750 = vunpack.c.l.b16 %v9087
        %v9751 = vunpack.c.h.b16 %v9087
        %v9752 = vunpack.c.l.b16 %v9088
        %v9753 = vunpack.c.h.b16 %v9088
        %v9754 = vunpack.c.l.b16 %v9089
        %v9755 = vunpack.c.h.b16 %v9089
        %v9756 = vunpack.c.l.b16 %v9090
        %v9757 = vunpack.c.h.b16 %v9090
        %v9758 = vunpack.c.l.b16 %v9091
        %v9759 = vunpack.c.h.b16 %v9091
        %v9760 = vunpack.c.l.b16 %v9092
        %v9761 = vunpack.c.h.b16 %v9092
        %v9762 = vunpack.c.l.b16 %v9093
        %v9763 = vunpack.c.h.b16 %v9093
        %v9764 = vunpack.c.l.b16 %v9094
        %v9765 = vunpack.c.h.b16 %v9094
        %v9766 = vunpack.c.l.b16 %v9095
        %v9767 = vunpack.c.h.b16 %v9095
        %v9768 = vunpack.c.l.b16 %v9096
        %v9769 = vunpack.c.h.b16 %v9096
        %v9770 = vunpack.c.l.b16 %v9097
        %v9771 = vunpack.c.h.b16 %v9097
        %v9772 = vunpack.c.l.b16 %v9098
        %v9773 = vunpack.c.h.b16 %v9098
        %v9774 = vunpack.c.l.b16 %v9099
        %v9775 = vunpack.c.h.b16 %v9099
        %v9776 = vunpack.c.l.b16 %v9100
        %v9777 = vunpack.c.h.b16 %v9100
        %v9778 = vunpack.c.l.b16 %v9101
        %v9779 = vunpack.c.h.b16 %v9101
        %v9780 = vunpack.c.l.b16 %v9102
        %v9781 = vunpack.c.h.b16 %v9102
        %v9782 = vunpack.c.l.b16 %v9103
        %v9783 = vunpack.c.h.b16 %v9103
        %v9784 = vunpack.c.l.b16 %v9104
        %v9785 = vunpack.c.h.b16 %v9104
        %v9786 = vunpack.c.l.b16 %v9105
        %v9787 = vunpack.c.h.b16 %v9105
        %v9788 = vunpack.c.l.b16 %v9106
        %v9789 = vunpack.c.h.b16 %v9106
        %v9790 = vunpack.c.l.b16 %v9107
        %v9791 = vunpack.c.h.b16 %v9107
        %v9792 = vunpack.c.l.b16 %v9108
        %v9793 = vunpack.c.h.b16 %v9108
        %v9794 = vunpack.c.l.b16 %v9109
        %v9795 = vunpack.c.h.b16 %v9109
        %v9796 = vunpack.c.l.b16 %v9110
        %v9797 = vunpack.c.h.b16 %v9110
        %v9798 = vunpack.c.l.b16 %v9111
        %v9799 = vunpack.c.h.b16 %v9111
        %v9800 = vunpack.c.l.b16 %v9112
        %v9801 = vunpack.c.h.b16 %v9112
        %v9802 = vunpack.c.l.b16 %v9113
        %v9803 = vunpack.c.h.b16 %v9113
        %v9804 = vunpack.c.l.b16 %v9114
        %v9805 = vunpack.c.h.b16 %v9114
        %v9806 = vunpack.c.l.b16 %v9115
        %v9807 = vunpack.c.h.b16 %v9115
        %v9808 = vunpack.c.l.b16 %v9116
        %v9809 = vunpack.c.h.b16 %v9116
        %v9810 = vunpack.c.l.b16 %v9117
        %v9811 = vunpack.c.h.b16 %v9117
        %v9812 = vunpack.c.l.b16 %v9118
        %v9813 = vunpack.c.h.b16 %v9118
        %v9814 = vunpack.c.l.b16 %v9119
        %v9815 = vunpack.c.h.b16 %v9119
        %v9816 = vunpack.c.l.b16 %v9120
        %v9817 = vunpack.c.h.b16 %v9120
        %v9818 = vunpack.c.l.b16 %v9121
        %v9819 = vunpack.c.h.b16 %v9121
        %v9820 = vunpack.c.l.b16 %v9122
        %v9821 = vunpack.c.h.b16 %v9122
        %v9822 = vunpack.c.l.b16 %v9123
        %v9823 = vunpack.c.h.b16 %v9123
        %v9824 = vunpack.c.l.b16 %v9124
        %v9825 = vunpack.c.h.b16 %v9124
        %v9826 = vunpack.c.l.b16 %v9125
        %v9827 = vunpack.c.h.b16 %v9125
        %v9828 = vunpack.c.l.b16 %v9126
        %v9829 = vunpack.c.h.b16 %v9126
        %v9830 = vunpack.c.l.b16 %v9127
        %v9831 = vunpack.c.h.b16 %v9127
        %v9832 = vunpack.c.l.b16 %v9128
        %v9833 = vunpack.c.h.b16 %v9128
        %v9834 = vunpack.c.l.b16 %v9129
        %v9835 = vunpack.c.h.b16 %v9129
        %v9836 = vunpack.c.l.b16 %v9130
        %v9837 = vunpack.c.h.b16 %v9130
        %v9838 = vunpack.c.l.b16 %v9131
        %v9839 = vunpack.c.h.b16 %v9131
        %v9840 = vunpack.c.l.b16 %v9132
        %v9841 = vunpack.c.h.b16 %v9132
        %v9842 = vunpack.c.l.b16 %v9133
        %v9843 = vunpack.c.h.b16 %v9133
        %v9844 = vunpack.c.l.b16 %v9134
        %v9845 = vunpack.c.h.b16 %v9134
        %v9846 = vunpack.c.l.b16 %v9135
        %v9847 = vunpack.c.h.b16 %v9135
        %v9848 = vunpack.c.l.b16 %v9136
        %v9849 = vunpack.c.h.b16 %v9136
        %v9850 = vunpack.c.l.b16 %v9137
        %v9851 = vunpack.c.h.b16 %v9137
        %v9852 = vunpack.c.l.b16 %v9138
        %v9853 = vunpack.c.h.b16 %v9138
        %v9854 = vunpack.c.l.b16 %v9139
        %v9855 = vunpack.c.h.b16 %v9139
        %v9856 = vunpack.c.l.b16 %v9140
        %v9857 = vunpack.c.h.b16 %v9140
        %v9858 = vunpack.c.l.b16 %v9141
        %v9859 = vunpack.c.h.b16 %v9141
        %v9860 = vunpack.c.l.b16 %v9142
        %v9861 = vunpack.c.h.b16 %v9142
        %v9862 = vunpack.c.l.b16 %v9143
        %v9863 = vunpack.c.h.b16 %v9143
        %v9864 = vunpack.c.l.b16 %v9144
        %v9865 = vunpack.c.h.b16 %v9144
        %v9866 = vunpack.c.l.b16 %v9145
        %v9867 = vunpack.c.h.b16 %v9145
        %v9868 = vunpack.c.l.b16 %v9146
        %v9869 = vunpack.c.h.b16 %v9146
        %v9870 = vunpack.c.l.b16 %v9147
        %v9871 = vunpack.c.h.b16 %v9147
        %v9872 = vunpack.c.l.b16 %v9148
        %v9873 = vunpack.c.h.b16 %v9148
        %v9874 = vunpack.c.l.b16 %v9149
        %v9875 = vunpack.c.h.b16 %v9149
        %v9876 = vunpack.c.l.b16 %v9150
        %v9877 = vunpack.c.h.b16 %v9150
        %v9878 = vunpack.c.l.b16 %v9151
        %v9879 = vunpack.c.h.b16 %v9151
        %v9880 = vunpack.c.l.b16 %v9152
        %v9881 = vunpack.c.h.b16 %v9152
        %v9882 = vunpack.c.l.b16 %v9153
        %v9883 = vunpack.c.h.b16 %v9153
        %v9884 = vunpack.c.l.b16 %v9154
        %v9885 = vunpack.c.h.b16 %v9154
        %v9886 = vunpack.c.l.b16 %v9155
        %v9887 = vunpack.c.h.b16 %v9155
        %v9888 = vunpack.c.l.b16 %v9156
        %v9889 = vunpack.c.h.b16 %v9156
        %v9890 = vunpack.c.l.b16 %v9157
        %v9891 = vunpack.c.h.b16 %v9157
        %v9892 = vunpack.c.l.b16 %v9158
        %v9893 = vunpack.c.h.b16 %v9158
        %v9894 = vunpack.c.l.b16 %v9159
        %v9895 = vunpack.c.h.b16 %v9159
        %v9896 = vunpack.c.l.b16 %v9160
        %v9897 = vunpack.c.h.b16 %v9160
        %v9898 = vunpack.c.l.b16 %v9161
        %v9899 = vunpack.c.h.b16 %v9161
        %v9900 = vunpack.c.l.b16 %v9162
        %v9901 = vunpack.c.h.b16 %v9162
        %v9902 = vunpack.c.l.b16 %v9163
        %v9903 = vunpack.c.h.b16 %v9163
        %v9904 = vunpack.c.l.b16 %v9164
        %v9905 = vunpack.c.h.b16 %v9164
        %v9906 = vunpack.c.l.b16 %v9165
        %v9907 = vunpack.c.h.b16 %v9165
        %v9908 = vunpack.c.l.b16 %v9166
        %v9909 = vunpack.c.h.b16 %v9166
        %v9910 = vunpack.c.l.b16 %v9167
        %v9911 = vunpack.c.h.b16 %v9167
        %v9912 = vunpack.c.l.b16 %v9168
        %v9913 = vunpack.c.h.b16 %v9168
        %v9914 = vunpack.c.l.b16 %v9169
        %v9915 = vunpack.c.h.b16 %v9169
        %v9916 = vunpack.c.l.b16 %v9170
        %v9917 = vunpack.c.h.b16 %v9170
        %v9918 = vunpack.c.l.b16 %v9171
        %v9919 = vunpack.c.h.b16 %v9171
        %v9920 = vunpack.c.l.b16 %v9172
        %v9921 = vunpack.c.h.b16 %v9172
        %v9922 = vunpack.c.l.b16 %v9173
        %v9923 = vunpack.c.h.b16 %v9173
        %v9924 = vunpack.c.l.b16 %v9174
        %v9925 = vunpack.c.h.b16 %v9174
        %v9926 = vunpack.c.l.b16 %v9175
        %v9927 = vunpack.c.h.b16 %v9175
        %v9928 = vunpack.c.l.b16 %v9176
        %v9929 = vunpack.c.h.b16 %v9176
        %v9930 = vunpack.c.l.b16 %v9177
        %v9931 = vunpack.c.h.b16 %v9177
        %v9932 = vunpack.c.l.b16 %v9178
        %v9933 = vunpack.c.h.b16 %v9178
        %v9934 = vunpack.c.l.b16 %v9179
        %v9935 = vunpack.c.h.b16 %v9179
        %v9936 = vunpack.c.l.b16 %v9180
        %v9937 = vunpack.c.h.b16 %v9180
        %v9938 = vunpack.c.l.b16 %v9181
        %v9939 = vunpack.c.h.b16 %v9181
        %v9940 = vunpack.c.l.b16 %v9182
        %v9941 = vunpack.c.h.b16 %v9182
        %v9942 = vunpack.c.l.b16 %v9183
        %v9943 = vunpack.c.h.b16 %v9183
        %v9944 = vunpack.c.l.b16 %v9184
        %v9945 = vunpack.c.h.b16 %v9184
        %v9946 = vunpack.c.l.b16 %v9185
        %v9947 = vunpack.c.h.b16 %v9185
        %v9948 = vunpack.c.l.b16 %v9186
        %v9949 = vunpack.c.h.b16 %v9186
        %v9950 = vunpack.c.l.b16 %v9187
        %v9951 = vunpack.c.h.b16 %v9187
        %v9952 = vunpack.c.l.b16 %v9188
        %v9953 = vunpack.c.h.b16 %v9188
        %v9954 = vunpack.c.l.b16 %v9189
        %v9955 = vunpack.c.h.b16 %v9189
        %v9956 = vunpack.c.l.b16 %v9190
        %v9957 = vunpack.c.h.b16 %v9190
        %v9958 = vunpack.c.l.b16 %v9191
        %v9959 = vunpack.c.h.b16 %v9191
        %v9960 = vpack.c.b16 %v9448, %v9448
        %v9961 = vpack.c.b16 %v9449, %v9449
        %v9962 = vpack.c.b16 %v9450, %v9450
        %v9963 = vpack.c.b16 %v9451, %v9451
        %v9964 = vpack.c.b16 %v9452, %v9452
        %v9965 = vpack.c.b16 %v9453, %v9453
        %v9966 = vpack.c.b16 %v9454, %v9454
        %v9967 = vpack.c.b16 %v9455, %v9455
        %v9968 = vpack.c.b16 %v9456, %v9456
        %v9969 = vpack.c.b16 %v9457, %v9457
        %v9970 = vpack.c.b16 %v9458, %v9458
        %v9971 = vpack.c.b16 %v9459, %v9459
        %v9972 = vpack.c.b16 %v9460, %v9460
        %v9973 = vpack.c.b16 %v9461, %v9461
        %v9974 = vpack.c.b16 %v9462, %v9462
        %v9975 = vpack.c.b16 %v9463, %v9463
        %v9976 = vpack.c.b16 %v9464, %v9464
        %v9977 = vpack.c.b16 %v9465, %v9465
        %v9978 = vpack.c.b16 %v9466, %v9466
        %v9979 = vpack.c.b16 %v9467, %v9467
        %v9980 = vpack.c.b16 %v9468, %v9468
        %v9981 = vpack.c.b16 %v9469, %v9469
        %v9982 = vpack.c.b16 %v9470, %v9470
        %v9983 = vpack.c.b16 %v9471, %v9471
        %v9984 = vpack.c.b16 %v9472, %v9472
        %v9985 = vpack.c.b16 %v9473, %v9473
        %v9986 = vpack.c.b16 %v9474, %v9474
        %v9987 = vpack.c.b16 %v9475, %v9475
        %v9988 = vpack.c.b16 %v9476, %v9476
        %v9989 = vpack.c.b16 %v9477, %v9477
        %v9990 = vpack.c.b16 %v9478, %v9478
        %v9991 = vpack.c.b16 %v9479, %v9479
        %v9992 = vpack.c.b16 %v9480, %v9480
        %v9993 = vpack.c.b16 %v9481, %v9481
        %v9994 = vpack.c.b16 %v9482, %v9482
        %v9995 = vpack.c.b16 %v9483, %v9483
        %v9996 = vpack.c.b16 %v9484, %v9484
        %v9997 = vpack.c.b16 %v9485, %v9485
        %v9998 = vpack.c.b16 %v9486, %v9486
        %v9999 = vpack.c.b16 %v9487, %v9487
        %v10000 = vpack.c.b16 %v9488, %v9488
        %v10001 = vpack.c.b16 %v9489, %v9489
        %v10002 = vpack.c.b16 %v9490, %v9490
        %v10003 = vpack.c.b16 %v9491, %v9491
        %v10004 = vpack.c.b16 %v9492, %v9492
        %v10005 = vpack.c.b16 %v9493, %v9493
        %v10006 = vpack.c.b16 %v9494, %v9494
        %v10007 = vpack.c.b16 %v9495, %v9495
        %v10008 = vpack.c.b16 %v9496, %v9496
        %v10009 = vpack.c.b16 %v9497, %v9497
        %v10010 = vpack.c.b16 %v9498, %v9498
        %v10011 = vpack.c.b16 %v9499, %v9499
        %v10012 = vpack.c.b16 %v9500, %v9500
        %v10013 = vpack.c.b16 %v9501, %v9501
        %v10014 = vpack.c.b16 %v9502, %v9502
        %v10015 = vpack.c.b16 %v9503, %v9503
        %v10016 = vpack.c.b16 %v9504, %v9504
        %v10017 = vpack.c.b16 %v9505, %v9505
        %v10018 = vpack.c.b16 %v9506, %v9506
        %v10019 = vpack.c.b16 %v9507, %v9507
        %v10020 = vpack.c.b16 %v9508, %v9508
        %v10021 = vpack.c.b16 %v9509, %v9509
        %v10022 = vpack.c.b16 %v9510, %v9510
        %v10023 = vpack.c.b16 %v9511, %v9511
        %v10024 = vpack.c.b16 %v9512, %v9512
        %v10025 = vpack.c.b16 %v9513, %v9513
        %v10026 = vpack.c.b16 %v9514, %v9514
        %v10027 = vpack.c.b16 %v9515, %v9515
        %v10028 = vpack.c.b16 %v9516, %v9516
        %v10029 = vpack.c.b16 %v9517, %v9517
        %v10030 = vpack.c.b16 %v9518, %v9518
        %v10031 = vpack.c.b16 %v9519, %v9519
        %v10032 = vpack.c.b16 %v9520, %v9520
        %v10033 = vpack.c.b16 %v9521, %v9521
        %v10034 = vpack.c.b16 %v9522, %v9522
        %v10035 = vpack.c.b16 %v9523, %v9523
        %v10036 = vpack.c.b16 %v9524, %v9524
        %v10037 = vpack.c.b16 %v9525, %v9525
        %v10038 = vpack.c.b16 %v9526, %v9526
        %v10039 = vpack.c.b16 %v9527, %v9527
        %v10040 = vpack.c.b16 %v9528, %v9528
        %v10041 = vpack.c.b16 %v9529, %v9529
        %v10042 = vpack.c.b16 %v9530, %v9530
        %v10043 = vpack.c.b16 %v9531, %v9531
        %v10044 = vpack.c.b16 %v9532, %v9532
        %v10045 = vpack.c.b16 %v9533, %v9533
        %v10046 = vpack.c.b16 %v9534, %v9534
        %v10047 = vpack.c.b16 %v9535, %v9535
        %v10048 = vpack.c.b16 %v9536, %v9536
        %v10049 = vpack.c.b16 %v9537, %v9537
        %v10050 = vpack.c.b16 %v9538, %v9538
        %v10051 = vpack.c.b16 %v9539, %v9539
        %v10052 = vpack.c.b16 %v9540, %v9540
        %v10053 = vpack.c.b16 %v9541, %v9541
        %v10054 = vpack.c.b16 %v9542, %v9542
        %v10055 = vpack.c.b16 %v9543, %v9543
        %v10056 = vpack.c.b16 %v9544, %v9544
        %v10057 = vpack.c.b16 %v9545, %v9545
        %v10058 = vpack.c.b16 %v9546, %v9546
        %v10059 = vpack.c.b16 %v9547, %v9547
        %v10060 = vpack.c.b16 %v9548, %v9548
        %v10061 = vpack.c.b16 %v9549, %v9549
        %v10062 = vpack.c.b16 %v9550, %v9550
        %v10063 = vpack.c.b16 %v9551, %v9551
        %v10064 = vpack.c.b16 %v9552, %v9552
        %v10065 = vpack.c.b16 %v9553, %v9553
        %v10066 = vpack.c.b16 %v9554, %v9554
        %v10067 = vpack.c.b16 %v9555, %v9555
        %v10068 = vpack.c.b16 %v9556, %v9556
        %v10069 = vpack.c.b16 %v9557, %v9557
        %v10070 = vpack.c.b16 %v9558, %v9558
        %v10071 = vpack.c.b16 %v9559, %v9559
        %v10072 = vpack.c.b16 %v9560, %v9560
        %v10073 = vpack.c.b16 %v9561, %v9561
        %v10074 = vpack.c.b16 %v9562, %v9562
        %v10075 = vpack.c.b16 %v9563, %v9563
        %v10076 = vpack.c.b16 %v9564, %v9564
        %v10077 = vpack.c.b16 %v9565, %v9565
        %v10078 = vpack.c.b16 %v9566, %v9566
        %v10079 = vpack.c.b16 %v9567, %v9567
        %v10080 = vpack.c.b16 %v9568, %v9568
        %v10081 = vpack.c.b16 %v9569, %v9569
        %v10082 = vpack.c.b16 %v9570, %v9570
        %v10083 = vpack.c.b16 %v9571, %v9571
        %v10084 = vpack.c.b16 %v9572, %v9572
        %v10085 = vpack.c.b16 %v9573, %v9573
        %v10086 = vpack.c.b16 %v9574, %v9574
        %v10087 = vpack.c.b16 %v9575, %v9575
        %v10088 = vpack.c.b16 %v9576, %v9576
        %v10089 = vpack.c.b16 %v9577, %v9577
        %v10090 = vpack.c.b16 %v9578, %v9578
        %v10091 = vpack.c.b16 %v9579, %v9579
        %v10092 = vpack.c.b16 %v9580, %v9580
        %v10093 = vpack.c.b16 %v9581, %v9581
        %v10094 = vpack.c.b16 %v9582, %v9582
        %v10095 = vpack.c.b16 %v9583, %v9583
        %v10096 = vpack.c.b16 %v9584, %v9584
        %v10097 = vpack.c.b16 %v9585, %v9585
        %v10098 = vpack.c.b16 %v9586, %v9586
        %v10099 = vpack.c.b16 %v9587, %v9587
        %v10100 = vpack.c.b16 %v9588, %v9588
        %v10101 = vpack.c.b16 %v9589, %v9589
        %v10102 = vpack.c.b16 %v9590, %v9590
        %v10103 = vpack.c.b16 %v9591, %v9591
        %v10104 = vpack.c.b16 %v9592, %v9592
        %v10105 = vpack.c.b16 %v9593, %v9593
        %v10106 = vpack.c.b16 %v9594, %v9594
        %v10107 = vpack.c.b16 %v9595, %v9595
        %v10108 = vpack.c.b16 %v9596, %v9596
        %v10109 = vpack.c.b16 %v9597, %v9597
        %v10110 = vpack.c.b16 %v9598, %v9598
        %v10111 = vpack.c.b16 %v9599, %v9599
        %v10112 = vpack.c.b16 %v9600, %v9600
        %v10113 = vpack.c.b16 %v9601, %v9601
        %v10114 = vpack.c.b16 %v9602, %v9602
        %v10115 = vpack.c.b16 %v9603, %v9603
        %v10116 = vpack.c.b16 %v9604, %v9604
        %v10117 = vpack.c.b16 %v9605, %v9605
        %v10118 = vpack.c.b16 %v9606, %v9606
        %v10119 = vpack.c.b16 %v9607, %v9607
        %v10120 = vpack.c.b16 %v9608, %v9608
        %v10121 = vpack.c.b16 %v9609, %v9609
        %v10122 = vpack.c.b16 %v9610, %v9610
        %v10123 = vpack.c.b16 %v9611, %v9611
        %v10124 = vpack.c.b16 %v9612, %v9612
        %v10125 = vpack.c.b16 %v9613, %v9613
        %v10126 = vpack.c.b16 %v9614, %v9614
        %v10127 = vpack.c.b16 %v9615, %v9615
        %v10128 = vpack.c.b16 %v9616, %v9616
        %v10129 = vpack.c.b16 %v9617, %v9617
        %v10130 = vpack.c.b16 %v9618, %v9618
        %v10131 = vpack.c.b16 %v9619, %v9619
        %v10132 = vpack.c.b16 %v9620, %v9620
        %v10133 = vpack.c.b16 %v9621, %v9621
        %v10134 = vpack.c.b16 %v9622, %v9622
        %v10135 = vpack.c.b16 %v9623, %v9623
        %v10136 = vpack.c.b16 %v9624, %v9624
        %v10137 = vpack.c.b16 %v9625, %v9625
        %v10138 = vpack.c.b16 %v9626, %v9626
        %v10139 = vpack.c.b16 %v9627, %v9627
        %v10140 = vpack.c.b16 %v9628, %v9628
        %v10141 = vpack.c.b16 %v9629, %v9629
        %v10142 = vpack.c.b16 %v9630, %v9630
        %v10143 = vpack.c.b16 %v9631, %v9631
        %v10144 = vpack.c.b16 %v9632, %v9632
        %v10145 = vpack.c.b16 %v9633, %v9633
        %v10146 = vpack.c.b16 %v9634, %v9634
        %v10147 = vpack.c.b16 %v9635, %v9635
        %v10148 = vpack.c.b16 %v9636, %v9636
        %v10149 = vpack.c.b16 %v9637, %v9637
        %v10150 = vpack.c.b16 %v9638, %v9638
        %v10151 = vpack.c.b16 %v9639, %v9639
        %v10152 = vpack.c.b16 %v9640, %v9640
        %v10153 = vpack.c.b16 %v9641, %v9641
        %v10154 = vpack.c.b16 %v9642, %v9642
        %v10155 = vpack.c.b16 %v9643, %v9643
        %v10156 = vpack.c.b16 %v9644, %v9644
        %v10157 = vpack.c.b16 %v9645, %v9645
        %v10158 = vpack.c.b16 %v9646, %v9646
        %v10159 = vpack.c.b16 %v9647, %v9647
        %v10160 = vpack.c.b16 %v9648, %v9648
        %v10161 = vpack.c.b16 %v9649, %v9649
        %v10162 = vpack.c.b16 %v9650, %v9650
        %v10163 = vpack.c.b16 %v9651, %v9651
        %v10164 = vpack.c.b16 %v9652, %v9652
        %v10165 = vpack.c.b16 %v9653, %v9653
        %v10166 = vpack.c.b16 %v9654, %v9654
        %v10167 = vpack.c.b16 %v9655, %v9655
        %v10168 = vpack.c.b16 %v9656, %v9656
        %v10169 = vpack.c.b16 %v9657, %v9657
        %v10170 = vpack.c.b16 %v9658, %v9658
        %v10171 = vpack.c.b16 %v9659, %v9659
        %v10172 = vpack.c.b16 %v9660, %v9660
        %v10173 = vpack.c.b16 %v9661, %v9661
        %v10174 = vpack.c.b16 %v9662, %v9662
        %v10175 = vpack.c.b16 %v9663, %v9663
        %v10176 = vpack.c.b16 %v9664, %v9664
        %v10177 = vpack.c.b16 %v9665, %v9665
        %v10178 = vpack.c.b16 %v9666, %v9666
        %v10179 = vpack.c.b16 %v9667, %v9667
        %v10180 = vpack.c.b16 %v9668, %v9668
        %v10181 = vpack.c.b16 %v9669, %v9669
        %v10182 = vpack.c.b16 %v9670, %v9670
        %v10183 = vpack.c.b16 %v9671, %v9671
        %v10184 = vpack.c.b16 %v9672, %v9672
        %v10185 = vpack.c.b16 %v9673, %v9673
        %v10186 = vpack.c.b16 %v9674, %v9674
        %v10187 = vpack.c.b16 %v9675, %v9675
        %v10188 = vpack.c.b16 %v9676, %v9676
        %v10189 = vpack.c.b16 %v9677, %v9677
        %v10190 = vpack.c.b16 %v9678, %v9678
        %v10191 = vpack.c.b16 %v9679, %v9679
        %v10192 = vpack.c.b16 %v9680, %v9680
        %v10193 = vpack.c.b16 %v9681, %v9681
        %v10194 = vpack.c.b16 %v9682, %v9682
        %v10195 = vpack.c.b16 %v9683, %v9683
        %v10196 = vpack.c.b16 %v9684, %v9684
        %v10197 = vpack.c.b16 %v9685, %v9685
        %v10198 = vpack.c.b16 %v9686, %v9686
        %v10199 = vpack.c.b16 %v9687, %v9687
        %v10200 = vpack.c.b16 %v9688, %v9688
        %v10201 = vpack.c.b16 %v9689, %v9689
        %v10202 = vpack.c.b16 %v9690, %v9690
        %v10203 = vpack.c.b16 %v9691, %v9691
        %v10204 = vpack.c.b16 %v9692, %v9692
        %v10205 = vpack.c.b16 %v9693, %v9693
        %v10206 = vpack.c.b16 %v9694, %v9694
        %v10207 = vpack.c.b16 %v9695, %v9695
        %v10208 = vpack.c.b16 %v9696, %v9696
        %v10209 = vpack.c.b16 %v9697, %v9697
        %v10210 = vpack.c.b16 %v9698, %v9698
        %v10211 = vpack.c.b16 %v9699, %v9699
        %v10212 = vpack.c.b16 %v9700, %v9700
        %v10213 = vpack.c.b16 %v9701, %v9701
        %v10214 = vpack.c.b16 %v9702, %v9702
        %v10215 = vpack.c.b16 %v9703, %v9703
        %v10216 = vpack.c.b16 %v9704, %v9704
        %v10217 = vpack.c.b16 %v9705, %v9705
        %v10218 = vpack.c.b16 %v9706, %v9706
        %v10219 = vpack.c.b16 %v9707, %v9707
        %v10220 = vpack.c.b16 %v9708, %v9708
        %v10221 = vpack.c.b16 %v9709, %v9709
        %v10222 = vpack.c.b16 %v9710, %v9710
        %v10223 = vpack.c.b16 %v9711, %v9711
        %v10224 = vpack.c.b16 %v9712, %v9712
        %v10225 = vpack.c.b16 %v9713, %v9713
        %v10226 = vpack.c.b16 %v9714, %v9714
        %v10227 = vpack.c.b16 %v9715, %v9715
        %v10228 = vpack.c.b16 %v9716, %v9716
        %v10229 = vpack.c.b16 %v9717, %v9717
        %v10230 = vpack.c.b16 %v9718, %v9718
        %v10231 = vpack.c.b16 %v9719, %v9719
        %v10232 = vpack.c.b16 %v9720, %v9720
        %v10233 = vpack.c.b16 %v9721, %v9721
        %v10234 = vpack.c.b16 %v9722, %v9722
        %v10235 = vpack.c.b16 %v9723, %v9723
        %v10236 = vpack.c.b16 %v9724, %v9724
        %v10237 = vpack.c.b16 %v9725, %v9725
        %v10238 = vpack.c.b16 %v9726, %v9726
        %v10239 = vpack.c.b16 %v9727, %v9727
        %v10240 = vpack.c.b16 %v9728, %v9728
        %v10241 = vpack.c.b16 %v9729, %v9729
        %v10242 = vpack.c.b16 %v9730, %v9730
        %v10243 = vpack.c.b16 %v9731, %v9731
        %v10244 = vpack.c.b16 %v9732, %v9732
        %v10245 = vpack.c.b16 %v9733, %v9733
        %v10246 = vpack.c.b16 %v9734, %v9734
        %v10247 = vpack.c.b16 %v9735, %v9735
        %v10248 = vpack.c.b16 %v9736, %v9736
        %v10249 = vpack.c.b16 %v9737, %v9737
        %v10250 = vpack.c.b16 %v9738, %v9738
        %v10251 = vpack.c.b16 %v9739, %v9739
        %v10252 = vpack.c.b16 %v9740, %v9740
        %v10253 = vpack.c.b16 %v9741, %v9741
        %v10254 = vpack.c.b16 %v9742, %v9742
        %v10255 = vpack.c.b16 %v9743, %v9743
        %v10256 = vpack.c.b16 %v9744, %v9744
        %v10257 = vpack.c.b16 %v9745, %v9745
        %v10258 = vpack.c.b16 %v9746, %v9746
        %v10259 = vpack.c.b16 %v9747, %v9747
        %v10260 = vpack.c.b16 %v9748, %v9748
        %v10261 = vpack.c.b16 %v9749, %v9749
        %v10262 = vpack.c.b16 %v9750, %v9750
        %v10263 = vpack.c.b16 %v9751, %v9751
        %v10264 = vpack.c.b16 %v9752, %v9752
        %v10265 = vpack.c.b16 %v9753, %v9753
        %v10266 = vpack.c.b16 %v9754, %v9754
        %v10267 = vpack.c.b16 %v9755, %v9755
        %v10268 = vpack.c.b16 %v9756, %v9756
        %v10269 = vpack.c.b16 %v9757, %v9757
        %v10270 = vpack.c.b16 %v9758, %v9758
        %v10271 = vpack.c.b16 %v9759, %v9759
        %v10272 = vpack.c.b16 %v9760, %v9760
        %v10273 = vpack.c.b16 %v9761, %v9761
        %v10274 = vpack.c.b16 %v9762, %v9762
        %v10275 = vpack.c.b16 %v9763, %v9763
        %v10276 = vpack.c.b16 %v9764, %v9764
        %v10277 = vpack.c.b16 %v9765, %v9765
        %v10278 = vpack.c.b16 %v9766, %v9766
        %v10279 = vpack.c.b16 %v9767, %v9767
        %v10280 = vpack.c.b16 %v9768, %v9768
        %v10281 = vpack.c.b16 %v9769, %v9769
        %v10282 = vpack.c.b16 %v9770, %v9770
        %v10283 = vpack.c.b16 %v9771, %v9771
        %v10284 = vpack.c.b16 %v9772, %v9772
        %v10285 = vpack.c.b16 %v9773, %v9773
        %v10286 = vpack.c.b16 %v9774, %v9774
        %v10287 = vpack.c.b16 %v9775, %v9775
        %v10288 = vpack.c.b16 %v9776, %v9776
        %v10289 = vpack.c.b16 %v9777, %v9777
        %v10290 = vpack.c.b16 %v9778, %v9778
        %v10291 = vpack.c.b16 %v9779, %v9779
        %v10292 = vpack.c.b16 %v9780, %v9780
        %v10293 = vpack.c.b16 %v9781, %v9781
        %v10294 = vpack.c.b16 %v9782, %v9782
        %v10295 = vpack.c.b16 %v9783, %v9783
        %v10296 = vpack.c.b16 %v9784, %v9784
        %v10297 = vpack.c.b16 %v9785, %v9785
        %v10298 = vpack.c.b16 %v9786, %v9786
        %v10299 = vpack.c.b16 %v9787, %v9787
        %v10300 = vpack.c.b16 %v9788, %v9788
        %v10301 = vpack.c.b16 %v9789, %v9789
        %v10302 = vpack.c.b16 %v9790, %v9790
        %v10303 = vpack.c.b16 %v9791, %v9791
        %v10304 = vpack.c.b16 %v9792, %v9792
        %v10305 = vpack.c.b16 %v9793, %v9793
        %v10306 = vpack.c.b16 %v9794, %v9794
        %v10307 = vpack.c.b16 %v9795, %v9795
        %v10308 = vpack.c.b16 %v9796, %v9796
        %v10309 = vpack.c.b16 %v9797, %v9797
        %v10310 = vpack.c.b16 %v9798, %v9798
        %v10311 = vpack.c.b16 %v9799, %v9799
        %v10312 = vpack.c.b16 %v9800, %v9800
        %v10313 = vpack.c.b16 %v9801, %v9801
        %v10314 = vpack.c.b16 %v9802, %v9802
        %v10315 = vpack.c.b16 %v9803, %v9803
        %v10316 = vpack.c.b16 %v9804, %v9804
        %v10317 = vpack.c.b16 %v9805, %v9805
        %v10318 = vpack.c.b16 %v9806, %v9806
        %v10319 = vpack.c.b16 %v9807, %v9807
        %v10320 = vpack.c.b16 %v9808, %v9808
        %v10321 = vpack.c.b16 %v9809, %v9809
        %v10322 = vpack.c.b16 %v9810, %v9810
        %v10323 = vpack.c.b16 %v9811, %v9811
        %v10324 = vpack.c.b16 %v9812, %v9812
        %v10325 = vpack.c.b16 %v9813, %v9813
        %v10326 = vpack.c.b16 %v9814, %v9814
        %v10327 = vpack.c.b16 %v9815, %v9815
        %v10328 = vpack.c.b16 %v9816, %v9816
        %v10329 = vpack.c.b16 %v9817, %v9817
        %v10330 = vpack.c.b16 %v9818, %v9818
        %v10331 = vpack.c.b16 %v9819, %v9819
        %v10332 = vpack.c.b16 %v9820, %v9820
        %v10333 = vpack.c.b16 %v9821, %v9821
        %v10334 = vpack.c.b16 %v9822, %v9822
        %v10335 = vpack.c.b16 %v9823, %v9823
        %v10336 = vpack.c.b16 %v9824, %v9824
        %v10337 = vpack.c.b16 %v9825, %v9825
        %v10338 = vpack.c.b16 %v9826, %v9826
        %v10339 = vpack.c.b16 %v9827, %v9827
        %v10340 = vpack.c.b16 %v9828, %v9828
        %v10341 = vpack.c.b16 %v9829, %v9829
        %v10342 = vpack.c.b16 %v9830, %v9830
        %v10343 = vpack.c.b16 %v9831, %v9831
        %v10344 = vpack.c.b16 %v9832, %v9832
        %v10345 = vpack.c.b16 %v9833, %v9833
        %v10346 = vpack.c.b16 %v9834, %v9834
        %v10347 = vpack.c.b16 %v9835, %v9835
        %v10348 = vpack.c.b16 %v9836, %v9836
        %v10349 = vpack.c.b16 %v9837, %v9837
        %v10350 = vpack.c.b16 %v9838, %v9838
        %v10351 = vpack.c.b16 %v9839, %v9839
        %v10352 = vpack.c.b16 %v9840, %v9840
        %v10353 = vpack.c.b16 %v9841, %v9841
        %v10354 = vpack.c.b16 %v9842, %v9842
        %v10355 = vpack.c.b16 %v9843, %v9843
        %v10356 = vpack.c.b16 %v9844, %v9844
        %v10357 = vpack.c.b16 %v9845, %v9845
        %v10358 = vpack.c.b16 %v9846, %v9846
        %v10359 = vpack.c.b16 %v9847, %v9847
        %v10360 = vpack.c.b16 %v9848, %v9848
        %v10361 = vpack.c.b16 %v9849, %v9849
        %v10362 = vpack.c.b16 %v9850, %v9850
        %v10363 = vpack.c.b16 %v9851, %v9851
        %v10364 = vpack.c.b16 %v9852, %v9852
        %v10365 = vpack.c.b16 %v9853, %v9853
        %v10366 = vpack.c.b16 %v9854, %v9854
        %v10367 = vpack.c.b16 %v9855, %v9855
        %v10368 = vpack.c.b16 %v9856, %v9856
        %v10369 = vpack.c.b16 %v9857, %v9857
        %v10370 = vpack.c.b16 %v9858, %v9858
        %v10371 = vpack.c.b16 %v9859, %v9859
        %v10372 = vpack.c.b16 %v9860, %v9860
        %v10373 = vpack.c.b16 %v9861, %v9861
        %v10374 = vpack.c.b16 %v9862, %v9862
        %v10375 = vpack.c.b16 %v9863, %v9863
        %v10376 = vpack.c.b16 %v9864, %v9864
        %v10377 = vpack.c.b16 %v9865, %v9865
        %v10378 = vpack.c.b16 %v9866, %v9866
        %v10379 = vpack.c.b16 %v9867, %v9867
        %v10380 = vpack.c.b16 %v9868, %v9868
        %v10381 = vpack.c.b16 %v9869, %v9869
        %v10382 = vpack.c.b16 %v9870, %v9870
        %v10383 = vpack.c.b16 %v9871, %v9871
        %v10384 = vpack.c.b16 %v9872, %v9872
        %v10385 = vpack.c.b16 %v9873, %v9873
        %v10386 = vpack.c.b16 %v9874, %v9874
        %v10387 = vpack.c.b16 %v9875, %v9875
        %v10388 = vpack.c.b16 %v9876, %v9876
        %v10389 = vpack.c.b16 %v9877, %v9877
        %v10390 = vpack.c.b16 %v9878, %v9878
        %v10391 = vpack.c.b16 %v9879, %v9879
        %v10392 = vpack.c.b16 %v9880, %v9880
        %v10393 = vpack.c.b16 %v9881, %v9881
        %v10394 = vpack.c.b16 %v9882, %v9882
        %v10395 = vpack.c.b16 %v9883, %v9883
        %v10396 = vpack.c.b16 %v9884, %v9884
        %v10397 = vpack.c.b16 %v9885, %v9885
        %v10398 = vpack.c.b16 %v9886, %v9886
        %v10399 = vpack.c.b16 %v9887, %v9887
        %v10400 = vpack.c.b16 %v9888, %v9888
        %v10401 = vpack.c.b16 %v9889, %v9889
        %v10402 = vpack.c.b16 %v9890, %v9890
        %v10403 = vpack.c.b16 %v9891, %v9891
        %v10404 = vpack.c.b16 %v9892, %v9892
        %v10405 = vpack.c.b16 %v9893, %v9893
        %v10406 = vpack.c.b16 %v9894, %v9894
        %v10407 = vpack.c.b16 %v9895, %v9895
        %v10408 = vpack.c.b16 %v9896, %v9896
        %v10409 = vpack.c.b16 %v9897, %v9897
        %v10410 = vpack.c.b16 %v9898, %v9898
        %v10411 = vpack.c.b16 %v9899, %v9899
        %v10412 = vpack.c.b16 %v9900, %v9900
        %v10413 = vpack.c.b16 %v9901, %v9901
        %v10414 = vpack.c.b16 %v9902, %v9902
        %v10415 = vpack.c.b16 %v9903, %v9903
        %v10416 = vpack.c.b16 %v9904, %v9904
        %v10417 = vpack.c.b16 %v9905, %v9905
        %v10418 = vpack.c.b16 %v9906, %v9906
        %v10419 = vpack.c.b16 %v9907, %v9907
        %v10420 = vpack.c.b16 %v9908, %v9908
        %v10421 = vpack.c.b16 %v9909, %v9909
        %v10422 = vpack.c.b16 %v9910, %v9910
        %v10423 = vpack.c.b16 %v9911, %v9911
        %v10424 = vpack.c.b16 %v9912, %v9912
        %v10425 = vpack.c.b16 %v9913, %v9913
        %v10426 = vpack.c.b16 %v9914, %v9914
        %v10427 = vpack.c.b16 %v9915, %v9915
        %v10428 = vpack.c.b16 %v9916, %v9916
        %v10429 = vpack.c.b16 %v9917, %v9917
        %v10430 = vpack.c.b16 %v9918, %v9918
        %v10431 = vpack.c.b16 %v9919, %v9919
        %v10432 = vpack.c.b16 %v9920, %v9920
        %v10433 = vpack.c.b16 %v9921, %v9921
        %v10434 = vpack.c.b16 %v9922, %v9922
        %v10435 = vpack.c.b16 %v9923, %v9923
        %v10436 = vpack.c.b16 %v9924, %v9924
        %v10437 = vpack.c.b16 %v9925, %v9925
        %v10438 = vpack.c.b16 %v9926, %v9926
        %v10439 = vpack.c.b16 %v9927, %v9927
        %v10440 = vpack.c.b16 %v9928, %v9928
        %v10441 = vpack.c.b16 %v9929, %v9929
        %v10442 = vpack.c.b16 %v9930, %v9930
        %v10443 = vpack.c.b16 %v9931, %v9931
        %v10444 = vpack.c.b16 %v9932, %v9932
        %v10445 = vpack.c.b16 %v9933, %v9933
        %v10446 = vpack.c.b16 %v9934, %v9934
        %v10447 = vpack.c.b16 %v9935, %v9935
        %v10448 = vpack.c.b16 %v9936, %v9936
        %v10449 = vpack.c.b16 %v9937, %v9937
        %v10450 = vpack.c.b16 %v9938, %v9938
        %v10451 = vpack.c.b16 %v9939, %v9939
        %v10452 = vpack.c.b16 %v9940, %v9940
        %v10453 = vpack.c.b16 %v9941, %v9941
        %v10454 = vpack.c.b16 %v9942, %v9942
        %v10455 = vpack.c.b16 %v9943, %v9943
        %v10456 = vpack.c.b16 %v9944, %v9944
        %v10457 = vpack.c.b16 %v9945, %v9945
        %v10458 = vpack.c.b16 %v9946, %v9946
        %v10459 = vpack.c.b16 %v9947, %v9947
        %v10460 = vpack.c.b16 %v9948, %v9948
        %v10461 = vpack.c.b16 %v9949, %v9949
        %v10462 = vpack.c.b16 %v9950, %v9950
        %v10463 = vpack.c.b16 %v9951, %v9951
        %v10464 = vpack.c.b16 %v9952, %v9952
        %v10465 = vpack.c.b16 %v9953, %v9953
        %v10466 = vpack.c.b16 %v9954, %v9954
        %v10467 = vpack.c.b16 %v9955, %v9955
        %v10468 = vpack.c.b16 %v9956, %v9956
        %v10469 = vpack.c.b16 %v9957, %v9957
        %v10470 = vpack.c.b16 %v9958, %v9958
        %v10471 = vpack.c.b16 %v9959, %v9959
        %vm10984 = vcmask 519168
        %10985 = vst.msk [vmem:[%s163] sm:$0xf] %vm10984, %v9960
        %10986 = vst.msk [vmem:[%s163 + $0x4] sm:$0xf] %vm10984, %v9961
        %10987 = vst.msk [vmem:[%s163 + $0x8] sm:$0xf] %vm10984, %v9962
        %10988 = vst.msk [vmem:[%s163 + $0xc] sm:$0xf] %vm10984, %v9963
        %10989 = vst.msk [vmem:[%s163 + $0x10] sm:$0xf] %vm10984, %v9964
        %10990 = vst.msk [vmem:[%s163 + $0x14] sm:$0xf] %vm10984, %v9965
        %10991 = vst.msk [vmem:[%s163 + $0x18] sm:$0xf] %vm10984, %v9966
        %10992 = vst.msk [vmem:[%s163 + $0x1c] sm:$0xf] %vm10984, %v9967
        %10993 = vst.msk [vmem:[%s163 + $0x20] sm:$0xf] %vm10984, %v9968
        %10994 = vst.msk [vmem:[%s163 + $0x24] sm:$0xf] %vm10984, %v9969
        %10995 = vst.msk [vmem:[%s163 + $0x28] sm:$0xf] %vm10984, %v9970
        %10996 = vst.msk [vmem:[%s163 + $0x2c] sm:$0xf] %vm10984, %v9971
        %10997 = vst.msk [vmem:[%s163 + $0x30] sm:$0xf] %vm10984, %v9972
        %10998 = vst.msk [vmem:[%s163 + $0x34] sm:$0xf] %vm10984, %v9973
        %10999 = vst.msk [vmem:[%s163 + $0x38] sm:$0xf] %vm10984, %v9974
        %11000 = vst.msk [vmem:[%s163 + $0x3c] sm:$0xf] %vm10984, %v9975
        %11001 = vst.msk [vmem:[%s163 + $0x40] sm:$0xf] %vm10984, %v9976
        %11002 = vst.msk [vmem:[%s163 + $0x44] sm:$0xf] %vm10984, %v9977
        %11003 = vst.msk [vmem:[%s163 + $0x48] sm:$0xf] %vm10984, %v9978
        %11004 = vst.msk [vmem:[%s163 + $0x4c] sm:$0xf] %vm10984, %v9979
        %11005 = vst.msk [vmem:[%s163 + $0x50] sm:$0xf] %vm10984, %v9980
        %11006 = vst.msk [vmem:[%s163 + $0x54] sm:$0xf] %vm10984, %v9981
        %11007 = vst.msk [vmem:[%s163 + $0x58] sm:$0xf] %vm10984, %v9982
        %11008 = vst.msk [vmem:[%s163 + $0x5c] sm:$0xf] %vm10984, %v9983
        %11009 = vst.msk [vmem:[%s163 + $0x60] sm:$0xf] %vm10984, %v9984
        %11010 = vst.msk [vmem:[%s163 + $0x64] sm:$0xf] %vm10984, %v9985
        %11011 = vst.msk [vmem:[%s163 + $0x68] sm:$0xf] %vm10984, %v9986
        %11012 = vst.msk [vmem:[%s163 + $0x6c] sm:$0xf] %vm10984, %v9987
        %11013 = vst.msk [vmem:[%s163 + $0x70] sm:$0xf] %vm10984, %v9988
        %11014 = vst.msk [vmem:[%s163 + $0x74] sm:$0xf] %vm10984, %v9989
        %11015 = vst.msk [vmem:[%s163 + $0x78] sm:$0xf] %vm10984, %v9990
        %11016 = vst.msk [vmem:[%s163 + $0x7c] sm:$0xf] %vm10984, %v9991
        %11017 = vst.msk [vmem:[%s163 + $0x80] sm:$0xf] %vm10984, %v9992
        %11018 = vst.msk [vmem:[%s163 + $0x84] sm:$0xf] %vm10984, %v9993
        %11019 = vst.msk [vmem:[%s163 + $0x88] sm:$0xf] %vm10984, %v9994
        %11020 = vst.msk [vmem:[%s163 + $0x8c] sm:$0xf] %vm10984, %v9995
        %11021 = vst.msk [vmem:[%s163 + $0x90] sm:$0xf] %vm10984, %v9996
        %11022 = vst.msk [vmem:[%s163 + $0x94] sm:$0xf] %vm10984, %v9997
        %11023 = vst.msk [vmem:[%s163 + $0x98] sm:$0xf] %vm10984, %v9998
        %11024 = vst.msk [vmem:[%s163 + $0x9c] sm:$0xf] %vm10984, %v9999
        %11025 = vst.msk [vmem:[%s163 + $0xa0] sm:$0xf] %vm10984, %v10000
        %11026 = vst.msk [vmem:[%s163 + $0xa4] sm:$0xf] %vm10984, %v10001
        %11027 = vst.msk [vmem:[%s163 + $0xa8] sm:$0xf] %vm10984, %v10002
        %11028 = vst.msk [vmem:[%s163 + $0xac] sm:$0xf] %vm10984, %v10003
        %11029 = vst.msk [vmem:[%s163 + $0xb0] sm:$0xf] %vm10984, %v10004
        %11030 = vst.msk [vmem:[%s163 + $0xb4] sm:$0xf] %vm10984, %v10005
        %11031 = vst.msk [vmem:[%s163 + $0xb8] sm:$0xf] %vm10984, %v10006
        %11032 = vst.msk [vmem:[%s163 + $0xbc] sm:$0xf] %vm10984, %v10007
        %11033 = vst.msk [vmem:[%s163 + $0xc0] sm:$0xf] %vm10984, %v10008
        %11034 = vst.msk [vmem:[%s163 + $0xc4] sm:$0xf] %vm10984, %v10009
        %11035 = vst.msk [vmem:[%s163 + $0xc8] sm:$0xf] %vm10984, %v10010
        %11036 = vst.msk [vmem:[%s163 + $0xcc] sm:$0xf] %vm10984, %v10011
        %11037 = vst.msk [vmem:[%s163 + $0xd0] sm:$0xf] %vm10984, %v10012
        %11038 = vst.msk [vmem:[%s163 + $0xd4] sm:$0xf] %vm10984, %v10013
        %11039 = vst.msk [vmem:[%s163 + $0xd8] sm:$0xf] %vm10984, %v10014
        %11040 = vst.msk [vmem:[%s163 + $0xdc] sm:$0xf] %vm10984, %v10015
        %11041 = vst.msk [vmem:[%s163 + $0xe0] sm:$0xf] %vm10984, %v10016
        %11042 = vst.msk [vmem:[%s163 + $0xe4] sm:$0xf] %vm10984, %v10017
        %11043 = vst.msk [vmem:[%s163 + $0xe8] sm:$0xf] %vm10984, %v10018
        %11044 = vst.msk [vmem:[%s163 + $0xec] sm:$0xf] %vm10984, %v10019
        %11045 = vst.msk [vmem:[%s163 + $0xf0] sm:$0xf] %vm10984, %v10020
        %11046 = vst.msk [vmem:[%s163 + $0xf4] sm:$0xf] %vm10984, %v10021
        %11047 = vst.msk [vmem:[%s163 + $0xf8] sm:$0xf] %vm10984, %v10022
        %11048 = vst.msk [vmem:[%s163 + $0xfc] sm:$0xf] %vm10984, %v10023
        %11049 = vst.msk [vmem:[%s163 + $0x100] sm:$0xf] %vm10984, %v10024
        %11050 = vst.msk [vmem:[%s163 + $0x104] sm:$0xf] %vm10984, %v10025
        %11051 = vst.msk [vmem:[%s163 + $0x108] sm:$0xf] %vm10984, %v10026
        %11052 = vst.msk [vmem:[%s163 + $0x10c] sm:$0xf] %vm10984, %v10027
        %11053 = vst.msk [vmem:[%s163 + $0x110] sm:$0xf] %vm10984, %v10028
        %11054 = vst.msk [vmem:[%s163 + $0x114] sm:$0xf] %vm10984, %v10029
        %11055 = vst.msk [vmem:[%s163 + $0x118] sm:$0xf] %vm10984, %v10030
        %11056 = vst.msk [vmem:[%s163 + $0x11c] sm:$0xf] %vm10984, %v10031
        %11057 = vst.msk [vmem:[%s163 + $0x120] sm:$0xf] %vm10984, %v10032
        %11058 = vst.msk [vmem:[%s163 + $0x124] sm:$0xf] %vm10984, %v10033
        %11059 = vst.msk [vmem:[%s163 + $0x128] sm:$0xf] %vm10984, %v10034
        %11060 = vst.msk [vmem:[%s163 + $0x12c] sm:$0xf] %vm10984, %v10035
        %11061 = vst.msk [vmem:[%s163 + $0x130] sm:$0xf] %vm10984, %v10036
        %11062 = vst.msk [vmem:[%s163 + $0x134] sm:$0xf] %vm10984, %v10037
        %11063 = vst.msk [vmem:[%s163 + $0x138] sm:$0xf] %vm10984, %v10038
        %11064 = vst.msk [vmem:[%s163 + $0x13c] sm:$0xf] %vm10984, %v10039
        %11065 = vst.msk [vmem:[%s163 + $0x140] sm:$0xf] %vm10984, %v10040
        %11066 = vst.msk [vmem:[%s163 + $0x144] sm:$0xf] %vm10984, %v10041
        %11067 = vst.msk [vmem:[%s163 + $0x148] sm:$0xf] %vm10984, %v10042
        %11068 = vst.msk [vmem:[%s163 + $0x14c] sm:$0xf] %vm10984, %v10043
        %11069 = vst.msk [vmem:[%s163 + $0x150] sm:$0xf] %vm10984, %v10044
        %11070 = vst.msk [vmem:[%s163 + $0x154] sm:$0xf] %vm10984, %v10045
        %11071 = vst.msk [vmem:[%s163 + $0x158] sm:$0xf] %vm10984, %v10046
        %11072 = vst.msk [vmem:[%s163 + $0x15c] sm:$0xf] %vm10984, %v10047
        %11073 = vst.msk [vmem:[%s163 + $0x160] sm:$0xf] %vm10984, %v10048
        %11074 = vst.msk [vmem:[%s163 + $0x164] sm:$0xf] %vm10984, %v10049
        %11075 = vst.msk [vmem:[%s163 + $0x168] sm:$0xf] %vm10984, %v10050
        %11076 = vst.msk [vmem:[%s163 + $0x16c] sm:$0xf] %vm10984, %v10051
        %11077 = vst.msk [vmem:[%s163 + $0x170] sm:$0xf] %vm10984, %v10052
        %11078 = vst.msk [vmem:[%s163 + $0x174] sm:$0xf] %vm10984, %v10053
        %11079 = vst.msk [vmem:[%s163 + $0x178] sm:$0xf] %vm10984, %v10054
        %11080 = vst.msk [vmem:[%s163 + $0x17c] sm:$0xf] %vm10984, %v10055
        %11081 = vst.msk [vmem:[%s163 + $0x180] sm:$0xf] %vm10984, %v10056
        %11082 = vst.msk [vmem:[%s163 + $0x184] sm:$0xf] %vm10984, %v10057
        %11083 = vst.msk [vmem:[%s163 + $0x188] sm:$0xf] %vm10984, %v10058
        %11084 = vst.msk [vmem:[%s163 + $0x18c] sm:$0xf] %vm10984, %v10059
        %11085 = vst.msk [vmem:[%s163 + $0x190] sm:$0xf] %vm10984, %v10060
        %11086 = vst.msk [vmem:[%s163 + $0x194] sm:$0xf] %vm10984, %v10061
        %11087 = vst.msk [vmem:[%s163 + $0x198] sm:$0xf] %vm10984, %v10062
        %11088 = vst.msk [vmem:[%s163 + $0x19c] sm:$0xf] %vm10984, %v10063
        %11089 = vst.msk [vmem:[%s163 + $0x1a0] sm:$0xf] %vm10984, %v10064
        %11090 = vst.msk [vmem:[%s163 + $0x1a4] sm:$0xf] %vm10984, %v10065
        %11091 = vst.msk [vmem:[%s163 + $0x1a8] sm:$0xf] %vm10984, %v10066
        %11092 = vst.msk [vmem:[%s163 + $0x1ac] sm:$0xf] %vm10984, %v10067
        %11093 = vst.msk [vmem:[%s163 + $0x1b0] sm:$0xf] %vm10984, %v10068
        %11094 = vst.msk [vmem:[%s163 + $0x1b4] sm:$0xf] %vm10984, %v10069
        %11095 = vst.msk [vmem:[%s163 + $0x1b8] sm:$0xf] %vm10984, %v10070
        %11096 = vst.msk [vmem:[%s163 + $0x1bc] sm:$0xf] %vm10984, %v10071
        %11097 = vst.msk [vmem:[%s163 + $0x1c0] sm:$0xf] %vm10984, %v10072
        %11098 = vst.msk [vmem:[%s163 + $0x1c4] sm:$0xf] %vm10984, %v10073
        %11099 = vst.msk [vmem:[%s163 + $0x1c8] sm:$0xf] %vm10984, %v10074
        %11100 = vst.msk [vmem:[%s163 + $0x1cc] sm:$0xf] %vm10984, %v10075
        %11101 = vst.msk [vmem:[%s163 + $0x1d0] sm:$0xf] %vm10984, %v10076
        %11102 = vst.msk [vmem:[%s163 + $0x1d4] sm:$0xf] %vm10984, %v10077
        %11103 = vst.msk [vmem:[%s163 + $0x1d8] sm:$0xf] %vm10984, %v10078
        %11104 = vst.msk [vmem:[%s163 + $0x1dc] sm:$0xf] %vm10984, %v10079
        %11105 = vst.msk [vmem:[%s163 + $0x1e0] sm:$0xf] %vm10984, %v10080
        %11106 = vst.msk [vmem:[%s163 + $0x1e4] sm:$0xf] %vm10984, %v10081
        %11107 = vst.msk [vmem:[%s163 + $0x1e8] sm:$0xf] %vm10984, %v10082
        %11108 = vst.msk [vmem:[%s163 + $0x1ec] sm:$0xf] %vm10984, %v10083
        %11109 = vst.msk [vmem:[%s163 + $0x1f0] sm:$0xf] %vm10984, %v10084
        %11110 = vst.msk [vmem:[%s163 + $0x1f4] sm:$0xf] %vm10984, %v10085
        %11111 = vst.msk [vmem:[%s163 + $0x1f8] sm:$0xf] %vm10984, %v10086
        %11112 = vst.msk [vmem:[%s163 + $0x1fc] sm:$0xf] %vm10984, %v10087
        %11113 = vst.msk [vmem:[%s163 + $0x200] sm:$0xf] %vm10984, %v10088
        %11114 = vst.msk [vmem:[%s163 + $0x204] sm:$0xf] %vm10984, %v10089
        %11115 = vst.msk [vmem:[%s163 + $0x208] sm:$0xf] %vm10984, %v10090
        %11116 = vst.msk [vmem:[%s163 + $0x20c] sm:$0xf] %vm10984, %v10091
        %11117 = vst.msk [vmem:[%s163 + $0x210] sm:$0xf] %vm10984, %v10092
        %11118 = vst.msk [vmem:[%s163 + $0x214] sm:$0xf] %vm10984, %v10093
        %11119 = vst.msk [vmem:[%s163 + $0x218] sm:$0xf] %vm10984, %v10094
        %11120 = vst.msk [vmem:[%s163 + $0x21c] sm:$0xf] %vm10984, %v10095
        %11121 = vst.msk [vmem:[%s163 + $0x220] sm:$0xf] %vm10984, %v10096
        %11122 = vst.msk [vmem:[%s163 + $0x224] sm:$0xf] %vm10984, %v10097
        %11123 = vst.msk [vmem:[%s163 + $0x228] sm:$0xf] %vm10984, %v10098
        %11124 = vst.msk [vmem:[%s163 + $0x22c] sm:$0xf] %vm10984, %v10099
        %11125 = vst.msk [vmem:[%s163 + $0x230] sm:$0xf] %vm10984, %v10100
        %11126 = vst.msk [vmem:[%s163 + $0x234] sm:$0xf] %vm10984, %v10101
        %11127 = vst.msk [vmem:[%s163 + $0x238] sm:$0xf] %vm10984, %v10102
        %11128 = vst.msk [vmem:[%s163 + $0x23c] sm:$0xf] %vm10984, %v10103
        %11129 = vst.msk [vmem:[%s163 + $0x240] sm:$0xf] %vm10984, %v10104
        %11130 = vst.msk [vmem:[%s163 + $0x244] sm:$0xf] %vm10984, %v10105
        %11131 = vst.msk [vmem:[%s163 + $0x248] sm:$0xf] %vm10984, %v10106
        %11132 = vst.msk [vmem:[%s163 + $0x24c] sm:$0xf] %vm10984, %v10107
        %11133 = vst.msk [vmem:[%s163 + $0x250] sm:$0xf] %vm10984, %v10108
        %11134 = vst.msk [vmem:[%s163 + $0x254] sm:$0xf] %vm10984, %v10109
        %11135 = vst.msk [vmem:[%s163 + $0x258] sm:$0xf] %vm10984, %v10110
        %11136 = vst.msk [vmem:[%s163 + $0x25c] sm:$0xf] %vm10984, %v10111
        %11137 = vst.msk [vmem:[%s163 + $0x260] sm:$0xf] %vm10984, %v10112
        %11138 = vst.msk [vmem:[%s163 + $0x264] sm:$0xf] %vm10984, %v10113
        %11139 = vst.msk [vmem:[%s163 + $0x268] sm:$0xf] %vm10984, %v10114
        %11140 = vst.msk [vmem:[%s163 + $0x26c] sm:$0xf] %vm10984, %v10115
        %11141 = vst.msk [vmem:[%s163 + $0x270] sm:$0xf] %vm10984, %v10116
        %11142 = vst.msk [vmem:[%s163 + $0x274] sm:$0xf] %vm10984, %v10117
        %11143 = vst.msk [vmem:[%s163 + $0x278] sm:$0xf] %vm10984, %v10118
        %11144 = vst.msk [vmem:[%s163 + $0x27c] sm:$0xf] %vm10984, %v10119
        %11145 = vst.msk [vmem:[%s163 + $0x280] sm:$0xf] %vm10984, %v10120
        %11146 = vst.msk [vmem:[%s163 + $0x284] sm:$0xf] %vm10984, %v10121
        %11147 = vst.msk [vmem:[%s163 + $0x288] sm:$0xf] %vm10984, %v10122
        %11148 = vst.msk [vmem:[%s163 + $0x28c] sm:$0xf] %vm10984, %v10123
        %11149 = vst.msk [vmem:[%s163 + $0x290] sm:$0xf] %vm10984, %v10124
        %11150 = vst.msk [vmem:[%s163 + $0x294] sm:$0xf] %vm10984, %v10125
        %11151 = vst.msk [vmem:[%s163 + $0x298] sm:$0xf] %vm10984, %v10126
        %11152 = vst.msk [vmem:[%s163 + $0x29c] sm:$0xf] %vm10984, %v10127
        %11153 = vst.msk [vmem:[%s163 + $0x2a0] sm:$0xf] %vm10984, %v10128
        %11154 = vst.msk [vmem:[%s163 + $0x2a4] sm:$0xf] %vm10984, %v10129
        %11155 = vst.msk [vmem:[%s163 + $0x2a8] sm:$0xf] %vm10984, %v10130
        %11156 = vst.msk [vmem:[%s163 + $0x2ac] sm:$0xf] %vm10984, %v10131
        %11157 = vst.msk [vmem:[%s163 + $0x2b0] sm:$0xf] %vm10984, %v10132
        %11158 = vst.msk [vmem:[%s163 + $0x2b4] sm:$0xf] %vm10984, %v10133
        %11159 = vst.msk [vmem:[%s163 + $0x2b8] sm:$0xf] %vm10984, %v10134
        %11160 = vst.msk [vmem:[%s163 + $0x2bc] sm:$0xf] %vm10984, %v10135
        %11161 = vst.msk [vmem:[%s163 + $0x2c0] sm:$0xf] %vm10984, %v10136
        %11162 = vst.msk [vmem:[%s163 + $0x2c4] sm:$0xf] %vm10984, %v10137
        %11163 = vst.msk [vmem:[%s163 + $0x2c8] sm:$0xf] %vm10984, %v10138
        %11164 = vst.msk [vmem:[%s163 + $0x2cc] sm:$0xf] %vm10984, %v10139
        %11165 = vst.msk [vmem:[%s163 + $0x2d0] sm:$0xf] %vm10984, %v10140
        %11166 = vst.msk [vmem:[%s163 + $0x2d4] sm:$0xf] %vm10984, %v10141
        %11167 = vst.msk [vmem:[%s163 + $0x2d8] sm:$0xf] %vm10984, %v10142
        %11168 = vst.msk [vmem:[%s163 + $0x2dc] sm:$0xf] %vm10984, %v10143
        %11169 = vst.msk [vmem:[%s163 + $0x2e0] sm:$0xf] %vm10984, %v10144
        %11170 = vst.msk [vmem:[%s163 + $0x2e4] sm:$0xf] %vm10984, %v10145
        %11171 = vst.msk [vmem:[%s163 + $0x2e8] sm:$0xf] %vm10984, %v10146
        %11172 = vst.msk [vmem:[%s163 + $0x2ec] sm:$0xf] %vm10984, %v10147
        %11173 = vst.msk [vmem:[%s163 + $0x2f0] sm:$0xf] %vm10984, %v10148
        %11174 = vst.msk [vmem:[%s163 + $0x2f4] sm:$0xf] %vm10984, %v10149
        %11175 = vst.msk [vmem:[%s163 + $0x2f8] sm:$0xf] %vm10984, %v10150
        %11176 = vst.msk [vmem:[%s163 + $0x2fc] sm:$0xf] %vm10984, %v10151
        %11177 = vst.msk [vmem:[%s163 + $0x300] sm:$0xf] %vm10984, %v10152
        %11178 = vst.msk [vmem:[%s163 + $0x304] sm:$0xf] %vm10984, %v10153
        %11179 = vst.msk [vmem:[%s163 + $0x308] sm:$0xf] %vm10984, %v10154
        %11180 = vst.msk [vmem:[%s163 + $0x30c] sm:$0xf] %vm10984, %v10155
        %11181 = vst.msk [vmem:[%s163 + $0x310] sm:$0xf] %vm10984, %v10156
        %11182 = vst.msk [vmem:[%s163 + $0x314] sm:$0xf] %vm10984, %v10157
        %11183 = vst.msk [vmem:[%s163 + $0x318] sm:$0xf] %vm10984, %v10158
        %11184 = vst.msk [vmem:[%s163 + $0x31c] sm:$0xf] %vm10984, %v10159
        %11185 = vst.msk [vmem:[%s163 + $0x320] sm:$0xf] %vm10984, %v10160
        %11186 = vst.msk [vmem:[%s163 + $0x324] sm:$0xf] %vm10984, %v10161
        %11187 = vst.msk [vmem:[%s163 + $0x328] sm:$0xf] %vm10984, %v10162
        %11188 = vst.msk [vmem:[%s163 + $0x32c] sm:$0xf] %vm10984, %v10163
        %11189 = vst.msk [vmem:[%s163 + $0x330] sm:$0xf] %vm10984, %v10164
        %11190 = vst.msk [vmem:[%s163 + $0x334] sm:$0xf] %vm10984, %v10165
        %11191 = vst.msk [vmem:[%s163 + $0x338] sm:$0xf] %vm10984, %v10166
        %11192 = vst.msk [vmem:[%s163 + $0x33c] sm:$0xf] %vm10984, %v10167
        %11193 = vst.msk [vmem:[%s163 + $0x340] sm:$0xf] %vm10984, %v10168
        %11194 = vst.msk [vmem:[%s163 + $0x344] sm:$0xf] %vm10984, %v10169
        %11195 = vst.msk [vmem:[%s163 + $0x348] sm:$0xf] %vm10984, %v10170
        %11196 = vst.msk [vmem:[%s163 + $0x34c] sm:$0xf] %vm10984, %v10171
        %11197 = vst.msk [vmem:[%s163 + $0x350] sm:$0xf] %vm10984, %v10172
        %11198 = vst.msk [vmem:[%s163 + $0x354] sm:$0xf] %vm10984, %v10173
        %11199 = vst.msk [vmem:[%s163 + $0x358] sm:$0xf] %vm10984, %v10174
        %11200 = vst.msk [vmem:[%s163 + $0x35c] sm:$0xf] %vm10984, %v10175
        %11201 = vst.msk [vmem:[%s163 + $0x360] sm:$0xf] %vm10984, %v10176
        %11202 = vst.msk [vmem:[%s163 + $0x364] sm:$0xf] %vm10984, %v10177
        %11203 = vst.msk [vmem:[%s163 + $0x368] sm:$0xf] %vm10984, %v10178
        %11204 = vst.msk [vmem:[%s163 + $0x36c] sm:$0xf] %vm10984, %v10179
        %11205 = vst.msk [vmem:[%s163 + $0x370] sm:$0xf] %vm10984, %v10180
        %11206 = vst.msk [vmem:[%s163 + $0x374] sm:$0xf] %vm10984, %v10181
        %11207 = vst.msk [vmem:[%s163 + $0x378] sm:$0xf] %vm10984, %v10182
        %11208 = vst.msk [vmem:[%s163 + $0x37c] sm:$0xf] %vm10984, %v10183
        %11209 = vst.msk [vmem:[%s163 + $0x380] sm:$0xf] %vm10984, %v10184
        %11210 = vst.msk [vmem:[%s163 + $0x384] sm:$0xf] %vm10984, %v10185
        %11211 = vst.msk [vmem:[%s163 + $0x388] sm:$0xf] %vm10984, %v10186
        %11212 = vst.msk [vmem:[%s163 + $0x38c] sm:$0xf] %vm10984, %v10187
        %11213 = vst.msk [vmem:[%s163 + $0x390] sm:$0xf] %vm10984, %v10188
        %11214 = vst.msk [vmem:[%s163 + $0x394] sm:$0xf] %vm10984, %v10189
        %11215 = vst.msk [vmem:[%s163 + $0x398] sm:$0xf] %vm10984, %v10190
        %11216 = vst.msk [vmem:[%s163 + $0x39c] sm:$0xf] %vm10984, %v10191
        %11217 = vst.msk [vmem:[%s163 + $0x3a0] sm:$0xf] %vm10984, %v10192
        %11218 = vst.msk [vmem:[%s163 + $0x3a4] sm:$0xf] %vm10984, %v10193
        %11219 = vst.msk [vmem:[%s163 + $0x3a8] sm:$0xf] %vm10984, %v10194
        %11220 = vst.msk [vmem:[%s163 + $0x3ac] sm:$0xf] %vm10984, %v10195
        %11221 = vst.msk [vmem:[%s163 + $0x3b0] sm:$0xf] %vm10984, %v10196
        %11222 = vst.msk [vmem:[%s163 + $0x3b4] sm:$0xf] %vm10984, %v10197
        %11223 = vst.msk [vmem:[%s163 + $0x3b8] sm:$0xf] %vm10984, %v10198
        %11224 = vst.msk [vmem:[%s163 + $0x3bc] sm:$0xf] %vm10984, %v10199
        %11225 = vst.msk [vmem:[%s163 + $0x3c0] sm:$0xf] %vm10984, %v10200
        %11226 = vst.msk [vmem:[%s163 + $0x3c4] sm:$0xf] %vm10984, %v10201
        %11227 = vst.msk [vmem:[%s163 + $0x3c8] sm:$0xf] %vm10984, %v10202
        %11228 = vst.msk [vmem:[%s163 + $0x3cc] sm:$0xf] %vm10984, %v10203
        %11229 = vst.msk [vmem:[%s163 + $0x3d0] sm:$0xf] %vm10984, %v10204
        %11230 = vst.msk [vmem:[%s163 + $0x3d4] sm:$0xf] %vm10984, %v10205
        %11231 = vst.msk [vmem:[%s163 + $0x3d8] sm:$0xf] %vm10984, %v10206
        %11232 = vst.msk [vmem:[%s163 + $0x3dc] sm:$0xf] %vm10984, %v10207
        %11233 = vst.msk [vmem:[%s163 + $0x3e0] sm:$0xf] %vm10984, %v10208
        %11234 = vst.msk [vmem:[%s163 + $0x3e4] sm:$0xf] %vm10984, %v10209
        %11235 = vst.msk [vmem:[%s163 + $0x3e8] sm:$0xf] %vm10984, %v10210
        %11236 = vst.msk [vmem:[%s163 + $0x3ec] sm:$0xf] %vm10984, %v10211
        %11237 = vst.msk [vmem:[%s163 + $0x3f0] sm:$0xf] %vm10984, %v10212
        %11238 = vst.msk [vmem:[%s163 + $0x3f4] sm:$0xf] %vm10984, %v10213
        %11239 = vst.msk [vmem:[%s163 + $0x3f8] sm:$0xf] %vm10984, %v10214
        %11240 = vst.msk [vmem:[%s163 + $0x3fc] sm:$0xf] %vm10984, %v10215
        %11241 = vst.msk [vmem:[%s163 + $0x400] sm:$0xf] %vm10984, %v10216
        %11242 = vst.msk [vmem:[%s163 + $0x404] sm:$0xf] %vm10984, %v10217
        %11243 = vst.msk [vmem:[%s163 + $0x408] sm:$0xf] %vm10984, %v10218
        %11244 = vst.msk [vmem:[%s163 + $0x40c] sm:$0xf] %vm10984, %v10219
        %11245 = vst.msk [vmem:[%s163 + $0x410] sm:$0xf] %vm10984, %v10220
        %11246 = vst.msk [vmem:[%s163 + $0x414] sm:$0xf] %vm10984, %v10221
        %11247 = vst.msk [vmem:[%s163 + $0x418] sm:$0xf] %vm10984, %v10222
        %11248 = vst.msk [vmem:[%s163 + $0x41c] sm:$0xf] %vm10984, %v10223
        %11249 = vst.msk [vmem:[%s163 + $0x420] sm:$0xf] %vm10984, %v10224
        %11250 = vst.msk [vmem:[%s163 + $0x424] sm:$0xf] %vm10984, %v10225
        %11251 = vst.msk [vmem:[%s163 + $0x428] sm:$0xf] %vm10984, %v10226
        %11252 = vst.msk [vmem:[%s163 + $0x42c] sm:$0xf] %vm10984, %v10227
        %11253 = vst.msk [vmem:[%s163 + $0x430] sm:$0xf] %vm10984, %v10228
        %11254 = vst.msk [vmem:[%s163 + $0x434] sm:$0xf] %vm10984, %v10229
        %11255 = vst.msk [vmem:[%s163 + $0x438] sm:$0xf] %vm10984, %v10230
        %11256 = vst.msk [vmem:[%s163 + $0x43c] sm:$0xf] %vm10984, %v10231
        %11257 = vst.msk [vmem:[%s163 + $0x440] sm:$0xf] %vm10984, %v10232
        %11258 = vst.msk [vmem:[%s163 + $0x444] sm:$0xf] %vm10984, %v10233
        %11259 = vst.msk [vmem:[%s163 + $0x448] sm:$0xf] %vm10984, %v10234
        %11260 = vst.msk [vmem:[%s163 + $0x44c] sm:$0xf] %vm10984, %v10235
        %11261 = vst.msk [vmem:[%s163 + $0x450] sm:$0xf] %vm10984, %v10236
        %11262 = vst.msk [vmem:[%s163 + $0x454] sm:$0xf] %vm10984, %v10237
        %11263 = vst.msk [vmem:[%s163 + $0x458] sm:$0xf] %vm10984, %v10238
        %11264 = vst.msk [vmem:[%s163 + $0x45c] sm:$0xf] %vm10984, %v10239
        %11265 = vst.msk [vmem:[%s163 + $0x460] sm:$0xf] %vm10984, %v10240
        %11266 = vst.msk [vmem:[%s163 + $0x464] sm:$0xf] %vm10984, %v10241
        %11267 = vst.msk [vmem:[%s163 + $0x468] sm:$0xf] %vm10984, %v10242
        %11268 = vst.msk [vmem:[%s163 + $0x46c] sm:$0xf] %vm10984, %v10243
        %11269 = vst.msk [vmem:[%s163 + $0x470] sm:$0xf] %vm10984, %v10244
        %11270 = vst.msk [vmem:[%s163 + $0x474] sm:$0xf] %vm10984, %v10245
        %11271 = vst.msk [vmem:[%s163 + $0x478] sm:$0xf] %vm10984, %v10246
        %11272 = vst.msk [vmem:[%s163 + $0x47c] sm:$0xf] %vm10984, %v10247
        %11273 = vst.msk [vmem:[%s163 + $0x480] sm:$0xf] %vm10984, %v10248
        %11274 = vst.msk [vmem:[%s163 + $0x484] sm:$0xf] %vm10984, %v10249
        %11275 = vst.msk [vmem:[%s163 + $0x488] sm:$0xf] %vm10984, %v10250
        %11276 = vst.msk [vmem:[%s163 + $0x48c] sm:$0xf] %vm10984, %v10251
        %11277 = vst.msk [vmem:[%s163 + $0x490] sm:$0xf] %vm10984, %v10252
        %11278 = vst.msk [vmem:[%s163 + $0x494] sm:$0xf] %vm10984, %v10253
        %11279 = vst.msk [vmem:[%s163 + $0x498] sm:$0xf] %vm10984, %v10254
        %11280 = vst.msk [vmem:[%s163 + $0x49c] sm:$0xf] %vm10984, %v10255
        %11281 = vst.msk [vmem:[%s163 + $0x4a0] sm:$0xf] %vm10984, %v10256
        %11282 = vst.msk [vmem:[%s163 + $0x4a4] sm:$0xf] %vm10984, %v10257
        %11283 = vst.msk [vmem:[%s163 + $0x4a8] sm:$0xf] %vm10984, %v10258
        %11284 = vst.msk [vmem:[%s163 + $0x4ac] sm:$0xf] %vm10984, %v10259
        %11285 = vst.msk [vmem:[%s163 + $0x4b0] sm:$0xf] %vm10984, %v10260
        %11286 = vst.msk [vmem:[%s163 + $0x4b4] sm:$0xf] %vm10984, %v10261
        %11287 = vst.msk [vmem:[%s163 + $0x4b8] sm:$0xf] %vm10984, %v10262
        %11288 = vst.msk [vmem:[%s163 + $0x4bc] sm:$0xf] %vm10984, %v10263
        %11289 = vst.msk [vmem:[%s163 + $0x4c0] sm:$0xf] %vm10984, %v10264
        %11290 = vst.msk [vmem:[%s163 + $0x4c4] sm:$0xf] %vm10984, %v10265
        %11291 = vst.msk [vmem:[%s163 + $0x4c8] sm:$0xf] %vm10984, %v10266
        %11292 = vst.msk [vmem:[%s163 + $0x4cc] sm:$0xf] %vm10984, %v10267
        %11293 = vst.msk [vmem:[%s163 + $0x4d0] sm:$0xf] %vm10984, %v10268
        %11294 = vst.msk [vmem:[%s163 + $0x4d4] sm:$0xf] %vm10984, %v10269
        %11295 = vst.msk [vmem:[%s163 + $0x4d8] sm:$0xf] %vm10984, %v10270
        %11296 = vst.msk [vmem:[%s163 + $0x4dc] sm:$0xf] %vm10984, %v10271
        %11297 = vst.msk [vmem:[%s163 + $0x4e0] sm:$0xf] %vm10984, %v10272
        %11298 = vst.msk [vmem:[%s163 + $0x4e4] sm:$0xf] %vm10984, %v10273
        %11299 = vst.msk [vmem:[%s163 + $0x4e8] sm:$0xf] %vm10984, %v10274
        %11300 = vst.msk [vmem:[%s163 + $0x4ec] sm:$0xf] %vm10984, %v10275
        %11301 = vst.msk [vmem:[%s163 + $0x4f0] sm:$0xf] %vm10984, %v10276
        %11302 = vst.msk [vmem:[%s163 + $0x4f4] sm:$0xf] %vm10984, %v10277
        %11303 = vst.msk [vmem:[%s163 + $0x4f8] sm:$0xf] %vm10984, %v10278
        %11304 = vst.msk [vmem:[%s163 + $0x4fc] sm:$0xf] %vm10984, %v10279
        %11305 = vst.msk [vmem:[%s163 + $0x500] sm:$0xf] %vm10984, %v10280
        %11306 = vst.msk [vmem:[%s163 + $0x504] sm:$0xf] %vm10984, %v10281
        %11307 = vst.msk [vmem:[%s163 + $0x508] sm:$0xf] %vm10984, %v10282
        %11308 = vst.msk [vmem:[%s163 + $0x50c] sm:$0xf] %vm10984, %v10283
        %11309 = vst.msk [vmem:[%s163 + $0x510] sm:$0xf] %vm10984, %v10284
        %11310 = vst.msk [vmem:[%s163 + $0x514] sm:$0xf] %vm10984, %v10285
        %11311 = vst.msk [vmem:[%s163 + $0x518] sm:$0xf] %vm10984, %v10286
        %11312 = vst.msk [vmem:[%s163 + $0x51c] sm:$0xf] %vm10984, %v10287
        %11313 = vst.msk [vmem:[%s163 + $0x520] sm:$0xf] %vm10984, %v10288
        %11314 = vst.msk [vmem:[%s163 + $0x524] sm:$0xf] %vm10984, %v10289
        %11315 = vst.msk [vmem:[%s163 + $0x528] sm:$0xf] %vm10984, %v10290
        %11316 = vst.msk [vmem:[%s163 + $0x52c] sm:$0xf] %vm10984, %v10291
        %11317 = vst.msk [vmem:[%s163 + $0x530] sm:$0xf] %vm10984, %v10292
        %11318 = vst.msk [vmem:[%s163 + $0x534] sm:$0xf] %vm10984, %v10293
        %11319 = vst.msk [vmem:[%s163 + $0x538] sm:$0xf] %vm10984, %v10294
        %11320 = vst.msk [vmem:[%s163 + $0x53c] sm:$0xf] %vm10984, %v10295
        %11321 = vst.msk [vmem:[%s163 + $0x540] sm:$0xf] %vm10984, %v10296
        %11322 = vst.msk [vmem:[%s163 + $0x544] sm:$0xf] %vm10984, %v10297
        %11323 = vst.msk [vmem:[%s163 + $0x548] sm:$0xf] %vm10984, %v10298
        %11324 = vst.msk [vmem:[%s163 + $0x54c] sm:$0xf] %vm10984, %v10299
        %11325 = vst.msk [vmem:[%s163 + $0x550] sm:$0xf] %vm10984, %v10300
        %11326 = vst.msk [vmem:[%s163 + $0x554] sm:$0xf] %vm10984, %v10301
        %11327 = vst.msk [vmem:[%s163 + $0x558] sm:$0xf] %vm10984, %v10302
        %11328 = vst.msk [vmem:[%s163 + $0x55c] sm:$0xf] %vm10984, %v10303
        %11329 = vst.msk [vmem:[%s163 + $0x560] sm:$0xf] %vm10984, %v10304
        %11330 = vst.msk [vmem:[%s163 + $0x564] sm:$0xf] %vm10984, %v10305
        %11331 = vst.msk [vmem:[%s163 + $0x568] sm:$0xf] %vm10984, %v10306
        %11332 = vst.msk [vmem:[%s163 + $0x56c] sm:$0xf] %vm10984, %v10307
        %11333 = vst.msk [vmem:[%s163 + $0x570] sm:$0xf] %vm10984, %v10308
        %11334 = vst.msk [vmem:[%s163 + $0x574] sm:$0xf] %vm10984, %v10309
        %11335 = vst.msk [vmem:[%s163 + $0x578] sm:$0xf] %vm10984, %v10310
        %11336 = vst.msk [vmem:[%s163 + $0x57c] sm:$0xf] %vm10984, %v10311
        %11337 = vst.msk [vmem:[%s163 + $0x580] sm:$0xf] %vm10984, %v10312
        %11338 = vst.msk [vmem:[%s163 + $0x584] sm:$0xf] %vm10984, %v10313
        %11339 = vst.msk [vmem:[%s163 + $0x588] sm:$0xf] %vm10984, %v10314
        %11340 = vst.msk [vmem:[%s163 + $0x58c] sm:$0xf] %vm10984, %v10315
        %11341 = vst.msk [vmem:[%s163 + $0x590] sm:$0xf] %vm10984, %v10316
        %11342 = vst.msk [vmem:[%s163 + $0x594] sm:$0xf] %vm10984, %v10317
        %11343 = vst.msk [vmem:[%s163 + $0x598] sm:$0xf] %vm10984, %v10318
        %11344 = vst.msk [vmem:[%s163 + $0x59c] sm:$0xf] %vm10984, %v10319
        %11345 = vst.msk [vmem:[%s163 + $0x5a0] sm:$0xf] %vm10984, %v10320
        %11346 = vst.msk [vmem:[%s163 + $0x5a4] sm:$0xf] %vm10984, %v10321
        %11347 = vst.msk [vmem:[%s163 + $0x5a8] sm:$0xf] %vm10984, %v10322
        %11348 = vst.msk [vmem:[%s163 + $0x5ac] sm:$0xf] %vm10984, %v10323
        %11349 = vst.msk [vmem:[%s163 + $0x5b0] sm:$0xf] %vm10984, %v10324
        %11350 = vst.msk [vmem:[%s163 + $0x5b4] sm:$0xf] %vm10984, %v10325
        %11351 = vst.msk [vmem:[%s163 + $0x5b8] sm:$0xf] %vm10984, %v10326
        %11352 = vst.msk [vmem:[%s163 + $0x5bc] sm:$0xf] %vm10984, %v10327
        %11353 = vst.msk [vmem:[%s163 + $0x5c0] sm:$0xf] %vm10984, %v10328
        %11354 = vst.msk [vmem:[%s163 + $0x5c4] sm:$0xf] %vm10984, %v10329
        %11355 = vst.msk [vmem:[%s163 + $0x5c8] sm:$0xf] %vm10984, %v10330
        %11356 = vst.msk [vmem:[%s163 + $0x5cc] sm:$0xf] %vm10984, %v10331
        %11357 = vst.msk [vmem:[%s163 + $0x5d0] sm:$0xf] %vm10984, %v10332
        %11358 = vst.msk [vmem:[%s163 + $0x5d4] sm:$0xf] %vm10984, %v10333
        %11359 = vst.msk [vmem:[%s163 + $0x5d8] sm:$0xf] %vm10984, %v10334
        %11360 = vst.msk [vmem:[%s163 + $0x5dc] sm:$0xf] %vm10984, %v10335
        %11361 = vst.msk [vmem:[%s163 + $0x5e0] sm:$0xf] %vm10984, %v10336
        %11362 = vst.msk [vmem:[%s163 + $0x5e4] sm:$0xf] %vm10984, %v10337
        %11363 = vst.msk [vmem:[%s163 + $0x5e8] sm:$0xf] %vm10984, %v10338
        %11364 = vst.msk [vmem:[%s163 + $0x5ec] sm:$0xf] %vm10984, %v10339
        %11365 = vst.msk [vmem:[%s163 + $0x5f0] sm:$0xf] %vm10984, %v10340
        %11366 = vst.msk [vmem:[%s163 + $0x5f4] sm:$0xf] %vm10984, %v10341
        %11367 = vst.msk [vmem:[%s163 + $0x5f8] sm:$0xf] %vm10984, %v10342
        %11368 = vst.msk [vmem:[%s163 + $0x5fc] sm:$0xf] %vm10984, %v10343
        %11369 = vst.msk [vmem:[%s163 + $0x600] sm:$0xf] %vm10984, %v10344
        %11370 = vst.msk [vmem:[%s163 + $0x604] sm:$0xf] %vm10984, %v10345
        %11371 = vst.msk [vmem:[%s163 + $0x608] sm:$0xf] %vm10984, %v10346
        %11372 = vst.msk [vmem:[%s163 + $0x60c] sm:$0xf] %vm10984, %v10347
        %11373 = vst.msk [vmem:[%s163 + $0x610] sm:$0xf] %vm10984, %v10348
        %11374 = vst.msk [vmem:[%s163 + $0x614] sm:$0xf] %vm10984, %v10349
        %11375 = vst.msk [vmem:[%s163 + $0x618] sm:$0xf] %vm10984, %v10350
        %11376 = vst.msk [vmem:[%s163 + $0x61c] sm:$0xf] %vm10984, %v10351
        %11377 = vst.msk [vmem:[%s163 + $0x620] sm:$0xf] %vm10984, %v10352
        %11378 = vst.msk [vmem:[%s163 + $0x624] sm:$0xf] %vm10984, %v10353
        %11379 = vst.msk [vmem:[%s163 + $0x628] sm:$0xf] %vm10984, %v10354
        %11380 = vst.msk [vmem:[%s163 + $0x62c] sm:$0xf] %vm10984, %v10355
        %11381 = vst.msk [vmem:[%s163 + $0x630] sm:$0xf] %vm10984, %v10356
        %11382 = vst.msk [vmem:[%s163 + $0x634] sm:$0xf] %vm10984, %v10357
        %11383 = vst.msk [vmem:[%s163 + $0x638] sm:$0xf] %vm10984, %v10358
        %11384 = vst.msk [vmem:[%s163 + $0x63c] sm:$0xf] %vm10984, %v10359
        %11385 = vst.msk [vmem:[%s163 + $0x640] sm:$0xf] %vm10984, %v10360
        %11386 = vst.msk [vmem:[%s163 + $0x644] sm:$0xf] %vm10984, %v10361
        %11387 = vst.msk [vmem:[%s163 + $0x648] sm:$0xf] %vm10984, %v10362
        %11388 = vst.msk [vmem:[%s163 + $0x64c] sm:$0xf] %vm10984, %v10363
        %11389 = vst.msk [vmem:[%s163 + $0x650] sm:$0xf] %vm10984, %v10364
        %11390 = vst.msk [vmem:[%s163 + $0x654] sm:$0xf] %vm10984, %v10365
        %11391 = vst.msk [vmem:[%s163 + $0x658] sm:$0xf] %vm10984, %v10366
        %11392 = vst.msk [vmem:[%s163 + $0x65c] sm:$0xf] %vm10984, %v10367
        %11393 = vst.msk [vmem:[%s163 + $0x660] sm:$0xf] %vm10984, %v10368
        %11394 = vst.msk [vmem:[%s163 + $0x664] sm:$0xf] %vm10984, %v10369
        %11395 = vst.msk [vmem:[%s163 + $0x668] sm:$0xf] %vm10984, %v10370
        %11396 = vst.msk [vmem:[%s163 + $0x66c] sm:$0xf] %vm10984, %v10371
        %11397 = vst.msk [vmem:[%s163 + $0x670] sm:$0xf] %vm10984, %v10372
        %11398 = vst.msk [vmem:[%s163 + $0x674] sm:$0xf] %vm10984, %v10373
        %11399 = vst.msk [vmem:[%s163 + $0x678] sm:$0xf] %vm10984, %v10374
        %11400 = vst.msk [vmem:[%s163 + $0x67c] sm:$0xf] %vm10984, %v10375
        %11401 = vst.msk [vmem:[%s163 + $0x680] sm:$0xf] %vm10984, %v10376
        %11402 = vst.msk [vmem:[%s163 + $0x684] sm:$0xf] %vm10984, %v10377
        %11403 = vst.msk [vmem:[%s163 + $0x688] sm:$0xf] %vm10984, %v10378
        %11404 = vst.msk [vmem:[%s163 + $0x68c] sm:$0xf] %vm10984, %v10379
        %11405 = vst.msk [vmem:[%s163 + $0x690] sm:$0xf] %vm10984, %v10380
        %11406 = vst.msk [vmem:[%s163 + $0x694] sm:$0xf] %vm10984, %v10381
        %11407 = vst.msk [vmem:[%s163 + $0x698] sm:$0xf] %vm10984, %v10382
        %11408 = vst.msk [vmem:[%s163 + $0x69c] sm:$0xf] %vm10984, %v10383
        %11409 = vst.msk [vmem:[%s163 + $0x6a0] sm:$0xf] %vm10984, %v10384
        %11410 = vst.msk [vmem:[%s163 + $0x6a4] sm:$0xf] %vm10984, %v10385
        %11411 = vst.msk [vmem:[%s163 + $0x6a8] sm:$0xf] %vm10984, %v10386
        %11412 = vst.msk [vmem:[%s163 + $0x6ac] sm:$0xf] %vm10984, %v10387
        %11413 = vst.msk [vmem:[%s163 + $0x6b0] sm:$0xf] %vm10984, %v10388
        %11414 = vst.msk [vmem:[%s163 + $0x6b4] sm:$0xf] %vm10984, %v10389
        %11415 = vst.msk [vmem:[%s163 + $0x6b8] sm:$0xf] %vm10984, %v10390
        %11416 = vst.msk [vmem:[%s163 + $0x6bc] sm:$0xf] %vm10984, %v10391
        %11417 = vst.msk [vmem:[%s163 + $0x6c0] sm:$0xf] %vm10984, %v10392
        %11418 = vst.msk [vmem:[%s163 + $0x6c4] sm:$0xf] %vm10984, %v10393
        %11419 = vst.msk [vmem:[%s163 + $0x6c8] sm:$0xf] %vm10984, %v10394
        %11420 = vst.msk [vmem:[%s163 + $0x6cc] sm:$0xf] %vm10984, %v10395
        %11421 = vst.msk [vmem:[%s163 + $0x6d0] sm:$0xf] %vm10984, %v10396
        %11422 = vst.msk [vmem:[%s163 + $0x6d4] sm:$0xf] %vm10984, %v10397
        %11423 = vst.msk [vmem:[%s163 + $0x6d8] sm:$0xf] %vm10984, %v10398
        %11424 = vst.msk [vmem:[%s163 + $0x6dc] sm:$0xf] %vm10984, %v10399
        %11425 = vst.msk [vmem:[%s163 + $0x6e0] sm:$0xf] %vm10984, %v10400
        %11426 = vst.msk [vmem:[%s163 + $0x6e4] sm:$0xf] %vm10984, %v10401
        %11427 = vst.msk [vmem:[%s163 + $0x6e8] sm:$0xf] %vm10984, %v10402
        %11428 = vst.msk [vmem:[%s163 + $0x6ec] sm:$0xf] %vm10984, %v10403
        %11429 = vst.msk [vmem:[%s163 + $0x6f0] sm:$0xf] %vm10984, %v10404
        %11430 = vst.msk [vmem:[%s163 + $0x6f4] sm:$0xf] %vm10984, %v10405
        %11431 = vst.msk [vmem:[%s163 + $0x6f8] sm:$0xf] %vm10984, %v10406
        %11432 = vst.msk [vmem:[%s163 + $0x6fc] sm:$0xf] %vm10984, %v10407
        %11433 = vst.msk [vmem:[%s163 + $0x700] sm:$0xf] %vm10984, %v10408
        %11434 = vst.msk [vmem:[%s163 + $0x704] sm:$0xf] %vm10984, %v10409
        %11435 = vst.msk [vmem:[%s163 + $0x708] sm:$0xf] %vm10984, %v10410
        %11436 = vst.msk [vmem:[%s163 + $0x70c] sm:$0xf] %vm10984, %v10411
        %11437 = vst.msk [vmem:[%s163 + $0x710] sm:$0xf] %vm10984, %v10412
        %11438 = vst.msk [vmem:[%s163 + $0x714] sm:$0xf] %vm10984, %v10413
        %11439 = vst.msk [vmem:[%s163 + $0x718] sm:$0xf] %vm10984, %v10414
        %11440 = vst.msk [vmem:[%s163 + $0x71c] sm:$0xf] %vm10984, %v10415
        %11441 = vst.msk [vmem:[%s163 + $0x720] sm:$0xf] %vm10984, %v10416
        %11442 = vst.msk [vmem:[%s163 + $0x724] sm:$0xf] %vm10984, %v10417
        %11443 = vst.msk [vmem:[%s163 + $0x728] sm:$0xf] %vm10984, %v10418
        %11444 = vst.msk [vmem:[%s163 + $0x72c] sm:$0xf] %vm10984, %v10419
        %11445 = vst.msk [vmem:[%s163 + $0x730] sm:$0xf] %vm10984, %v10420
        %11446 = vst.msk [vmem:[%s163 + $0x734] sm:$0xf] %vm10984, %v10421
        %11447 = vst.msk [vmem:[%s163 + $0x738] sm:$0xf] %vm10984, %v10422
        %11448 = vst.msk [vmem:[%s163 + $0x73c] sm:$0xf] %vm10984, %v10423
        %11449 = vst.msk [vmem:[%s163 + $0x740] sm:$0xf] %vm10984, %v10424
        %11450 = vst.msk [vmem:[%s163 + $0x744] sm:$0xf] %vm10984, %v10425
        %11451 = vst.msk [vmem:[%s163 + $0x748] sm:$0xf] %vm10984, %v10426
        %11452 = vst.msk [vmem:[%s163 + $0x74c] sm:$0xf] %vm10984, %v10427
        %11453 = vst.msk [vmem:[%s163 + $0x750] sm:$0xf] %vm10984, %v10428
        %11454 = vst.msk [vmem:[%s163 + $0x754] sm:$0xf] %vm10984, %v10429
        %11455 = vst.msk [vmem:[%s163 + $0x758] sm:$0xf] %vm10984, %v10430
        %11456 = vst.msk [vmem:[%s163 + $0x75c] sm:$0xf] %vm10984, %v10431
        %11457 = vst.msk [vmem:[%s163 + $0x760] sm:$0xf] %vm10984, %v10432
        %11458 = vst.msk [vmem:[%s163 + $0x764] sm:$0xf] %vm10984, %v10433
        %11459 = vst.msk [vmem:[%s163 + $0x768] sm:$0xf] %vm10984, %v10434
        %11460 = vst.msk [vmem:[%s163 + $0x76c] sm:$0xf] %vm10984, %v10435
        %11461 = vst.msk [vmem:[%s163 + $0x770] sm:$0xf] %vm10984, %v10436
        %11462 = vst.msk [vmem:[%s163 + $0x774] sm:$0xf] %vm10984, %v10437
        %11463 = vst.msk [vmem:[%s163 + $0x778] sm:$0xf] %vm10984, %v10438
        %11464 = vst.msk [vmem:[%s163 + $0x77c] sm:$0xf] %vm10984, %v10439
        %11465 = vst.msk [vmem:[%s163 + $0x780] sm:$0xf] %vm10984, %v10440
        %11466 = vst.msk [vmem:[%s163 + $0x784] sm:$0xf] %vm10984, %v10441
        %11467 = vst.msk [vmem:[%s163 + $0x788] sm:$0xf] %vm10984, %v10442
        %11468 = vst.msk [vmem:[%s163 + $0x78c] sm:$0xf] %vm10984, %v10443
        %11469 = vst.msk [vmem:[%s163 + $0x790] sm:$0xf] %vm10984, %v10444
        %11470 = vst.msk [vmem:[%s163 + $0x794] sm:$0xf] %vm10984, %v10445
        %11471 = vst.msk [vmem:[%s163 + $0x798] sm:$0xf] %vm10984, %v10446
        %11472 = vst.msk [vmem:[%s163 + $0x79c] sm:$0xf] %vm10984, %v10447
        %11473 = vst.msk [vmem:[%s163 + $0x7a0] sm:$0xf] %vm10984, %v10448
        %11474 = vst.msk [vmem:[%s163 + $0x7a4] sm:$0xf] %vm10984, %v10449
        %11475 = vst.msk [vmem:[%s163 + $0x7a8] sm:$0xf] %vm10984, %v10450
        %11476 = vst.msk [vmem:[%s163 + $0x7ac] sm:$0xf] %vm10984, %v10451
        %11477 = vst.msk [vmem:[%s163 + $0x7b0] sm:$0xf] %vm10984, %v10452
        %11478 = vst.msk [vmem:[%s163 + $0x7b4] sm:$0xf] %vm10984, %v10453
        %11479 = vst.msk [vmem:[%s163 + $0x7b8] sm:$0xf] %vm10984, %v10454
        %11480 = vst.msk [vmem:[%s163 + $0x7bc] sm:$0xf] %vm10984, %v10455
        %11481 = vst.msk [vmem:[%s163 + $0x7c0] sm:$0xf] %vm10984, %v10456
        %11482 = vst.msk [vmem:[%s163 + $0x7c4] sm:$0xf] %vm10984, %v10457
        %11483 = vst.msk [vmem:[%s163 + $0x7c8] sm:$0xf] %vm10984, %v10458
        %11484 = vst.msk [vmem:[%s163 + $0x7cc] sm:$0xf] %vm10984, %v10459
        %11485 = vst.msk [vmem:[%s163 + $0x7d0] sm:$0xf] %vm10984, %v10460
        %11486 = vst.msk [vmem:[%s163 + $0x7d4] sm:$0xf] %vm10984, %v10461
        %11487 = vst.msk [vmem:[%s163 + $0x7d8] sm:$0xf] %vm10984, %v10462
        %11488 = vst.msk [vmem:[%s163 + $0x7dc] sm:$0xf] %vm10984, %v10463
        %11489 = vst.msk [vmem:[%s163 + $0x7e0] sm:$0xf] %vm10984, %v10464
        %11490 = vst.msk [vmem:[%s163 + $0x7e4] sm:$0xf] %vm10984, %v10465
        %11491 = vst.msk [vmem:[%s163 + $0x7e8] sm:$0xf] %vm10984, %v10466
        %11492 = vst.msk [vmem:[%s163 + $0x7ec] sm:$0xf] %vm10984, %v10467
        %11493 = vst.msk [vmem:[%s163 + $0x7f0] sm:$0xf] %vm10984, %v10468
        %11494 = vst.msk [vmem:[%s163 + $0x7f4] sm:$0xf] %vm10984, %v10469
        %11495 = vst.msk [vmem:[%s163 + $0x7f8] sm:$0xf] %vm10984, %v10470
        %11496 = vst.msk [vmem:[%s163 + $0x7fc] sm:$0xf] %vm10984, %v10471
        %s11497 = sand.u32 %s90, 1
        %s11498 = scalar_lea.sflag [#allocation3], %s11497
        %s11499 = sand.u32 %s90, 1
        %s11500 = smul.addr %s11499, 2048
        %s11501 = scalar_lea.vmem [#allocation2], %s11500
        // Predicated region
        $region29: #{conv3d_op.1} parent=27 // pred_check
          %p11502 = pneg %p100
        $region30: #{conv3d_op.1} parent=27 // pred_check_branch
          %11504 = sbr.rel (%p11502) target = $region32
        $region31: #{conv3d_op.1} parent=27 // pred_region
          %s11506 = ssub.s32 32768, 32768
          %11507 = vsyncadd %s11498, %s11506
          %s11508 = smul.addr %s20, 512
          %s11509 = sadd.s32 %s21, %s11508
          %s11510 = smul.addr %s11509, 64
          %s11511 = scalar_lea.hbm %s2, %s11510
          %s11512 = sshll.u32 %s11501, 4
          %s11513 = int_to_ptr.vmem [resolvable:$true] %s11512
          %11518 = dma.vmem_to_hbm [thread:$0]  %s11513, 32768, %s11511, %s11498, 64, 64, 4
        $region32: #{conv3d_op.1} parent=27 // pred_fallthru
          _
      $region28: #{conv3d_op.1} parent=5 // pred_fallthru
        _
      %p11519 = scmp.le.s32.totalorder 2, %s11
      // Predicated region
      $region33: #{conv3d_op.1} parent=5 // pred_check
        %p11520 = pneg %p11519
      $region34: #{conv3d_op.1} parent=5 // pred_check_branch
        %11522 = sbr.rel (%p11520) target = $region36
      $region35: #{conv3d_op.1} parent=5 // pred_region
        %s11523 = ssub.s32 %s11, 2
        // Predicated region
        $region37: #{conv3d_op.1} parent=35 // pred_check
          %p11524 = pneg %p106
        $region38: #{conv3d_op.1} parent=35 // pred_check_branch
          %11526 = sbr.rel (%p11524) target = $region40
        $region39: #{conv3d_op.1} parent=35 // pred_region
          %s11527 = sand.u32 %s91, 1
          %s11528 = scalar_lea.sflag [#allocation3], %s11527
          %s11529 = sand.u32 %s91, 1
          %s11530 = smul.addr %s11529, 2048
          %s11531 = scalar_lea.vmem [#allocation2], %s11530
          %11532 = dma.done %s11528, 32768
        $region40: #{conv3d_op.1} parent=35 // pred_fallthru
          _
      $region36: #{conv3d_op.1} parent=5 // pred_fallthru
        _
    $region6: #{conv3d_op.1} parent=1 // loop_footer
      %s15 = sadd.s32 1, %s11
    $region7: #{conv3d_op.1} parent=1 // loop_footer_branch
      %10 = sbr.rel target = $region3
    $region8: #{conv3d_op.1} parent=1 // loop_exit
      _
    %11533 = vsyncpa [#allocation3], 1
    %s11534 = scalar_lea.sflag [#allocation3], 1
    %11535 = vsyncpa %s11534, 1

</llo_original>
